<compile_context>
chip_gen: v5e
topology: v5e:2x2
jax: 0.10.0
libtpu: 0.0.40
codegen_flags: <defaults>
</compile_context>

<pallas_src>
import functools

import numpy as np
import jax
import jax.numpy as jnp
from jax import lax
from jax.experimental import pallas as pl
from jax.experimental.pallas import tpu as pltpu


# bf16 operands for the 1x1-conv MXU matmul (accumulation stays f32).
MXU_BF16 = True


# ----------------------------------------------------------------------------
# XLA glue: 1-D 2x bilinear upsample (align_corners=False), exact-2x case.
# Only the width direction of the stride-1 stages still runs here (see TODO above).
# ----------------------------------------------------------------------------
def _up2x_along(x, axis):
    n = x.shape[axis]
    first = lax.slice_in_dim(x, 0, 1, axis=axis)
    last = lax.slice_in_dim(x, n - 1, n, axis=axis)
    prev = jnp.concatenate([first, lax.slice_in_dim(x, 0, n - 1, axis=axis)], axis=axis)
    nxt = jnp.concatenate([lax.slice_in_dim(x, 1, n, axis=axis), last], axis=axis)
    even = 0.75 * x + 0.25 * prev      # out[2k]   = .25*x[k-1] + .75*x[k]   (edge clamped)
    odd = 0.75 * x + 0.25 * nxt        # out[2k+1] = .75*x[k]   + .25*x[k+1] (edge clamped)
    out = jnp.stack([even, odd], axis=axis + 1)
    new_shape = list(x.shape)
    new_shape[axis] = 2 * n
    return out.reshape(new_shape)


def upsample2x_bilinear(x):
    """NHWC 2x bilinear upsample == F.upsample(mode='bilinear', align_corners=False)."""
    return _up2x_along(_up2x_along(x, 1), 2)


# ----------------------------------------------------------------------------
# In-kernel helpers
# ----------------------------------------------------------------------------
def _shift_rows_down(t):
    """u[:, i] = t[:, i-1], zero at i == 0  (tap reading row r-1 of a zero-padded map)."""
    return jnp.concatenate([jnp.zeros_like(t[:, :1]), t[:, :-1]], axis=1)


def _shift_rows_up(t):
    """u[:, i] = t[:, i+1], zero at the last row (tap reading row r+1)."""
    return jnp.concatenate([t[:, 1:], jnp.zeros_like(t[:, :1])], axis=1)


def _shift_cols_down(t):
    return jnp.concatenate([jnp.zeros_like(t[:, :, :1]), t[:, :, :-1]], axis=2)


def _shift_cols_up(t):
    return jnp.concatenate([t[:, :, 1:], jnp.zeros_like(t[:, :, :1])], axis=2)


def _dw3x3_s1(z, dwv):
    """3x3 depthwise conv, stride 1, zero pad 1: nine shifted multiply-adds on z (1,H,W,C).

    TODO(synk): shifted pl.ds reads from a padded VMEM scratch would move this work
    from VALU/XLU selects onto the (slack) load slots; kept as concats for safety.
    """
    acc = None
    for di, row_shift in enumerate((_shift_rows_down, None, _shift_rows_up)):
        zr = z if row_shift is None else row_shift(z)
        for dj, col_shift in enumerate((_shift_cols_down, None, _shift_cols_up)):
            t = zr if col_shift is None else col_shift(zr)
            c = t * dwv[3 * di + dj]
            acc = c if acc is None else acc + c
    return acc


def _pointwise_bn_relu(acc, pw, b, Hout, Wout, C):
    """1x1 conv (BN scale pre-folded into pw) + bias + ReLU as one flattened MXU matmul."""
    pad = (-Wout) % 8
    if pad:
        # Pad the sublane (width) dim to a multiple of 8 so the (H*W, C) collapse is a
        # layout no-op; padded rows are sliced off after the matmul (perf review: no
        # per-row M=1 matmuls on the tiny f4-level maps).
        acc = jnp.concatenate([acc, jnp.zeros((1, Hout, pad, C), acc.dtype)], axis=2)
    Wp = Wout + pad
    flat = acc.reshape(Hout * Wp, C)
    r = jnp.dot(flat.astype(pw.dtype), pw, preferred_element_type=jnp.float32)
    r = jnp.maximum(r + b.astype(jnp.float32), 0.0)
    r = r.reshape(1, Hout, Wp, C)
    if pad:
        r = r[:, :, :Wout, :]
    return r


# ----------------------------------------------------------------------------
# Stride-1 stage kernel: row-upsample(xw) + y -> dw3x3 s1 -> 1x1 + bias + ReLU
# ----------------------------------------------------------------------------
def _stride1_kernel(xw_ref, y_ref, dw_ref, pw_ref, b_ref, *out_refs,
                    h, H, W, C, res_mode, dual_out):
    yv = y_ref[...]                                      # (1, H, W, C)
    xw = xw_ref[...]                                     # (1, h, W, C), h = H // 2
    dwv = dw_ref[...]                                    # (9, C), loaded once

    # Fused 2x bilinear *row* upsample of xw (align_corners=False phase weights).
    xm = jnp.concatenate([xw[:, :1], xw[:, :h - 1]], axis=1)      # xw[i-1], edge clamped
    xp = jnp.concatenate([xw[:, 1:], xw[:, h - 1:]], axis=1)      # xw[i+1], edge clamped
    even = 0.75 * xw + 0.25 * xm
    odd = 0.75 * xw + 0.25 * xp
    # Row interleave = merge of dims above the (sublane, lane) tile -> layout no-op.
    up = jnp.stack([even, odd], axis=2).reshape(1, H, W, C)

    z = up + yv                                          # _upsample_add
    acc = _dw3x3_s1(z, dwv)
    out = _pointwise_bn_relu(acc, pw_ref[...], b_ref[...], H, W, C)

    if dual_out:                                         # pre-residual map used downstream
        out_refs[0][...] = out.astype(out_refs[0].dtype)
    if res_mode == "y":                                  # residual operand already in VMEM
        out = out + yv
    out_refs[-1][...] = out.astype(out_refs[-1].dtype)


# ----------------------------------------------------------------------------
# Stride-2 stage kernel: up2x(x) + y -> dw3x3 s2 -> 1x1 + bias + ReLU
# ----------------------------------------------------------------------------
# Taps of the stride-2 3x3 conv grouped by the (row, col) phase plane of z they read:
#   out[i,j] = sum_k dw[k] * z[2i + k//3 - 1, 2j + k%3 - 1]   (zero outside z).
# Entry = (tap index k, shift rows down by 1?, shift cols down by 1?).
_S2_TAPS = {
    (0, 0): ((4, 0, 0),),
    (0, 1): ((5, 0, 0), (3, 0, 1)),
    (1, 0): ((7, 0, 0), (1, 1, 0)),
    (1, 1): ((8, 0, 0), (6, 0, 1), (2, 1, 0), (0, 1, 1)),
}


def _stride2_kernel(*refs, h, w, C, res_mode, dual_out):
    """The upsampled map is never materialized: one z = up2x(x)+y phase plane at a time."""
    it = iter(refs)
    x_ref = next(it)                       # (1, h, w, C)  low-res map to upsample
    y_ref = next(it)                       # (1, h, 2, 2w, C)  rows pre-split as (i, phase)
    res_ref = next(it) if res_mode == "extra" else None
    dw_ref = next(it)                      # (9, C)
    pw_ref = next(it)                      # (C, C), BN scale folded (bf16 if MXU_BF16)
    b_ref = next(it)                       # (1, C)
    pre_ref = next(it) if dual_out else None
    final_ref = next(it)

    xv = x_ref[...]
    dwv = dw_ref[...]

    # Row-phase neighbours of x (edge clamped), shared by both column phases.
    xm = jnp.concatenate([xv[:, :1], xv[:, :h - 1]], axis=1)     # x[i-1]
    xp = jnp.concatenate([xv[:, 1:], xv[:, h - 1:]], axis=1)     # x[i+1]

    acc = None
    for p in (0, 1):
        rp = 0.75 * xv + 0.25 * (xm if p == 0 else xp)           # up2x rows, phase p
        for q in (0, 1):
            if q == 0:
                nb = jnp.concatenate([rp[:, :, :1], rp[:, :, :w - 1]], axis=2)
            else:
                nb = jnp.concatenate([rp[:, :, 1:], rp[:, :, w - 1:]], axis=2)
            # y phase plane read straight from the y view: no staging scratch.
            ypq = y_ref[:, :, p:p + 1, pl.ds(q, w, 2), :].reshape(1, h, w, C)
            zpq = 0.75 * rp + 0.25 * nb + ypq                    # z[2i+p, 2j+q]
            for k, sr, sc in _S2_TAPS[(p, q)]:
                t = zpq
                if sr:
                    t = _shift_rows_down(t)
                if sc:
                    t = _shift_cols_down(t)
                c = t * dwv[k]
                acc = c if acc is None else acc + c

    out = _pointwise_bn_relu(acc, pw_ref[...], b_ref[...], h, w, C)

    if dual_out:
        pre_ref[...] = out.astype(pre_ref.dtype)
    if res_mode == "x":                                          # residual already in VMEM
        out = out + xv
    elif res_mode == "extra":
        out = out + res_ref[...]
    final_ref[...] = out.astype(final_ref.dtype)


# ----------------------------------------------------------------------------
# Stage wrapper
# ----------------------------------------------------------------------------
def fused_stage(x, y, *, stride, dw, pw, bias, res=None, return_pre=False):
    """One FPEM_v2 stage: relu(bn(conv1x1(dwconv3x3_s{1,2}(up2x(x) + y)))) [+ residual].

    x: (N, H/2, W/2, C),  y: (N, H, W, C).  Output spatial = y's (stride 1) or x's
    (stride 2).  res: None | "x" | "y" | array of the output shape; added AFTER the
    ReLU (matching `f = f + f_`).  If return_pre, returns (pre_residual, with_residual).
    """
    N, H, W, C = y.shape
    n2, h2, w2, c2 = x.shape
    # NOTE: PyTorch Conv2d(k=3, s=2, p=1) gives ceil(H/2); we require the exact-2x
    # pyramid the module is used with.
    assert n2 == N and c2 == C and H == 2 * h2 and W == 2 * w2, "expect exact 2x pyramid"
    assert h2 >= 2 and w2 >= 2

    res_is_array = (res is not None) and (not isinstance(res, str))
    if isinstance(res, str):
        assert (stride == 1 and res == "y") or (stride == 2 and res == "x"), res
    if stride == 1:
        assert not res_is_array, "array residual not needed for stride-1 stages"

    pw_k = pw.astype(jnp.bfloat16) if MXU_BF16 else pw

    per_map4 = lambda n: (n, 0, 0, 0)
    const2 = lambda n: (0, 0)

    if stride == 1:
        Hout, Wout = H, W
        # TODO(synk): column half of the upsample stays in XLA glue (needs sublane-
        # strided stores / even-odd swizzle); row half is fused in-kernel.
        first = _up2x_along(x, 2)                               # (N, h2, W, C)
        first_spec = pl.BlockSpec((1, h2, W, C), per_map4)
        y_in = y
        y_spec = pl.BlockSpec((1, H, W, C), per_map4)
        kernel = functools.partial(_stride1_kernel, h=h2, H=H, W=W, C=C,
                                   res_mode=res, dual_out=return_pre)
        res_mode = res
    else:
        Hout, Wout = h2, w2
        first = x
        first_spec = pl.BlockSpec((1, h2, w2, C), per_map4)
        # Free reshape: split the row dim into (row, row-phase) so the kernel reads y's
        # phase planes directly (no VMEM->VMEM staging copy, no scratch buffer).
        y_in = y.reshape(N, Hout, 2, 2 * Wout, C)
        y_spec = pl.BlockSpec((1, Hout, 2, 2 * Wout, C), lambda n: (n, 0, 0, 0, 0))
        res_mode = "extra" if res_is_array else res
        kernel = functools.partial(_stride2_kernel, h=Hout, w=Wout, C=C,
                                   res_mode=res_mode, dual_out=return_pre)

    extra_in, extra_specs = [], []
    if res_mode == "extra":
        extra_in = [res]
        extra_specs = [pl.BlockSpec((1, Hout, Wout, C), per_map4)]

    out_spec = pl.BlockSpec((1, Hout, Wout, C), per_map4)
    out_sds = jax.ShapeDtypeStruct((N, Hout, Wout, C), jnp.float32)
    out_shape = (out_sds, out_sds) if return_pre else out_sds
    out_specs = (out_spec, out_spec) if return_pre else out_spec

    # Scoped VMEM: double-buffered in/out blocks plus headroom for in-kernel temporaries
    # (z + a few tap planes).  Re-derive together with H-tiling at production sizes.
    blk_elems = (first.size // N + y_in.size // N
                 + sum(int(a.size) // N for a in extra_in)
                 + dw.size + pw.size + bias.size
                 + (2 if return_pre else 1) * Hout * Wout * C)
    vmem_limit = int(min(96 * 2 ** 20, max(32 * 2 ** 20, 12 * 4 * blk_elems)))

    return pl.pallas_call(
        kernel,
        out_shape=out_shape,
        grid=(N,),
        in_specs=[first_spec, y_spec, *extra_specs,
                  pl.BlockSpec((9, C), const2),
                  pl.BlockSpec((C, C), const2),
                  pl.BlockSpec((1, C), const2)],
        out_specs=out_specs,
        compiler_params=pltpu.CompilerParams(
            # Batch axis feeds v7x's two TensorCores; no-op on single-TC chips.
            dimension_semantics=("parallel",),
            vmem_limit_bytes=vmem_limit),
    )(first, y_in, *extra_in, dw, pw_k, bias)


# ----------------------------------------------------------------------------
# FPEM_v2 forward
# ----------------------------------------------------------------------------
def fpem_v2_forward(f1, f2, f3, f4, params):
    f3_ = fused_stage(f4, f3, stride=1, **params["3_1"])
    f2_ = fused_stage(f3_, f2, stride=1, **params["2_1"])
    # Residual adds (f + f_) are fused into the producing stages; where the pre-residual
    # map is still consumed downstream the stage emits both (pre, final).
    f1_pre, f1o = fused_stage(f2_, f1, stride=1, res="y", return_pre=True, **params["1_1"])
    f2_pre, f2o = fused_stage(f2_, f1_pre, stride=2, res=f2, return_pre=True, **params["2_2"])
    f3_pre, f3o = fused_stage(f3_, f2_pre, stride=2, res=f3, return_pre=True, **params["3_2"])
    f4o = fused_stage(f4, f3_pre, stride=2, res="x", **params["4_2"])
    return f1o, f2o, f3o, f4o


# ----------------------------------------------------------------------------
# Pure-JAX f32 reference (XLA ops only) for validation
# ----------------------------------------------------------------------------
def _ref_dwconv3x3(x, dw9, stride):
    C = x.shape[-1]
    w = dw9.reshape(3, 3, 1, C)
    return lax.conv_general_dilated(
        x, w, window_strides=(stride, stride), padding=((1, 1), (1, 1)),
        dimension_numbers=("NHWC", "HWIO", "NHWC"), feature_group_count=C)


def _ref_stage(x, y, stride, p):
    z = upsample2x_bilinear(x) + y
    d = _ref_dwconv3x3(z, p["dw"], stride)
    r = jnp.einsum("nhwc,cd->nhwd", d, p["pw"]) + p["bias"].reshape(-1)
    return jnp.maximum(r, 0.0)


def fpem_v2_reference(f1, f2, f3, f4, params):
    f3_ = _ref_stage(f4, f3, 1, params["3_1"])
    f2_ = _ref_stage(f3_, f2, 1, params["2_1"])
    f1_ = _ref_stage(f2_, f1, 1, params["1_1"])
    f2n = _ref_stage(f2_, f1_, 2, params["2_2"])
    f3n = _ref_stage(f3_, f2n, 2, params["3_2"])
    f4n = _ref_stage(f4, f3n, 2, params["4_2"])
    return f1 + f1_, f2 + f2n, f3 + f3n, f4 + f4n


# ----------------------------------------------------------------------------
# Deterministic parameter init (mirrors FPEM_v2.__init__ shapes; BN folded for inference)
# ----------------------------------------------------------------------------
def init_stage_params(key, C):
    k = jax.random.split(key, 6)
    # depthwise Conv2d(C, C, 3, groups=C): fan_out = 9 -> std sqrt(2/9); stored as (9, C)
    dw = jax.random.normal(k[0], (9, C), jnp.float32) * np.sqrt(2.0 / 9.0)
    # pointwise Conv2d(C, C, 1): fan_out = C; stored as (Cin, Cout)
    pw = jax.random.normal(k[1], (C, C), jnp.float32) * np.sqrt(2.0 / C)
    # BatchNorm2d (inference), folded to per-channel scale / bias
    gamma = 1.0 + 0.1 * jax.random.normal(k[2], (C,), jnp.float32)
    beta = 0.1 * jax.random.normal(k[3], (C,), jnp.float32)
    mean = 0.1 * jax.random.normal(k[4], (C,), jnp.float32)
    var = jnp.abs(jax.random.normal(k[5], (C,), jnp.float32)) + 0.5
    scale = gamma / jnp.sqrt(var + 1e-5)
    bias = beta - mean * scale
    # Host-side precompute: fold the BN scale into the 1x1 conv weights.
    return dict(dw=dw, pw=pw * scale[None, :], bias=bias.reshape(1, C))


if __name__ == "__main__":
    key = jax.random.PRNGKey(0)
    kf, kp = jax.random.split(key)

    N, C = 2, 128             # C = 128 keeps the channel/lane dim dense (full MXU width)
    H1 = W1 = 16              # f1 spatial; pyramid halves each level (f4 = 2x2)
    k1, k2, k3, k4 = jax.random.split(kf, 4)
    f1 = jax.random.normal(k1, (N, H1, W1, C), jnp.float32)
    f2 = jax.random.normal(k2, (N, H1 // 2, W1 // 2, C), jnp.float32)
    f3 = jax.random.normal(k3, (N, H1 // 4, W1 // 4, C), jnp.float32)
    f4 = jax.random.normal(k4, (N, H1 // 8, W1 // 8, C), jnp.float32)

    names = ["3_1", "2_1", "1_1", "2_2", "3_2", "4_2"]
    params = {nm: init_stage_params(sk, C)
              for nm, sk in zip(names, jax.random.split(kp, 6))}

    fwd = jax.jit(fpem_v2_forward)
    outs = jax.block_until_ready(fwd(f1, f2, f3, f4, params))

    refs = fpem_v2_reference(f1, f2, f3, f4, params)
    for o, r, f in zip(outs, refs, (f1, f2, f3, f4)):
        assert o.shape == f.shape and o.dtype == jnp.float32
        # bf16 MXU operands (f32 accumulation) -> loose but meaningful tolerance.
        np.testing.assert_allclose(np.asarray(o), np.asarray(r), rtol=5e-2, atol=2e-1)
    print("KERNEL_OK")
</pallas_src>

<mosaic_0001>
module attributes {stable_mosaic.version = 11 : i64} {
  func.func @_stride1_kernel(%arg0: i32, %arg1: memref<1x2x4x128xf32, #tpu.memory_space<vmem>>, %arg2: memref<1x4x4x128xf32, #tpu.memory_space<vmem>>, %arg3: memref<9x128xf32, #tpu.memory_space<vmem>>, %arg4: memref<128x128xbf16, #tpu.memory_space<vmem>>, %arg5: memref<1x128xf32, #tpu.memory_space<vmem>>, %arg6: memref<1x4x4x128xf32, #tpu.memory_space<vmem>>) attributes {dimension_semantics = [#tpu.dimension_semantics<parallel>], iteration_bounds = array<i64: 2>, scalar_prefetch = 0 : i64, scratch_operands = 0 : i64, tpu.core_type = #tpu.core_type<tc>, window_params = [{transform_indices = @transform_0, window_bounds = array<i64: 1, 2, 4, 128>}, {transform_indices = @transform_1, window_bounds = array<i64: 1, 4, 4, 128>}, {pipeline_mode = #tpu.pipeline_mode<synchronous>, transform_indices = @transform_2, window_bounds = array<i64: 9, 128>}, {pipeline_mode = #tpu.pipeline_mode<synchronous>, transform_indices = @transform_3, window_bounds = array<i64: 128, 128>}, {pipeline_mode = #tpu.pipeline_mode<synchronous>, transform_indices = @transform_4, window_bounds = array<i64: 1, 128>}, {transform_indices = @transform_5, window_bounds = array<i64: 1, 4, 4, 128>}]} {
    %c0 = arith.constant 0 : index
    %c0_0 = arith.constant 0 : index
    %c0_1 = arith.constant 0 : index
    %c0_2 = arith.constant 0 : index
    %0 = vector.load %arg2[%c0, %c0_0, %c0_1, %c0_2] : memref<1x4x4x128xf32, #tpu.memory_space<vmem>>, vector<1x4x4x128xf32>
    %c0_3 = arith.constant 0 : index
    %c0_4 = arith.constant 0 : index
    %c0_5 = arith.constant 0 : index
    %c0_6 = arith.constant 0 : index
    %1 = vector.load %arg1[%c0_3, %c0_4, %c0_5, %c0_6] : memref<1x2x4x128xf32, #tpu.memory_space<vmem>>, vector<1x2x4x128xf32>
    %c0_7 = arith.constant 0 : index
    %c0_8 = arith.constant 0 : index
    %2 = vector.load %arg3[%c0_7, %c0_8] : memref<9x128xf32, #tpu.memory_space<vmem>>, vector<9x128xf32>
    %3 = vector.extract_strided_slice %1 {offsets = [0, 0, 0, 0], sizes = [1, 1, 4, 128], strides = [1, 1, 1, 1]} : vector<1x2x4x128xf32> to vector<1x1x4x128xf32>
    %4 = vector.extract_strided_slice %1 {offsets = [0, 0, 0, 0], sizes = [1, 1, 4, 128], strides = [1, 1, 1, 1]} : vector<1x2x4x128xf32> to vector<1x1x4x128xf32>
    %5 = tpu.concatenate %3, %4 in 1 : vector<1x1x4x128xf32>, vector<1x1x4x128xf32> -> vector<1x2x4x128xf32>
    %6 = vector.extract_strided_slice %1 {offsets = [0, 1, 0, 0], sizes = [1, 1, 4, 128], strides = [1, 1, 1, 1]} : vector<1x2x4x128xf32> to vector<1x1x4x128xf32>
    %7 = vector.extract_strided_slice %1 {offsets = [0, 1, 0, 0], sizes = [1, 1, 4, 128], strides = [1, 1, 1, 1]} : vector<1x2x4x128xf32> to vector<1x1x4x128xf32>
    %8 = tpu.concatenate %6, %7 in 1 : vector<1x1x4x128xf32>, vector<1x1x4x128xf32> -> vector<1x2x4x128xf32>
    %cst = arith.constant 7.500000e-01 : f32
    %9 = vector.broadcast %cst : f32 to vector<1x2x4x128xf32>
    %10 = arith.mulf %9, %1 : vector<1x2x4x128xf32>
    %cst_9 = arith.constant 2.500000e-01 : f32
    %11 = vector.broadcast %cst_9 : f32 to vector<1x2x4x128xf32>
    %12 = arith.mulf %11, %5 : vector<1x2x4x128xf32>
    %13 = arith.addf %10, %12 : vector<1x2x4x128xf32>
    %cst_10 = arith.constant 7.500000e-01 : f32
    %14 = vector.broadcast %cst_10 : f32 to vector<1x2x4x128xf32>
    %15 = arith.mulf %14, %1 : vector<1x2x4x128xf32>
    %cst_11 = arith.constant 2.500000e-01 : f32
    %16 = vector.broadcast %cst_11 : f32 to vector<1x2x4x128xf32>
    %17 = arith.mulf %16, %8 : vector<1x2x4x128xf32>
    %18 = arith.addf %15, %17 : vector<1x2x4x128xf32>
    %19 = vector.shape_cast %13 : vector<1x2x4x128xf32> to vector<1x2x1x4x128xf32>
    %20 = vector.shape_cast %18 : vector<1x2x4x128xf32> to vector<1x2x1x4x128xf32>
    %21 = tpu.concatenate %19, %20 in 2 : vector<1x2x1x4x128xf32>, vector<1x2x1x4x128xf32> -> vector<1x2x2x4x128xf32>
    %22 = vector.shape_cast %21 : vector<1x2x2x4x128xf32> to vector<1x4x4x128xf32>
    %23 = arith.addf %22, %0 : vector<1x4x4x128xf32>
    %cst_12 = arith.constant 0.000000e+00 : f32
    %24 = vector.broadcast %cst_12 : f32 to vector<1x1x4x128xf32>
    %25 = vector.extract_strided_slice %23 {offsets = [0, 0, 0, 0], sizes = [1, 3, 4, 128], strides = [1, 1, 1, 1]} : vector<1x4x4x128xf32> to vector<1x3x4x128xf32>
    %26 = tpu.concatenate %24, %25 in 1 : vector<1x1x4x128xf32>, vector<1x3x4x128xf32> -> vector<1x4x4x128xf32>
    %cst_13 = arith.constant 0.000000e+00 : f32
    %27 = vector.broadcast %cst_13 : f32 to vector<1x4x1x128xf32>
    %28 = vector.extract_strided_slice %26 {offsets = [0, 0, 0, 0], sizes = [1, 4, 3, 128], strides = [1, 1, 1, 1]} : vector<1x4x4x128xf32> to vector<1x4x3x128xf32>
    %29 = tpu.concatenate %27, %28 in 2 : vector<1x4x1x128xf32>, vector<1x4x3x128xf32> -> vector<1x4x4x128xf32>
    %30 = vector.extract_strided_slice %2 {offsets = [0, 0], sizes = [1, 128], strides = [1, 1]} : vector<9x128xf32> to vector<1x128xf32>
    %31 = vector.shape_cast %30 : vector<1x128xf32> to vector<128xf32>
    %32 = vector.shape_cast %31 : vector<128xf32> to vector<1x1x1x128xf32>
    %33 = vector.broadcast %32 : vector<1x1x1x128xf32> to vector<1x4x4x128xf32>
    %34 = arith.mulf %29, %33 : vector<1x4x4x128xf32>
    %35 = vector.extract_strided_slice %2 {offsets = [1, 0], sizes = [1, 128], strides = [1, 1]} : vector<9x128xf32> to vector<1x128xf32>
    %36 = vector.shape_cast %35 : vector<1x128xf32> to vector<128xf32>
    %37 = vector.shape_cast %36 : vector<128xf32> to vector<1x1x1x128xf32>
    %38 = vector.broadcast %37 : vector<1x1x1x128xf32> to vector<1x4x4x128xf32>
    %39 = arith.mulf %26, %38 : vector<1x4x4x128xf32>
    %40 = arith.addf %34, %39 : vector<1x4x4x128xf32>
    %41 = vector.extract_strided_slice %26 {offsets = [0, 0, 1, 0], sizes = [1, 4, 3, 128], strides = [1, 1, 1, 1]} : vector<1x4x4x128xf32> to vector<1x4x3x128xf32>
    %cst_14 = arith.constant 0.000000e+00 : f32
    %42 = vector.broadcast %cst_14 : f32 to vector<1x4x1x128xf32>
    %43 = tpu.concatenate %41, %42 in 2 : vector<1x4x3x128xf32>, vector<1x4x1x128xf32> -> vector<1x4x4x128xf32>
    %44 = vector.extract_strided_slice %2 {offsets = [2, 0], sizes = [1, 128], strides = [1, 1]} : vector<9x128xf32> to vector<1x128xf32>
    %45 = vector.shape_cast %44 : vector<1x128xf32> to vector<128xf32>
    %46 = vector.shape_cast %45 : vector<128xf32> to vector<1x1x1x128xf32>
    %47 = vector.broadcast %46 : vector<1x1x1x128xf32> to vector<1x4x4x128xf32>
    %48 = arith.mulf %43, %47 : vector<1x4x4x128xf32>
    %49 = arith.addf %40, %48 : vector<1x4x4x128xf32>
    %cst_15 = arith.constant 0.000000e+00 : f32
    %50 = vector.broadcast %cst_15 : f32 to vector<1x4x1x128xf32>
    %51 = vector.extract_strided_slice %23 {offsets = [0, 0, 0, 0], sizes = [1, 4, 3, 128], strides = [1, 1, 1, 1]} : vector<1x4x4x128xf32> to vector<1x4x3x128xf32>
    %52 = tpu.concatenate %50, %51 in 2 : vector<1x4x1x128xf32>, vector<1x4x3x128xf32> -> vector<1x4x4x128xf32>
    %53 = vector.extract_strided_slice %2 {offsets = [3, 0], sizes = [1, 128], strides = [1, 1]} : vector<9x128xf32> to vector<1x128xf32>
    %54 = vector.shape_cast %53 : vector<1x128xf32> to vector<128xf32>
    %55 = vector.shape_cast %54 : vector<128xf32> to vector<1x1x1x128xf32>
    %56 = vector.broadcast %55 : vector<1x1x1x128xf32> to vector<1x4x4x128xf32>
    %57 = arith.mulf %52, %56 : vector<1x4x4x128xf32>
    %58 = arith.addf %49, %57 : vector<1x4x4x128xf32>
    %59 = vector.extract_strided_slice %2 {offsets = [4, 0], sizes = [1, 128], strides = [1, 1]} : vector<9x128xf32> to vector<1x128xf32>
    %60 = vector.shape_cast %59 : vector<1x128xf32> to vector<128xf32>
    %61 = vector.shape_cast %60 : vector<128xf32> to vector<1x1x1x128xf32>
    %62 = vector.broadcast %61 : vector<1x1x1x128xf32> to vector<1x4x4x128xf32>
    %63 = arith.mulf %23, %62 : vector<1x4x4x128xf32>
    %64 = arith.addf %58, %63 : vector<1x4x4x128xf32>
    %65 = vector.extract_strided_slice %23 {offsets = [0, 0, 1, 0], sizes = [1, 4, 3, 128], strides = [1, 1, 1, 1]} : vector<1x4x4x128xf32> to vector<1x4x3x128xf32>
    %cst_16 = arith.constant 0.000000e+00 : f32
    %66 = vector.broadcast %cst_16 : f32 to vector<1x4x1x128xf32>
    %67 = tpu.concatenate %65, %66 in 2 : vector<1x4x3x128xf32>, vector<1x4x1x128xf32> -> vector<1x4x4x128xf32>
    %68 = vector.extract_strided_slice %2 {offsets = [5, 0], sizes = [1, 128], strides = [1, 1]} : vector<9x128xf32> to vector<1x128xf32>
    %69 = vector.shape_cast %68 : vector<1x128xf32> to vector<128xf32>
    %70 = vector.shape_cast %69 : vector<128xf32> to vector<1x1x1x128xf32>
    %71 = vector.broadcast %70 : vector<1x1x1x128xf32> to vector<1x4x4x128xf32>
    %72 = arith.mulf %67, %71 : vector<1x4x4x128xf32>
    %73 = arith.addf %64, %72 : vector<1x4x4x128xf32>
    %74 = vector.extract_strided_slice %23 {offsets = [0, 1, 0, 0], sizes = [1, 3, 4, 128], strides = [1, 1, 1, 1]} : vector<1x4x4x128xf32> to vector<1x3x4x128xf32>
    %cst_17 = arith.constant 0.000000e+00 : f32
    %75 = vector.broadcast %cst_17 : f32 to vector<1x1x4x128xf32>
    %76 = tpu.concatenate %74, %75 in 1 : vector<1x3x4x128xf32>, vector<1x1x4x128xf32> -> vector<1x4x4x128xf32>
    %cst_18 = arith.constant 0.000000e+00 : f32
    %77 = vector.broadcast %cst_18 : f32 to vector<1x4x1x128xf32>
    %78 = vector.extract_strided_slice %76 {offsets = [0, 0, 0, 0], sizes = [1, 4, 3, 128], strides = [1, 1, 1, 1]} : vector<1x4x4x128xf32> to vector<1x4x3x128xf32>
    %79 = tpu.concatenate %77, %78 in 2 : vector<1x4x1x128xf32>, vector<1x4x3x128xf32> -> vector<1x4x4x128xf32>
    %80 = vector.extract_strided_slice %2 {offsets = [6, 0], sizes = [1, 128], strides = [1, 1]} : vector<9x128xf32> to vector<1x128xf32>
    %81 = vector.shape_cast %80 : vector<1x128xf32> to vector<128xf32>
    %82 = vector.shape_cast %81 : vector<128xf32> to vector<1x1x1x128xf32>
    %83 = vector.broadcast %82 : vector<1x1x1x128xf32> to vector<1x4x4x128xf32>
    %84 = arith.mulf %79, %83 : vector<1x4x4x128xf32>
    %85 = arith.addf %73, %84 : vector<1x4x4x128xf32>
    %86 = vector.extract_strided_slice %2 {offsets = [7, 0], sizes = [1, 128], strides = [1, 1]} : vector<9x128xf32> to vector<1x128xf32>
    %87 = vector.shape_cast %86 : vector<1x128xf32> to vector<128xf32>
    %88 = vector.shape_cast %87 : vector<128xf32> to vector<1x1x1x128xf32>
    %89 = vector.broadcast %88 : vector<1x1x1x128xf32> to vector<1x4x4x128xf32>
    %90 = arith.mulf %76, %89 : vector<1x4x4x128xf32>
    %91 = arith.addf %85, %90 : vector<1x4x4x128xf32>
    %92 = vector.extract_strided_slice %76 {offsets = [0, 0, 1, 0], sizes = [1, 4, 3, 128], strides = [1, 1, 1, 1]} : vector<1x4x4x128xf32> to vector<1x4x3x128xf32>
    %cst_19 = arith.constant 0.000000e+00 : f32
    %93 = vector.broadcast %cst_19 : f32 to vector<1x4x1x128xf32>
    %94 = tpu.concatenate %92, %93 in 2 : vector<1x4x3x128xf32>, vector<1x4x1x128xf32> -> vector<1x4x4x128xf32>
    %95 = vector.extract_strided_slice %2 {offsets = [8, 0], sizes = [1, 128], strides = [1, 1]} : vector<9x128xf32> to vector<1x128xf32>
    %96 = vector.shape_cast %95 : vector<1x128xf32> to vector<128xf32>
    %97 = vector.shape_cast %96 : vector<128xf32> to vector<1x1x1x128xf32>
    %98 = vector.broadcast %97 : vector<1x1x1x128xf32> to vector<1x4x4x128xf32>
    %99 = arith.mulf %94, %98 : vector<1x4x4x128xf32>
    %100 = arith.addf %91, %99 : vector<1x4x4x128xf32>
    %c0_20 = arith.constant 0 : index
    %c0_21 = arith.constant 0 : index
    %101 = vector.load %arg4[%c0_20, %c0_21] : memref<128x128xbf16, #tpu.memory_space<vmem>>, vector<128x128xbf16>
    %c0_22 = arith.constant 0 : index
    %c0_23 = arith.constant 0 : index
    %102 = vector.load %arg5[%c0_22, %c0_23] : memref<1x128xf32, #tpu.memory_space<vmem>>, vector<1x128xf32>
    %cst_24 = arith.constant 0.000000e+00 : f32
    %103 = vector.broadcast %cst_24 : f32 to vector<1x4x4x128xf32>
    %104 = tpu.concatenate %100, %103 in 2 : vector<1x4x4x128xf32>, vector<1x4x4x128xf32> -> vector<1x4x8x128xf32>
    %105 = vector.shape_cast %104 : vector<1x4x8x128xf32> to vector<32x128xf32>
    %106 = arith.truncf %105 : vector<32x128xf32> to vector<32x128xbf16>
    %cst_25 = arith.constant dense<0.000000e+00> : vector<32x128xf32>
    %107 = tpu.matmul %106, %101, %cst_25 {dimension_numbers = #tpu.dot_dimension_numbers<[1], [0], [0], [1], [0, 0, 1, 1], [], []>} : vector<32x128xbf16>, vector<128x128xbf16>, vector<32x128xf32> -> vector<32x128xf32>
    %108 = vector.broadcast %102 : vector<1x128xf32> to vector<32x128xf32>
    %109 = arith.addf %107, %108 : vector<32x128xf32>
    %cst_26 = arith.constant 0.000000e+00 : f32
    %110 = vector.broadcast %cst_26 : f32 to vector<32x128xf32>
    %111 = arith.maximumf %109, %110 : vector<32x128xf32>
    %112 = vector.shape_cast %111 : vector<32x128xf32> to vector<1x4x8x128xf32>
    %113 = vector.extract_strided_slice %112 {offsets = [0, 0, 0, 0], sizes = [1, 4, 4, 128], strides = [1, 1, 1, 1]} : vector<1x4x8x128xf32> to vector<1x4x4x128xf32>
    %c0_27 = arith.constant 0 : index
    %c0_28 = arith.constant 0 : index
    %c0_29 = arith.constant 0 : index
    %c0_30 = arith.constant 0 : index
    %114 = vector.load %arg6[%c0_27, %c0_28, %c0_29, %c0_30] : memref<1x4x4x128xf32, #tpu.memory_space<vmem>>, vector<1x4x4x128xf32>
    tpu.vector_store %arg6[%c0_27, %c0_28, %c0_29, %c0_30], %113 {strides = array<i32>} : memref<1x4x4x128xf32, #tpu.memory_space<vmem>>, vector<1x4x4x128xf32>,
    return
  }
  func.func @transform_0(%arg0: i32) -> (i32, i32, i32, i32) {
    %c0_i32 = arith.constant 0 : i32
    %c0_i32_0 = arith.constant 0 : i32
    %c0_i32_1 = arith.constant 0 : i32
    %c0_i32_2 = arith.constant 0 : i32
    return %arg0, %c0_i32, %c0_i32_0, %c0_i32_1 : i32, i32, i32, i32
  }
  func.func @transform_1(%arg0: i32) -> (i32, i32, i32, i32) {
    %c0_i32 = arith.constant 0 : i32
    %c0_i32_0 = arith.constant 0 : i32
    %c0_i32_1 = arith.constant 0 : i32
    %c0_i32_2 = arith.constant 0 : i32
    return %arg0, %c0_i32, %c0_i32_0, %c0_i32_1 : i32, i32, i32, i32
  }
  func.func @transform_2(%arg0: i32) -> (i32, i32) {
    %c0_i32 = arith.constant 0 : i32
    %c0_i32_0 = arith.constant 0 : i32
    %c0_i32_1 = arith.constant 0 : i32
    return %c0_i32, %c0_i32_0 : i32, i32
  }
  func.func @transform_3(%arg0: i32) -> (i32, i32) {
    %c0_i32 = arith.constant 0 : i32
    %c0_i32_0 = arith.constant 0 : i32
    %c0_i32_1 = arith.constant 0 : i32
    return %c0_i32, %c0_i32_0 : i32, i32
  }
  func.func @transform_4(%arg0: i32) -> (i32, i32) {
    %c0_i32 = arith.constant 0 : i32
    %c0_i32_0 = arith.constant 0 : i32
    %c0_i32_1 = arith.constant 0 : i32
    return %c0_i32, %c0_i32_0 : i32, i32
  }
  func.func @transform_5(%arg0: i32) -> (i32, i32, i32, i32) {
    %c0_i32 = arith.constant 0 : i32
    %c0_i32_0 = arith.constant 0 : i32
    %c0_i32_1 = arith.constant 0 : i32
    %c0_i32_2 = arith.constant 0 : i32
    return %arg0, %c0_i32, %c0_i32_0, %c0_i32_1 : i32, i32, i32, i32
  }
}

module attributes {stable_mosaic.version = 11 : i64} {
  func.func @_stride1_kernel(%arg0: i32, %arg1: memref<1x4x8x128xf32, #tpu.memory_space<vmem>>, %arg2: memref<1x8x8x128xf32, #tpu.memory_space<vmem>>, %arg3: memref<9x128xf32, #tpu.memory_space<vmem>>, %arg4: memref<128x128xbf16, #tpu.memory_space<vmem>>, %arg5: memref<1x128xf32, #tpu.memory_space<vmem>>, %arg6: memref<1x8x8x128xf32, #tpu.memory_space<vmem>>) attributes {dimension_semantics = [#tpu.dimension_semantics<parallel>], iteration_bounds = array<i64: 2>, scalar_prefetch = 0 : i64, scratch_operands = 0 : i64, tpu.core_type = #tpu.core_type<tc>, window_params = [{transform_indices = @transform_0, window_bounds = array<i64: 1, 4, 8, 128>}, {transform_indices = @transform_1, window_bounds = array<i64: 1, 8, 8, 128>}, {pipeline_mode = #tpu.pipeline_mode<synchronous>, transform_indices = @transform_2, window_bounds = array<i64: 9, 128>}, {pipeline_mode = #tpu.pipeline_mode<synchronous>, transform_indices = @transform_3, window_bounds = array<i64: 128, 128>}, {pipeline_mode = #tpu.pipeline_mode<synchronous>, transform_indices = @transform_4, window_bounds = array<i64: 1, 128>}, {transform_indices = @transform_5, window_bounds = array<i64: 1, 8, 8, 128>}]} {
    %c0 = arith.constant 0 : index
    %c0_0 = arith.constant 0 : index
    %c0_1 = arith.constant 0 : index
    %c0_2 = arith.constant 0 : index
    %0 = vector.load %arg2[%c0, %c0_0, %c0_1, %c0_2] : memref<1x8x8x128xf32, #tpu.memory_space<vmem>>, vector<1x8x8x128xf32>
    %c0_3 = arith.constant 0 : index
    %c0_4 = arith.constant 0 : index
    %c0_5 = arith.constant 0 : index
    %c0_6 = arith.constant 0 : index
    %1 = vector.load %arg1[%c0_3, %c0_4, %c0_5, %c0_6] : memref<1x4x8x128xf32, #tpu.memory_space<vmem>>, vector<1x4x8x128xf32>
    %c0_7 = arith.constant 0 : index
    %c0_8 = arith.constant 0 : index
    %2 = vector.load %arg3[%c0_7, %c0_8] : memref<9x128xf32, #tpu.memory_space<vmem>>, vector<9x128xf32>
    %3 = vector.extract_strided_slice %1 {offsets = [0, 0, 0, 0], sizes = [1, 1, 8, 128], strides = [1, 1, 1, 1]} : vector<1x4x8x128xf32> to vector<1x1x8x128xf32>
    %4 = vector.extract_strided_slice %1 {offsets = [0, 0, 0, 0], sizes = [1, 3, 8, 128], strides = [1, 1, 1, 1]} : vector<1x4x8x128xf32> to vector<1x3x8x128xf32>
    %5 = tpu.concatenate %3, %4 in 1 : vector<1x1x8x128xf32>, vector<1x3x8x128xf32> -> vector<1x4x8x128xf32>
    %6 = vector.extract_strided_slice %1 {offsets = [0, 1, 0, 0], sizes = [1, 3, 8, 128], strides = [1, 1, 1, 1]} : vector<1x4x8x128xf32> to vector<1x3x8x128xf32>
    %7 = vector.extract_strided_slice %1 {offsets = [0, 3, 0, 0], sizes = [1, 1, 8, 128], strides = [1, 1, 1, 1]} : vector<1x4x8x128xf32> to vector<1x1x8x128xf32>
    %8 = tpu.concatenate %6, %7 in 1 : vector<1x3x8x128xf32>, vector<1x1x8x128xf32> -> vector<1x4x8x128xf32>
    %cst = arith.constant 7.500000e-01 : f32
    %9 = vector.broadcast %cst : f32 to vector<1x4x8x128xf32>
    %10 = arith.mulf %9, %1 : vector<1x4x8x128xf32>
    %cst_9 = arith.constant 2.500000e-01 : f32
    %11 = vector.broadcast %cst_9 : f32 to vector<1x4x8x128xf32>
    %12 = arith.mulf %11, %5 : vector<1x4x8x128xf32>
    %13 = arith.addf %10, %12 : vector<1x4x8x128xf32>
    %cst_10 = arith.constant 7.500000e-01 : f32
    %14 = vector.broadcast %cst_10 : f32 to vector<1x4x8x128xf32>
    %15 = arith.mulf %14, %1 : vector<1x4x8x128xf32>
    %cst_11 = arith.constant 2.500000e-01 : f32
    %16 = vector.broadcast %cst_11 : f32 to vector<1x4x8x128xf32>
    %17 = arith.mulf %16, %8 : vector<1x4x8x128xf32>
    %18 = arith.addf %15, %17 : vector<1x4x8x128xf32>
    %19 = vector.shape_cast %13 : vector<1x4x8x128xf32> to vector<1x4x1x8x128xf32>
    %20 = vector.shape_cast %18 : vector<1x4x8x128xf32> to vector<1x4x1x8x128xf32>
    %21 = tpu.concatenate %19, %20 in 2 : vector<1x4x1x8x128xf32>, vector<1x4x1x8x128xf32> -> vector<1x4x2x8x128xf32>
    %22 = vector.shape_cast %21 : vector<1x4x2x8x128xf32> to vector<1x8x8x128xf32>
    %23 = arith.addf %22, %0 : vector<1x8x8x128xf32>
    %cst_12 = arith.constant 0.000000e+00 : f32
    %24 = vector.broadcast %cst_12 : f32 to vector<1x1x8x128xf32>
    %25 = vector.extract_strided_slice %23 {offsets = [0, 0, 0, 0], sizes = [1, 7, 8, 128], strides = [1, 1, 1, 1]} : vector<1x8x8x128xf32> to vector<1x7x8x128xf32>
    %26 = tpu.concatenate %24, %25 in 1 : vector<1x1x8x128xf32>, vector<1x7x8x128xf32> -> vector<1x8x8x128xf32>
    %cst_13 = arith.constant 0.000000e+00 : f32
    %27 = vector.broadcast %cst_13 : f32 to vector<1x8x1x128xf32>
    %28 = vector.extract_strided_slice %26 {offsets = [0, 0, 0, 0], sizes = [1, 8, 7, 128], strides = [1, 1, 1, 1]} : vector<1x8x8x128xf32> to vector<1x8x7x128xf32>
    %29 = tpu.concatenate %27, %28 in 2 : vector<1x8x1x128xf32>, vector<1x8x7x128xf32> -> vector<1x8x8x128xf32>
    %30 = vector.extract_strided_slice %2 {offsets = [0, 0], sizes = [1, 128], strides = [1, 1]} : vector<9x128xf32> to vector<1x128xf32>
    %31 = vector.shape_cast %30 : vector<1x128xf32> to vector<128xf32>
    %32 = vector.shape_cast %31 : vector<128xf32> to vector<1x1x1x128xf32>
    %33 = vector.broadcast %32 : vector<1x1x1x128xf32> to vector<1x8x8x128xf32>
    %34 = arith.mulf %29, %33 : vector<1x8x8x128xf32>
    %35 = vector.extract_strided_slice %2 {offsets = [1, 0], sizes = [1, 128], strides = [1, 1]} : vector<9x128xf32> to vector<1x128xf32>
    %36 = vector.shape_cast %35 : vector<1x128xf32> to vector<128xf32>
    %37 = vector.shape_cast %36 : vector<128xf32> to vector<1x1x1x128xf32>
    %38 = vector.broadcast %37 : vector<1x1x1x128xf32> to vector<1x8x8x128xf32>
    %39 = arith.mulf %26, %38 : vector<1x8x8x128xf32>
    %40 = arith.addf %34, %39 : vector<1x8x8x128xf32>
    %41 = vector.extract_strided_slice %26 {offsets = [0, 0, 1, 0], sizes = [1, 8, 7, 128], strides = [1, 1, 1, 1]} : vector<1x8x8x128xf32> to vector<1x8x7x128xf32>
    %cst_14 = arith.constant 0.000000e+00 : f32
    %42 = vector.broadcast %cst_14 : f32 to vector<1x8x1x128xf32>
    %43 = tpu.concatenate %41, %42 in 2 : vector<1x8x7x128xf32>, vector<1x8x1x128xf32> -> vector<1x8x8x128xf32>
    %44 = vector.extract_strided_slice %2 {offsets = [2, 0], sizes = [1, 128], strides = [1, 1]} : vector<9x128xf32> to vector<1x128xf32>
    %45 = vector.shape_cast %44 : vector<1x128xf32> to vector<128xf32>
    %46 = vector.shape_cast %45 : vector<128xf32> to vector<1x1x1x128xf32>
    %47 = vector.broadcast %46 : vector<1x1x1x128xf32> to vector<1x8x8x128xf32>
    %48 = arith.mulf %43, %47 : vector<1x8x8x128xf32>
    %49 = arith.addf %40, %48 : vector<1x8x8x128xf32>
    %cst_15 = arith.constant 0.000000e+00 : f32
    %50 = vector.broadcast %cst_15 : f32 to vector<1x8x1x128xf32>
    %51 = vector.extract_strided_slice %23 {offsets = [0, 0, 0, 0], sizes = [1, 8, 7, 128], strides = [1, 1, 1, 1]} : vector<1x8x8x128xf32> to vector<1x8x7x128xf32>
    %52 = tpu.concatenate %50, %51 in 2 : vector<1x8x1x128xf32>, vector<1x8x7x128xf32> -> vector<1x8x8x128xf32>
    %53 = vector.extract_strided_slice %2 {offsets = [3, 0], sizes = [1, 128], strides = [1, 1]} : vector<9x128xf32> to vector<1x128xf32>
    %54 = vector.shape_cast %53 : vector<1x128xf32> to vector<128xf32>
    %55 = vector.shape_cast %54 : vector<128xf32> to vector<1x1x1x128xf32>
    %56 = vector.broadcast %55 : vector<1x1x1x128xf32> to vector<1x8x8x128xf32>
    %57 = arith.mulf %52, %56 : vector<1x8x8x128xf32>
    %58 = arith.addf %49, %57 : vector<1x8x8x128xf32>
    %59 = vector.extract_strided_slice %2 {offsets = [4, 0], sizes = [1, 128], strides = [1, 1]} : vector<9x128xf32> to vector<1x128xf32>
    %60 = vector.shape_cast %59 : vector<1x128xf32> to vector<128xf32>
    %61 = vector.shape_cast %60 : vector<128xf32> to vector<1x1x1x128xf32>
    %62 = vector.broadcast %61 : vector<1x1x1x128xf32> to vector<1x8x8x128xf32>
    %63 = arith.mulf %23, %62 : vector<1x8x8x128xf32>
    %64 = arith.addf %58, %63 : vector<1x8x8x128xf32>
    %65 = vector.extract_strided_slice %23 {offsets = [0, 0, 1, 0], sizes = [1, 8, 7, 128], strides = [1, 1, 1, 1]} : vector<1x8x8x128xf32> to vector<1x8x7x128xf32>
    %cst_16 = arith.constant 0.000000e+00 : f32
    %66 = vector.broadcast %cst_16 : f32 to vector<1x8x1x128xf32>
    %67 = tpu.concatenate %65, %66 in 2 : vector<1x8x7x128xf32>, vector<1x8x1x128xf32> -> vector<1x8x8x128xf32>
    %68 = vector.extract_strided_slice %2 {offsets = [5, 0], sizes = [1, 128], strides = [1, 1]} : vector<9x128xf32> to vector<1x128xf32>
    %69 = vector.shape_cast %68 : vector<1x128xf32> to vector<128xf32>
    %70 = vector.shape_cast %69 : vector<128xf32> to vector<1x1x1x128xf32>
    %71 = vector.broadcast %70 : vector<1x1x1x128xf32> to vector<1x8x8x128xf32>
    %72 = arith.mulf %67, %71 : vector<1x8x8x128xf32>
    %73 = arith.addf %64, %72 : vector<1x8x8x128xf32>
    %74 = vector.extract_strided_slice %23 {offsets = [0, 1, 0, 0], sizes = [1, 7, 8, 128], strides = [1, 1, 1, 1]} : vector<1x8x8x128xf32> to vector<1x7x8x128xf32>
    %cst_17 = arith.constant 0.000000e+00 : f32
    %75 = vector.broadcast %cst_17 : f32 to vector<1x1x8x128xf32>
    %76 = tpu.concatenate %74, %75 in 1 : vector<1x7x8x128xf32>, vector<1x1x8x128xf32> -> vector<1x8x8x128xf32>
    %cst_18 = arith.constant 0.000000e+00 : f32
    %77 = vector.broadcast %cst_18 : f32 to vector<1x8x1x128xf32>
    %78 = vector.extract_strided_slice %76 {offsets = [0, 0, 0, 0], sizes = [1, 8, 7, 128], strides = [1, 1, 1, 1]} : vector<1x8x8x128xf32> to vector<1x8x7x128xf32>
    %79 = tpu.concatenate %77, %78 in 2 : vector<1x8x1x128xf32>, vector<1x8x7x128xf32> -> vector<1x8x8x128xf32>
    %80 = vector.extract_strided_slice %2 {offsets = [6, 0], sizes = [1, 128], strides = [1, 1]} : vector<9x128xf32> to vector<1x128xf32>
    %81 = vector.shape_cast %80 : vector<1x128xf32> to vector<128xf32>
    %82 = vector.shape_cast %81 : vector<128xf32> to vector<1x1x1x128xf32>
    %83 = vector.broadcast %82 : vector<1x1x1x128xf32> to vector<1x8x8x128xf32>
    %84 = arith.mulf %79, %83 : vector<1x8x8x128xf32>
    %85 = arith.addf %73, %84 : vector<1x8x8x128xf32>
    %86 = vector.extract_strided_slice %2 {offsets = [7, 0], sizes = [1, 128], strides = [1, 1]} : vector<9x128xf32> to vector<1x128xf32>
    %87 = vector.shape_cast %86 : vector<1x128xf32> to vector<128xf32>
    %88 = vector.shape_cast %87 : vector<128xf32> to vector<1x1x1x128xf32>
    %89 = vector.broadcast %88 : vector<1x1x1x128xf32> to vector<1x8x8x128xf32>
    %90 = arith.mulf %76, %89 : vector<1x8x8x128xf32>
    %91 = arith.addf %85, %90 : vector<1x8x8x128xf32>
    %92 = vector.extract_strided_slice %76 {offsets = [0, 0, 1, 0], sizes = [1, 8, 7, 128], strides = [1, 1, 1, 1]} : vector<1x8x8x128xf32> to vector<1x8x7x128xf32>
    %cst_19 = arith.constant 0.000000e+00 : f32
    %93 = vector.broadcast %cst_19 : f32 to vector<1x8x1x128xf32>
    %94 = tpu.concatenate %92, %93 in 2 : vector<1x8x7x128xf32>, vector<1x8x1x128xf32> -> vector<1x8x8x128xf32>
    %95 = vector.extract_strided_slice %2 {offsets = [8, 0], sizes = [1, 128], strides = [1, 1]} : vector<9x128xf32> to vector<1x128xf32>
    %96 = vector.shape_cast %95 : vector<1x128xf32> to vector<128xf32>
    %97 = vector.shape_cast %96 : vector<128xf32> to vector<1x1x1x128xf32>
    %98 = vector.broadcast %97 : vector<1x1x1x128xf32> to vector<1x8x8x128xf32>
    %99 = arith.mulf %94, %98 : vector<1x8x8x128xf32>
    %100 = arith.addf %91, %99 : vector<1x8x8x128xf32>
    %c0_20 = arith.constant 0 : index
    %c0_21 = arith.constant 0 : index
    %101 = vector.load %arg4[%c0_20, %c0_21] : memref<128x128xbf16, #tpu.memory_space<vmem>>, vector<128x128xbf16>
    %c0_22 = arith.constant 0 : index
    %c0_23 = arith.constant 0 : index
    %102 = vector.load %arg5[%c0_22, %c0_23] : memref<1x128xf32, #tpu.memory_space<vmem>>, vector<1x128xf32>
    %103 = vector.shape_cast %100 : vector<1x8x8x128xf32> to vector<64x128xf32>
    %104 = arith.truncf %103 : vector<64x128xf32> to vector<64x128xbf16>
    %cst_24 = arith.constant dense<0.000000e+00> : vector<64x128xf32>
    %105 = tpu.matmul %104, %101, %cst_24 {dimension_numbers = #tpu.dot_dimension_numbers<[1], [0], [0], [1], [0, 0, 1, 1], [], []>} : vector<64x128xbf16>, vector<128x128xbf16>, vector<64x128xf32> -> vector<64x128xf32>
    %106 = vector.broadcast %102 : vector<1x128xf32> to vector<64x128xf32>
    %107 = arith.addf %105, %106 : vector<64x128xf32>
    %cst_25 = arith.constant 0.000000e+00 : f32
    %108 = vector.broadcast %cst_25 : f32 to vector<64x128xf32>
    %109 = arith.maximumf %107, %108 : vector<64x128xf32>
    %110 = vector.shape_cast %109 : vector<64x128xf32> to vector<1x8x8x128xf32>
    %c0_26 = arith.constant 0 : index
    %c0_27 = arith.constant 0 : index
    %c0_28 = arith.constant 0 : index
    %c0_29 = arith.constant 0 : index
    %111 = vector.load %arg6[%c0_26, %c0_27, %c0_28, %c0_29] : memref<1x8x8x128xf32, #tpu.memory_space<vmem>>, vector<1x8x8x128xf32>
    tpu.vector_store %arg6[%c0_26, %c0_27, %c0_28, %c0_29], %110 {strides = array<i32>} : memref<1x8x8x128xf32, #tpu.memory_space<vmem>>, vector<1x8x8x128xf32>,
    return
  }
  func.func @transform_0(%arg0: i32) -> (i32, i32, i32, i32) {
    %c0_i32 = arith.constant 0 : i32
    %c0_i32_0 = arith.constant 0 : i32
    %c0_i32_1 = arith.constant 0 : i32
    %c0_i32_2 = arith.constant 0 : i32
    return %arg0, %c0_i32, %c0_i32_0, %c0_i32_1 : i32, i32, i32, i32
  }
  func.func @transform_1(%arg0: i32) -> (i32, i32, i32, i32) {
    %c0_i32 = arith.constant 0 : i32
    %c0_i32_0 = arith.constant 0 : i32
    %c0_i32_1 = arith.constant 0 : i32
    %c0_i32_2 = arith.constant 0 : i32
    return %arg0, %c0_i32, %c0_i32_0, %c0_i32_1 : i32, i32, i32, i32
  }
  func.func @transform_2(%arg0: i32) -> (i32, i32) {
    %c0_i32 = arith.constant 0 : i32
    %c0_i32_0 = arith.constant 0 : i32
    %c0_i32_1 = arith.constant 0 : i32
    return %c0_i32, %c0_i32_0 : i32, i32
  }
  func.func @transform_3(%arg0: i32) -> (i32, i32) {
    %c0_i32 = arith.constant 0 : i32
    %c0_i32_0 = arith.constant 0 : i32
    %c0_i32_1 = arith.constant 0 : i32
    return %c0_i32, %c0_i32_0 : i32, i32
  }
  func.func @transform_4(%arg0: i32) -> (i32, i32) {
    %c0_i32 = arith.constant 0 : i32
    %c0_i32_0 = arith.constant 0 : i32
    %c0_i32_1 = arith.constant 0 : i32
    return %c0_i32, %c0_i32_0 : i32, i32
  }
  func.func @transform_5(%arg0: i32) -> (i32, i32, i32, i32) {
    %c0_i32 = arith.constant 0 : i32
    %c0_i32_0 = arith.constant 0 : i32
    %c0_i32_1 = arith.constant 0 : i32
    %c0_i32_2 = arith.constant 0 : i32
    return %arg0, %c0_i32, %c0_i32_0, %c0_i32_1 : i32, i32, i32, i32
  }
}

module attributes {stable_mosaic.version = 11 : i64} {
  func.func @_stride1_kernel(%arg0: i32, %arg1: memref<1x8x16x128xf32, #tpu.memory_space<vmem>>, %arg2: memref<1x16x16x128xf32, #tpu.memory_space<vmem>>, %arg3: memref<9x128xf32, #tpu.memory_space<vmem>>, %arg4: memref<128x128xbf16, #tpu.memory_space<vmem>>, %arg5: memref<1x128xf32, #tpu.memory_space<vmem>>, %arg6: memref<1x16x16x128xf32, #tpu.memory_space<vmem>>, %arg7: memref<1x16x16x128xf32, #tpu.memory_space<vmem>>) attributes {dimension_semantics = [#tpu.dimension_semantics<parallel>], iteration_bounds = array<i64: 2>, scalar_prefetch = 0 : i64, scratch_operands = 0 : i64, tpu.core_type = #tpu.core_type<tc>, window_params = [{transform_indices = @transform_0, window_bounds = array<i64: 1, 8, 16, 128>}, {transform_indices = @transform_1, window_bounds = array<i64: 1, 16, 16, 128>}, {pipeline_mode = #tpu.pipeline_mode<synchronous>, transform_indices = @transform_2, window_bounds = array<i64: 9, 128>}, {pipeline_mode = #tpu.pipeline_mode<synchronous>, transform_indices = @transform_3, window_bounds = array<i64: 128, 128>}, {pipeline_mode = #tpu.pipeline_mode<synchronous>, transform_indices = @transform_4, window_bounds = array<i64: 1, 128>}, {transform_indices = @transform_5, window_bounds = array<i64: 1, 16, 16, 128>}, {transform_indices = @transform_6, window_bounds = array<i64: 1, 16, 16, 128>}]} {
    %c0 = arith.constant 0 : index
    %c0_0 = arith.constant 0 : index
    %c0_1 = arith.constant 0 : index
    %c0_2 = arith.constant 0 : index
    %0 = vector.load %arg2[%c0, %c0_0, %c0_1, %c0_2] : memref<1x16x16x128xf32, #tpu.memory_space<vmem>>, vector<1x16x16x128xf32>
    %c0_3 = arith.constant 0 : index
    %c0_4 = arith.constant 0 : index
    %c0_5 = arith.constant 0 : index
    %c0_6 = arith.constant 0 : index
    %1 = vector.load %arg1[%c0_3, %c0_4, %c0_5, %c0_6] : memref<1x8x16x128xf32, #tpu.memory_space<vmem>>, vector<1x8x16x128xf32>
    %c0_7 = arith.constant 0 : index
    %c0_8 = arith.constant 0 : index
    %2 = vector.load %arg3[%c0_7, %c0_8] : memref<9x128xf32, #tpu.memory_space<vmem>>, vector<9x128xf32>
    %3 = vector.extract_strided_slice %1 {offsets = [0, 0, 0, 0], sizes = [1, 1, 16, 128], strides = [1, 1, 1, 1]} : vector<1x8x16x128xf32> to vector<1x1x16x128xf32>
    %4 = vector.extract_strided_slice %1 {offsets = [0, 0, 0, 0], sizes = [1, 7, 16, 128], strides = [1, 1, 1, 1]} : vector<1x8x16x128xf32> to vector<1x7x16x128xf32>
    %5 = tpu.concatenate %3, %4 in 1 : vector<1x1x16x128xf32>, vector<1x7x16x128xf32> -> vector<1x8x16x128xf32>
    %6 = vector.extract_strided_slice %1 {offsets = [0, 1, 0, 0], sizes = [1, 7, 16, 128], strides = [1, 1, 1, 1]} : vector<1x8x16x128xf32> to vector<1x7x16x128xf32>
    %7 = vector.extract_strided_slice %1 {offsets = [0, 7, 0, 0], sizes = [1, 1, 16, 128], strides = [1, 1, 1, 1]} : vector<1x8x16x128xf32> to vector<1x1x16x128xf32>
    %8 = tpu.concatenate %6, %7 in 1 : vector<1x7x16x128xf32>, vector<1x1x16x128xf32> -> vector<1x8x16x128xf32>
    %cst = arith.constant 7.500000e-01 : f32
    %9 = vector.broadcast %cst : f32 to vector<1x8x16x128xf32>
    %10 = arith.mulf %9, %1 : vector<1x8x16x128xf32>
    %cst_9 = arith.constant 2.500000e-01 : f32
    %11 = vector.broadcast %cst_9 : f32 to vector<1x8x16x128xf32>
    %12 = arith.mulf %11, %5 : vector<1x8x16x128xf32>
    %13 = arith.addf %10, %12 : vector<1x8x16x128xf32>
    %cst_10 = arith.constant 7.500000e-01 : f32
    %14 = vector.broadcast %cst_10 : f32 to vector<1x8x16x128xf32>
    %15 = arith.mulf %14, %1 : vector<1x8x16x128xf32>
    %cst_11 = arith.constant 2.500000e-01 : f32
    %16 = vector.broadcast %cst_11 : f32 to vector<1x8x16x128xf32>
    %17 = arith.mulf %16, %8 : vector<1x8x16x128xf32>
    %18 = arith.addf %15, %17 : vector<1x8x16x128xf32>
    %19 = vector.shape_cast %13 : vector<1x8x16x128xf32> to vector<1x8x1x16x128xf32>
    %20 = vector.shape_cast %18 : vector<1x8x16x128xf32> to vector<1x8x1x16x128xf32>
    %21 = tpu.concatenate %19, %20 in 2 : vector<1x8x1x16x128xf32>, vector<1x8x1x16x128xf32> -> vector<1x8x2x16x128xf32>
    %22 = vector.shape_cast %21 : vector<1x8x2x16x128xf32> to vector<1x16x16x128xf32>
    %23 = arith.addf %22, %0 : vector<1x16x16x128xf32>
    %cst_12 = arith.constant 0.000000e+00 : f32
    %24 = vector.broadcast %cst_12 : f32 to vector<1x1x16x128xf32>
    %25 = vector.extract_strided_slice %23 {offsets = [0, 0, 0, 0], sizes = [1, 15, 16, 128], strides = [1, 1, 1, 1]} : vector<1x16x16x128xf32> to vector<1x15x16x128xf32>
    %26 = tpu.concatenate %24, %25 in 1 : vector<1x1x16x128xf32>, vector<1x15x16x128xf32> -> vector<1x16x16x128xf32>
    %cst_13 = arith.constant 0.000000e+00 : f32
    %27 = vector.broadcast %cst_13 : f32 to vector<1x16x1x128xf32>
    %28 = vector.extract_strided_slice %26 {offsets = [0, 0, 0, 0], sizes = [1, 16, 15, 128], strides = [1, 1, 1, 1]} : vector<1x16x16x128xf32> to vector<1x16x15x128xf32>
    %29 = tpu.concatenate %27, %28 in 2 : vector<1x16x1x128xf32>, vector<1x16x15x128xf32> -> vector<1x16x16x128xf32>
    %30 = vector.extract_strided_slice %2 {offsets = [0, 0], sizes = [1, 128], strides = [1, 1]} : vector<9x128xf32> to vector<1x128xf32>
    %31 = vector.shape_cast %30 : vector<1x128xf32> to vector<128xf32>
    %32 = vector.shape_cast %31 : vector<128xf32> to vector<1x1x1x128xf32>
    %33 = vector.broadcast %32 : vector<1x1x1x128xf32> to vector<1x16x16x128xf32>
    %34 = arith.mulf %29, %33 : vector<1x16x16x128xf32>
    %35 = vector.extract_strided_slice %2 {offsets = [1, 0], sizes = [1, 128], strides = [1, 1]} : vector<9x128xf32> to vector<1x128xf32>
    %36 = vector.shape_cast %35 : vector<1x128xf32> to vector<128xf32>
    %37 = vector.shape_cast %36 : vector<128xf32> to vector<1x1x1x128xf32>
    %38 = vector.broadcast %37 : vector<1x1x1x128xf32> to vector<1x16x16x128xf32>
    %39 = arith.mulf %26, %38 : vector<1x16x16x128xf32>
    %40 = arith.addf %34, %39 : vector<1x16x16x128xf32>
    %41 = vector.extract_strided_slice %26 {offsets = [0, 0, 1, 0], sizes = [1, 16, 15, 128], strides = [1, 1, 1, 1]} : vector<1x16x16x128xf32> to vector<1x16x15x128xf32>
    %cst_14 = arith.constant 0.000000e+00 : f32
    %42 = vector.broadcast %cst_14 : f32 to vector<1x16x1x128xf32>
    %43 = tpu.concatenate %41, %42 in 2 : vector<1x16x15x128xf32>, vector<1x16x1x128xf32> -> vector<1x16x16x128xf32>
    %44 = vector.extract_strided_slice %2 {offsets = [2, 0], sizes = [1, 128], strides = [1, 1]} : vector<9x128xf32> to vector<1x128xf32>
    %45 = vector.shape_cast %44 : vector<1x128xf32> to vector<128xf32>
    %46 = vector.shape_cast %45 : vector<128xf32> to vector<1x1x1x128xf32>
    %47 = vector.broadcast %46 : vector<1x1x1x128xf32> to vector<1x16x16x128xf32>
    %48 = arith.mulf %43, %47 : vector<1x16x16x128xf32>
    %49 = arith.addf %40, %48 : vector<1x16x16x128xf32>
    %cst_15 = arith.constant 0.000000e+00 : f32
    %50 = vector.broadcast %cst_15 : f32 to vector<1x16x1x128xf32>
    %51 = vector.extract_strided_slice %23 {offsets = [0, 0, 0, 0], sizes = [1, 16, 15, 128], strides = [1, 1, 1, 1]} : vector<1x16x16x128xf32> to vector<1x16x15x128xf32>
    %52 = tpu.concatenate %50, %51 in 2 : vector<1x16x1x128xf32>, vector<1x16x15x128xf32> -> vector<1x16x16x128xf32>
    %53 = vector.extract_strided_slice %2 {offsets = [3, 0], sizes = [1, 128], strides = [1, 1]} : vector<9x128xf32> to vector<1x128xf32>
    %54 = vector.shape_cast %53 : vector<1x128xf32> to vector<128xf32>
    %55 = vector.shape_cast %54 : vector<128xf32> to vector<1x1x1x128xf32>
    %56 = vector.broadcast %55 : vector<1x1x1x128xf32> to vector<1x16x16x128xf32>
    %57 = arith.mulf %52, %56 : vector<1x16x16x128xf32>
    %58 = arith.addf %49, %57 : vector<1x16x16x128xf32>
    %59 = vector.extract_strided_slice %2 {offsets = [4, 0], sizes = [1, 128], strides = [1, 1]} : vector<9x128xf32> to vector<1x128xf32>
    %60 = vector.shape_cast %59 : vector<1x128xf32> to vector<128xf32>
    %61 = vector.shape_cast %60 : vector<128xf32> to vector<1x1x1x128xf32>
    %62 = vector.broadcast %61 : vector<1x1x1x128xf32> to vector<1x16x16x128xf32>
    %63 = arith.mulf %23, %62 : vector<1x16x16x128xf32>
    %64 = arith.addf %58, %63 : vector<1x16x16x128xf32>
    %65 = vector.extract_strided_slice %23 {offsets = [0, 0, 1, 0], sizes = [1, 16, 15, 128], strides = [1, 1, 1, 1]} : vector<1x16x16x128xf32> to vector<1x16x15x128xf32>
    %cst_16 = arith.constant 0.000000e+00 : f32
    %66 = vector.broadcast %cst_16 : f32 to vector<1x16x1x128xf32>
    %67 = tpu.concatenate %65, %66 in 2 : vector<1x16x15x128xf32>, vector<1x16x1x128xf32> -> vector<1x16x16x128xf32>
    %68 = vector.extract_strided_slice %2 {offsets = [5, 0], sizes = [1, 128], strides = [1, 1]} : vector<9x128xf32> to vector<1x128xf32>
    %69 = vector.shape_cast %68 : vector<1x128xf32> to vector<128xf32>
    %70 = vector.shape_cast %69 : vector<128xf32> to vector<1x1x1x128xf32>
    %71 = vector.broadcast %70 : vector<1x1x1x128xf32> to vector<1x16x16x128xf32>
    %72 = arith.mulf %67, %71 : vector<1x16x16x128xf32>
    %73 = arith.addf %64, %72 : vector<1x16x16x128xf32>
    %74 = vector.extract_strided_slice %23 {offsets = [0, 1, 0, 0], sizes = [1, 15, 16, 128], strides = [1, 1, 1, 1]} : vector<1x16x16x128xf32> to vector<1x15x16x128xf32>
    %cst_17 = arith.constant 0.000000e+00 : f32
    %75 = vector.broadcast %cst_17 : f32 to vector<1x1x16x128xf32>
    %76 = tpu.concatenate %74, %75 in 1 : vector<1x15x16x128xf32>, vector<1x1x16x128xf32> -> vector<1x16x16x128xf32>
    %cst_18 = arith.constant 0.000000e+00 : f32
    %77 = vector.broadcast %cst_18 : f32 to vector<1x16x1x128xf32>
    %78 = vector.extract_strided_slice %76 {offsets = [0, 0, 0, 0], sizes = [1, 16, 15, 128], strides = [1, 1, 1, 1]} : vector<1x16x16x128xf32> to vector<1x16x15x128xf32>
    %79 = tpu.concatenate %77, %78 in 2 : vector<1x16x1x128xf32>, vector<1x16x15x128xf32> -> vector<1x16x16x128xf32>
    %80 = vector.extract_strided_slice %2 {offsets = [6, 0], sizes = [1, 128], strides = [1, 1]} : vector<9x128xf32> to vector<1x128xf32>
    %81 = vector.shape_cast %80 : vector<1x128xf32> to vector<128xf32>
    %82 = vector.shape_cast %81 : vector<128xf32> to vector<1x1x1x128xf32>
    %83 = vector.broadcast %82 : vector<1x1x1x128xf32> to vector<1x16x16x128xf32>
    %84 = arith.mulf %79, %83 : vector<1x16x16x128xf32>
    %85 = arith.addf %73, %84 : vector<1x16x16x128xf32>
    %86 = vector.extract_strided_slice %2 {offsets = [7, 0], sizes = [1, 128], strides = [1, 1]} : vector<9x128xf32> to vector<1x128xf32>
    %87 = vector.shape_cast %86 : vector<1x128xf32> to vector<128xf32>
    %88 = vector.shape_cast %87 : vector<128xf32> to vector<1x1x1x128xf32>
    %89 = vector.broadcast %88 : vector<1x1x1x128xf32> to vector<1x16x16x128xf32>
    %90 = arith.mulf %76, %89 : vector<1x16x16x128xf32>
    %91 = arith.addf %85, %90 : vector<1x16x16x128xf32>
    %92 = vector.extract_strided_slice %76 {offsets = [0, 0, 1, 0], sizes = [1, 16, 15, 128], strides = [1, 1, 1, 1]} : vector<1x16x16x128xf32> to vector<1x16x15x128xf32>
    %cst_19 = arith.constant 0.000000e+00 : f32
    %93 = vector.broadcast %cst_19 : f32 to vector<1x16x1x128xf32>
    %94 = tpu.concatenate %92, %93 in 2 : vector<1x16x15x128xf32>, vector<1x16x1x128xf32> -> vector<1x16x16x128xf32>
    %95 = vector.extract_strided_slice %2 {offsets = [8, 0], sizes = [1, 128], strides = [1, 1]} : vector<9x128xf32> to vector<1x128xf32>
    %96 = vector.shape_cast %95 : vector<1x128xf32> to vector<128xf32>
    %97 = vector.shape_cast %96 : vector<128xf32> to vector<1x1x1x128xf32>
    %98 = vector.broadcast %97 : vector<1x1x1x128xf32> to vector<1x16x16x128xf32>
    %99 = arith.mulf %94, %98 : vector<1x16x16x128xf32>
    %100 = arith.addf %91, %99 : vector<1x16x16x128xf32>
    %c0_20 = arith.constant 0 : index
    %c0_21 = arith.constant 0 : index
    %101 = vector.load %arg4[%c0_20, %c0_21] : memref<128x128xbf16, #tpu.memory_space<vmem>>, vector<128x128xbf16>
    %c0_22 = arith.constant 0 : index
    %c0_23 = arith.constant 0 : index
    %102 = vector.load %arg5[%c0_22, %c0_23] : memref<1x128xf32, #tpu.memory_space<vmem>>, vector<1x128xf32>
    %103 = vector.shape_cast %100 : vector<1x16x16x128xf32> to vector<256x128xf32>
    %104 = arith.truncf %103 : vector<256x128xf32> to vector<256x128xbf16>
    %cst_24 = arith.constant dense<0.000000e+00> : vector<256x128xf32>
    %105 = tpu.matmul %104, %101, %cst_24 {dimension_numbers = #tpu.dot_dimension_numbers<[1], [0], [0], [1], [0, 0, 1, 1], [], []>} : vector<256x128xbf16>, vector<128x128xbf16>, vector<256x128xf32> -> vector<256x128xf32>
    %106 = vector.broadcast %102 : vector<1x128xf32> to vector<256x128xf32>
    %107 = arith.addf %105, %106 : vector<256x128xf32>
    %cst_25 = arith.constant 0.000000e+00 : f32
    %108 = vector.broadcast %cst_25 : f32 to vector<256x128xf32>
    %109 = arith.maximumf %107, %108 : vector<256x128xf32>
    %110 = vector.shape_cast %109 : vector<256x128xf32> to vector<1x16x16x128xf32>
    %c0_26 = arith.constant 0 : index
    %c0_27 = arith.constant 0 : index
    %c0_28 = arith.constant 0 : index
    %c0_29 = arith.constant 0 : index
    %111 = vector.load %arg6[%c0_26, %c0_27, %c0_28, %c0_29] : memref<1x16x16x128xf32, #tpu.memory_space<vmem>>, vector<1x16x16x128xf32>
    tpu.vector_store %arg6[%c0_26, %c0_27, %c0_28, %c0_29], %110 {strides = array<i32>} : memref<1x16x16x128xf32, #tpu.memory_space<vmem>>, vector<1x16x16x128xf32>,
    %112 = arith.addf %110, %0 : vector<1x16x16x128xf32>
    %c0_30 = arith.constant 0 : index
    %c0_31 = arith.constant 0 : index
    %c0_32 = arith.constant 0 : index
    %c0_33 = arith.constant 0 : index
    %113 = vector.load %arg7[%c0_30, %c0_31, %c0_32, %c0_33] : memref<1x16x16x128xf32, #tpu.memory_space<vmem>>, vector<1x16x16x128xf32>
    tpu.vector_store %arg7[%c0_30, %c0_31, %c0_32, %c0_33], %112 {strides = array<i32>} : memref<1x16x16x128xf32, #tpu.memory_space<vmem>>, vector<1x16x16x128xf32>,
    return
  }
  func.func @transform_0(%arg0: i32) -> (i32, i32, i32, i32) {
    %c0_i32 = arith.constant 0 : i32
    %c0_i32_0 = arith.constant 0 : i32
    %c0_i32_1 = arith.constant 0 : i32
    %c0_i32_2 = arith.constant 0 : i32
    return %arg0, %c0_i32, %c0_i32_0, %c0_i32_1 : i32, i32, i32, i32
  }
  func.func @transform_1(%arg0: i32) -> (i32, i32, i32, i32) {
    %c0_i32 = arith.constant 0 : i32
    %c0_i32_0 = arith.constant 0 : i32
    %c0_i32_1 = arith.constant 0 : i32
    %c0_i32_2 = arith.constant 0 : i32
    return %arg0, %c0_i32, %c0_i32_0, %c0_i32_1 : i32, i32, i32, i32
  }
  func.func @transform_2(%arg0: i32) -> (i32, i32) {
    %c0_i32 = arith.constant 0 : i32
    %c0_i32_0 = arith.constant 0 : i32
    %c0_i32_1 = arith.constant 0 : i32
    return %c0_i32, %c0_i32_0 : i32, i32
  }
  func.func @transform_3(%arg0: i32) -> (i32, i32) {
    %c0_i32 = arith.constant 0 : i32
    %c0_i32_0 = arith.constant 0 : i32
    %c0_i32_1 = arith.constant 0 : i32
    return %c0_i32, %c0_i32_0 : i32, i32
  }
  func.func @transform_4(%arg0: i32) -> (i32, i32) {
    %c0_i32 = arith.constant 0 : i32
    %c0_i32_0 = arith.constant 0 : i32
    %c0_i32_1 = arith.constant 0 : i32
    return %c0_i32, %c0_i32_0 : i32, i32
  }
  func.func @transform_5(%arg0: i32) -> (i32, i32, i32, i32) {
    %c0_i32 = arith.constant 0 : i32
    %c0_i32_0 = arith.constant 0 : i32
    %c0_i32_1 = arith.constant 0 : i32
    %c0_i32_2 = arith.constant 0 : i32
    return %arg0, %c0_i32, %c0_i32_0, %c0_i32_1 : i32, i32, i32, i32
  }
  func.func @transform_6(%arg0: i32) -> (i32, i32, i32, i32) {
    %c0_i32 = arith.constant 0 : i32
    %c0_i32_0 = arith.constant 0 : i32
    %c0_i32_1 = arith.constant 0 : i32
    %c0_i32_2 = arith.constant 0 : i32
    return %arg0, %c0_i32, %c0_i32_0, %c0_i32_1 : i32, i32, i32, i32
  }
}

module attributes {stable_mosaic.version = 11 : i64} {
  func.func @_stride2_kernel(%arg0: i32, %arg1: memref<1x8x8x128xf32, #tpu.memory_space<vmem>>, %arg2: memref<1x8x2x16x128xf32, #tpu.memory_space<vmem>>, %arg3: memref<1x8x8x128xf32, #tpu.memory_space<vmem>>, %arg4: memref<9x128xf32, #tpu.memory_space<vmem>>, %arg5: memref<128x128xbf16, #tpu.memory_space<vmem>>, %arg6: memref<1x128xf32, #tpu.memory_space<vmem>>, %arg7: memref<1x8x8x128xf32, #tpu.memory_space<vmem>>, %arg8: memref<1x8x8x128xf32, #tpu.memory_space<vmem>>) attributes {dimension_semantics = [#tpu.dimension_semantics<parallel>], iteration_bounds = array<i64: 2>, scalar_prefetch = 0 : i64, scratch_operands = 0 : i64, tpu.core_type = #tpu.core_type<tc>, window_params = [{transform_indices = @transform_0, window_bounds = array<i64: 1, 8, 8, 128>}, {transform_indices = @transform_1, window_bounds = array<i64: 1, 8, 2, 16, 128>}, {transform_indices = @transform_2, window_bounds = array<i64: 1, 8, 8, 128>}, {pipeline_mode = #tpu.pipeline_mode<synchronous>, transform_indices = @transform_3, window_bounds = array<i64: 9, 128>}, {pipeline_mode = #tpu.pipeline_mode<synchronous>, transform_indices = @transform_4, window_bounds = array<i64: 128, 128>}, {pipeline_mode = #tpu.pipeline_mode<synchronous>, transform_indices = @transform_5, window_bounds = array<i64: 1, 128>}, {transform_indices = @transform_6, window_bounds = array<i64: 1, 8, 8, 128>}, {transform_indices = @transform_7, window_bounds = array<i64: 1, 8, 8, 128>}]} {
    %c0 = arith.constant 0 : index
    %c0_0 = arith.constant 0 : index
    %c0_1 = arith.constant 0 : index
    %c0_2 = arith.constant 0 : index
    %0 = vector.load %arg1[%c0, %c0_0, %c0_1, %c0_2] : memref<1x8x8x128xf32, #tpu.memory_space<vmem>>, vector<1x8x8x128xf32>
    %c0_3 = arith.constant 0 : index
    %c0_4 = arith.constant 0 : index
    %1 = vector.load %arg4[%c0_3, %c0_4] : memref<9x128xf32, #tpu.memory_space<vmem>>, vector<9x128xf32>
    %2 = vector.extract_strided_slice %0 {offsets = [0, 0, 0, 0], sizes = [1, 1, 8, 128], strides = [1, 1, 1, 1]} : vector<1x8x8x128xf32> to vector<1x1x8x128xf32>
    %3 = vector.extract_strided_slice %0 {offsets = [0, 0, 0, 0], sizes = [1, 7, 8, 128], strides = [1, 1, 1, 1]} : vector<1x8x8x128xf32> to vector<1x7x8x128xf32>
    %4 = tpu.concatenate %2, %3 in 1 : vector<1x1x8x128xf32>, vector<1x7x8x128xf32> -> vector<1x8x8x128xf32>
    %5 = vector.extract_strided_slice %0 {offsets = [0, 1, 0, 0], sizes = [1, 7, 8, 128], strides = [1, 1, 1, 1]} : vector<1x8x8x128xf32> to vector<1x7x8x128xf32>
    %6 = vector.extract_strided_slice %0 {offsets = [0, 7, 0, 0], sizes = [1, 1, 8, 128], strides = [1, 1, 1, 1]} : vector<1x8x8x128xf32> to vector<1x1x8x128xf32>
    %7 = tpu.concatenate %5, %6 in 1 : vector<1x7x8x128xf32>, vector<1x1x8x128xf32> -> vector<1x8x8x128xf32>
    %cst = arith.constant 7.500000e-01 : f32
    %8 = vector.broadcast %cst : f32 to vector<1x8x8x128xf32>
    %9 = arith.mulf %8, %0 : vector<1x8x8x128xf32>
    %cst_5 = arith.constant 2.500000e-01 : f32
    %10 = vector.broadcast %cst_5 : f32 to vector<1x8x8x128xf32>
    %11 = arith.mulf %10, %4 : vector<1x8x8x128xf32>
    %12 = arith.addf %9, %11 : vector<1x8x8x128xf32>
    %13 = vector.extract_strided_slice %12 {offsets = [0, 0, 0, 0], sizes = [1, 8, 1, 128], strides = [1, 1, 1, 1]} : vector<1x8x8x128xf32> to vector<1x8x1x128xf32>
    %14 = vector.extract_strided_slice %12 {offsets = [0, 0, 0, 0], sizes = [1, 8, 7, 128], strides = [1, 1, 1, 1]} : vector<1x8x8x128xf32> to vector<1x8x7x128xf32>
    %15 = tpu.concatenate %13, %14 in 2 : vector<1x8x1x128xf32>, vector<1x8x7x128xf32> -> vector<1x8x8x128xf32>
    %c0_6 = arith.constant 0 : index
    %c0_7 = arith.constant 0 : index
    %c0_8 = arith.constant 0 : index
    %c0_9 = arith.constant 0 : index
    %c0_10 = arith.constant 0 : index
    %16 = tpu.strided_load %arg2[%c0_6, %c0_7, %c0_8, %c0_9, %c0_10] {strides = array<i32: 1, 1, 1, 2, 1>} : memref<1x8x2x16x128xf32, #tpu.memory_space<vmem>>, vector<1x8x1x8x128xf32>
    %17 = vector.shape_cast %16 : vector<1x8x1x8x128xf32> to vector<1x8x8x128xf32>
    %cst_11 = arith.constant 7.500000e-01 : f32
    %18 = vector.broadcast %cst_11 : f32 to vector<1x8x8x128xf32>
    %19 = arith.mulf %18, %12 : vector<1x8x8x128xf32>
    %cst_12 = arith.constant 2.500000e-01 : f32
    %20 = vector.broadcast %cst_12 : f32 to vector<1x8x8x128xf32>
    %21 = arith.mulf %20, %15 : vector<1x8x8x128xf32>
    %22 = arith.addf %19, %21 : vector<1x8x8x128xf32>
    %23 = arith.addf %22, %17 : vector<1x8x8x128xf32>
    %24 = vector.extract_strided_slice %1 {offsets = [4, 0], sizes = [1, 128], strides = [1, 1]} : vector<9x128xf32> to vector<1x128xf32>
    %25 = vector.shape_cast %24 : vector<1x128xf32> to vector<128xf32>
    %26 = vector.shape_cast %25 : vector<128xf32> to vector<1x1x1x128xf32>
    %27 = vector.broadcast %26 : vector<1x1x1x128xf32> to vector<1x8x8x128xf32>
    %28 = arith.mulf %23, %27 : vector<1x8x8x128xf32>
    %29 = vector.extract_strided_slice %12 {offsets = [0, 0, 1, 0], sizes = [1, 8, 7, 128], strides = [1, 1, 1, 1]} : vector<1x8x8x128xf32> to vector<1x8x7x128xf32>
    %30 = vector.extract_strided_slice %12 {offsets = [0, 0, 7, 0], sizes = [1, 8, 1, 128], strides = [1, 1, 1, 1]} : vector<1x8x8x128xf32> to vector<1x8x1x128xf32>
    %31 = tpu.concatenate %29, %30 in 2 : vector<1x8x7x128xf32>, vector<1x8x1x128xf32> -> vector<1x8x8x128xf32>
    %c0_13 = arith.constant 0 : index
    %c0_14 = arith.constant 0 : index
    %c0_15 = arith.constant 0 : index
    %c1 = arith.constant 1 : index
    %c0_16 = arith.constant 0 : index
    %32 = tpu.strided_load %arg2[%c0_13, %c0_14, %c0_15, %c1, %c0_16] {strides = array<i32: 1, 1, 1, 2, 1>} : memref<1x8x2x16x128xf32, #tpu.memory_space<vmem>>, vector<1x8x1x8x128xf32>
    %33 = vector.shape_cast %32 : vector<1x8x1x8x128xf32> to vector<1x8x8x128xf32>
    %cst_17 = arith.constant 7.500000e-01 : f32
    %34 = vector.broadcast %cst_17 : f32 to vector<1x8x8x128xf32>
    %35 = arith.mulf %34, %12 : vector<1x8x8x128xf32>
    %cst_18 = arith.constant 2.500000e-01 : f32
    %36 = vector.broadcast %cst_18 : f32 to vector<1x8x8x128xf32>
    %37 = arith.mulf %36, %31 : vector<1x8x8x128xf32>
    %38 = arith.addf %35, %37 : vector<1x8x8x128xf32>
    %39 = arith.addf %38, %33 : vector<1x8x8x128xf32>
    %40 = vector.extract_strided_slice %1 {offsets = [5, 0], sizes = [1, 128], strides = [1, 1]} : vector<9x128xf32> to vector<1x128xf32>
    %41 = vector.shape_cast %40 : vector<1x128xf32> to vector<128xf32>
    %42 = vector.shape_cast %41 : vector<128xf32> to vector<1x1x1x128xf32>
    %43 = vector.broadcast %42 : vector<1x1x1x128xf32> to vector<1x8x8x128xf32>
    %44 = arith.mulf %39, %43 : vector<1x8x8x128xf32>
    %45 = arith.addf %28, %44 : vector<1x8x8x128xf32>
    %cst_19 = arith.constant 0.000000e+00 : f32
    %46 = vector.broadcast %cst_19 : f32 to vector<1x8x1x128xf32>
    %47 = vector.extract_strided_slice %39 {offsets = [0, 0, 0, 0], sizes = [1, 8, 7, 128], strides = [1, 1, 1, 1]} : vector<1x8x8x128xf32> to vector<1x8x7x128xf32>
    %48 = tpu.concatenate %46, %47 in 2 : vector<1x8x1x128xf32>, vector<1x8x7x128xf32> -> vector<1x8x8x128xf32>
    %49 = vector.extract_strided_slice %1 {offsets = [3, 0], sizes = [1, 128], strides = [1, 1]} : vector<9x128xf32> to vector<1x128xf32>
    %50 = vector.shape_cast %49 : vector<1x128xf32> to vector<128xf32>
    %51 = vector.shape_cast %50 : vector<128xf32> to vector<1x1x1x128xf32>
    %52 = vector.broadcast %51 : vector<1x1x1x128xf32> to vector<1x8x8x128xf32>
    %53 = arith.mulf %48, %52 : vector<1x8x8x128xf32>
    %54 = arith.addf %45, %53 : vector<1x8x8x128xf32>
    %cst_20 = arith.constant 7.500000e-01 : f32
    %55 = vector.broadcast %cst_20 : f32 to vector<1x8x8x128xf32>
    %56 = arith.mulf %55, %0 : vector<1x8x8x128xf32>
    %cst_21 = arith.constant 2.500000e-01 : f32
    %57 = vector.broadcast %cst_21 : f32 to vector<1x8x8x128xf32>
    %58 = arith.mulf %57, %7 : vector<1x8x8x128xf32>
    %59 = arith.addf %56, %58 : vector<1x8x8x128xf32>
    %60 = vector.extract_strided_slice %59 {offsets = [0, 0, 0, 0], sizes = [1, 8, 1, 128], strides = [1, 1, 1, 1]} : vector<1x8x8x128xf32> to vector<1x8x1x128xf32>
    %61 = vector.extract_strided_slice %59 {offsets = [0, 0, 0, 0], sizes = [1, 8, 7, 128], strides = [1, 1, 1, 1]} : vector<1x8x8x128xf32> to vector<1x8x7x128xf32>
    %62 = tpu.concatenate %60, %61 in 2 : vector<1x8x1x128xf32>, vector<1x8x7x128xf32> -> vector<1x8x8x128xf32>
    %c0_22 = arith.constant 0 : index
    %c0_23 = arith.constant 0 : index
    %c1_24 = arith.constant 1 : index
    %c0_25 = arith.constant 0 : index
    %c0_26 = arith.constant 0 : index
    %63 = tpu.strided_load %arg2[%c0_22, %c0_23, %c1_24, %c0_25, %c0_26] {strides = array<i32: 1, 1, 1, 2, 1>} : memref<1x8x2x16x128xf32, #tpu.memory_space<vmem>>, vector<1x8x1x8x128xf32>
    %64 = vector.shape_cast %63 : vector<1x8x1x8x128xf32> to vector<1x8x8x128xf32>
    %cst_27 = arith.constant 7.500000e-01 : f32
    %65 = vector.broadcast %cst_27 : f32 to vector<1x8x8x128xf32>
    %66 = arith.mulf %65, %59 : vector<1x8x8x128xf32>
    %cst_28 = arith.constant 2.500000e-01 : f32
    %67 = vector.broadcast %cst_28 : f32 to vector<1x8x8x128xf32>
    %68 = arith.mulf %67, %62 : vector<1x8x8x128xf32>
    %69 = arith.addf %66, %68 : vector<1x8x8x128xf32>
    %70 = arith.addf %69, %64 : vector<1x8x8x128xf32>
    %71 = vector.extract_strided_slice %1 {offsets = [7, 0], sizes = [1, 128], strides = [1, 1]} : vector<9x128xf32> to vector<1x128xf32>
    %72 = vector.shape_cast %71 : vector<1x128xf32> to vector<128xf32>
    %73 = vector.shape_cast %72 : vector<128xf32> to vector<1x1x1x128xf32>
    %74 = vector.broadcast %73 : vector<1x1x1x128xf32> to vector<1x8x8x128xf32>
    %75 = arith.mulf %70, %74 : vector<1x8x8x128xf32>
    %76 = arith.addf %54, %75 : vector<1x8x8x128xf32>
    %cst_29 = arith.constant 0.000000e+00 : f32
    %77 = vector.broadcast %cst_29 : f32 to vector<1x1x8x128xf32>
    %78 = vector.extract_strided_slice %70 {offsets = [0, 0, 0, 0], sizes = [1, 7, 8, 128], strides = [1, 1, 1, 1]} : vector<1x8x8x128xf32> to vector<1x7x8x128xf32>
    %79 = tpu.concatenate %77, %78 in 1 : vector<1x1x8x128xf32>, vector<1x7x8x128xf32> -> vector<1x8x8x128xf32>
    %80 = vector.extract_strided_slice %1 {offsets = [1, 0], sizes = [1, 128], strides = [1, 1]} : vector<9x128xf32> to vector<1x128xf32>
    %81 = vector.shape_cast %80 : vector<1x128xf32> to vector<128xf32>
    %82 = vector.shape_cast %81 : vector<128xf32> to vector<1x1x1x128xf32>
    %83 = vector.broadcast %82 : vector<1x1x1x128xf32> to vector<1x8x8x128xf32>
    %84 = arith.mulf %79, %83 : vector<1x8x8x128xf32>
    %85 = arith.addf %76, %84 : vector<1x8x8x128xf32>
    %86 = vector.extract_strided_slice %59 {offsets = [0, 0, 1, 0], sizes = [1, 8, 7, 128], strides = [1, 1, 1, 1]} : vector<1x8x8x128xf32> to vector<1x8x7x128xf32>
    %87 = vector.extract_strided_slice %59 {offsets = [0, 0, 7, 0], sizes = [1, 8, 1, 128], strides = [1, 1, 1, 1]} : vector<1x8x8x128xf32> to vector<1x8x1x128xf32>
    %88 = tpu.concatenate %86, %87 in 2 : vector<1x8x7x128xf32>, vector<1x8x1x128xf32> -> vector<1x8x8x128xf32>
    %c0_30 = arith.constant 0 : index
    %c0_31 = arith.constant 0 : index
    %c1_32 = arith.constant 1 : index
    %c1_33 = arith.constant 1 : index
    %c0_34 = arith.constant 0 : index
    %89 = tpu.strided_load %arg2[%c0_30, %c0_31, %c1_32, %c1_33, %c0_34] {strides = array<i32: 1, 1, 1, 2, 1>} : memref<1x8x2x16x128xf32, #tpu.memory_space<vmem>>, vector<1x8x1x8x128xf32>
    %90 = vector.shape_cast %89 : vector<1x8x1x8x128xf32> to vector<1x8x8x128xf32>
    %cst_35 = arith.constant 7.500000e-01 : f32
    %91 = vector.broadcast %cst_35 : f32 to vector<1x8x8x128xf32>
    %92 = arith.mulf %91, %59 : vector<1x8x8x128xf32>
    %cst_36 = arith.constant 2.500000e-01 : f32
    %93 = vector.broadcast %cst_36 : f32 to vector<1x8x8x128xf32>
    %94 = arith.mulf %93, %88 : vector<1x8x8x128xf32>
    %95 = arith.addf %92, %94 : vector<1x8x8x128xf32>
    %96 = arith.addf %95, %90 : vector<1x8x8x128xf32>
    %97 = vector.extract_strided_slice %1 {offsets = [8, 0], sizes = [1, 128], strides = [1, 1]} : vector<9x128xf32> to vector<1x128xf32>
    %98 = vector.shape_cast %97 : vector<1x128xf32> to vector<128xf32>
    %99 = vector.shape_cast %98 : vector<128xf32> to vector<1x1x1x128xf32>
    %100 = vector.broadcast %99 : vector<1x1x1x128xf32> to vector<1x8x8x128xf32>
    %101 = arith.mulf %96, %100 : vector<1x8x8x128xf32>
    %102 = arith.addf %85, %101 : vector<1x8x8x128xf32>
    %cst_37 = arith.constant 0.000000e+00 : f32
    %103 = vector.broadcast %cst_37 : f32 to vector<1x8x1x128xf32>
    %104 = vector.extract_strided_slice %96 {offsets = [0, 0, 0, 0], sizes = [1, 8, 7, 128], strides = [1, 1, 1, 1]} : vector<1x8x8x128xf32> to vector<1x8x7x128xf32>
    %105 = tpu.concatenate %103, %104 in 2 : vector<1x8x1x128xf32>, vector<1x8x7x128xf32> -> vector<1x8x8x128xf32>
    %106 = vector.extract_strided_slice %1 {offsets = [6, 0], sizes = [1, 128], strides = [1, 1]} : vector<9x128xf32> to vector<1x128xf32>
    %107 = vector.shape_cast %106 : vector<1x128xf32> to vector<128xf32>
    %108 = vector.shape_cast %107 : vector<128xf32> to vector<1x1x1x128xf32>
    %109 = vector.broadcast %108 : vector<1x1x1x128xf32> to vector<1x8x8x128xf32>
    %110 = arith.mulf %105, %109 : vector<1x8x8x128xf32>
    %111 = arith.addf %102, %110 : vector<1x8x8x128xf32>
    %cst_38 = arith.constant 0.000000e+00 : f32
    %112 = vector.broadcast %cst_38 : f32 to vector<1x1x8x128xf32>
    %113 = vector.extract_strided_slice %96 {offsets = [0, 0, 0, 0], sizes = [1, 7, 8, 128], strides = [1, 1, 1, 1]} : vector<1x8x8x128xf32> to vector<1x7x8x128xf32>
    %114 = tpu.concatenate %112, %113 in 1 : vector<1x1x8x128xf32>, vector<1x7x8x128xf32> -> vector<1x8x8x128xf32>
    %115 = vector.extract_strided_slice %1 {offsets = [2, 0], sizes = [1, 128], strides = [1, 1]} : vector<9x128xf32> to vector<1x128xf32>
    %116 = vector.shape_cast %115 : vector<1x128xf32> to vector<128xf32>
    %117 = vector.shape_cast %116 : vector<128xf32> to vector<1x1x1x128xf32>
    %118 = vector.broadcast %117 : vector<1x1x1x128xf32> to vector<1x8x8x128xf32>
    %119 = arith.mulf %114, %118 : vector<1x8x8x128xf32>
    %120 = arith.addf %111, %119 : vector<1x8x8x128xf32>
    %cst_39 = arith.constant 0.000000e+00 : f32
    %121 = vector.broadcast %cst_39 : f32 to vector<1x1x8x128xf32>
    %122 = vector.extract_strided_slice %96 {offsets = [0, 0, 0, 0], sizes = [1, 7, 8, 128], strides = [1, 1, 1, 1]} : vector<1x8x8x128xf32> to vector<1x7x8x128xf32>
    %123 = tpu.concatenate %121, %122 in 1 : vector<1x1x8x128xf32>, vector<1x7x8x128xf32> -> vector<1x8x8x128xf32>
    %cst_40 = arith.constant 0.000000e+00 : f32
    %124 = vector.broadcast %cst_40 : f32 to vector<1x8x1x128xf32>
    %125 = vector.extract_strided_slice %123 {offsets = [0, 0, 0, 0], sizes = [1, 8, 7, 128], strides = [1, 1, 1, 1]} : vector<1x8x8x128xf32> to vector<1x8x7x128xf32>
    %126 = tpu.concatenate %124, %125 in 2 : vector<1x8x1x128xf32>, vector<1x8x7x128xf32> -> vector<1x8x8x128xf32>
    %127 = vector.extract_strided_slice %1 {offsets = [0, 0], sizes = [1, 128], strides = [1, 1]} : vector<9x128xf32> to vector<1x128xf32>
    %128 = vector.shape_cast %127 : vector<1x128xf32> to vector<128xf32>
    %129 = vector.shape_cast %128 : vector<128xf32> to vector<1x1x1x128xf32>
    %130 = vector.broadcast %129 : vector<1x1x1x128xf32> to vector<1x8x8x128xf32>
    %131 = arith.mulf %126, %130 : vector<1x8x8x128xf32>
    %132 = arith.addf %120, %131 : vector<1x8x8x128xf32>
    %c0_41 = arith.constant 0 : index
    %c0_42 = arith.constant 0 : index
    %133 = vector.load %arg5[%c0_41, %c0_42] : memref<128x128xbf16, #tpu.memory_space<vmem>>, vector<128x128xbf16>
    %c0_43 = arith.constant 0 : index
    %c0_44 = arith.constant 0 : index
    %134 = vector.load %arg6[%c0_43, %c0_44] : memref<1x128xf32, #tpu.memory_space<vmem>>, vector<1x128xf32>
    %135 = vector.shape_cast %132 : vector<1x8x8x128xf32> to vector<64x128xf32>
    %136 = arith.truncf %135 : vector<64x128xf32> to vector<64x128xbf16>
    %cst_45 = arith.constant dense<0.000000e+00> : vector<64x128xf32>
    %137 = tpu.matmul %136, %133, %cst_45 {dimension_numbers = #tpu.dot_dimension_numbers<[1], [0], [0], [1], [0, 0, 1, 1], [], []>} : vector<64x128xbf16>, vector<128x128xbf16>, vector<64x128xf32> -> vector<64x128xf32>
    %138 = vector.broadcast %134 : vector<1x128xf32> to vector<64x128xf32>
    %139 = arith.addf %137, %138 : vector<64x128xf32>
    %cst_46 = arith.constant 0.000000e+00 : f32
    %140 = vector.broadcast %cst_46 : f32 to vector<64x128xf32>
    %141 = arith.maximumf %139, %140 : vector<64x128xf32>
    %142 = vector.shape_cast %141 : vector<64x128xf32> to vector<1x8x8x128xf32>
    %c0_47 = arith.constant 0 : index
    %c0_48 = arith.constant 0 : index
    %c0_49 = arith.constant 0 : index
    %c0_50 = arith.constant 0 : index
    %143 = vector.load %arg7[%c0_47, %c0_48, %c0_49, %c0_50] : memref<1x8x8x128xf32, #tpu.memory_space<vmem>>, vector<1x8x8x128xf32>
    tpu.vector_store %arg7[%c0_47, %c0_48, %c0_49, %c0_50], %142 {strides = array<i32>} : memref<1x8x8x128xf32, #tpu.memory_space<vmem>>, vector<1x8x8x128xf32>,
    %c0_51 = arith.constant 0 : index
    %c0_52 = arith.constant 0 : index
    %c0_53 = arith.constant 0 : index
    %c0_54 = arith.constant 0 : index
    %144 = vector.load %arg3[%c0_51, %c0_52, %c0_53, %c0_54] : memref<1x8x8x128xf32, #tpu.memory_space<vmem>>, vector<1x8x8x128xf32>
    %145 = arith.addf %142, %144 : vector<1x8x8x128xf32>
    %c0_55 = arith.constant 0 : index
    %c0_56 = arith.constant 0 : index
    %c0_57 = arith.constant 0 : index
    %c0_58 = arith.constant 0 : index
    %146 = vector.load %arg8[%c0_55, %c0_56, %c0_57, %c0_58] : memref<1x8x8x128xf32, #tpu.memory_space<vmem>>, vector<1x8x8x128xf32>
    tpu.vector_store %arg8[%c0_55, %c0_56, %c0_57, %c0_58], %145 {strides = array<i32>} : memref<1x8x8x128xf32, #tpu.memory_space<vmem>>, vector<1x8x8x128xf32>,
    return
  }
  func.func @transform_0(%arg0: i32) -> (i32, i32, i32, i32) {
    %c0_i32 = arith.constant 0 : i32
    %c0_i32_0 = arith.constant 0 : i32
    %c0_i32_1 = arith.constant 0 : i32
    %c0_i32_2 = arith.constant 0 : i32
    return %arg0, %c0_i32, %c0_i32_0, %c0_i32_1 : i32, i32, i32, i32
  }
  func.func @transform_1(%arg0: i32) -> (i32, i32, i32, i32, i32) {
    %c0_i32 = arith.constant 0 : i32
    %c0_i32_0 = arith.constant 0 : i32
    %c0_i32_1 = arith.constant 0 : i32
    %c0_i32_2 = arith.constant 0 : i32
    %c0_i32_3 = arith.constant 0 : i32
    return %arg0, %c0_i32, %c0_i32_0, %c0_i32_1, %c0_i32_2 : i32, i32, i32, i32, i32
  }
  func.func @transform_2(%arg0: i32) -> (i32, i32, i32, i32) {
    %c0_i32 = arith.constant 0 : i32
    %c0_i32_0 = arith.constant 0 : i32
    %c0_i32_1 = arith.constant 0 : i32
    %c0_i32_2 = arith.constant 0 : i32
    return %arg0, %c0_i32, %c0_i32_0, %c0_i32_1 : i32, i32, i32, i32
  }
  func.func @transform_3(%arg0: i32) -> (i32, i32) {
    %c0_i32 = arith.constant 0 : i32
    %c0_i32_0 = arith.constant 0 : i32
    %c0_i32_1 = arith.constant 0 : i32
    return %c0_i32, %c0_i32_0 : i32, i32
  }
  func.func @transform_4(%arg0: i32) -> (i32, i32) {
    %c0_i32 = arith.constant 0 : i32
    %c0_i32_0 = arith.constant 0 : i32
    %c0_i32_1 = arith.constant 0 : i32
    return %c0_i32, %c0_i32_0 : i32, i32
  }
  func.func @transform_5(%arg0: i32) -> (i32, i32) {
    %c0_i32 = arith.constant 0 : i32
    %c0_i32_0 = arith.constant 0 : i32
    %c0_i32_1 = arith.constant 0 : i32
    return %c0_i32, %c0_i32_0 : i32, i32
  }
  func.func @transform_6(%arg0: i32) -> (i32, i32, i32, i32) {
    %c0_i32 = arith.constant 0 : i32
    %c0_i32_0 = arith.constant 0 : i32
    %c0_i32_1 = arith.constant 0 : i32
    %c0_i32_2 = arith.constant 0 : i32
    return %arg0, %c0_i32, %c0_i32_0, %c0_i32_1 : i32, i32, i32, i32
  }
  func.func @transform_7(%arg0: i32) -> (i32, i32, i32, i32) {
    %c0_i32 = arith.constant 0 : i32
    %c0_i32_0 = arith.constant 0 : i32
    %c0_i32_1 = arith.constant 0 : i32
    %c0_i32_2 = arith.constant 0 : i32
    return %arg0, %c0_i32, %c0_i32_0, %c0_i32_1 : i32, i32, i32, i32
  }
}

module attributes {stable_mosaic.version = 11 : i64} {
  func.func @_stride2_kernel(%arg0: i32, %arg1: memref<1x4x4x128xf32, #tpu.memory_space<vmem>>, %arg2: memref<1x4x2x8x128xf32, #tpu.memory_space<vmem>>, %arg3: memref<1x4x4x128xf32, #tpu.memory_space<vmem>>, %arg4: memref<9x128xf32, #tpu.memory_space<vmem>>, %arg5: memref<128x128xbf16, #tpu.memory_space<vmem>>, %arg6: memref<1x128xf32, #tpu.memory_space<vmem>>, %arg7: memref<1x4x4x128xf32, #tpu.memory_space<vmem>>, %arg8: memref<1x4x4x128xf32, #tpu.memory_space<vmem>>) attributes {dimension_semantics = [#tpu.dimension_semantics<parallel>], iteration_bounds = array<i64: 2>, scalar_prefetch = 0 : i64, scratch_operands = 0 : i64, tpu.core_type = #tpu.core_type<tc>, window_params = [{transform_indices = @transform_0, window_bounds = array<i64: 1, 4, 4, 128>}, {transform_indices = @transform_1, window_bounds = array<i64: 1, 4, 2, 8, 128>}, {transform_indices = @transform_2, window_bounds = array<i64: 1, 4, 4, 128>}, {pipeline_mode = #tpu.pipeline_mode<synchronous>, transform_indices = @transform_3, window_bounds = array<i64: 9, 128>}, {pipeline_mode = #tpu.pipeline_mode<synchronous>, transform_indices = @transform_4, window_bounds = array<i64: 128, 128>}, {pipeline_mode = #tpu.pipeline_mode<synchronous>, transform_indices = @transform_5, window_bounds = array<i64: 1, 128>}, {transform_indices = @transform_6, window_bounds = array<i64: 1, 4, 4, 128>}, {transform_indices = @transform_7, window_bounds = array<i64: 1, 4, 4, 128>}]} {
    %c0 = arith.constant 0 : index
    %c0_0 = arith.constant 0 : index
    %c0_1 = arith.constant 0 : index
    %c0_2 = arith.constant 0 : index
    %0 = vector.load %arg1[%c0, %c0_0, %c0_1, %c0_2] : memref<1x4x4x128xf32, #tpu.memory_space<vmem>>, vector<1x4x4x128xf32>
    %c0_3 = arith.constant 0 : index
    %c0_4 = arith.constant 0 : index
    %1 = vector.load %arg4[%c0_3, %c0_4] : memref<9x128xf32, #tpu.memory_space<vmem>>, vector<9x128xf32>
    %2 = vector.extract_strided_slice %0 {offsets = [0, 0, 0, 0], sizes = [1, 1, 4, 128], strides = [1, 1, 1, 1]} : vector<1x4x4x128xf32> to vector<1x1x4x128xf32>
    %3 = vector.extract_strided_slice %0 {offsets = [0, 0, 0, 0], sizes = [1, 3, 4, 128], strides = [1, 1, 1, 1]} : vector<1x4x4x128xf32> to vector<1x3x4x128xf32>
    %4 = tpu.concatenate %2, %3 in 1 : vector<1x1x4x128xf32>, vector<1x3x4x128xf32> -> vector<1x4x4x128xf32>
    %5 = vector.extract_strided_slice %0 {offsets = [0, 1, 0, 0], sizes = [1, 3, 4, 128], strides = [1, 1, 1, 1]} : vector<1x4x4x128xf32> to vector<1x3x4x128xf32>
    %6 = vector.extract_strided_slice %0 {offsets = [0, 3, 0, 0], sizes = [1, 1, 4, 128], strides = [1, 1, 1, 1]} : vector<1x4x4x128xf32> to vector<1x1x4x128xf32>
    %7 = tpu.concatenate %5, %6 in 1 : vector<1x3x4x128xf32>, vector<1x1x4x128xf32> -> vector<1x4x4x128xf32>
    %cst = arith.constant 7.500000e-01 : f32
    %8 = vector.broadcast %cst : f32 to vector<1x4x4x128xf32>
    %9 = arith.mulf %8, %0 : vector<1x4x4x128xf32>
    %cst_5 = arith.constant 2.500000e-01 : f32
    %10 = vector.broadcast %cst_5 : f32 to vector<1x4x4x128xf32>
    %11 = arith.mulf %10, %4 : vector<1x4x4x128xf32>
    %12 = arith.addf %9, %11 : vector<1x4x4x128xf32>
    %13 = vector.extract_strided_slice %12 {offsets = [0, 0, 0, 0], sizes = [1, 4, 1, 128], strides = [1, 1, 1, 1]} : vector<1x4x4x128xf32> to vector<1x4x1x128xf32>
    %14 = vector.extract_strided_slice %12 {offsets = [0, 0, 0, 0], sizes = [1, 4, 3, 128], strides = [1, 1, 1, 1]} : vector<1x4x4x128xf32> to vector<1x4x3x128xf32>
    %15 = tpu.concatenate %13, %14 in 2 : vector<1x4x1x128xf32>, vector<1x4x3x128xf32> -> vector<1x4x4x128xf32>
    %c0_6 = arith.constant 0 : index
    %c0_7 = arith.constant 0 : index
    %c0_8 = arith.constant 0 : index
    %c0_9 = arith.constant 0 : index
    %c0_10 = arith.constant 0 : index
    %16 = tpu.strided_load %arg2[%c0_6, %c0_7, %c0_8, %c0_9, %c0_10] {strides = array<i32: 1, 1, 1, 2, 1>} : memref<1x4x2x8x128xf32, #tpu.memory_space<vmem>>, vector<1x4x1x4x128xf32>
    %17 = vector.shape_cast %16 : vector<1x4x1x4x128xf32> to vector<1x4x4x128xf32>
    %cst_11 = arith.constant 7.500000e-01 : f32
    %18 = vector.broadcast %cst_11 : f32 to vector<1x4x4x128xf32>
    %19 = arith.mulf %18, %12 : vector<1x4x4x128xf32>
    %cst_12 = arith.constant 2.500000e-01 : f32
    %20 = vector.broadcast %cst_12 : f32 to vector<1x4x4x128xf32>
    %21 = arith.mulf %20, %15 : vector<1x4x4x128xf32>
    %22 = arith.addf %19, %21 : vector<1x4x4x128xf32>
    %23 = arith.addf %22, %17 : vector<1x4x4x128xf32>
    %24 = vector.extract_strided_slice %1 {offsets = [4, 0], sizes = [1, 128], strides = [1, 1]} : vector<9x128xf32> to vector<1x128xf32>
    %25 = vector.shape_cast %24 : vector<1x128xf32> to vector<128xf32>
    %26 = vector.shape_cast %25 : vector<128xf32> to vector<1x1x1x128xf32>
    %27 = vector.broadcast %26 : vector<1x1x1x128xf32> to vector<1x4x4x128xf32>
    %28 = arith.mulf %23, %27 : vector<1x4x4x128xf32>
    %29 = vector.extract_strided_slice %12 {offsets = [0, 0, 1, 0], sizes = [1, 4, 3, 128], strides = [1, 1, 1, 1]} : vector<1x4x4x128xf32> to vector<1x4x3x128xf32>
    %30 = vector.extract_strided_slice %12 {offsets = [0, 0, 3, 0], sizes = [1, 4, 1, 128], strides = [1, 1, 1, 1]} : vector<1x4x4x128xf32> to vector<1x4x1x128xf32>
    %31 = tpu.concatenate %29, %30 in 2 : vector<1x4x3x128xf32>, vector<1x4x1x128xf32> -> vector<1x4x4x128xf32>
    %c0_13 = arith.constant 0 : index
    %c0_14 = arith.constant 0 : index
    %c0_15 = arith.constant 0 : index
    %c1 = arith.constant 1 : index
    %c0_16 = arith.constant 0 : index
    %32 = tpu.strided_load %arg2[%c0_13, %c0_14, %c0_15, %c1, %c0_16] {strides = array<i32: 1, 1, 1, 2, 1>} : memref<1x4x2x8x128xf32, #tpu.memory_space<vmem>>, vector<1x4x1x4x128xf32>
    %33 = vector.shape_cast %32 : vector<1x4x1x4x128xf32> to vector<1x4x4x128xf32>
    %cst_17 = arith.constant 7.500000e-01 : f32
    %34 = vector.broadcast %cst_17 : f32 to vector<1x4x4x128xf32>
    %35 = arith.mulf %34, %12 : vector<1x4x4x128xf32>
    %cst_18 = arith.constant 2.500000e-01 : f32
    %36 = vector.broadcast %cst_18 : f32 to vector<1x4x4x128xf32>
    %37 = arith.mulf %36, %31 : vector<1x4x4x128xf32>
    %38 = arith.addf %35, %37 : vector<1x4x4x128xf32>
    %39 = arith.addf %38, %33 : vector<1x4x4x128xf32>
    %40 = vector.extract_strided_slice %1 {offsets = [5, 0], sizes = [1, 128], strides = [1, 1]} : vector<9x128xf32> to vector<1x128xf32>
    %41 = vector.shape_cast %40 : vector<1x128xf32> to vector<128xf32>
    %42 = vector.shape_cast %41 : vector<128xf32> to vector<1x1x1x128xf32>
    %43 = vector.broadcast %42 : vector<1x1x1x128xf32> to vector<1x4x4x128xf32>
    %44 = arith.mulf %39, %43 : vector<1x4x4x128xf32>
    %45 = arith.addf %28, %44 : vector<1x4x4x128xf32>
    %cst_19 = arith.constant 0.000000e+00 : f32
    %46 = vector.broadcast %cst_19 : f32 to vector<1x4x1x128xf32>
    %47 = vector.extract_strided_slice %39 {offsets = [0, 0, 0, 0], sizes = [1, 4, 3, 128], strides = [1, 1, 1, 1]} : vector<1x4x4x128xf32> to vector<1x4x3x128xf32>
    %48 = tpu.concatenate %46, %47 in 2 : vector<1x4x1x128xf32>, vector<1x4x3x128xf32> -> vector<1x4x4x128xf32>
    %49 = vector.extract_strided_slice %1 {offsets = [3, 0], sizes = [1, 128], strides = [1, 1]} : vector<9x128xf32> to vector<1x128xf32>
    %50 = vector.shape_cast %49 : vector<1x128xf32> to vector<128xf32>
    %51 = vector.shape_cast %50 : vector<128xf32> to vector<1x1x1x128xf32>
    %52 = vector.broadcast %51 : vector<1x1x1x128xf32> to vector<1x4x4x128xf32>
    %53 = arith.mulf %48, %52 : vector<1x4x4x128xf32>
    %54 = arith.addf %45, %53 : vector<1x4x4x128xf32>
    %cst_20 = arith.constant 7.500000e-01 : f32
    %55 = vector.broadcast %cst_20 : f32 to vector<1x4x4x128xf32>
    %56 = arith.mulf %55, %0 : vector<1x4x4x128xf32>
    %cst_21 = arith.constant 2.500000e-01 : f32
    %57 = vector.broadcast %cst_21 : f32 to vector<1x4x4x128xf32>
    %58 = arith.mulf %57, %7 : vector<1x4x4x128xf32>
    %59 = arith.addf %56, %58 : vector<1x4x4x128xf32>
    %60 = vector.extract_strided_slice %59 {offsets = [0, 0, 0, 0], sizes = [1, 4, 1, 128], strides = [1, 1, 1, 1]} : vector<1x4x4x128xf32> to vector<1x4x1x128xf32>
    %61 = vector.extract_strided_slice %59 {offsets = [0, 0, 0, 0], sizes = [1, 4, 3, 128], strides = [1, 1, 1, 1]} : vector<1x4x4x128xf32> to vector<1x4x3x128xf32>
    %62 = tpu.concatenate %60, %61 in 2 : vector<1x4x1x128xf32>, vector<1x4x3x128xf32> -> vector<1x4x4x128xf32>
    %c0_22 = arith.constant 0 : index
    %c0_23 = arith.constant 0 : index
    %c1_24 = arith.constant 1 : index
    %c0_25 = arith.constant 0 : index
    %c0_26 = arith.constant 0 : index
    %63 = tpu.strided_load %arg2[%c0_22, %c0_23, %c1_24, %c0_25, %c0_26] {strides = array<i32: 1, 1, 1, 2, 1>} : memref<1x4x2x8x128xf32, #tpu.memory_space<vmem>>, vector<1x4x1x4x128xf32>
    %64 = vector.shape_cast %63 : vector<1x4x1x4x128xf32> to vector<1x4x4x128xf32>
    %cst_27 = arith.constant 7.500000e-01 : f32
    %65 = vector.broadcast %cst_27 : f32 to vector<1x4x4x128xf32>
    %66 = arith.mulf %65, %59 : vector<1x4x4x128xf32>
    %cst_28 = arith.constant 2.500000e-01 : f32
    %67 = vector.broadcast %cst_28 : f32 to vector<1x4x4x128xf32>
    %68 = arith.mulf %67, %62 : vector<1x4x4x128xf32>
    %69 = arith.addf %66, %68 : vector<1x4x4x128xf32>
    %70 = arith.addf %69, %64 : vector<1x4x4x128xf32>
    %71 = vector.extract_strided_slice %1 {offsets = [7, 0], sizes = [1, 128], strides = [1, 1]} : vector<9x128xf32> to vector<1x128xf32>
    %72 = vector.shape_cast %71 : vector<1x128xf32> to vector<128xf32>
    %73 = vector.shape_cast %72 : vector<128xf32> to vector<1x1x1x128xf32>
    %74 = vector.broadcast %73 : vector<1x1x1x128xf32> to vector<1x4x4x128xf32>
    %75 = arith.mulf %70, %74 : vector<1x4x4x128xf32>
    %76 = arith.addf %54, %75 : vector<1x4x4x128xf32>
    %cst_29 = arith.constant 0.000000e+00 : f32
    %77 = vector.broadcast %cst_29 : f32 to vector<1x1x4x128xf32>
    %78 = vector.extract_strided_slice %70 {offsets = [0, 0, 0, 0], sizes = [1, 3, 4, 128], strides = [1, 1, 1, 1]} : vector<1x4x4x128xf32> to vector<1x3x4x128xf32>
    %79 = tpu.concatenate %77, %78 in 1 : vector<1x1x4x128xf32>, vector<1x3x4x128xf32> -> vector<1x4x4x128xf32>
    %80 = vector.extract_strided_slice %1 {offsets = [1, 0], sizes = [1, 128], strides = [1, 1]} : vector<9x128xf32> to vector<1x128xf32>
    %81 = vector.shape_cast %80 : vector<1x128xf32> to vector<128xf32>
    %82 = vector.shape_cast %81 : vector<128xf32> to vector<1x1x1x128xf32>
    %83 = vector.broadcast %82 : vector<1x1x1x128xf32> to vector<1x4x4x128xf32>
    %84 = arith.mulf %79, %83 : vector<1x4x4x128xf32>
    %85 = arith.addf %76, %84 : vector<1x4x4x128xf32>
    %86 = vector.extract_strided_slice %59 {offsets = [0, 0, 1, 0], sizes = [1, 4, 3, 128], strides = [1, 1, 1, 1]} : vector<1x4x4x128xf32> to vector<1x4x3x128xf32>
    %87 = vector.extract_strided_slice %59 {offsets = [0, 0, 3, 0], sizes = [1, 4, 1, 128], strides = [1, 1, 1, 1]} : vector<1x4x4x128xf32> to vector<1x4x1x128xf32>
    %88 = tpu.concatenate %86, %87 in 2 : vector<1x4x3x128xf32>, vector<1x4x1x128xf32> -> vector<1x4x4x128xf32>
    %c0_30 = arith.constant 0 : index
    %c0_31 = arith.constant 0 : index
    %c1_32 = arith.constant 1 : index
    %c1_33 = arith.constant 1 : index
    %c0_34 = arith.constant 0 : index
    %89 = tpu.strided_load %arg2[%c0_30, %c0_31, %c1_32, %c1_33, %c0_34] {strides = array<i32: 1, 1, 1, 2, 1>} : memref<1x4x2x8x128xf32, #tpu.memory_space<vmem>>, vector<1x4x1x4x128xf32>
    %90 = vector.shape_cast %89 : vector<1x4x1x4x128xf32> to vector<1x4x4x128xf32>
    %cst_35 = arith.constant 7.500000e-01 : f32
    %91 = vector.broadcast %cst_35 : f32 to vector<1x4x4x128xf32>
    %92 = arith.mulf %91, %59 : vector<1x4x4x128xf32>
    %cst_36 = arith.constant 2.500000e-01 : f32
    %93 = vector.broadcast %cst_36 : f32 to vector<1x4x4x128xf32>
    %94 = arith.mulf %93, %88 : vector<1x4x4x128xf32>
    %95 = arith.addf %92, %94 : vector<1x4x4x128xf32>
    %96 = arith.addf %95, %90 : vector<1x4x4x128xf32>
    %97 = vector.extract_strided_slice %1 {offsets = [8, 0], sizes = [1, 128], strides = [1, 1]} : vector<9x128xf32> to vector<1x128xf32>
    %98 = vector.shape_cast %97 : vector<1x128xf32> to vector<128xf32>
    %99 = vector.shape_cast %98 : vector<128xf32> to vector<1x1x1x128xf32>
    %100 = vector.broadcast %99 : vector<1x1x1x128xf32> to vector<1x4x4x128xf32>
    %101 = arith.mulf %96, %100 : vector<1x4x4x128xf32>
    %102 = arith.addf %85, %101 : vector<1x4x4x128xf32>
    %cst_37 = arith.constant 0.000000e+00 : f32
    %103 = vector.broadcast %cst_37 : f32 to vector<1x4x1x128xf32>
    %104 = vector.extract_strided_slice %96 {offsets = [0, 0, 0, 0], sizes = [1, 4, 3, 128], strides = [1, 1, 1, 1]} : vector<1x4x4x128xf32> to vector<1x4x3x128xf32>
    %105 = tpu.concatenate %103, %104 in 2 : vector<1x4x1x128xf32>, vector<1x4x3x128xf32> -> vector<1x4x4x128xf32>
    %106 = vector.extract_strided_slice %1 {offsets = [6, 0], sizes = [1, 128], strides = [1, 1]} : vector<9x128xf32> to vector<1x128xf32>
    %107 = vector.shape_cast %106 : vector<1x128xf32> to vector<128xf32>
    %108 = vector.shape_cast %107 : vector<128xf32> to vector<1x1x1x128xf32>
    %109 = vector.broadcast %108 : vector<1x1x1x128xf32> to vector<1x4x4x128xf32>
    %110 = arith.mulf %105, %109 : vector<1x4x4x128xf32>
    %111 = arith.addf %102, %110 : vector<1x4x4x128xf32>
    %cst_38 = arith.constant 0.000000e+00 : f32
    %112 = vector.broadcast %cst_38 : f32 to vector<1x1x4x128xf32>
    %113 = vector.extract_strided_slice %96 {offsets = [0, 0, 0, 0], sizes = [1, 3, 4, 128], strides = [1, 1, 1, 1]} : vector<1x4x4x128xf32> to vector<1x3x4x128xf32>
    %114 = tpu.concatenate %112, %113 in 1 : vector<1x1x4x128xf32>, vector<1x3x4x128xf32> -> vector<1x4x4x128xf32>
    %115 = vector.extract_strided_slice %1 {offsets = [2, 0], sizes = [1, 128], strides = [1, 1]} : vector<9x128xf32> to vector<1x128xf32>
    %116 = vector.shape_cast %115 : vector<1x128xf32> to vector<128xf32>
    %117 = vector.shape_cast %116 : vector<128xf32> to vector<1x1x1x128xf32>
    %118 = vector.broadcast %117 : vector<1x1x1x128xf32> to vector<1x4x4x128xf32>
    %119 = arith.mulf %114, %118 : vector<1x4x4x128xf32>
    %120 = arith.addf %111, %119 : vector<1x4x4x128xf32>
    %cst_39 = arith.constant 0.000000e+00 : f32
    %121 = vector.broadcast %cst_39 : f32 to vector<1x1x4x128xf32>
    %122 = vector.extract_strided_slice %96 {offsets = [0, 0, 0, 0], sizes = [1, 3, 4, 128], strides = [1, 1, 1, 1]} : vector<1x4x4x128xf32> to vector<1x3x4x128xf32>
    %123 = tpu.concatenate %121, %122 in 1 : vector<1x1x4x128xf32>, vector<1x3x4x128xf32> -> vector<1x4x4x128xf32>
    %cst_40 = arith.constant 0.000000e+00 : f32
    %124 = vector.broadcast %cst_40 : f32 to vector<1x4x1x128xf32>
    %125 = vector.extract_strided_slice %123 {offsets = [0, 0, 0, 0], sizes = [1, 4, 3, 128], strides = [1, 1, 1, 1]} : vector<1x4x4x128xf32> to vector<1x4x3x128xf32>
    %126 = tpu.concatenate %124, %125 in 2 : vector<1x4x1x128xf32>, vector<1x4x3x128xf32> -> vector<1x4x4x128xf32>
    %127 = vector.extract_strided_slice %1 {offsets = [0, 0], sizes = [1, 128], strides = [1, 1]} : vector<9x128xf32> to vector<1x128xf32>
    %128 = vector.shape_cast %127 : vector<1x128xf32> to vector<128xf32>
    %129 = vector.shape_cast %128 : vector<128xf32> to vector<1x1x1x128xf32>
    %130 = vector.broadcast %129 : vector<1x1x1x128xf32> to vector<1x4x4x128xf32>
    %131 = arith.mulf %126, %130 : vector<1x4x4x128xf32>
    %132 = arith.addf %120, %131 : vector<1x4x4x128xf32>
    %c0_41 = arith.constant 0 : index
    %c0_42 = arith.constant 0 : index
    %133 = vector.load %arg5[%c0_41, %c0_42] : memref<128x128xbf16, #tpu.memory_space<vmem>>, vector<128x128xbf16>
    %c0_43 = arith.constant 0 : index
    %c0_44 = arith.constant 0 : index
    %134 = vector.load %arg6[%c0_43, %c0_44] : memref<1x128xf32, #tpu.memory_space<vmem>>, vector<1x128xf32>
    %cst_45 = arith.constant 0.000000e+00 : f32
    %135 = vector.broadcast %cst_45 : f32 to vector<1x4x4x128xf32>
    %136 = tpu.concatenate %132, %135 in 2 : vector<1x4x4x128xf32>, vector<1x4x4x128xf32> -> vector<1x4x8x128xf32>
    %137 = vector.shape_cast %136 : vector<1x4x8x128xf32> to vector<32x128xf32>
    %138 = arith.truncf %137 : vector<32x128xf32> to vector<32x128xbf16>
    %cst_46 = arith.constant dense<0.000000e+00> : vector<32x128xf32>
    %139 = tpu.matmul %138, %133, %cst_46 {dimension_numbers = #tpu.dot_dimension_numbers<[1], [0], [0], [1], [0, 0, 1, 1], [], []>} : vector<32x128xbf16>, vector<128x128xbf16>, vector<32x128xf32> -> vector<32x128xf32>
    %140 = vector.broadcast %134 : vector<1x128xf32> to vector<32x128xf32>
    %141 = arith.addf %139, %140 : vector<32x128xf32>
    %cst_47 = arith.constant 0.000000e+00 : f32
    %142 = vector.broadcast %cst_47 : f32 to vector<32x128xf32>
    %143 = arith.maximumf %141, %142 : vector<32x128xf32>
    %144 = vector.shape_cast %143 : vector<32x128xf32> to vector<1x4x8x128xf32>
    %145 = vector.extract_strided_slice %144 {offsets = [0, 0, 0, 0], sizes = [1, 4, 4, 128], strides = [1, 1, 1, 1]} : vector<1x4x8x128xf32> to vector<1x4x4x128xf32>
    %c0_48 = arith.constant 0 : index
    %c0_49 = arith.constant 0 : index
    %c0_50 = arith.constant 0 : index
    %c0_51 = arith.constant 0 : index
    %146 = vector.load %arg7[%c0_48, %c0_49, %c0_50, %c0_51] : memref<1x4x4x128xf32, #tpu.memory_space<vmem>>, vector<1x4x4x128xf32>
    tpu.vector_store %arg7[%c0_48, %c0_49, %c0_50, %c0_51], %145 {strides = array<i32>} : memref<1x4x4x128xf32, #tpu.memory_space<vmem>>, vector<1x4x4x128xf32>,
    %c0_52 = arith.constant 0 : index
    %c0_53 = arith.constant 0 : index
    %c0_54 = arith.constant 0 : index
    %c0_55 = arith.constant 0 : index
    %147 = vector.load %arg3[%c0_52, %c0_53, %c0_54, %c0_55] : memref<1x4x4x128xf32, #tpu.memory_space<vmem>>, vector<1x4x4x128xf32>
    %148 = arith.addf %145, %147 : vector<1x4x4x128xf32>
    %c0_56 = arith.constant 0 : index
    %c0_57 = arith.constant 0 : index
    %c0_58 = arith.constant 0 : index
    %c0_59 = arith.constant 0 : index
    %149 = vector.load %arg8[%c0_56, %c0_57, %c0_58, %c0_59] : memref<1x4x4x128xf32, #tpu.memory_space<vmem>>, vector<1x4x4x128xf32>
    tpu.vector_store %arg8[%c0_56, %c0_57, %c0_58, %c0_59], %148 {strides = array<i32>} : memref<1x4x4x128xf32, #tpu.memory_space<vmem>>, vector<1x4x4x128xf32>,
    return
  }
  func.func @transform_0(%arg0: i32) -> (i32, i32, i32, i32) {
    %c0_i32 = arith.constant 0 : i32
    %c0_i32_0 = arith.constant 0 : i32
    %c0_i32_1 = arith.constant 0 : i32
    %c0_i32_2 = arith.constant 0 : i32
    return %arg0, %c0_i32, %c0_i32_0, %c0_i32_1 : i32, i32, i32, i32
  }
  func.func @transform_1(%arg0: i32) -> (i32, i32, i32, i32, i32) {
    %c0_i32 = arith.constant 0 : i32
    %c0_i32_0 = arith.constant 0 : i32
    %c0_i32_1 = arith.constant 0 : i32
    %c0_i32_2 = arith.constant 0 : i32
    %c0_i32_3 = arith.constant 0 : i32
    return %arg0, %c0_i32, %c0_i32_0, %c0_i32_1, %c0_i32_2 : i32, i32, i32, i32, i32
  }
  func.func @transform_2(%arg0: i32) -> (i32, i32, i32, i32) {
    %c0_i32 = arith.constant 0 : i32
    %c0_i32_0 = arith.constant 0 : i32
    %c0_i32_1 = arith.constant 0 : i32
    %c0_i32_2 = arith.constant 0 : i32
    return %arg0, %c0_i32, %c0_i32_0, %c0_i32_1 : i32, i32, i32, i32
  }
  func.func @transform_3(%arg0: i32) -> (i32, i32) {
    %c0_i32 = arith.constant 0 : i32
    %c0_i32_0 = arith.constant 0 : i32
    %c0_i32_1 = arith.constant 0 : i32
    return %c0_i32, %c0_i32_0 : i32, i32
  }
  func.func @transform_4(%arg0: i32) -> (i32, i32) {
    %c0_i32 = arith.constant 0 : i32
    %c0_i32_0 = arith.constant 0 : i32
    %c0_i32_1 = arith.constant 0 : i32
    return %c0_i32, %c0_i32_0 : i32, i32
  }
  func.func @transform_5(%arg0: i32) -> (i32, i32) {
    %c0_i32 = arith.constant 0 : i32
    %c0_i32_0 = arith.constant 0 : i32
    %c0_i32_1 = arith.constant 0 : i32
    return %c0_i32, %c0_i32_0 : i32, i32
  }
  func.func @transform_6(%arg0: i32) -> (i32, i32, i32, i32) {
    %c0_i32 = arith.constant 0 : i32
    %c0_i32_0 = arith.constant 0 : i32
    %c0_i32_1 = arith.constant 0 : i32
    %c0_i32_2 = arith.constant 0 : i32
    return %arg0, %c0_i32, %c0_i32_0, %c0_i32_1 : i32, i32, i32, i32
  }
  func.func @transform_7(%arg0: i32) -> (i32, i32, i32, i32) {
    %c0_i32 = arith.constant 0 : i32
    %c0_i32_0 = arith.constant 0 : i32
    %c0_i32_1 = arith.constant 0 : i32
    %c0_i32_2 = arith.constant 0 : i32
    return %arg0, %c0_i32, %c0_i32_0, %c0_i32_1 : i32, i32, i32, i32
  }
}

module attributes {stable_mosaic.version = 11 : i64} {
  func.func @_stride2_kernel(%arg0: i32, %arg1: memref<1x2x2x128xf32, #tpu.memory_space<vmem>>, %arg2: memref<1x2x2x4x128xf32, #tpu.memory_space<vmem>>, %arg3: memref<9x128xf32, #tpu.memory_space<vmem>>, %arg4: memref<128x128xbf16, #tpu.memory_space<vmem>>, %arg5: memref<1x128xf32, #tpu.memory_space<vmem>>, %arg6: memref<1x2x2x128xf32, #tpu.memory_space<vmem>>) attributes {dimension_semantics = [#tpu.dimension_semantics<parallel>], iteration_bounds = array<i64: 2>, scalar_prefetch = 0 : i64, scratch_operands = 0 : i64, tpu.core_type = #tpu.core_type<tc>, window_params = [{transform_indices = @transform_0, window_bounds = array<i64: 1, 2, 2, 128>}, {transform_indices = @transform_1, window_bounds = array<i64: 1, 2, 2, 4, 128>}, {pipeline_mode = #tpu.pipeline_mode<synchronous>, transform_indices = @transform_2, window_bounds = array<i64: 9, 128>}, {pipeline_mode = #tpu.pipeline_mode<synchronous>, transform_indices = @transform_3, window_bounds = array<i64: 128, 128>}, {pipeline_mode = #tpu.pipeline_mode<synchronous>, transform_indices = @transform_4, window_bounds = array<i64: 1, 128>}, {transform_indices = @transform_5, window_bounds = array<i64: 1, 2, 2, 128>}]} {
    %c0 = arith.constant 0 : index
    %c0_0 = arith.constant 0 : index
    %c0_1 = arith.constant 0 : index
    %c0_2 = arith.constant 0 : index
    %0 = vector.load %arg1[%c0, %c0_0, %c0_1, %c0_2] : memref<1x2x2x128xf32, #tpu.memory_space<vmem>>, vector<1x2x2x128xf32>
    %c0_3 = arith.constant 0 : index
    %c0_4 = arith.constant 0 : index
    %1 = vector.load %arg3[%c0_3, %c0_4] : memref<9x128xf32, #tpu.memory_space<vmem>>, vector<9x128xf32>
    %2 = vector.extract_strided_slice %0 {offsets = [0, 0, 0, 0], sizes = [1, 1, 2, 128], strides = [1, 1, 1, 1]} : vector<1x2x2x128xf32> to vector<1x1x2x128xf32>
    %3 = vector.extract_strided_slice %0 {offsets = [0, 0, 0, 0], sizes = [1, 1, 2, 128], strides = [1, 1, 1, 1]} : vector<1x2x2x128xf32> to vector<1x1x2x128xf32>
    %4 = tpu.concatenate %2, %3 in 1 : vector<1x1x2x128xf32>, vector<1x1x2x128xf32> -> vector<1x2x2x128xf32>
    %5 = vector.extract_strided_slice %0 {offsets = [0, 1, 0, 0], sizes = [1, 1, 2, 128], strides = [1, 1, 1, 1]} : vector<1x2x2x128xf32> to vector<1x1x2x128xf32>
    %6 = vector.extract_strided_slice %0 {offsets = [0, 1, 0, 0], sizes = [1, 1, 2, 128], strides = [1, 1, 1, 1]} : vector<1x2x2x128xf32> to vector<1x1x2x128xf32>
    %7 = tpu.concatenate %5, %6 in 1 : vector<1x1x2x128xf32>, vector<1x1x2x128xf32> -> vector<1x2x2x128xf32>
    %cst = arith.constant 7.500000e-01 : f32
    %8 = vector.broadcast %cst : f32 to vector<1x2x2x128xf32>
    %9 = arith.mulf %8, %0 : vector<1x2x2x128xf32>
    %cst_5 = arith.constant 2.500000e-01 : f32
    %10 = vector.broadcast %cst_5 : f32 to vector<1x2x2x128xf32>
    %11 = arith.mulf %10, %4 : vector<1x2x2x128xf32>
    %12 = arith.addf %9, %11 : vector<1x2x2x128xf32>
    %13 = vector.extract_strided_slice %12 {offsets = [0, 0, 0, 0], sizes = [1, 2, 1, 128], strides = [1, 1, 1, 1]} : vector<1x2x2x128xf32> to vector<1x2x1x128xf32>
    %14 = vector.extract_strided_slice %12 {offsets = [0, 0, 0, 0], sizes = [1, 2, 1, 128], strides = [1, 1, 1, 1]} : vector<1x2x2x128xf32> to vector<1x2x1x128xf32>
    %15 = tpu.concatenate %13, %14 in 2 : vector<1x2x1x128xf32>, vector<1x2x1x128xf32> -> vector<1x2x2x128xf32>
    %c0_6 = arith.constant 0 : index
    %c0_7 = arith.constant 0 : index
    %c0_8 = arith.constant 0 : index
    %c0_9 = arith.constant 0 : index
    %c0_10 = arith.constant 0 : index
    %16 = tpu.strided_load %arg2[%c0_6, %c0_7, %c0_8, %c0_9, %c0_10] {strides = array<i32: 1, 1, 1, 2, 1>} : memref<1x2x2x4x128xf32, #tpu.memory_space<vmem>>, vector<1x2x1x2x128xf32>
    %17 = vector.shape_cast %16 : vector<1x2x1x2x128xf32> to vector<1x2x2x128xf32>
    %cst_11 = arith.constant 7.500000e-01 : f32
    %18 = vector.broadcast %cst_11 : f32 to vector<1x2x2x128xf32>
    %19 = arith.mulf %18, %12 : vector<1x2x2x128xf32>
    %cst_12 = arith.constant 2.500000e-01 : f32
    %20 = vector.broadcast %cst_12 : f32 to vector<1x2x2x128xf32>
    %21 = arith.mulf %20, %15 : vector<1x2x2x128xf32>
    %22 = arith.addf %19, %21 : vector<1x2x2x128xf32>
    %23 = arith.addf %22, %17 : vector<1x2x2x128xf32>
    %24 = vector.extract_strided_slice %1 {offsets = [4, 0], sizes = [1, 128], strides = [1, 1]} : vector<9x128xf32> to vector<1x128xf32>
    %25 = vector.shape_cast %24 : vector<1x128xf32> to vector<128xf32>
    %26 = vector.shape_cast %25 : vector<128xf32> to vector<1x1x1x128xf32>
    %27 = vector.broadcast %26 : vector<1x1x1x128xf32> to vector<1x2x2x128xf32>
    %28 = arith.mulf %23, %27 : vector<1x2x2x128xf32>
    %29 = vector.extract_strided_slice %12 {offsets = [0, 0, 1, 0], sizes = [1, 2, 1, 128], strides = [1, 1, 1, 1]} : vector<1x2x2x128xf32> to vector<1x2x1x128xf32>
    %30 = vector.extract_strided_slice %12 {offsets = [0, 0, 1, 0], sizes = [1, 2, 1, 128], strides = [1, 1, 1, 1]} : vector<1x2x2x128xf32> to vector<1x2x1x128xf32>
    %31 = tpu.concatenate %29, %30 in 2 : vector<1x2x1x128xf32>, vector<1x2x1x128xf32> -> vector<1x2x2x128xf32>
    %c0_13 = arith.constant 0 : index
    %c0_14 = arith.constant 0 : index
    %c0_15 = arith.constant 0 : index
    %c1 = arith.constant 1 : index
    %c0_16 = arith.constant 0 : index
    %32 = tpu.strided_load %arg2[%c0_13, %c0_14, %c0_15, %c1, %c0_16] {strides = array<i32: 1, 1, 1, 2, 1>} : memref<1x2x2x4x128xf32, #tpu.memory_space<vmem>>, vector<1x2x1x2x128xf32>
    %33 = vector.shape_cast %32 : vector<1x2x1x2x128xf32> to vector<1x2x2x128xf32>
    %cst_17 = arith.constant 7.500000e-01 : f32
    %34 = vector.broadcast %cst_17 : f32 to vector<1x2x2x128xf32>
    %35 = arith.mulf %34, %12 : vector<1x2x2x128xf32>
    %cst_18 = arith.constant 2.500000e-01 : f32
    %36 = vector.broadcast %cst_18 : f32 to vector<1x2x2x128xf32>
    %37 = arith.mulf %36, %31 : vector<1x2x2x128xf32>
    %38 = arith.addf %35, %37 : vector<1x2x2x128xf32>
    %39 = arith.addf %38, %33 : vector<1x2x2x128xf32>
    %40 = vector.extract_strided_slice %1 {offsets = [5, 0], sizes = [1, 128], strides = [1, 1]} : vector<9x128xf32> to vector<1x128xf32>
    %41 = vector.shape_cast %40 : vector<1x128xf32> to vector<128xf32>
    %42 = vector.shape_cast %41 : vector<128xf32> to vector<1x1x1x128xf32>
    %43 = vector.broadcast %42 : vector<1x1x1x128xf32> to vector<1x2x2x128xf32>
    %44 = arith.mulf %39, %43 : vector<1x2x2x128xf32>
    %45 = arith.addf %28, %44 : vector<1x2x2x128xf32>
    %cst_19 = arith.constant 0.000000e+00 : f32
    %46 = vector.broadcast %cst_19 : f32 to vector<1x2x1x128xf32>
    %47 = vector.extract_strided_slice %39 {offsets = [0, 0, 0, 0], sizes = [1, 2, 1, 128], strides = [1, 1, 1, 1]} : vector<1x2x2x128xf32> to vector<1x2x1x128xf32>
    %48 = tpu.concatenate %46, %47 in 2 : vector<1x2x1x128xf32>, vector<1x2x1x128xf32> -> vector<1x2x2x128xf32>
    %49 = vector.extract_strided_slice %1 {offsets = [3, 0], sizes = [1, 128], strides = [1, 1]} : vector<9x128xf32> to vector<1x128xf32>
    %50 = vector.shape_cast %49 : vector<1x128xf32> to vector<128xf32>
    %51 = vector.shape_cast %50 : vector<128xf32> to vector<1x1x1x128xf32>
    %52 = vector.broadcast %51 : vector<1x1x1x128xf32> to vector<1x2x2x128xf32>
    %53 = arith.mulf %48, %52 : vector<1x2x2x128xf32>
    %54 = arith.addf %45, %53 : vector<1x2x2x128xf32>
    %cst_20 = arith.constant 7.500000e-01 : f32
    %55 = vector.broadcast %cst_20 : f32 to vector<1x2x2x128xf32>
    %56 = arith.mulf %55, %0 : vector<1x2x2x128xf32>
    %cst_21 = arith.constant 2.500000e-01 : f32
    %57 = vector.broadcast %cst_21 : f32 to vector<1x2x2x128xf32>
    %58 = arith.mulf %57, %7 : vector<1x2x2x128xf32>
    %59 = arith.addf %56, %58 : vector<1x2x2x128xf32>
    %60 = vector.extract_strided_slice %59 {offsets = [0, 0, 0, 0], sizes = [1, 2, 1, 128], strides = [1, 1, 1, 1]} : vector<1x2x2x128xf32> to vector<1x2x1x128xf32>
    %61 = vector.extract_strided_slice %59 {offsets = [0, 0, 0, 0], sizes = [1, 2, 1, 128], strides = [1, 1, 1, 1]} : vector<1x2x2x128xf32> to vector<1x2x1x128xf32>
    %62 = tpu.concatenate %60, %61 in 2 : vector<1x2x1x128xf32>, vector<1x2x1x128xf32> -> vector<1x2x2x128xf32>
    %c0_22 = arith.constant 0 : index
    %c0_23 = arith.constant 0 : index
    %c1_24 = arith.constant 1 : index
    %c0_25 = arith.constant 0 : index
    %c0_26 = arith.constant 0 : index
    %63 = tpu.strided_load %arg2[%c0_22, %c0_23, %c1_24, %c0_25, %c0_26] {strides = array<i32: 1, 1, 1, 2, 1>} : memref<1x2x2x4x128xf32, #tpu.memory_space<vmem>>, vector<1x2x1x2x128xf32>
    %64 = vector.shape_cast %63 : vector<1x2x1x2x128xf32> to vector<1x2x2x128xf32>
    %cst_27 = arith.constant 7.500000e-01 : f32
    %65 = vector.broadcast %cst_27 : f32 to vector<1x2x2x128xf32>
    %66 = arith.mulf %65, %59 : vector<1x2x2x128xf32>
    %cst_28 = arith.constant 2.500000e-01 : f32
    %67 = vector.broadcast %cst_28 : f32 to vector<1x2x2x128xf32>
    %68 = arith.mulf %67, %62 : vector<1x2x2x128xf32>
    %69 = arith.addf %66, %68 : vector<1x2x2x128xf32>
    %70 = arith.addf %69, %64 : vector<1x2x2x128xf32>
    %71 = vector.extract_strided_slice %1 {offsets = [7, 0], sizes = [1, 128], strides = [1, 1]} : vector<9x128xf32> to vector<1x128xf32>
    %72 = vector.shape_cast %71 : vector<1x128xf32> to vector<128xf32>
    %73 = vector.shape_cast %72 : vector<128xf32> to vector<1x1x1x128xf32>
    %74 = vector.broadcast %73 : vector<1x1x1x128xf32> to vector<1x2x2x128xf32>
    %75 = arith.mulf %70, %74 : vector<1x2x2x128xf32>
    %76 = arith.addf %54, %75 : vector<1x2x2x128xf32>
    %cst_29 = arith.constant 0.000000e+00 : f32
    %77 = vector.broadcast %cst_29 : f32 to vector<1x1x2x128xf32>
    %78 = vector.extract_strided_slice %70 {offsets = [0, 0, 0, 0], sizes = [1, 1, 2, 128], strides = [1, 1, 1, 1]} : vector<1x2x2x128xf32> to vector<1x1x2x128xf32>
    %79 = tpu.concatenate %77, %78 in 1 : vector<1x1x2x128xf32>, vector<1x1x2x128xf32> -> vector<1x2x2x128xf32>
    %80 = vector.extract_strided_slice %1 {offsets = [1, 0], sizes = [1, 128], strides = [1, 1]} : vector<9x128xf32> to vector<1x128xf32>
    %81 = vector.shape_cast %80 : vector<1x128xf32> to vector<128xf32>
    %82 = vector.shape_cast %81 : vector<128xf32> to vector<1x1x1x128xf32>
    %83 = vector.broadcast %82 : vector<1x1x1x128xf32> to vector<1x2x2x128xf32>
    %84 = arith.mulf %79, %83 : vector<1x2x2x128xf32>
    %85 = arith.addf %76, %84 : vector<1x2x2x128xf32>
    %86 = vector.extract_strided_slice %59 {offsets = [0, 0, 1, 0], sizes = [1, 2, 1, 128], strides = [1, 1, 1, 1]} : vector<1x2x2x128xf32> to vector<1x2x1x128xf32>
    %87 = vector.extract_strided_slice %59 {offsets = [0, 0, 1, 0], sizes = [1, 2, 1, 128], strides = [1, 1, 1, 1]} : vector<1x2x2x128xf32> to vector<1x2x1x128xf32>
    %88 = tpu.concatenate %86, %87 in 2 : vector<1x2x1x128xf32>, vector<1x2x1x128xf32> -> vector<1x2x2x128xf32>
    %c0_30 = arith.constant 0 : index
    %c0_31 = arith.constant 0 : index
    %c1_32 = arith.constant 1 : index
    %c1_33 = arith.constant 1 : index
    %c0_34 = arith.constant 0 : index
    %89 = tpu.strided_load %arg2[%c0_30, %c0_31, %c1_32, %c1_33, %c0_34] {strides = array<i32: 1, 1, 1, 2, 1>} : memref<1x2x2x4x128xf32, #tpu.memory_space<vmem>>, vector<1x2x1x2x128xf32>
    %90 = vector.shape_cast %89 : vector<1x2x1x2x128xf32> to vector<1x2x2x128xf32>
    %cst_35 = arith.constant 7.500000e-01 : f32
    %91 = vector.broadcast %cst_35 : f32 to vector<1x2x2x128xf32>
    %92 = arith.mulf %91, %59 : vector<1x2x2x128xf32>
    %cst_36 = arith.constant 2.500000e-01 : f32
    %93 = vector.broadcast %cst_36 : f32 to vector<1x2x2x128xf32>
    %94 = arith.mulf %93, %88 : vector<1x2x2x128xf32>
    %95 = arith.addf %92, %94 : vector<1x2x2x128xf32>
    %96 = arith.addf %95, %90 : vector<1x2x2x128xf32>
    %97 = vector.extract_strided_slice %1 {offsets = [8, 0], sizes = [1, 128], strides = [1, 1]} : vector<9x128xf32> to vector<1x128xf32>
    %98 = vector.shape_cast %97 : vector<1x128xf32> to vector<128xf32>
    %99 = vector.shape_cast %98 : vector<128xf32> to vector<1x1x1x128xf32>
    %100 = vector.broadcast %99 : vector<1x1x1x128xf32> to vector<1x2x2x128xf32>
    %101 = arith.mulf %96, %100 : vector<1x2x2x128xf32>
    %102 = arith.addf %85, %101 : vector<1x2x2x128xf32>
    %cst_37 = arith.constant 0.000000e+00 : f32
    %103 = vector.broadcast %cst_37 : f32 to vector<1x2x1x128xf32>
    %104 = vector.extract_strided_slice %96 {offsets = [0, 0, 0, 0], sizes = [1, 2, 1, 128], strides = [1, 1, 1, 1]} : vector<1x2x2x128xf32> to vector<1x2x1x128xf32>
    %105 = tpu.concatenate %103, %104 in 2 : vector<1x2x1x128xf32>, vector<1x2x1x128xf32> -> vector<1x2x2x128xf32>
    %106 = vector.extract_strided_slice %1 {offsets = [6, 0], sizes = [1, 128], strides = [1, 1]} : vector<9x128xf32> to vector<1x128xf32>
    %107 = vector.shape_cast %106 : vector<1x128xf32> to vector<128xf32>
    %108 = vector.shape_cast %107 : vector<128xf32> to vector<1x1x1x128xf32>
    %109 = vector.broadcast %108 : vector<1x1x1x128xf32> to vector<1x2x2x128xf32>
    %110 = arith.mulf %105, %109 : vector<1x2x2x128xf32>
    %111 = arith.addf %102, %110 : vector<1x2x2x128xf32>
    %cst_38 = arith.constant 0.000000e+00 : f32
    %112 = vector.broadcast %cst_38 : f32 to vector<1x1x2x128xf32>
    %113 = vector.extract_strided_slice %96 {offsets = [0, 0, 0, 0], sizes = [1, 1, 2, 128], strides = [1, 1, 1, 1]} : vector<1x2x2x128xf32> to vector<1x1x2x128xf32>
    %114 = tpu.concatenate %112, %113 in 1 : vector<1x1x2x128xf32>, vector<1x1x2x128xf32> -> vector<1x2x2x128xf32>
    %115 = vector.extract_strided_slice %1 {offsets = [2, 0], sizes = [1, 128], strides = [1, 1]} : vector<9x128xf32> to vector<1x128xf32>
    %116 = vector.shape_cast %115 : vector<1x128xf32> to vector<128xf32>
    %117 = vector.shape_cast %116 : vector<128xf32> to vector<1x1x1x128xf32>
    %118 = vector.broadcast %117 : vector<1x1x1x128xf32> to vector<1x2x2x128xf32>
    %119 = arith.mulf %114, %118 : vector<1x2x2x128xf32>
    %120 = arith.addf %111, %119 : vector<1x2x2x128xf32>
    %cst_39 = arith.constant 0.000000e+00 : f32
    %121 = vector.broadcast %cst_39 : f32 to vector<1x1x2x128xf32>
    %122 = vector.extract_strided_slice %96 {offsets = [0, 0, 0, 0], sizes = [1, 1, 2, 128], strides = [1, 1, 1, 1]} : vector<1x2x2x128xf32> to vector<1x1x2x128xf32>
    %123 = tpu.concatenate %121, %122 in 1 : vector<1x1x2x128xf32>, vector<1x1x2x128xf32> -> vector<1x2x2x128xf32>
    %cst_40 = arith.constant 0.000000e+00 : f32
    %124 = vector.broadcast %cst_40 : f32 to vector<1x2x1x128xf32>
    %125 = vector.extract_strided_slice %123 {offsets = [0, 0, 0, 0], sizes = [1, 2, 1, 128], strides = [1, 1, 1, 1]} : vector<1x2x2x128xf32> to vector<1x2x1x128xf32>
    %126 = tpu.concatenate %124, %125 in 2 : vector<1x2x1x128xf32>, vector<1x2x1x128xf32> -> vector<1x2x2x128xf32>
    %127 = vector.extract_strided_slice %1 {offsets = [0, 0], sizes = [1, 128], strides = [1, 1]} : vector<9x128xf32> to vector<1x128xf32>
    %128 = vector.shape_cast %127 : vector<1x128xf32> to vector<128xf32>
    %129 = vector.shape_cast %128 : vector<128xf32> to vector<1x1x1x128xf32>
    %130 = vector.broadcast %129 : vector<1x1x1x128xf32> to vector<1x2x2x128xf32>
    %131 = arith.mulf %126, %130 : vector<1x2x2x128xf32>
    %132 = arith.addf %120, %131 : vector<1x2x2x128xf32>
    %c0_41 = arith.constant 0 : index
    %c0_42 = arith.constant 0 : index
    %133 = vector.load %arg4[%c0_41, %c0_42] : memref<128x128xbf16, #tpu.memory_space<vmem>>, vector<128x128xbf16>
    %c0_43 = arith.constant 0 : index
    %c0_44 = arith.constant 0 : index
    %134 = vector.load %arg5[%c0_43, %c0_44] : memref<1x128xf32, #tpu.memory_space<vmem>>, vector<1x128xf32>
    %cst_45 = arith.constant 0.000000e+00 : f32
    %135 = vector.broadcast %cst_45 : f32 to vector<1x2x6x128xf32>
    %136 = tpu.concatenate %132, %135 in 2 : vector<1x2x2x128xf32>, vector<1x2x6x128xf32> -> vector<1x2x8x128xf32>
    %137 = vector.shape_cast %136 : vector<1x2x8x128xf32> to vector<16x128xf32>
    %138 = arith.truncf %137 : vector<16x128xf32> to vector<16x128xbf16>
    %cst_46 = arith.constant dense<0.000000e+00> : vector<16x128xf32>
    %139 = tpu.matmul %138, %133, %cst_46 {dimension_numbers = #tpu.dot_dimension_numbers<[1], [0], [0], [1], [0, 0, 1, 1], [], []>} : vector<16x128xbf16>, vector<128x128xbf16>, vector<16x128xf32> -> vector<16x128xf32>
    %140 = vector.broadcast %134 : vector<1x128xf32> to vector<16x128xf32>
    %141 = arith.addf %139, %140 : vector<16x128xf32>
    %cst_47 = arith.constant 0.000000e+00 : f32
    %142 = vector.broadcast %cst_47 : f32 to vector<16x128xf32>
    %143 = arith.maximumf %141, %142 : vector<16x128xf32>
    %144 = vector.shape_cast %143 : vector<16x128xf32> to vector<1x2x8x128xf32>
    %145 = vector.extract_strided_slice %144 {offsets = [0, 0, 0, 0], sizes = [1, 2, 2, 128], strides = [1, 1, 1, 1]} : vector<1x2x8x128xf32> to vector<1x2x2x128xf32>
    %146 = arith.addf %145, %0 : vector<1x2x2x128xf32>
    %c0_48 = arith.constant 0 : index
    %c0_49 = arith.constant 0 : index
    %c0_50 = arith.constant 0 : index
    %c0_51 = arith.constant 0 : index
    %147 = vector.load %arg6[%c0_48, %c0_49, %c0_50, %c0_51] : memref<1x2x2x128xf32, #tpu.memory_space<vmem>>, vector<1x2x2x128xf32>
    tpu.vector_store %arg6[%c0_48, %c0_49, %c0_50, %c0_51], %146 {strides = array<i32>} : memref<1x2x2x128xf32, #tpu.memory_space<vmem>>, vector<1x2x2x128xf32>,
    return
  }
  func.func @transform_0(%arg0: i32) -> (i32, i32, i32, i32) {
    %c0_i32 = arith.constant 0 : i32
    %c0_i32_0 = arith.constant 0 : i32
    %c0_i32_1 = arith.constant 0 : i32
    %c0_i32_2 = arith.constant 0 : i32
    return %arg0, %c0_i32, %c0_i32_0, %c0_i32_1 : i32, i32, i32, i32
  }
  func.func @transform_1(%arg0: i32) -> (i32, i32, i32, i32, i32) {
    %c0_i32 = arith.constant 0 : i32
    %c0_i32_0 = arith.constant 0 : i32
    %c0_i32_1 = arith.constant 0 : i32
    %c0_i32_2 = arith.constant 0 : i32
    %c0_i32_3 = arith.constant 0 : i32
    return %arg0, %c0_i32, %c0_i32_0, %c0_i32_1, %c0_i32_2 : i32, i32, i32, i32, i32
  }
  func.func @transform_2(%arg0: i32) -> (i32, i32) {
    %c0_i32 = arith.constant 0 : i32
    %c0_i32_0 = arith.constant 0 : i32
    %c0_i32_1 = arith.constant 0 : i32
    return %c0_i32, %c0_i32_0 : i32, i32
  }
  func.func @transform_3(%arg0: i32) -> (i32, i32) {
    %c0_i32 = arith.constant 0 : i32
    %c0_i32_0 = arith.constant 0 : i32
    %c0_i32_1 = arith.constant 0 : i32
    return %c0_i32, %c0_i32_0 : i32, i32
  }
  func.func @transform_4(%arg0: i32) -> (i32, i32) {
    %c0_i32 = arith.constant 0 : i32
    %c0_i32_0 = arith.constant 0 : i32
    %c0_i32_1 = arith.constant 0 : i32
    return %c0_i32, %c0_i32_0 : i32, i32
  }
  func.func @transform_5(%arg0: i32) -> (i32, i32, i32, i32) {
    %c0_i32 = arith.constant 0 : i32
    %c0_i32_0 = arith.constant 0 : i32
    %c0_i32_1 = arith.constant 0 : i32
    %c0_i32_2 = arith.constant 0 : i32
    return %arg0, %c0_i32, %c0_i32_0, %c0_i32_1 : i32, i32, i32, i32
  }
}

</mosaic_0001>

<llo_original>
// kernel: fpem_v2_forward.7
$region0: #{fpem_v2_forward.7}
  #allocation0 [shape = 'u32[]', space=smem, size = 0x4, offset = 0x4, fixed_abs, tag = 'smem constant byte address 0x4 - core index']
  #allocation1 [shape = 'u32[72,128]{1,0:T(1,128)}', space=vmem, size = 0x9000, scoped, tag = 'internal scratch']
  %s0 = inlined_call_operand.vmem [shape: f32[2,4,8,128], index: 0, kind: input, shape index: {}]
  %s1 = inlined_call_operand.vmem [shape: f32[2,8,8,128], index: 1, kind: input, shape index: {}]
  %s2 = inlined_call_operand.vmem [shape: f32[9,128], index: 2, kind: input, shape index: {}]
  %s3 = inlined_call_operand.vmem [shape: bf16[128,128], index: 3, kind: input, shape index: {}]
  %s4 = inlined_call_operand.vmem [shape: f32[1,128], index: 4, kind: input, shape index: {}]
  %s5 = inlined_call_operand.vmem [shape: f32[2,8,8,128], index: 5, kind: output, shape index: {}]
  %s6 = sld [smem:[#allocation0]]
  $region53: #{fpem_v2_forward.7} parent=0
    _
  %s8 = ssub.s32 1, %s6
  %s9 = scalar_select 0, %s8, %s6
  loop: start=0, step=1, limit=4
  $region2: #{fpem_v2_forward.7} parent=0 // loop_pre_header
    _
  $region3: #{fpem_v2_forward.7} parent=0 // loop_header
    %s11 = sphi 0, %s15
    %p12 = scmp.ge.s32.totalorder %s11, 4
    %s21 = sphi 0, %s23
    %s24 = sphi 0, %s21
    %s25 = sphi 0, %s24
    %s41 = sphi 0, %s25
    %s47 = sphi 0, %s49
    %s50 = sphi 0, %s47
    %s51 = sphi 0, %s50
    %s67 = sphi 0, %s51
    %s71 = sphi 0, %s71
    %s73 = sphi 0, %s71
    %s74 = sphi 0, %s73
    %s88 = sphi 0, %s74
    %s92 = sphi 0, %s92
    %s94 = sphi 0, %s92
    %s95 = sphi 0, %s94
    %s109 = sphi 0, %s95
    %s113 = sphi 0, %s113
    %s115 = sphi 0, %s113
    %s116 = sphi 0, %s115
    %s130 = sphi 0, %s116
    %s136 = sphi 0, %s138
    %s139 = sphi 0, %s136
    %s140 = sphi 0, %s139
    %s156 = sphi 0, %s140
  $region4: #{fpem_v2_forward.7} parent=0 // loop_header_branch
    %14 = sbr.rel (%p12) target = $region8
  $region5: #{fpem_v2_forward.7} parent=0 // loop_body
    %s16 = ssub.s32 %s11, 1
    %s17 = ssub.s32 %s11, 2
    %s18 = sadd.s32 %s11, 1
    %s19 = ssub.s32 %s11, %s18
    %p20 = scmp.eq.s32.totalorder %s19, 0
    %s22 = sadd.s32 %s21, 1
    %s23 = scalar_select %p20, %s21, %s22
    %p26 = pneg %p20
    %p27 = scmp.eq.s32.totalorder %s11, 1
    %p28 = por %p26, %p27
    %p29 = scmp.ne.s32.totalorder %s21, %s24
    %p30 = scmp.eq.s32.totalorder %s11, 0
    %p31 = por %p29, %p30
    %p32 = scmp.ne.s32.totalorder %s21, %s24
    %p33 = scmp.eq.s32.totalorder %s16, 1
    %p34 = por %p32, %p33
    %p35 = scmp.ne.s32.totalorder %s24, %s25
    %p36 = scmp.eq.s32.totalorder %s16, 0
    %p37 = por %p35, %p36
    %p38 = scmp.ne.s32.totalorder %s24, %s25
    %p39 = scmp.eq.s32.totalorder %s17, 1
    %p40 = por %p38, %p39
    %p42 = scmp.ne.s32.totalorder %s25, %s41
    %p43 = scmp.eq.s32.totalorder %s17, 0
    %p44 = por %p42, %p43
    %s45 = ssub.s32 %s11, %s18
    %p46 = scmp.eq.s32.totalorder %s45, 0
    %s48 = sadd.s32 %s47, 1
    %s49 = scalar_select %p46, %s47, %s48
    %p52 = pneg %p46
    %p53 = scmp.eq.s32.totalorder %s11, 1
    %p54 = por %p52, %p53
    %p55 = scmp.ne.s32.totalorder %s47, %s50
    %p56 = scmp.eq.s32.totalorder %s11, 0
    %p57 = por %p55, %p56
    %p58 = scmp.ne.s32.totalorder %s47, %s50
    %p59 = scmp.eq.s32.totalorder %s16, 1
    %p60 = por %p58, %p59
    %p61 = scmp.ne.s32.totalorder %s50, %s51
    %p62 = scmp.eq.s32.totalorder %s16, 0
    %p63 = por %p61, %p62
    %p64 = scmp.ne.s32.totalorder %s50, %s51
    %p65 = scmp.eq.s32.totalorder %s17, 1
    %p66 = por %p64, %p65
    %p68 = scmp.ne.s32.totalorder %s51, %s67
    %p69 = scmp.eq.s32.totalorder %s17, 0
    %p70 = por %p68, %p69
    %s72 = sadd.s32 %s71, 1
    %p75 = scmp.eq.s32.totalorder %s11, 1
    %p76 = scmp.ne.s32.totalorder %s71, %s73
    %p77 = scmp.eq.s32.totalorder %s11, 0
    %p78 = por %p76, %p77
    %p79 = scmp.ne.s32.totalorder %s71, %s73
    %p80 = scmp.eq.s32.totalorder %s16, 1
    %p81 = por %p79, %p80
    %p82 = scmp.ne.s32.totalorder %s73, %s74
    %p83 = scmp.eq.s32.totalorder %s16, 0
    %p84 = por %p82, %p83
    %p85 = scmp.ne.s32.totalorder %s73, %s74
    %p86 = scmp.eq.s32.totalorder %s17, 1
    %p87 = por %p85, %p86
    %p89 = scmp.ne.s32.totalorder %s74, %s88
    %p90 = scmp.eq.s32.totalorder %s17, 0
    %p91 = por %p89, %p90
    %s93 = sadd.s32 %s92, 1
    %p96 = scmp.eq.s32.totalorder %s11, 1
    %p97 = scmp.ne.s32.totalorder %s92, %s94
    %p98 = scmp.eq.s32.totalorder %s11, 0
    %p99 = por %p97, %p98
    %p100 = scmp.ne.s32.totalorder %s92, %s94
    %p101 = scmp.eq.s32.totalorder %s16, 1
    %p102 = por %p100, %p101
    %p103 = scmp.ne.s32.totalorder %s94, %s95
    %p104 = scmp.eq.s32.totalorder %s16, 0
    %p105 = por %p103, %p104
    %p106 = scmp.ne.s32.totalorder %s94, %s95
    %p107 = scmp.eq.s32.totalorder %s17, 1
    %p108 = por %p106, %p107
    %p110 = scmp.ne.s32.totalorder %s95, %s109
    %p111 = scmp.eq.s32.totalorder %s17, 0
    %p112 = por %p110, %p111
    %s114 = sadd.s32 %s113, 1
    %p117 = scmp.eq.s32.totalorder %s11, 1
    %p118 = scmp.ne.s32.totalorder %s113, %s115
    %p119 = scmp.eq.s32.totalorder %s11, 0
    %p120 = por %p118, %p119
    %p121 = scmp.ne.s32.totalorder %s113, %s115
    %p122 = scmp.eq.s32.totalorder %s16, 1
    %p123 = por %p121, %p122
    %p124 = scmp.ne.s32.totalorder %s115, %s116
    %p125 = scmp.eq.s32.totalorder %s16, 0
    %p126 = por %p124, %p125
    %p127 = scmp.ne.s32.totalorder %s115, %s116
    %p128 = scmp.eq.s32.totalorder %s17, 1
    %p129 = por %p127, %p128
    %p131 = scmp.ne.s32.totalorder %s116, %s130
    %p132 = scmp.eq.s32.totalorder %s17, 0
    %p133 = por %p131, %p132
    %s134 = ssub.s32 %s11, %s18
    %p135 = scmp.eq.s32.totalorder %s134, 0
    %s137 = sadd.s32 %s136, 1
    %s138 = scalar_select %p135, %s136, %s137
    %p141 = pneg %p135
    %p142 = scmp.eq.s32.totalorder %s11, 1
    %p143 = por %p141, %p142
    %p144 = scmp.ne.s32.totalorder %s136, %s139
    %p145 = scmp.eq.s32.totalorder %s11, 0
    %p146 = por %p144, %p145
    %p147 = scmp.ne.s32.totalorder %s136, %s139
    %p148 = scmp.eq.s32.totalorder %s16, 1
    %p149 = por %p147, %p148
    %p150 = scmp.ne.s32.totalorder %s139, %s140
    %p151 = scmp.eq.s32.totalorder %s16, 0
    %p152 = por %p150, %p151
    %p153 = scmp.ne.s32.totalorder %s139, %s140
    %p154 = scmp.eq.s32.totalorder %s17, 1
    %p155 = por %p153, %p154
    %p157 = scmp.ne.s32.totalorder %s140, %s156
    %p158 = scmp.eq.s32.totalorder %s17, 0
    %p159 = por %p157, %p158
    %p160 = scmp.le.s32.totalorder 1, %s11
    %p161 = scmp.lt.s32.totalorder %s11, 3
    %p162 = pnand %p160, %p161
    %p163 = pneg %p162
    // Predicated region
    $region9: #{fpem_v2_forward.7} parent=5 // pred_check
      _
    $region10: #{fpem_v2_forward.7} parent=5 // pred_check_branch
      %165 = sbr.rel (%p162) target = $region12
    $region11: #{fpem_v2_forward.7} parent=5 // pred_region
      %s166 = ssub.s32 %s11, 1
      // Predicated region
      $region13: #{fpem_v2_forward.7} parent=11 // pred_check
        %p167 = pneg %p84
      $region14: #{fpem_v2_forward.7} parent=11 // pred_check_branch
        %169 = sbr.rel (%p167) target = $region16
      $region15: #{fpem_v2_forward.7} parent=11 // pred_region
        _
      $region16: #{fpem_v2_forward.7} parent=11 // pred_fallthru
        _
      // Predicated region
      $region17: #{fpem_v2_forward.7} parent=11 // pred_check
        %p170 = pneg %p105
      $region18: #{fpem_v2_forward.7} parent=11 // pred_check_branch
        %172 = sbr.rel (%p170) target = $region20
      $region19: #{fpem_v2_forward.7} parent=11 // pred_region
        _
      $region20: #{fpem_v2_forward.7} parent=11 // pred_fallthru
        _
      // Predicated region
      $region21: #{fpem_v2_forward.7} parent=11 // pred_check
        %p173 = pneg %p126
      $region22: #{fpem_v2_forward.7} parent=11 // pred_check_branch
        %175 = sbr.rel (%p173) target = $region24
      $region23: #{fpem_v2_forward.7} parent=11 // pred_region
        _
      $region24: #{fpem_v2_forward.7} parent=11 // pred_fallthru
        _
    $region12: #{fpem_v2_forward.7} parent=5 // pred_fallthru
      _
    %p176 = scmp.lt.s32.totalorder %s11, 2
    // Predicated region
    $region25: #{fpem_v2_forward.7} parent=5 // pred_check
      %p177 = pneg %p176
    $region26: #{fpem_v2_forward.7} parent=5 // pred_check_branch
      %179 = sbr.rel (%p177) target = $region28
    $region27: #{fpem_v2_forward.7} parent=5 // pred_region
      // Predicated region
      $region29: #{fpem_v2_forward.7} parent=27 // pred_check
        %p180 = pneg %p31
      $region30: #{fpem_v2_forward.7} parent=27 // pred_check_branch
        %182 = sbr.rel (%p180) target = $region32
      $region31: #{fpem_v2_forward.7} parent=27 // pred_region
        %p183 = scmp.lt.s32.totalorder %s11, 1
        %s184 = scalar_select %p183, %s11, 1
        %s185 = smul.addr %s184, 4
        %s186 = smul.addr %s185, 8
        %s187 = scalar_lea.vmem %s0, %s186
      $region32: #{fpem_v2_forward.7} parent=27 // pred_fallthru
        _
      // Predicated region
      $region33: #{fpem_v2_forward.7} parent=27 // pred_check
        %p188 = pneg %p57
      $region34: #{fpem_v2_forward.7} parent=27 // pred_check_branch
        %190 = sbr.rel (%p188) target = $region36
      $region35: #{fpem_v2_forward.7} parent=27 // pred_region
        %p191 = scmp.lt.s32.totalorder %s11, 1
        %s192 = scalar_select %p191, %s11, 1
        %s193 = smul.addr %s192, 8
        %s194 = smul.addr %s193, 8
        %s195 = scalar_lea.vmem %s1, %s194
      $region36: #{fpem_v2_forward.7} parent=27 // pred_fallthru
        _
    $region28: #{fpem_v2_forward.7} parent=5 // pred_fallthru
      _
    %p196 = scmp.le.s32.totalorder 1, %s11
    %p197 = scmp.lt.s32.totalorder %s11, 3
    %p198 = pnand %p196, %p197
    %p199 = pneg %p198
    // Predicated region
    $region37: #{fpem_v2_forward.7} parent=5 // pred_check
      _
    $region38: #{fpem_v2_forward.7} parent=5 // pred_check_branch
      %201 = sbr.rel (%p198) target = $region40
    $region39: #{fpem_v2_forward.7} parent=5 // pred_region
      %s202 = ssub.s32 %s11, 1
      %p203 = scmp.lt.s32.totalorder %s16, 1
      %s204 = scalar_select %p203, %s16, 1
      %s205 = smul.addr %s204, 4
      %s206 = smul.addr %s205, 8
      %s207 = scalar_lea.vmem %s0, %s206
      %p208 = pneg %p37
      %p209 = pneg %p34
      %p210 = scmp.lt.s32.totalorder %s16, 1
      %s211 = scalar_select %p210, %s16, 1
      %s212 = smul.addr %s211, 8
      %s213 = smul.addr %s212, 8
      %s214 = scalar_lea.vmem %s1, %s213
      %p215 = pneg %p63
      %p216 = pneg %p60
      %p217 = pneg %p84
      %p218 = pneg %p81
      %p219 = pneg %p105
      %p220 = pneg %p102
      %p221 = pneg %p126
      %p222 = pneg %p123
      %p223 = pneg %p152
      %p224 = pneg %p149
      %p225 = scmp.lt.s32.totalorder %s16, 1
      %s226 = scalar_select %p225, %s16, 1
      %s227 = smul.addr %s226, 8
      %s228 = smul.addr %s227, 8
      %s229 = scalar_lea.vmem %s5, %s228
      %p230 = scmp.lt.s32.totalorder %s16, 1
      %s231 = scalar_select %p230, %s16, 1
      %s232 = smul.addr %s231, 4
      %s233 = smul.addr %s232, 8
      %s234 = scalar_lea.vmem %s0, %s233
      %p235 = scmp.lt.s32.totalorder %s16, 1
      %s236 = scalar_select %p235, %s16, 1
      %s237 = smul.addr %s236, 8
      %s238 = smul.addr %s237, 8
      %s239 = scalar_lea.vmem %s1, %s238
      %p240 = scmp.lt.s32.totalorder %s16, 1
      %s241 = scalar_select %p240, %s16, 1
      %s242 = smul.addr %s241, 8
      %s243 = smul.addr %s242, 8
      %s244 = scalar_lea.vmem %s5, %s243
      %v245 = vld [vmem:[%s239] sm:$0xff]
      %v246 = vld [vmem:[%s239 + $0x8] sm:$0xff]
      %v247 = vld [vmem:[%s239 + $0x10] sm:$0xff]
      %v248 = vld [vmem:[%s239 + $0x18] sm:$0xff]
      %v249 = vld [vmem:[%s239 + $0x20] sm:$0xff]
      %v250 = vld [vmem:[%s239 + $0x28] sm:$0xff]
      %v251 = vld [vmem:[%s239 + $0x30] sm:$0xff]
      %v252 = vld [vmem:[%s239 + $0x38] sm:$0xff]
      %v253 = vld [vmem:[%s234] sm:$0xff]
      %v254 = vld [vmem:[%s234 + $0x8] sm:$0xff]
      %v255 = vld [vmem:[%s234 + $0x10] sm:$0xff]
      %v256 = vld [vmem:[%s234 + $0x18] sm:$0xff]
      %v257 = vld [vmem:[%s2] sm:$0xff]
      %v258 = vld [vmem:[%s2 + $0x8] sm:$0x1]
      %v259 = vmul.f32 %v253, 0.75
      %v260 = vmul.f32 %v254, 0.75
      %v261 = vmul.f32 %v255, 0.75
      %v262 = vmul.f32 %v256, 0.75
      %v263 = vmul.f32 %v253, 0.25
      %v264 = vmul.f32 %v254, 0.25
      %v265 = vmul.f32 %v255, 0.25
      %v266 = vadd.f32 %v259, %v263
      %v267 = vadd.f32 %v260, %v263
      %v268 = vadd.f32 %v261, %v264
      %v269 = vadd.f32 %v262, %v265
      %v270 = vmul.f32 %v256, 0.25
      %v271 = vadd.f32 %v259, %v264
      %v272 = vadd.f32 %v260, %v265
      %v273 = vadd.f32 %v261, %v270
      %v274 = vadd.f32 %v262, %v270
      %v275 = vadd.f32 %v266, %v245
      %v276 = vadd.f32 %v271, %v246
      %v277 = vadd.f32 %v267, %v247
      %v278 = vadd.f32 %v272, %v248
      %v279 = vadd.f32 %v268, %v249
      %v280 = vadd.f32 %v273, %v250
      %v281 = vadd.f32 %v269, %v251
      %v282 = vadd.f32 %v274, %v252
      %v291 = vrot.slane 0.0, 7
      %v292 = vrot.slane %v275, 7
      %v293 = vrot.slane %v276, 7
      %v294 = vrot.slane %v277, 7
      %v295 = vrot.slane %v278, 7
      %v296 = vrot.slane %v279, 7
      %v297 = vrot.slane %v280, 7
      %v298 = vrot.slane %v281, 7
      %vm307 = vcmask 1040384
      %v308 = vsel %vm307, 0.0, %v291
      %v309 = vsel %vm307, 0.0, %v292
      %v310 = vsel %vm307, 0.0, %v293
      %v311 = vsel %vm307, 0.0, %v294
      %v312 = vsel %vm307, 0.0, %v295
      %v313 = vsel %vm307, 0.0, %v296
      %v314 = vsel %vm307, 0.0, %v297
      %v315 = vsel %vm307, 0.0, %v298
      %v316 = vperm.slane %v257, 0
      %v317 = vmul.f32 %v308, %v316
      %v318 = vmul.f32 %v309, %v316
      %v319 = vmul.f32 %v310, %v316
      %v320 = vmul.f32 %v311, %v316
      %v321 = vmul.f32 %v312, %v316
      %v322 = vmul.f32 %v313, %v316
      %v323 = vmul.f32 %v314, %v316
      %v324 = vmul.f32 %v315, %v316
      %v325 = vperm.slane %v257, 1
      %v326 = vmul.f32 %v325, 0.0
      %v327 = vmul.f32 %v275, %v325
      %v328 = vmul.f32 %v276, %v325
      %v329 = vmul.f32 %v277, %v325
      %v330 = vmul.f32 %v278, %v325
      %v331 = vmul.f32 %v279, %v325
      %v332 = vmul.f32 %v280, %v325
      %v333 = vmul.f32 %v281, %v325
      %v334 = vadd.f32 %v317, %v326
      %v335 = vadd.f32 %v318, %v327
      %v336 = vadd.f32 %v319, %v328
      %v337 = vadd.f32 %v320, %v329
      %v338 = vadd.f32 %v321, %v330
      %v339 = vadd.f32 %v322, %v331
      %v340 = vadd.f32 %v323, %v332
      %v341 = vadd.f32 %v324, %v333
      %v342 = vrot.slane 0.0, 1
      %v343 = vrot.slane %v275, 1
      %v344 = vrot.slane %v276, 1
      %v345 = vrot.slane %v277, 1
      %v346 = vrot.slane %v278, 1
      %v347 = vrot.slane %v279, 1
      %v348 = vrot.slane %v280, 1
      %v349 = vrot.slane %v281, 1
      %vm358 = vcmask 1046528
      %v359 = vsel %vm358, %v342, 0.0
      %v360 = vsel %vm358, %v343, 0.0
      %v361 = vsel %vm358, %v344, 0.0
      %v362 = vsel %vm358, %v345, 0.0
      %v363 = vsel %vm358, %v346, 0.0
      %v364 = vsel %vm358, %v347, 0.0
      %v365 = vsel %vm358, %v348, 0.0
      %v366 = vsel %vm358, %v349, 0.0
      %v367 = vperm.slane %v257, 2
      %v368 = vmul.f32 %v359, %v367
      %v369 = vmul.f32 %v360, %v367
      %v370 = vmul.f32 %v361, %v367
      %v371 = vmul.f32 %v362, %v367
      %v372 = vmul.f32 %v363, %v367
      %v373 = vmul.f32 %v364, %v367
      %v374 = vmul.f32 %v365, %v367
      %v375 = vmul.f32 %v366, %v367
      %v376 = vadd.f32 %v334, %v368
      %v377 = vadd.f32 %v335, %v369
      %v378 = vadd.f32 %v336, %v370
      %v379 = vadd.f32 %v337, %v371
      %v380 = vadd.f32 %v338, %v372
      %v381 = vadd.f32 %v339, %v373
      %v382 = vadd.f32 %v340, %v374
      %v383 = vadd.f32 %v341, %v375
      %v385 = vrot.slane %v282, 7
      %v387 = vsel %vm307, 0.0, %v385
      %v388 = vperm.slane %v257, 3
      %v389 = vmul.f32 %v309, %v388
      %v390 = vmul.f32 %v310, %v388
      %v391 = vmul.f32 %v311, %v388
      %v392 = vmul.f32 %v312, %v388
      %v393 = vmul.f32 %v313, %v388
      %v394 = vmul.f32 %v314, %v388
      %v395 = vmul.f32 %v315, %v388
      %v396 = vmul.f32 %v387, %v388
      %v397 = vadd.f32 %v376, %v389
      %v398 = vadd.f32 %v377, %v390
      %v399 = vadd.f32 %v378, %v391
      %v400 = vadd.f32 %v379, %v392
      %v401 = vadd.f32 %v380, %v393
      %v402 = vadd.f32 %v381, %v394
      %v403 = vadd.f32 %v382, %v395
      %v404 = vadd.f32 %v383, %v396
      %v405 = vperm.slane %v257, 4
      %v406 = vmul.f32 %v275, %v405
      %v407 = vmul.f32 %v276, %v405
      %v408 = vmul.f32 %v277, %v405
      %v409 = vmul.f32 %v278, %v405
      %v410 = vmul.f32 %v279, %v405
      %v411 = vmul.f32 %v280, %v405
      %v412 = vmul.f32 %v281, %v405
      %v413 = vmul.f32 %v282, %v405
      %v414 = vadd.f32 %v397, %v406
      %v415 = vadd.f32 %v398, %v407
      %v416 = vadd.f32 %v399, %v408
      %v417 = vadd.f32 %v400, %v409
      %v418 = vadd.f32 %v401, %v410
      %v419 = vadd.f32 %v402, %v411
      %v420 = vadd.f32 %v403, %v412
      %v421 = vadd.f32 %v404, %v413
      %v422 = vrot.slane %v282, 1
      %v424 = vsel %vm358, %v422, 0.0
      %v425 = vperm.slane %v257, 5
      %v426 = vmul.f32 %v360, %v425
      %v427 = vmul.f32 %v361, %v425
      %v428 = vmul.f32 %v362, %v425
      %v429 = vmul.f32 %v363, %v425
      %v430 = vmul.f32 %v364, %v425
      %v431 = vmul.f32 %v365, %v425
      %v432 = vmul.f32 %v366, %v425
      %v433 = vmul.f32 %v424, %v425
      %v434 = vadd.f32 %v414, %v426
      %v435 = vadd.f32 %v415, %v427
      %v436 = vadd.f32 %v416, %v428
      %v437 = vadd.f32 %v417, %v429
      %v438 = vadd.f32 %v418, %v430
      %v439 = vadd.f32 %v419, %v431
      %v440 = vadd.f32 %v420, %v432
      %v441 = vadd.f32 %v421, %v433
      %v442 = vperm.slane %v257, 6
      %v443 = vmul.f32 %v310, %v442
      %v444 = vmul.f32 %v311, %v442
      %v445 = vmul.f32 %v312, %v442
      %v446 = vmul.f32 %v313, %v442
      %v447 = vmul.f32 %v314, %v442
      %v448 = vmul.f32 %v315, %v442
      %v449 = vmul.f32 %v387, %v442
      %v450 = vmul.f32 %v308, %v442
      %v451 = vadd.f32 %v434, %v443
      %v452 = vadd.f32 %v435, %v444
      %v453 = vadd.f32 %v436, %v445
      %v454 = vadd.f32 %v437, %v446
      %v455 = vadd.f32 %v438, %v447
      %v456 = vadd.f32 %v439, %v448
      %v457 = vadd.f32 %v440, %v449
      %v458 = vadd.f32 %v441, %v450
      %v459 = vperm.slane %v257, 7
      %v460 = vmul.f32 %v276, %v459
      %v461 = vmul.f32 %v277, %v459
      %v462 = vmul.f32 %v278, %v459
      %v463 = vmul.f32 %v279, %v459
      %v464 = vmul.f32 %v280, %v459
      %v465 = vmul.f32 %v281, %v459
      %v466 = vmul.f32 %v282, %v459
      %v467 = vmul.f32 %v459, 0.0
      %v468 = vadd.f32 %v451, %v460
      %v469 = vadd.f32 %v452, %v461
      %v470 = vadd.f32 %v453, %v462
      %v471 = vadd.f32 %v454, %v463
      %v472 = vadd.f32 %v455, %v464
      %v473 = vadd.f32 %v456, %v465
      %v474 = vadd.f32 %v457, %v466
      %v475 = vadd.f32 %v458, %v467
      %v476 = vperm.slane %v258, 0
      %v477 = vmul.f32 %v361, %v476
      %v478 = vmul.f32 %v362, %v476
      %v479 = vmul.f32 %v363, %v476
      %v480 = vmul.f32 %v364, %v476
      %v481 = vmul.f32 %v365, %v476
      %v482 = vmul.f32 %v366, %v476
      %v483 = vmul.f32 %v424, %v476
      %v484 = vmul.f32 %v359, %v476
      %v485 = vadd.f32 %v468, %v477
      %v486 = vadd.f32 %v469, %v478
      %v487 = vadd.f32 %v470, %v479
      %v488 = vadd.f32 %v471, %v480
      %v489 = vadd.f32 %v472, %v481
      %v490 = vadd.f32 %v473, %v482
      %v491 = vadd.f32 %v474, %v483
      %v492 = vadd.f32 %v475, %v484
      %v493 = vld [vmem:[%s3] sm:$0xf]
      %v494 = vld [vmem:[%s3 + $0x4] sm:$0xf]
      %v495 = vld [vmem:[%s3 + $0x8] sm:$0xf]
      %v496 = vld [vmem:[%s3 + $0xc] sm:$0xf]
      %v497 = vld [vmem:[%s3 + $0x10] sm:$0xf]
      %v498 = vld [vmem:[%s3 + $0x14] sm:$0xf]
      %v499 = vld [vmem:[%s3 + $0x18] sm:$0xf]
      %v500 = vld [vmem:[%s3 + $0x1c] sm:$0xf]
      %v501 = vld [vmem:[%s3 + $0x20] sm:$0xf]
      %v502 = vld [vmem:[%s3 + $0x24] sm:$0xf]
      %v503 = vld [vmem:[%s3 + $0x28] sm:$0xf]
      %v504 = vld [vmem:[%s3 + $0x2c] sm:$0xf]
      %v505 = vld [vmem:[%s3 + $0x30] sm:$0xf]
      %v506 = vld [vmem:[%s3 + $0x34] sm:$0xf]
      %v507 = vld [vmem:[%s3 + $0x38] sm:$0xf]
      %v508 = vld [vmem:[%s3 + $0x3c] sm:$0xf]
      %v509 = vld [vmem:[%s4] sm:$0x1]
      %v510 = vpack.c.bf16 %v486, %v485
      %v511 = vpack.c.bf16 %v488, %v487
      %v512 = vpack.c.bf16 %v490, %v489
      %v513 = vpack.c.bf16 %v492, %v491
      %v515 = vperm.slane %v509, 0
      %v533 = vunpack.c.l.b16 %v493
      %v534 = vunpack.c.l.b16 %v494
      %v535 = vunpack.c.l.b16 %v495
      %v536 = vunpack.c.l.b16 %v496
      %v537 = vunpack.c.l.b16 %v497
      %v538 = vunpack.c.l.b16 %v498
      %v539 = vunpack.c.l.b16 %v499
      %v540 = vunpack.c.l.b16 %v500
      %v541 = vunpack.c.l.b16 %v501
      %v542 = vunpack.c.l.b16 %v502
      %v543 = vunpack.c.l.b16 %v503
      %v544 = vunpack.c.l.b16 %v504
      %v545 = vunpack.c.l.b16 %v505
      %v546 = vunpack.c.l.b16 %v506
      %v547 = vunpack.c.l.b16 %v507
      %v548 = vunpack.c.l.b16 %v508
      %v549 = vpack.c.b16 %v534, %v533
      %v550 = vpack.c.b16 %v536, %v535
      %v551 = vpack.c.b16 %v538, %v537
      %v552 = vpack.c.b16 %v540, %v539
      %v553 = vpack.c.b16 %v542, %v541
      %v554 = vpack.c.b16 %v544, %v543
      %v555 = vpack.c.b16 %v546, %v545
      %v556 = vpack.c.b16 %v548, %v547
      %565 = vmatpush.bf16.msra.mxu0 %v556
      %566 = vmatpush.bf16.msra.mxu0 %v555
      %567 = vmatpush.bf16.msra.mxu0 %v554
      %568 = vmatpush.bf16.msra.mxu0 %v553
      %569 = vmatpush.bf16.msra.mxu0 %v552
      %570 = vmatpush.bf16.msra.mxu0 %v551
      %571 = vmatpush.bf16.msra.mxu0 %v550
      %572 = vmatpush.bf16.msra.mxu0 %v549
      %573 = vmatmul.bf16.gmra.mxu0 %v510
      %v574 = vpop.f32.mrf.mxu0
      %v575 = vadd.f32 %v515, %v574
      %v576 = vpop.f32.mrf.mxu0
      %v577 = vadd.f32 %v515, %v576
      %578 = vmatmul.bf16.gmra.mxu0 %v511
      %v579 = vpop.f32.mrf.mxu0
      %v580 = vadd.f32 %v515, %v579
      %v581 = vpop.f32.mrf.mxu0
      %v582 = vadd.f32 %v515, %v581
      %583 = vmatmul.bf16.gmra.mxu0 %v512
      %v584 = vpop.f32.mrf.mxu0
      %v585 = vadd.f32 %v515, %v584
      %v586 = vpop.f32.mrf.mxu0
      %v587 = vadd.f32 %v515, %v586
      %588 = vmatmul.bf16.gmra.mxu0 %v513
      %v589 = vpop.f32.mrf.mxu0
      %v590 = vadd.f32 %v515, %v589
      %v591 = vpop.f32.mrf.mxu0
      %v592 = vadd.f32 %v515, %v591
      %593 = vdwg.mxu0
      %v594 = vmax.f32 %v575, 0.0
      %v595 = vmax.f32 %v577, 0.0
      %v596 = vmax.f32 %v580, 0.0
      %v597 = vmax.f32 %v582, 0.0
      %v598 = vmax.f32 %v585, 0.0
      %v599 = vmax.f32 %v587, 0.0
      %v600 = vmax.f32 %v590, 0.0
      %v601 = vmax.f32 %v592, 0.0
      %602 = vst [vmem:[%s244] sm:$0xff] %v594
      %603 = vst [vmem:[%s244 + $0x8] sm:$0xff] %v595
      %604 = vst [vmem:[%s244 + $0x10] sm:$0xff] %v596
      %605 = vst [vmem:[%s244 + $0x18] sm:$0xff] %v597
      %606 = vst [vmem:[%s244 + $0x20] sm:$0xff] %v598
      %607 = vst [vmem:[%s244 + $0x28] sm:$0xff] %v599
      %608 = vst [vmem:[%s244 + $0x30] sm:$0xff] %v600
      %609 = vst [vmem:[%s244 + $0x38] sm:$0xff] %v601
      %p610 = scmp.lt.s32.totalorder %s16, 1
      %s611 = scalar_select %p610, %s16, 1
      %s612 = smul.addr %s611, 8
      %s613 = smul.addr %s612, 8
      %s614 = scalar_lea.vmem %s5, %s613
      // Predicated region
      $region41: #{fpem_v2_forward.7} parent=39 // pred_check
        %p615 = pneg %p149
      $region42: #{fpem_v2_forward.7} parent=39 // pred_check_branch
        %617 = sbr.rel (%p615) target = $region44
      $region43: #{fpem_v2_forward.7} parent=39 // pred_region
        _
      $region44: #{fpem_v2_forward.7} parent=39 // pred_fallthru
        _
    $region40: #{fpem_v2_forward.7} parent=5 // pred_fallthru
      _
    %p618 = scmp.le.s32.totalorder 2, %s11
    // Predicated region
    $region45: #{fpem_v2_forward.7} parent=5 // pred_check
      %p619 = pneg %p618
    $region46: #{fpem_v2_forward.7} parent=5 // pred_check_branch
      %621 = sbr.rel (%p619) target = $region48
    $region47: #{fpem_v2_forward.7} parent=5 // pred_region
      %s622 = ssub.s32 %s11, 2
      // Predicated region
      $region49: #{fpem_v2_forward.7} parent=47 // pred_check
        %p623 = pneg %p155
      $region50: #{fpem_v2_forward.7} parent=47 // pred_check_branch
        %625 = sbr.rel (%p623) target = $region52
      $region51: #{fpem_v2_forward.7} parent=47 // pred_region
        %p626 = scmp.lt.s32.totalorder %s17, 1
        %s627 = scalar_select %p626, %s17, 1
        %s628 = smul.addr %s627, 8
        %s629 = smul.addr %s628, 8
        %s630 = scalar_lea.vmem %s5, %s629
      $region52: #{fpem_v2_forward.7} parent=47 // pred_fallthru
        _
    $region48: #{fpem_v2_forward.7} parent=5 // pred_fallthru
      _
  $region6: #{fpem_v2_forward.7} parent=0 // loop_footer
    %s15 = sadd.s32 1, %s11
  $region7: #{fpem_v2_forward.7} parent=0 // loop_footer_branch
    %10 = sbr.rel target = $region3
  $region8: #{fpem_v2_forward.7} parent=0 // loop_exit
    _

// kernel: fpem_v2_forward.6
$region0: #{fpem_v2_forward.6}
  #allocation0 [shape = 'u32[]', space=smem, size = 0x4, offset = 0x4, fixed_abs, tag = 'smem constant byte address 0x4 - core index']
  #allocation1 [shape = 'u32[72,128]{1,0:T(1,128)}', space=vmem, size = 0x9000, scoped, tag = 'internal scratch']
  %s0 = inlined_call_operand.vmem [shape: f32[2,2,4,128], index: 0, kind: input, shape index: {}]
  %s1 = inlined_call_operand.vmem [shape: f32[2,4,4,128], index: 1, kind: input, shape index: {}]
  %s2 = inlined_call_operand.vmem [shape: f32[9,128], index: 2, kind: input, shape index: {}]
  %s3 = inlined_call_operand.vmem [shape: bf16[128,128], index: 3, kind: input, shape index: {}]
  %s4 = inlined_call_operand.vmem [shape: f32[1,128], index: 4, kind: input, shape index: {}]
  %s5 = inlined_call_operand.vmem [shape: f32[2,4,4,128], index: 5, kind: output, shape index: {}]
  %s6 = sld [smem:[#allocation0]]
  $region53: #{fpem_v2_forward.6} parent=0
    _
  %s8 = ssub.s32 1, %s6
  %s9 = scalar_select 0, %s8, %s6
  loop: start=0, step=1, limit=4
  $region2: #{fpem_v2_forward.6} parent=0 // loop_pre_header
    _
  $region3: #{fpem_v2_forward.6} parent=0 // loop_header
    %s11 = sphi 0, %s15
    %p12 = scmp.ge.s32.totalorder %s11, 4
    %s21 = sphi 0, %s23
    %s24 = sphi 0, %s21
    %s25 = sphi 0, %s24
    %s41 = sphi 0, %s25
    %s47 = sphi 0, %s49
    %s50 = sphi 0, %s47
    %s51 = sphi 0, %s50
    %s67 = sphi 0, %s51
    %s71 = sphi 0, %s71
    %s73 = sphi 0, %s71
    %s74 = sphi 0, %s73
    %s88 = sphi 0, %s74
    %s92 = sphi 0, %s92
    %s94 = sphi 0, %s92
    %s95 = sphi 0, %s94
    %s109 = sphi 0, %s95
    %s113 = sphi 0, %s113
    %s115 = sphi 0, %s113
    %s116 = sphi 0, %s115
    %s130 = sphi 0, %s116
    %s136 = sphi 0, %s138
    %s139 = sphi 0, %s136
    %s140 = sphi 0, %s139
    %s156 = sphi 0, %s140
  $region4: #{fpem_v2_forward.6} parent=0 // loop_header_branch
    %14 = sbr.rel (%p12) target = $region8
  $region5: #{fpem_v2_forward.6} parent=0 // loop_body
    %s16 = ssub.s32 %s11, 1
    %s17 = ssub.s32 %s11, 2
    %s18 = sadd.s32 %s11, 1
    %s19 = ssub.s32 %s11, %s18
    %p20 = scmp.eq.s32.totalorder %s19, 0
    %s22 = sadd.s32 %s21, 1
    %s23 = scalar_select %p20, %s21, %s22
    %p26 = pneg %p20
    %p27 = scmp.eq.s32.totalorder %s11, 1
    %p28 = por %p26, %p27
    %p29 = scmp.ne.s32.totalorder %s21, %s24
    %p30 = scmp.eq.s32.totalorder %s11, 0
    %p31 = por %p29, %p30
    %p32 = scmp.ne.s32.totalorder %s21, %s24
    %p33 = scmp.eq.s32.totalorder %s16, 1
    %p34 = por %p32, %p33
    %p35 = scmp.ne.s32.totalorder %s24, %s25
    %p36 = scmp.eq.s32.totalorder %s16, 0
    %p37 = por %p35, %p36
    %p38 = scmp.ne.s32.totalorder %s24, %s25
    %p39 = scmp.eq.s32.totalorder %s17, 1
    %p40 = por %p38, %p39
    %p42 = scmp.ne.s32.totalorder %s25, %s41
    %p43 = scmp.eq.s32.totalorder %s17, 0
    %p44 = por %p42, %p43
    %s45 = ssub.s32 %s11, %s18
    %p46 = scmp.eq.s32.totalorder %s45, 0
    %s48 = sadd.s32 %s47, 1
    %s49 = scalar_select %p46, %s47, %s48
    %p52 = pneg %p46
    %p53 = scmp.eq.s32.totalorder %s11, 1
    %p54 = por %p52, %p53
    %p55 = scmp.ne.s32.totalorder %s47, %s50
    %p56 = scmp.eq.s32.totalorder %s11, 0
    %p57 = por %p55, %p56
    %p58 = scmp.ne.s32.totalorder %s47, %s50
    %p59 = scmp.eq.s32.totalorder %s16, 1
    %p60 = por %p58, %p59
    %p61 = scmp.ne.s32.totalorder %s50, %s51
    %p62 = scmp.eq.s32.totalorder %s16, 0
    %p63 = por %p61, %p62
    %p64 = scmp.ne.s32.totalorder %s50, %s51
    %p65 = scmp.eq.s32.totalorder %s17, 1
    %p66 = por %p64, %p65
    %p68 = scmp.ne.s32.totalorder %s51, %s67
    %p69 = scmp.eq.s32.totalorder %s17, 0
    %p70 = por %p68, %p69
    %s72 = sadd.s32 %s71, 1
    %p75 = scmp.eq.s32.totalorder %s11, 1
    %p76 = scmp.ne.s32.totalorder %s71, %s73
    %p77 = scmp.eq.s32.totalorder %s11, 0
    %p78 = por %p76, %p77
    %p79 = scmp.ne.s32.totalorder %s71, %s73
    %p80 = scmp.eq.s32.totalorder %s16, 1
    %p81 = por %p79, %p80
    %p82 = scmp.ne.s32.totalorder %s73, %s74
    %p83 = scmp.eq.s32.totalorder %s16, 0
    %p84 = por %p82, %p83
    %p85 = scmp.ne.s32.totalorder %s73, %s74
    %p86 = scmp.eq.s32.totalorder %s17, 1
    %p87 = por %p85, %p86
    %p89 = scmp.ne.s32.totalorder %s74, %s88
    %p90 = scmp.eq.s32.totalorder %s17, 0
    %p91 = por %p89, %p90
    %s93 = sadd.s32 %s92, 1
    %p96 = scmp.eq.s32.totalorder %s11, 1
    %p97 = scmp.ne.s32.totalorder %s92, %s94
    %p98 = scmp.eq.s32.totalorder %s11, 0
    %p99 = por %p97, %p98
    %p100 = scmp.ne.s32.totalorder %s92, %s94
    %p101 = scmp.eq.s32.totalorder %s16, 1
    %p102 = por %p100, %p101
    %p103 = scmp.ne.s32.totalorder %s94, %s95
    %p104 = scmp.eq.s32.totalorder %s16, 0
    %p105 = por %p103, %p104
    %p106 = scmp.ne.s32.totalorder %s94, %s95
    %p107 = scmp.eq.s32.totalorder %s17, 1
    %p108 = por %p106, %p107
    %p110 = scmp.ne.s32.totalorder %s95, %s109
    %p111 = scmp.eq.s32.totalorder %s17, 0
    %p112 = por %p110, %p111
    %s114 = sadd.s32 %s113, 1
    %p117 = scmp.eq.s32.totalorder %s11, 1
    %p118 = scmp.ne.s32.totalorder %s113, %s115
    %p119 = scmp.eq.s32.totalorder %s11, 0
    %p120 = por %p118, %p119
    %p121 = scmp.ne.s32.totalorder %s113, %s115
    %p122 = scmp.eq.s32.totalorder %s16, 1
    %p123 = por %p121, %p122
    %p124 = scmp.ne.s32.totalorder %s115, %s116
    %p125 = scmp.eq.s32.totalorder %s16, 0
    %p126 = por %p124, %p125
    %p127 = scmp.ne.s32.totalorder %s115, %s116
    %p128 = scmp.eq.s32.totalorder %s17, 1
    %p129 = por %p127, %p128
    %p131 = scmp.ne.s32.totalorder %s116, %s130
    %p132 = scmp.eq.s32.totalorder %s17, 0
    %p133 = por %p131, %p132
    %s134 = ssub.s32 %s11, %s18
    %p135 = scmp.eq.s32.totalorder %s134, 0
    %s137 = sadd.s32 %s136, 1
    %s138 = scalar_select %p135, %s136, %s137
    %p141 = pneg %p135
    %p142 = scmp.eq.s32.totalorder %s11, 1
    %p143 = por %p141, %p142
    %p144 = scmp.ne.s32.totalorder %s136, %s139
    %p145 = scmp.eq.s32.totalorder %s11, 0
    %p146 = por %p144, %p145
    %p147 = scmp.ne.s32.totalorder %s136, %s139
    %p148 = scmp.eq.s32.totalorder %s16, 1
    %p149 = por %p147, %p148
    %p150 = scmp.ne.s32.totalorder %s139, %s140
    %p151 = scmp.eq.s32.totalorder %s16, 0
    %p152 = por %p150, %p151
    %p153 = scmp.ne.s32.totalorder %s139, %s140
    %p154 = scmp.eq.s32.totalorder %s17, 1
    %p155 = por %p153, %p154
    %p157 = scmp.ne.s32.totalorder %s140, %s156
    %p158 = scmp.eq.s32.totalorder %s17, 0
    %p159 = por %p157, %p158
    %p160 = scmp.le.s32.totalorder 1, %s11
    %p161 = scmp.lt.s32.totalorder %s11, 3
    %p162 = pnand %p160, %p161
    %p163 = pneg %p162
    // Predicated region
    $region9: #{fpem_v2_forward.6} parent=5 // pred_check
      _
    $region10: #{fpem_v2_forward.6} parent=5 // pred_check_branch
      %165 = sbr.rel (%p162) target = $region12
    $region11: #{fpem_v2_forward.6} parent=5 // pred_region
      %s166 = ssub.s32 %s11, 1
      // Predicated region
      $region13: #{fpem_v2_forward.6} parent=11 // pred_check
        %p167 = pneg %p84
      $region14: #{fpem_v2_forward.6} parent=11 // pred_check_branch
        %169 = sbr.rel (%p167) target = $region16
      $region15: #{fpem_v2_forward.6} parent=11 // pred_region
        _
      $region16: #{fpem_v2_forward.6} parent=11 // pred_fallthru
        _
      // Predicated region
      $region17: #{fpem_v2_forward.6} parent=11 // pred_check
        %p170 = pneg %p105
      $region18: #{fpem_v2_forward.6} parent=11 // pred_check_branch
        %172 = sbr.rel (%p170) target = $region20
      $region19: #{fpem_v2_forward.6} parent=11 // pred_region
        _
      $region20: #{fpem_v2_forward.6} parent=11 // pred_fallthru
        _
      // Predicated region
      $region21: #{fpem_v2_forward.6} parent=11 // pred_check
        %p173 = pneg %p126
      $region22: #{fpem_v2_forward.6} parent=11 // pred_check_branch
        %175 = sbr.rel (%p173) target = $region24
      $region23: #{fpem_v2_forward.6} parent=11 // pred_region
        _
      $region24: #{fpem_v2_forward.6} parent=11 // pred_fallthru
        _
    $region12: #{fpem_v2_forward.6} parent=5 // pred_fallthru
      _
    %p176 = scmp.lt.s32.totalorder %s11, 2
    // Predicated region
    $region25: #{fpem_v2_forward.6} parent=5 // pred_check
      %p177 = pneg %p176
    $region26: #{fpem_v2_forward.6} parent=5 // pred_check_branch
      %179 = sbr.rel (%p177) target = $region28
    $region27: #{fpem_v2_forward.6} parent=5 // pred_region
      // Predicated region
      $region29: #{fpem_v2_forward.6} parent=27 // pred_check
        %p180 = pneg %p31
      $region30: #{fpem_v2_forward.6} parent=27 // pred_check_branch
        %182 = sbr.rel (%p180) target = $region32
      $region31: #{fpem_v2_forward.6} parent=27 // pred_region
        %p183 = scmp.lt.s32.totalorder %s11, 1
        %s184 = scalar_select %p183, %s11, 1
        %s185 = smul.addr %s184, 2
        %s186 = smul.addr %s185, 4
        %s187 = scalar_lea.vmem %s0, %s186
      $region32: #{fpem_v2_forward.6} parent=27 // pred_fallthru
        _
      // Predicated region
      $region33: #{fpem_v2_forward.6} parent=27 // pred_check
        %p188 = pneg %p57
      $region34: #{fpem_v2_forward.6} parent=27 // pred_check_branch
        %190 = sbr.rel (%p188) target = $region36
      $region35: #{fpem_v2_forward.6} parent=27 // pred_region
        %p191 = scmp.lt.s32.totalorder %s11, 1
        %s192 = scalar_select %p191, %s11, 1
        %s193 = smul.addr %s192, 4
        %s194 = smul.addr %s193, 4
        %s195 = scalar_lea.vmem %s1, %s194
      $region36: #{fpem_v2_forward.6} parent=27 // pred_fallthru
        _
    $region28: #{fpem_v2_forward.6} parent=5 // pred_fallthru
      _
    %p196 = scmp.le.s32.totalorder 1, %s11
    %p197 = scmp.lt.s32.totalorder %s11, 3
    %p198 = pnand %p196, %p197
    %p199 = pneg %p198
    // Predicated region
    $region37: #{fpem_v2_forward.6} parent=5 // pred_check
      _
    $region38: #{fpem_v2_forward.6} parent=5 // pred_check_branch
      %201 = sbr.rel (%p198) target = $region40
    $region39: #{fpem_v2_forward.6} parent=5 // pred_region
      %s202 = ssub.s32 %s11, 1
      %p203 = scmp.lt.s32.totalorder %s16, 1
      %s204 = scalar_select %p203, %s16, 1
      %s205 = smul.addr %s204, 2
      %s206 = smul.addr %s205, 4
      %s207 = scalar_lea.vmem %s0, %s206
      %p208 = pneg %p37
      %p209 = pneg %p34
      %p210 = scmp.lt.s32.totalorder %s16, 1
      %s211 = scalar_select %p210, %s16, 1
      %s212 = smul.addr %s211, 4
      %s213 = smul.addr %s212, 4
      %s214 = scalar_lea.vmem %s1, %s213
      %p215 = pneg %p63
      %p216 = pneg %p60
      %p217 = pneg %p84
      %p218 = pneg %p81
      %p219 = pneg %p105
      %p220 = pneg %p102
      %p221 = pneg %p126
      %p222 = pneg %p123
      %p223 = pneg %p152
      %p224 = pneg %p149
      %p225 = scmp.lt.s32.totalorder %s16, 1
      %s226 = scalar_select %p225, %s16, 1
      %s227 = smul.addr %s226, 4
      %s228 = smul.addr %s227, 4
      %s229 = scalar_lea.vmem %s5, %s228
      %p230 = scmp.lt.s32.totalorder %s16, 1
      %s231 = scalar_select %p230, %s16, 1
      %s232 = smul.addr %s231, 2
      %s233 = smul.addr %s232, 4
      %s234 = scalar_lea.vmem %s0, %s233
      %p235 = scmp.lt.s32.totalorder %s16, 1
      %s236 = scalar_select %p235, %s16, 1
      %s237 = smul.addr %s236, 4
      %s238 = smul.addr %s237, 4
      %s239 = scalar_lea.vmem %s1, %s238
      %p240 = scmp.lt.s32.totalorder %s16, 1
      %s241 = scalar_select %p240, %s16, 1
      %s242 = smul.addr %s241, 4
      %s243 = smul.addr %s242, 4
      %s244 = scalar_lea.vmem %s5, %s243
      %v245 = vld [vmem:[%s239] sm:$0xf]
      %v246 = vld [vmem:[%s239 + $0x4] sm:$0xf]
      %v247 = vld [vmem:[%s239 + $0x8] sm:$0xf]
      %v248 = vld [vmem:[%s239 + $0xc] sm:$0xf]
      %v249 = vld [vmem:[%s234] sm:$0xf]
      %v250 = vld [vmem:[%s234 + $0x4] sm:$0xf]
      %v251 = vld [vmem:[%s2] sm:$0xff]
      %v252 = vld [vmem:[%s2 + $0x8] sm:$0x1]
      %v253 = vmul.f32 %v249, 0.75
      %v254 = vmul.f32 %v250, 0.75
      %v255 = vmul.f32 %v249, 0.25
      %v256 = vadd.f32 %v253, %v255
      %v257 = vadd.f32 %v254, %v255
      %v258 = vmul.f32 %v250, 0.25
      %v259 = vadd.f32 %v253, %v258
      %v260 = vadd.f32 %v254, %v258
      %v261 = vadd.f32 %v256, %v245
      %v262 = vadd.f32 %v259, %v246
      %v263 = vadd.f32 %v257, %v247
      %v264 = vadd.f32 %v260, %v248
      %v269 = vrot.slane 0.0, 7
      %v270 = vrot.slane %v261, 7
      %v271 = vrot.slane %v262, 7
      %v272 = vrot.slane %v263, 7
      %vm277 = vcmask 1040384
      %v278 = vsel %vm277, 0.0, %v269
      %v279 = vsel %vm277, 0.0, %v270
      %v280 = vsel %vm277, 0.0, %v271
      %v281 = vsel %vm277, 0.0, %v272
      %v282 = vperm.slane %v251, 0
      %v283 = vmul.f32 %v278, %v282
      %v284 = vmul.f32 %v279, %v282
      %v285 = vmul.f32 %v280, %v282
      %v286 = vmul.f32 %v281, %v282
      %v287 = vperm.slane %v251, 1
      %v288 = vmul.f32 %v287, 0.0
      %v289 = vmul.f32 %v261, %v287
      %v290 = vmul.f32 %v262, %v287
      %v291 = vmul.f32 %v263, %v287
      %v292 = vadd.f32 %v283, %v288
      %v293 = vadd.f32 %v284, %v289
      %v294 = vadd.f32 %v285, %v290
      %v295 = vadd.f32 %v286, %v291
      %v296 = vrot.slane 0.0, 1
      %v297 = vrot.slane %v261, 1
      %v298 = vrot.slane %v262, 1
      %v299 = vrot.slane %v263, 1
      %vm304 = vcmask 1042432
      %v305 = vsel %vm304, %v296, 0.0
      %v306 = vsel %vm304, %v297, 0.0
      %v307 = vsel %vm304, %v298, 0.0
      %v308 = vsel %vm304, %v299, 0.0
      %v309 = vperm.slane %v251, 2
      %v310 = vmul.f32 %v305, %v309
      %v311 = vmul.f32 %v306, %v309
      %v312 = vmul.f32 %v307, %v309
      %v313 = vmul.f32 %v308, %v309
      %v314 = vadd.f32 %v292, %v310
      %v315 = vadd.f32 %v293, %v311
      %v316 = vadd.f32 %v294, %v312
      %v317 = vadd.f32 %v295, %v313
      %v319 = vrot.slane %v264, 7
      %v321 = vsel %vm277, 0.0, %v319
      %v322 = vperm.slane %v251, 3
      %v323 = vmul.f32 %v279, %v322
      %v324 = vmul.f32 %v280, %v322
      %v325 = vmul.f32 %v281, %v322
      %v326 = vmul.f32 %v321, %v322
      %v327 = vadd.f32 %v314, %v323
      %v328 = vadd.f32 %v315, %v324
      %v329 = vadd.f32 %v316, %v325
      %v330 = vadd.f32 %v317, %v326
      %v331 = vperm.slane %v251, 4
      %v332 = vmul.f32 %v261, %v331
      %v333 = vmul.f32 %v262, %v331
      %v334 = vmul.f32 %v263, %v331
      %v335 = vmul.f32 %v264, %v331
      %v336 = vadd.f32 %v327, %v332
      %v337 = vadd.f32 %v328, %v333
      %v338 = vadd.f32 %v329, %v334
      %v339 = vadd.f32 %v330, %v335
      %v340 = vrot.slane %v264, 1
      %v342 = vsel %vm304, %v340, 0.0
      %v343 = vperm.slane %v251, 5
      %v344 = vmul.f32 %v306, %v343
      %v345 = vmul.f32 %v307, %v343
      %v346 = vmul.f32 %v308, %v343
      %v347 = vmul.f32 %v342, %v343
      %v348 = vadd.f32 %v336, %v344
      %v349 = vadd.f32 %v337, %v345
      %v350 = vadd.f32 %v338, %v346
      %v351 = vadd.f32 %v339, %v347
      %v352 = vperm.slane %v251, 6
      %v353 = vmul.f32 %v280, %v352
      %v354 = vmul.f32 %v281, %v352
      %v355 = vmul.f32 %v321, %v352
      %v356 = vmul.f32 %v278, %v352
      %v357 = vadd.f32 %v348, %v353
      %v358 = vadd.f32 %v349, %v354
      %v359 = vadd.f32 %v350, %v355
      %v360 = vadd.f32 %v351, %v356
      %v361 = vperm.slane %v251, 7
      %v362 = vmul.f32 %v262, %v361
      %v363 = vmul.f32 %v263, %v361
      %v364 = vmul.f32 %v264, %v361
      %v365 = vmul.f32 %v361, 0.0
      %v366 = vadd.f32 %v357, %v362
      %v367 = vadd.f32 %v358, %v363
      %v368 = vadd.f32 %v359, %v364
      %v369 = vadd.f32 %v360, %v365
      %v370 = vperm.slane %v252, 0
      %v371 = vmul.f32 %v307, %v370
      %v372 = vmul.f32 %v308, %v370
      %v373 = vmul.f32 %v342, %v370
      %v374 = vmul.f32 %v305, %v370
      %v375 = vadd.f32 %v366, %v371
      %v376 = vadd.f32 %v367, %v372
      %v377 = vadd.f32 %v368, %v373
      %v378 = vadd.f32 %v369, %v374
      %v379 = vld [vmem:[%s3] sm:$0xf]
      %v380 = vld [vmem:[%s3 + $0x4] sm:$0xf]
      %v381 = vld [vmem:[%s3 + $0x8] sm:$0xf]
      %v382 = vld [vmem:[%s3 + $0xc] sm:$0xf]
      %v383 = vld [vmem:[%s3 + $0x10] sm:$0xf]
      %v384 = vld [vmem:[%s3 + $0x14] sm:$0xf]
      %v385 = vld [vmem:[%s3 + $0x18] sm:$0xf]
      %v386 = vld [vmem:[%s3 + $0x1c] sm:$0xf]
      %v387 = vld [vmem:[%s3 + $0x20] sm:$0xf]
      %v388 = vld [vmem:[%s3 + $0x24] sm:$0xf]
      %v389 = vld [vmem:[%s3 + $0x28] sm:$0xf]
      %v390 = vld [vmem:[%s3 + $0x2c] sm:$0xf]
      %v391 = vld [vmem:[%s3 + $0x30] sm:$0xf]
      %v392 = vld [vmem:[%s3 + $0x34] sm:$0xf]
      %v393 = vld [vmem:[%s3 + $0x38] sm:$0xf]
      %v394 = vld [vmem:[%s3 + $0x3c] sm:$0xf]
      %v395 = vld [vmem:[%s4] sm:$0x1]
      %vm396 = vcmask 1043456
      %v397 = vsel %vm396, %v375, 0.0
      %v398 = vsel %vm396, %v376, 0.0
      %v399 = vsel %vm396, %v377, 0.0
      %v400 = vsel %vm396, %v378, 0.0
      %v401 = vpack.c.bf16 %v398, %v397
      %v402 = vpack.c.bf16 %v400, %v399
      %v404 = vperm.slane %v395, 0
      %v422 = vunpack.c.l.b16 %v379
      %v423 = vunpack.c.l.b16 %v380
      %v424 = vunpack.c.l.b16 %v381
      %v425 = vunpack.c.l.b16 %v382
      %v426 = vunpack.c.l.b16 %v383
      %v427 = vunpack.c.l.b16 %v384
      %v428 = vunpack.c.l.b16 %v385
      %v429 = vunpack.c.l.b16 %v386
      %v430 = vunpack.c.l.b16 %v387
      %v431 = vunpack.c.l.b16 %v388
      %v432 = vunpack.c.l.b16 %v389
      %v433 = vunpack.c.l.b16 %v390
      %v434 = vunpack.c.l.b16 %v391
      %v435 = vunpack.c.l.b16 %v392
      %v436 = vunpack.c.l.b16 %v393
      %v437 = vunpack.c.l.b16 %v394
      %v438 = vpack.c.b16 %v423, %v422
      %v439 = vpack.c.b16 %v425, %v424
      %v440 = vpack.c.b16 %v427, %v426
      %v441 = vpack.c.b16 %v429, %v428
      %v442 = vpack.c.b16 %v431, %v430
      %v443 = vpack.c.b16 %v433, %v432
      %v444 = vpack.c.b16 %v435, %v434
      %v445 = vpack.c.b16 %v437, %v436
      %454 = vmatpush.bf16.msra.mxu0 %v445
      %455 = vmatpush.bf16.msra.mxu0 %v444
      %456 = vmatpush.bf16.msra.mxu0 %v443
      %457 = vmatpush.bf16.msra.mxu0 %v442
      %458 = vmatpush.bf16.msra.mxu0 %v441
      %459 = vmatpush.bf16.msra.mxu0 %v440
      %460 = vmatpush.bf16.msra.mxu0 %v439
      %461 = vmatpush.bf16.msra.mxu0 %v438
      %462 = vmatmul.bf16.gmra.mxu0 %v401
      %v463 = vpop.f32.mrf.mxu0
      %v464 = vadd.f32 %v404, %v463
      %v465 = vpop.f32.mrf.mxu0
      %v466 = vadd.f32 %v404, %v465
      %467 = vmatmul.bf16.gmra.mxu0 %v402
      %v468 = vpop.f32.mrf.mxu0
      %v469 = vadd.f32 %v404, %v468
      %v470 = vpop.f32.mrf.mxu0
      %v471 = vadd.f32 %v404, %v470
      %472 = vdwg.mxu0
      %v473 = vmax.f32 %v464, 0.0
      %v474 = vmax.f32 %v466, 0.0
      %v475 = vmax.f32 %v469, 0.0
      %v476 = vmax.f32 %v471, 0.0
      %477 = vst [vmem:[%s244] sm:$0xf] %v473
      %478 = vst [vmem:[%s244 + $0x4] sm:$0xf] %v474
      %479 = vst [vmem:[%s244 + $0x8] sm:$0xf] %v475
      %480 = vst [vmem:[%s244 + $0xc] sm:$0xf] %v476
      %p481 = scmp.lt.s32.totalorder %s16, 1
      %s482 = scalar_select %p481, %s16, 1
      %s483 = smul.addr %s482, 4
      %s484 = smul.addr %s483, 4
      %s485 = scalar_lea.vmem %s5, %s484
      // Predicated region
      $region41: #{fpem_v2_forward.6} parent=39 // pred_check
        %p486 = pneg %p149
      $region42: #{fpem_v2_forward.6} parent=39 // pred_check_branch
        %488 = sbr.rel (%p486) target = $region44
      $region43: #{fpem_v2_forward.6} parent=39 // pred_region
        _
      $region44: #{fpem_v2_forward.6} parent=39 // pred_fallthru
        _
    $region40: #{fpem_v2_forward.6} parent=5 // pred_fallthru
      _
    %p489 = scmp.le.s32.totalorder 2, %s11
    // Predicated region
    $region45: #{fpem_v2_forward.6} parent=5 // pred_check
      %p490 = pneg %p489
    $region46: #{fpem_v2_forward.6} parent=5 // pred_check_branch
      %492 = sbr.rel (%p490) target = $region48
    $region47: #{fpem_v2_forward.6} parent=5 // pred_region
      %s493 = ssub.s32 %s11, 2
      // Predicated region
      $region49: #{fpem_v2_forward.6} parent=47 // pred_check
        %p494 = pneg %p155
      $region50: #{fpem_v2_forward.6} parent=47 // pred_check_branch
        %496 = sbr.rel (%p494) target = $region52
      $region51: #{fpem_v2_forward.6} parent=47 // pred_region
        %p497 = scmp.lt.s32.totalorder %s17, 1
        %s498 = scalar_select %p497, %s17, 1
        %s499 = smul.addr %s498, 4
        %s500 = smul.addr %s499, 4
        %s501 = scalar_lea.vmem %s5, %s500
      $region52: #{fpem_v2_forward.6} parent=47 // pred_fallthru
        _
    $region48: #{fpem_v2_forward.6} parent=5 // pred_fallthru
      _
  $region6: #{fpem_v2_forward.6} parent=0 // loop_footer
    %s15 = sadd.s32 1, %s11
  $region7: #{fpem_v2_forward.6} parent=0 // loop_footer_branch
    %10 = sbr.rel target = $region3
  $region8: #{fpem_v2_forward.6} parent=0 // loop_exit
    _

// kernel: fpem_v2_forward.9
$region0: #{fpem_v2_forward.9}
  #allocation0 [shape = 'u32[]', space=smem, size = 0x4, offset = 0x4, fixed_abs, tag = 'smem constant byte address 0x4 - core index']
  #allocation1 [shape = 'u32[72,128]{1,0:T(1,128)}', space=vmem, size = 0x9000, scoped, tag = 'internal scratch']
  %s0 = inlined_call_operand.vmem [shape: f32[2,8,8,128], index: 0, kind: input, shape index: {}]
  %s1 = inlined_call_operand.vmem [shape: f32[2,8,2,16,128], index: 1, kind: input, shape index: {}]
  %s2 = inlined_call_operand.vmem [shape: f32[2,8,8,128], index: 2, kind: input, shape index: {}]
  %s3 = inlined_call_operand.vmem [shape: f32[9,128], index: 3, kind: input, shape index: {}]
  %s4 = inlined_call_operand.vmem [shape: bf16[128,128], index: 4, kind: input, shape index: {}]
  %s5 = inlined_call_operand.vmem [shape: f32[1,128], index: 5, kind: input, shape index: {}]
  %s6 = inlined_call_operand.vmem [shape: f32[2,8,8,128], index: 6, kind: output, shape index: {0}]
  %s7 = inlined_call_operand.hbm [shape: f32[2,8,8,128], index: 7, kind: output, shape index: {1}]
  %8 = xla_tuple %s6, %s7
  %s9 = sld [smem:[#allocation0]]
  $region65: #{fpem_v2_forward.9} parent=0
    _
  %s11 = ssub.s32 1, %s9
  %s12 = scalar_select 0, %s11, %s9
  $region1: #{fpem_v2_forward.9} parent=0
    #allocation2 [shape = 'u8[65536]{0}', space=vmem, size = 0x10000, scoped, tag = 'output window, operand 1']
    #allocation3 [shape = 's32[2]{0}', space=sflag, size = 0x8, scoped, tag = 'scoped memory for fpem_v2_forward.9']
    %13 = vsyncpa [#allocation3], 0
    %s14 = scalar_lea.sflag [#allocation3], 1
    %15 = vsyncpa %s14, 0
    loop: start=0, step=1, limit=4
    $region2: #{fpem_v2_forward.9} parent=1 // loop_pre_header
      _
    $region3: #{fpem_v2_forward.9} parent=1 // loop_header
      %s17 = sphi 0, %s21
      %p18 = scmp.ge.s32.totalorder %s17, 4
      %s27 = sphi 0, %s29
      %s30 = sphi 0, %s27
      %s31 = sphi 0, %s30
      %s47 = sphi 0, %s31
      %s53 = sphi 0, %s55
      %s56 = sphi 0, %s53
      %s57 = sphi 0, %s56
      %s73 = sphi 0, %s57
      %s79 = sphi 0, %s81
      %s82 = sphi 0, %s79
      %s83 = sphi 0, %s82
      %s99 = sphi 0, %s83
      %s103 = sphi 0, %s103
      %s105 = sphi 0, %s103
      %s106 = sphi 0, %s105
      %s120 = sphi 0, %s106
      %s124 = sphi 0, %s124
      %s126 = sphi 0, %s124
      %s127 = sphi 0, %s126
      %s141 = sphi 0, %s127
      %s145 = sphi 0, %s145
      %s147 = sphi 0, %s145
      %s148 = sphi 0, %s147
      %s162 = sphi 0, %s148
      %s168 = sphi 0, %s170
      %s171 = sphi 0, %s168
      %s172 = sphi 0, %s171
      %s188 = sphi 0, %s172
      %s194 = sphi 0, %s196
      %s197 = sphi 0, %s194
      %s198 = sphi 0, %s197
      %s214 = sphi 0, %s198
    $region4: #{fpem_v2_forward.9} parent=1 // loop_header_branch
      %20 = sbr.rel (%p18) target = $region8
    $region5: #{fpem_v2_forward.9} parent=1 // loop_body
      %s22 = ssub.s32 %s17, 1
      %s23 = ssub.s32 %s17, 2
      %s24 = sadd.s32 %s17, 1
      %s25 = ssub.s32 %s17, %s24
      %p26 = scmp.eq.s32.totalorder %s25, 0
      %s28 = sadd.s32 %s27, 1
      %s29 = scalar_select %p26, %s27, %s28
      %p32 = pneg %p26
      %p33 = scmp.eq.s32.totalorder %s17, 1
      %p34 = por %p32, %p33
      %p35 = scmp.ne.s32.totalorder %s27, %s30
      %p36 = scmp.eq.s32.totalorder %s17, 0
      %p37 = por %p35, %p36
      %p38 = scmp.ne.s32.totalorder %s27, %s30
      %p39 = scmp.eq.s32.totalorder %s22, 1
      %p40 = por %p38, %p39
      %p41 = scmp.ne.s32.totalorder %s30, %s31
      %p42 = scmp.eq.s32.totalorder %s22, 0
      %p43 = por %p41, %p42
      %p44 = scmp.ne.s32.totalorder %s30, %s31
      %p45 = scmp.eq.s32.totalorder %s23, 1
      %p46 = por %p44, %p45
      %p48 = scmp.ne.s32.totalorder %s31, %s47
      %p49 = scmp.eq.s32.totalorder %s23, 0
      %p50 = por %p48, %p49
      %s51 = ssub.s32 %s17, %s24
      %p52 = scmp.eq.s32.totalorder %s51, 0
      %s54 = sadd.s32 %s53, 1
      %s55 = scalar_select %p52, %s53, %s54
      %p58 = pneg %p52
      %p59 = scmp.eq.s32.totalorder %s17, 1
      %p60 = por %p58, %p59
      %p61 = scmp.ne.s32.totalorder %s53, %s56
      %p62 = scmp.eq.s32.totalorder %s17, 0
      %p63 = por %p61, %p62
      %p64 = scmp.ne.s32.totalorder %s53, %s56
      %p65 = scmp.eq.s32.totalorder %s22, 1
      %p66 = por %p64, %p65
      %p67 = scmp.ne.s32.totalorder %s56, %s57
      %p68 = scmp.eq.s32.totalorder %s22, 0
      %p69 = por %p67, %p68
      %p70 = scmp.ne.s32.totalorder %s56, %s57
      %p71 = scmp.eq.s32.totalorder %s23, 1
      %p72 = por %p70, %p71
      %p74 = scmp.ne.s32.totalorder %s57, %s73
      %p75 = scmp.eq.s32.totalorder %s23, 0
      %p76 = por %p74, %p75
      %s77 = ssub.s32 %s17, %s24
      %p78 = scmp.eq.s32.totalorder %s77, 0
      %s80 = sadd.s32 %s79, 1
      %s81 = scalar_select %p78, %s79, %s80
      %p84 = pneg %p78
      %p85 = scmp.eq.s32.totalorder %s17, 1
      %p86 = por %p84, %p85
      %p87 = scmp.ne.s32.totalorder %s79, %s82
      %p88 = scmp.eq.s32.totalorder %s17, 0
      %p89 = por %p87, %p88
      %p90 = scmp.ne.s32.totalorder %s79, %s82
      %p91 = scmp.eq.s32.totalorder %s22, 1
      %p92 = por %p90, %p91
      %p93 = scmp.ne.s32.totalorder %s82, %s83
      %p94 = scmp.eq.s32.totalorder %s22, 0
      %p95 = por %p93, %p94
      %p96 = scmp.ne.s32.totalorder %s82, %s83
      %p97 = scmp.eq.s32.totalorder %s23, 1
      %p98 = por %p96, %p97
      %p100 = scmp.ne.s32.totalorder %s83, %s99
      %p101 = scmp.eq.s32.totalorder %s23, 0
      %p102 = por %p100, %p101
      %s104 = sadd.s32 %s103, 1
      %p107 = scmp.eq.s32.totalorder %s17, 1
      %p108 = scmp.ne.s32.totalorder %s103, %s105
      %p109 = scmp.eq.s32.totalorder %s17, 0
      %p110 = por %p108, %p109
      %p111 = scmp.ne.s32.totalorder %s103, %s105
      %p112 = scmp.eq.s32.totalorder %s22, 1
      %p113 = por %p111, %p112
      %p114 = scmp.ne.s32.totalorder %s105, %s106
      %p115 = scmp.eq.s32.totalorder %s22, 0
      %p116 = por %p114, %p115
      %p117 = scmp.ne.s32.totalorder %s105, %s106
      %p118 = scmp.eq.s32.totalorder %s23, 1
      %p119 = por %p117, %p118
      %p121 = scmp.ne.s32.totalorder %s106, %s120
      %p122 = scmp.eq.s32.totalorder %s23, 0
      %p123 = por %p121, %p122
      %s125 = sadd.s32 %s124, 1
      %p128 = scmp.eq.s32.totalorder %s17, 1
      %p129 = scmp.ne.s32.totalorder %s124, %s126
      %p130 = scmp.eq.s32.totalorder %s17, 0
      %p131 = por %p129, %p130
      %p132 = scmp.ne.s32.totalorder %s124, %s126
      %p133 = scmp.eq.s32.totalorder %s22, 1
      %p134 = por %p132, %p133
      %p135 = scmp.ne.s32.totalorder %s126, %s127
      %p136 = scmp.eq.s32.totalorder %s22, 0
      %p137 = por %p135, %p136
      %p138 = scmp.ne.s32.totalorder %s126, %s127
      %p139 = scmp.eq.s32.totalorder %s23, 1
      %p140 = por %p138, %p139
      %p142 = scmp.ne.s32.totalorder %s127, %s141
      %p143 = scmp.eq.s32.totalorder %s23, 0
      %p144 = por %p142, %p143
      %s146 = sadd.s32 %s145, 1
      %p149 = scmp.eq.s32.totalorder %s17, 1
      %p150 = scmp.ne.s32.totalorder %s145, %s147
      %p151 = scmp.eq.s32.totalorder %s17, 0
      %p152 = por %p150, %p151
      %p153 = scmp.ne.s32.totalorder %s145, %s147
      %p154 = scmp.eq.s32.totalorder %s22, 1
      %p155 = por %p153, %p154
      %p156 = scmp.ne.s32.totalorder %s147, %s148
      %p157 = scmp.eq.s32.totalorder %s22, 0
      %p158 = por %p156, %p157
      %p159 = scmp.ne.s32.totalorder %s147, %s148
      %p160 = scmp.eq.s32.totalorder %s23, 1
      %p161 = por %p159, %p160
      %p163 = scmp.ne.s32.totalorder %s148, %s162
      %p164 = scmp.eq.s32.totalorder %s23, 0
      %p165 = por %p163, %p164
      %s166 = ssub.s32 %s17, %s24
      %p167 = scmp.eq.s32.totalorder %s166, 0
      %s169 = sadd.s32 %s168, 1
      %s170 = scalar_select %p167, %s168, %s169
      %p173 = pneg %p167
      %p174 = scmp.eq.s32.totalorder %s17, 1
      %p175 = por %p173, %p174
      %p176 = scmp.ne.s32.totalorder %s168, %s171
      %p177 = scmp.eq.s32.totalorder %s17, 0
      %p178 = por %p176, %p177
      %p179 = scmp.ne.s32.totalorder %s168, %s171
      %p180 = scmp.eq.s32.totalorder %s22, 1
      %p181 = por %p179, %p180
      %p182 = scmp.ne.s32.totalorder %s171, %s172
      %p183 = scmp.eq.s32.totalorder %s22, 0
      %p184 = por %p182, %p183
      %p185 = scmp.ne.s32.totalorder %s171, %s172
      %p186 = scmp.eq.s32.totalorder %s23, 1
      %p187 = por %p185, %p186
      %p189 = scmp.ne.s32.totalorder %s172, %s188
      %p190 = scmp.eq.s32.totalorder %s23, 0
      %p191 = por %p189, %p190
      %s192 = ssub.s32 %s17, %s24
      %p193 = scmp.eq.s32.totalorder %s192, 0
      %s195 = sadd.s32 %s194, 1
      %s196 = scalar_select %p193, %s194, %s195
      %p199 = pneg %p193
      %p200 = scmp.eq.s32.totalorder %s17, 1
      %p201 = por %p199, %p200
      %p202 = scmp.ne.s32.totalorder %s194, %s197
      %p203 = scmp.eq.s32.totalorder %s17, 0
      %p204 = por %p202, %p203
      %p205 = scmp.ne.s32.totalorder %s194, %s197
      %p206 = scmp.eq.s32.totalorder %s22, 1
      %p207 = por %p205, %p206
      %p208 = scmp.ne.s32.totalorder %s197, %s198
      %p209 = scmp.eq.s32.totalorder %s22, 0
      %p210 = por %p208, %p209
      %p211 = scmp.ne.s32.totalorder %s197, %s198
      %p212 = scmp.eq.s32.totalorder %s23, 1
      %p213 = por %p211, %p212
      %p215 = scmp.ne.s32.totalorder %s198, %s214
      %p216 = scmp.eq.s32.totalorder %s23, 0
      %p217 = por %p215, %p216
      %p218 = scmp.le.s32.totalorder 1, %s17
      %p219 = scmp.lt.s32.totalorder %s17, 3
      %p220 = pnand %p218, %p219
      %p221 = pneg %p220
      // Predicated region
      $region9: #{fpem_v2_forward.9} parent=5 // pred_check
        _
      $region10: #{fpem_v2_forward.9} parent=5 // pred_check_branch
        %223 = sbr.rel (%p220) target = $region12
      $region11: #{fpem_v2_forward.9} parent=5 // pred_region
        %s224 = ssub.s32 %s17, 1
        // Predicated region
        $region13: #{fpem_v2_forward.9} parent=11 // pred_check
          %p225 = pneg %p116
        $region14: #{fpem_v2_forward.9} parent=11 // pred_check_branch
          %227 = sbr.rel (%p225) target = $region16
        $region15: #{fpem_v2_forward.9} parent=11 // pred_region
          _
        $region16: #{fpem_v2_forward.9} parent=11 // pred_fallthru
          _
        // Predicated region
        $region17: #{fpem_v2_forward.9} parent=11 // pred_check
          %p228 = pneg %p137
        $region18: #{fpem_v2_forward.9} parent=11 // pred_check_branch
          %230 = sbr.rel (%p228) target = $region20
        $region19: #{fpem_v2_forward.9} parent=11 // pred_region
          _
        $region20: #{fpem_v2_forward.9} parent=11 // pred_fallthru
          _
        // Predicated region
        $region21: #{fpem_v2_forward.9} parent=11 // pred_check
          %p231 = pneg %p158
        $region22: #{fpem_v2_forward.9} parent=11 // pred_check_branch
          %233 = sbr.rel (%p231) target = $region24
        $region23: #{fpem_v2_forward.9} parent=11 // pred_region
          _
        $region24: #{fpem_v2_forward.9} parent=11 // pred_fallthru
          _
      $region12: #{fpem_v2_forward.9} parent=5 // pred_fallthru
        _
      %p234 = scmp.lt.s32.totalorder %s17, 2
      // Predicated region
      $region25: #{fpem_v2_forward.9} parent=5 // pred_check
        %p235 = pneg %p234
      $region26: #{fpem_v2_forward.9} parent=5 // pred_check_branch
        %237 = sbr.rel (%p235) target = $region28
      $region27: #{fpem_v2_forward.9} parent=5 // pred_region
        // Predicated region
        $region29: #{fpem_v2_forward.9} parent=27 // pred_check
          %p238 = pneg %p37
        $region30: #{fpem_v2_forward.9} parent=27 // pred_check_branch
          %240 = sbr.rel (%p238) target = $region32
        $region31: #{fpem_v2_forward.9} parent=27 // pred_region
          %p241 = scmp.lt.s32.totalorder %s17, 1
          %s242 = scalar_select %p241, %s17, 1
          %s243 = smul.addr %s242, 8
          %s244 = smul.addr %s243, 8
          %s245 = scalar_lea.vmem %s0, %s244
        $region32: #{fpem_v2_forward.9} parent=27 // pred_fallthru
          _
        // Predicated region
        $region33: #{fpem_v2_forward.9} parent=27 // pred_check
          %p246 = pneg %p63
        $region34: #{fpem_v2_forward.9} parent=27 // pred_check_branch
          %248 = sbr.rel (%p246) target = $region36
        $region35: #{fpem_v2_forward.9} parent=27 // pred_region
          %p249 = scmp.lt.s32.totalorder %s17, 1
          %s250 = scalar_select %p249, %s17, 1
          %s251 = smul.addr %s250, 32
          %s252 = smul.addr %s251, 8
          %s253 = scalar_lea.vmem %s1, %s252
        $region36: #{fpem_v2_forward.9} parent=27 // pred_fallthru
          _
        // Predicated region
        $region37: #{fpem_v2_forward.9} parent=27 // pred_check
          %p254 = pneg %p89
        $region38: #{fpem_v2_forward.9} parent=27 // pred_check_branch
          %256 = sbr.rel (%p254) target = $region40
        $region39: #{fpem_v2_forward.9} parent=27 // pred_region
          %p257 = scmp.lt.s32.totalorder %s17, 1
          %s258 = scalar_select %p257, %s17, 1
          %s259 = smul.addr %s258, 8
          %s260 = smul.addr %s259, 8
          %s261 = scalar_lea.vmem %s2, %s260
        $region40: #{fpem_v2_forward.9} parent=27 // pred_fallthru
          _
      $region28: #{fpem_v2_forward.9} parent=5 // pred_fallthru
        _
      %p262 = scmp.le.s32.totalorder 1, %s17
      %p263 = scmp.lt.s32.totalorder %s17, 3
      %p264 = pnand %p262, %p263
      %p265 = pneg %p264
      // Predicated region
      $region41: #{fpem_v2_forward.9} parent=5 // pred_check
        _
      $region42: #{fpem_v2_forward.9} parent=5 // pred_check_branch
        %267 = sbr.rel (%p264) target = $region44
      $region43: #{fpem_v2_forward.9} parent=5 // pred_region
        %s268 = ssub.s32 %s17, 1
        %p269 = scmp.lt.s32.totalorder %s22, 1
        %s270 = scalar_select %p269, %s22, 1
        %s271 = smul.addr %s270, 8
        %s272 = smul.addr %s271, 8
        %s273 = scalar_lea.vmem %s0, %s272
        %p274 = pneg %p43
        %p275 = pneg %p40
        %p276 = scmp.lt.s32.totalorder %s22, 1
        %s277 = scalar_select %p276, %s22, 1
        %s278 = smul.addr %s277, 32
        %s279 = smul.addr %s278, 8
        %s280 = scalar_lea.vmem %s1, %s279
        %p281 = pneg %p69
        %p282 = pneg %p66
        %p283 = scmp.lt.s32.totalorder %s22, 1
        %s284 = scalar_select %p283, %s22, 1
        %s285 = smul.addr %s284, 8
        %s286 = smul.addr %s285, 8
        %s287 = scalar_lea.vmem %s2, %s286
        %p288 = pneg %p95
        %p289 = pneg %p92
        %p290 = pneg %p116
        %p291 = pneg %p113
        %p292 = pneg %p137
        %p293 = pneg %p134
        %p294 = pneg %p158
        %p295 = pneg %p155
        %p296 = pneg %p184
        %p297 = pneg %p181
        %p298 = scmp.lt.s32.totalorder %s22, 1
        %s299 = scalar_select %p298, %s22, 1
        %s300 = smul.addr %s299, 8
        %s301 = smul.addr %s300, 8
        %s302 = scalar_lea.vmem %s6, %s301
        %p303 = pneg %p210
        %p304 = pneg %p207
        %s305 = sand.u32 %s197, 1
        %s306 = scalar_lea.sflag [#allocation3], %s305
        %s307 = sand.u32 %s197, 1
        %s308 = smul.addr %s307, 64
        %s309 = scalar_lea.vmem [#allocation2], %s308
        %p310 = scmp.lt.s32.totalorder %s22, 1
        %s311 = scalar_select %p310, %s22, 1
        %s312 = smul.addr %s311, 8
        %s313 = smul.addr %s312, 8
        %s314 = scalar_lea.vmem %s0, %s313
        %p315 = scmp.lt.s32.totalorder %s22, 1
        %s316 = scalar_select %p315, %s22, 1
        %s317 = smul.addr %s316, 32
        %s318 = smul.addr %s317, 8
        %s319 = scalar_lea.vmem %s1, %s318
        %p320 = scmp.lt.s32.totalorder %s22, 1
        %s321 = scalar_select %p320, %s22, 1
        %s322 = smul.addr %s321, 8
        %s323 = smul.addr %s322, 8
        %s324 = scalar_lea.vmem %s2, %s323
        %p325 = scmp.lt.s32.totalorder %s22, 1
        %s326 = scalar_select %p325, %s22, 1
        %s327 = smul.addr %s326, 8
        %s328 = smul.addr %s327, 8
        %s329 = scalar_lea.vmem %s6, %s328
        %v330 = vld [vmem:[%s314] sm:$0xff]
        %v331 = vld [vmem:[%s314 + $0x8] sm:$0xff]
        %v332 = vld [vmem:[%s314 + $0x10] sm:$0xff]
        %v333 = vld [vmem:[%s314 + $0x18] sm:$0xff]
        %v334 = vld [vmem:[%s314 + $0x20] sm:$0xff]
        %v335 = vld [vmem:[%s314 + $0x28] sm:$0xff]
        %v336 = vld [vmem:[%s314 + $0x30] sm:$0xff]
        %v337 = vld [vmem:[%s314 + $0x38] sm:$0xff]
        %v338 = vld [vmem:[%s3] sm:$0xff]
        %v339 = vld [vmem:[%s3 + $0x8] sm:$0x1]
        %v340 = vmul.f32 %v330, 0.75
        %v341 = vmul.f32 %v331, 0.75
        %v342 = vmul.f32 %v332, 0.75
        %v343 = vmul.f32 %v333, 0.75
        %v344 = vmul.f32 %v334, 0.75
        %v345 = vmul.f32 %v335, 0.75
        %v346 = vmul.f32 %v336, 0.75
        %v347 = vmul.f32 %v337, 0.75
        %v348 = vmul.f32 %v330, 0.25
        %v349 = vmul.f32 %v331, 0.25
        %v350 = vmul.f32 %v332, 0.25
        %v351 = vmul.f32 %v333, 0.25
        %v352 = vmul.f32 %v334, 0.25
        %v353 = vmul.f32 %v335, 0.25
        %v354 = vmul.f32 %v336, 0.25
        %v355 = vadd.f32 %v340, %v348
        %v356 = vadd.f32 %v341, %v348
        %v357 = vadd.f32 %v342, %v349
        %v358 = vadd.f32 %v343, %v350
        %v359 = vadd.f32 %v344, %v351
        %v360 = vadd.f32 %v345, %v352
        %v361 = vadd.f32 %v346, %v353
        %v362 = vadd.f32 %v347, %v354
        %v371 = vrot.slane %v355, 7
        %v372 = vrot.slane %v356, 7
        %v373 = vrot.slane %v357, 7
        %v374 = vrot.slane %v358, 7
        %v375 = vrot.slane %v359, 7
        %v376 = vrot.slane %v360, 7
        %v377 = vrot.slane %v361, 7
        %v378 = vrot.slane %v362, 7
        %vm387 = vcmask 1040384
        %v388 = vsel %vm387, %v355, %v371
        %v389 = vsel %vm387, %v356, %v372
        %v390 = vsel %vm387, %v357, %v373
        %v391 = vsel %vm387, %v358, %v374
        %v392 = vsel %vm387, %v359, %v375
        %v393 = vsel %vm387, %v360, %v376
        %v394 = vsel %vm387, %v361, %v377
        %v395 = vsel %vm387, %v362, %v378
        %v396 = vld [vmem:[%s319] ss:$2 sm:$0xff]
        %s397 = scalar_lea.vmem %s319, 32
        %v398 = vld [vmem:[%s397] ss:$2 sm:$0xff]
        %s399 = scalar_lea.vmem %s319, 64
        %v400 = vld [vmem:[%s399] ss:$2 sm:$0xff]
        %s401 = scalar_lea.vmem %s319, 96
        %v402 = vld [vmem:[%s401] ss:$2 sm:$0xff]
        %s403 = scalar_lea.vmem %s319, 128
        %v404 = vld [vmem:[%s403] ss:$2 sm:$0xff]
        %s405 = scalar_lea.vmem %s319, 160
        %v406 = vld [vmem:[%s405] ss:$2 sm:$0xff]
        %s407 = scalar_lea.vmem %s319, 192
        %v408 = vld [vmem:[%s407] ss:$2 sm:$0xff]
        %s409 = scalar_lea.vmem %s319, 224
        %v410 = vld [vmem:[%s409] ss:$2 sm:$0xff]
        %v411 = vmul.f32 %v355, 0.75
        %v412 = vmul.f32 %v356, 0.75
        %v413 = vmul.f32 %v357, 0.75
        %v414 = vmul.f32 %v358, 0.75
        %v415 = vmul.f32 %v359, 0.75
        %v416 = vmul.f32 %v360, 0.75
        %v417 = vmul.f32 %v361, 0.75
        %v418 = vmul.f32 %v362, 0.75
        %v419 = vmul.f32 %v388, 0.25
        %v420 = vmul.f32 %v389, 0.25
        %v421 = vmul.f32 %v390, 0.25
        %v422 = vmul.f32 %v391, 0.25
        %v423 = vmul.f32 %v392, 0.25
        %v424 = vmul.f32 %v393, 0.25
        %v425 = vmul.f32 %v394, 0.25
        %v426 = vmul.f32 %v395, 0.25
        %v427 = vadd.f32 %v411, %v419
        %v428 = vadd.f32 %v412, %v420
        %v429 = vadd.f32 %v413, %v421
        %v430 = vadd.f32 %v414, %v422
        %v431 = vadd.f32 %v415, %v423
        %v432 = vadd.f32 %v416, %v424
        %v433 = vadd.f32 %v417, %v425
        %v434 = vadd.f32 %v418, %v426
        %v435 = vadd.f32 %v427, %v396
        %v436 = vadd.f32 %v428, %v398
        %v437 = vadd.f32 %v429, %v400
        %v438 = vadd.f32 %v430, %v402
        %v439 = vadd.f32 %v431, %v404
        %v440 = vadd.f32 %v432, %v406
        %v441 = vadd.f32 %v433, %v408
        %v442 = vadd.f32 %v434, %v410
        %v443 = vperm.slane %v338, 4
        %v444 = vmul.f32 %v435, %v443
        %v445 = vmul.f32 %v436, %v443
        %v446 = vmul.f32 %v437, %v443
        %v447 = vmul.f32 %v438, %v443
        %v448 = vmul.f32 %v439, %v443
        %v449 = vmul.f32 %v440, %v443
        %v450 = vmul.f32 %v441, %v443
        %v451 = vmul.f32 %v442, %v443
        %v452 = vrot.slane %v355, 1
        %v453 = vrot.slane %v356, 1
        %v454 = vrot.slane %v357, 1
        %v455 = vrot.slane %v358, 1
        %v456 = vrot.slane %v359, 1
        %v457 = vrot.slane %v360, 1
        %v458 = vrot.slane %v361, 1
        %v459 = vrot.slane %v362, 1
        %vm468 = vcmask 1046528
        %v469 = vsel %vm468, %v452, %v355
        %v470 = vsel %vm468, %v453, %v356
        %v471 = vsel %vm468, %v454, %v357
        %v472 = vsel %vm468, %v455, %v358
        %v473 = vsel %vm468, %v456, %v359
        %v474 = vsel %vm468, %v457, %v360
        %v475 = vsel %vm468, %v458, %v361
        %v476 = vsel %vm468, %v459, %v362
        %s477 = scalar_lea.vmem %s319, 1
        %v478 = vld [vmem:[%s477] ss:$2 sm:$0xff]
        %s479 = scalar_lea.vmem %s319, 33
        %v480 = vld [vmem:[%s479] ss:$2 sm:$0xff]
        %s481 = scalar_lea.vmem %s319, 65
        %v482 = vld [vmem:[%s481] ss:$2 sm:$0xff]
        %s483 = scalar_lea.vmem %s319, 97
        %v484 = vld [vmem:[%s483] ss:$2 sm:$0xff]
        %s485 = scalar_lea.vmem %s319, 129
        %v486 = vld [vmem:[%s485] ss:$2 sm:$0xff]
        %s487 = scalar_lea.vmem %s319, 161
        %v488 = vld [vmem:[%s487] ss:$2 sm:$0xff]
        %s489 = scalar_lea.vmem %s319, 193
        %v490 = vld [vmem:[%s489] ss:$2 sm:$0xff]
        %s491 = scalar_lea.vmem %s319, 225
        %v492 = vld [vmem:[%s491] ss:$2 sm:$0xff]
        %v493 = vmul.f32 %v469, 0.25
        %v494 = vmul.f32 %v470, 0.25
        %v495 = vmul.f32 %v471, 0.25
        %v496 = vmul.f32 %v472, 0.25
        %v497 = vmul.f32 %v473, 0.25
        %v498 = vmul.f32 %v474, 0.25
        %v499 = vmul.f32 %v475, 0.25
        %v500 = vmul.f32 %v476, 0.25
        %v501 = vadd.f32 %v411, %v493
        %v502 = vadd.f32 %v412, %v494
        %v503 = vadd.f32 %v413, %v495
        %v504 = vadd.f32 %v414, %v496
        %v505 = vadd.f32 %v415, %v497
        %v506 = vadd.f32 %v416, %v498
        %v507 = vadd.f32 %v417, %v499
        %v508 = vadd.f32 %v418, %v500
        %v509 = vadd.f32 %v501, %v478
        %v510 = vadd.f32 %v502, %v480
        %v511 = vadd.f32 %v503, %v482
        %v512 = vadd.f32 %v504, %v484
        %v513 = vadd.f32 %v505, %v486
        %v514 = vadd.f32 %v506, %v488
        %v515 = vadd.f32 %v507, %v490
        %v516 = vadd.f32 %v508, %v492
        %v517 = vperm.slane %v338, 5
        %v518 = vmul.f32 %v509, %v517
        %v519 = vmul.f32 %v510, %v517
        %v520 = vmul.f32 %v511, %v517
        %v521 = vmul.f32 %v512, %v517
        %v522 = vmul.f32 %v513, %v517
        %v523 = vmul.f32 %v514, %v517
        %v524 = vmul.f32 %v515, %v517
        %v525 = vmul.f32 %v516, %v517
        %v526 = vadd.f32 %v444, %v518
        %v527 = vadd.f32 %v445, %v519
        %v528 = vadd.f32 %v446, %v520
        %v529 = vadd.f32 %v447, %v521
        %v530 = vadd.f32 %v448, %v522
        %v531 = vadd.f32 %v449, %v523
        %v532 = vadd.f32 %v450, %v524
        %v533 = vadd.f32 %v451, %v525
        %v542 = vrot.slane %v509, 7
        %v543 = vrot.slane %v510, 7
        %v544 = vrot.slane %v511, 7
        %v545 = vrot.slane %v512, 7
        %v546 = vrot.slane %v513, 7
        %v547 = vrot.slane %v514, 7
        %v548 = vrot.slane %v515, 7
        %v549 = vrot.slane %v516, 7
        %v558 = vsel %vm387, 0.0, %v542
        %v559 = vsel %vm387, 0.0, %v543
        %v560 = vsel %vm387, 0.0, %v544
        %v561 = vsel %vm387, 0.0, %v545
        %v562 = vsel %vm387, 0.0, %v546
        %v563 = vsel %vm387, 0.0, %v547
        %v564 = vsel %vm387, 0.0, %v548
        %v565 = vsel %vm387, 0.0, %v549
        %v566 = vperm.slane %v338, 3
        %v567 = vmul.f32 %v558, %v566
        %v568 = vmul.f32 %v559, %v566
        %v569 = vmul.f32 %v560, %v566
        %v570 = vmul.f32 %v561, %v566
        %v571 = vmul.f32 %v562, %v566
        %v572 = vmul.f32 %v563, %v566
        %v573 = vmul.f32 %v564, %v566
        %v574 = vmul.f32 %v565, %v566
        %v575 = vadd.f32 %v526, %v567
        %v576 = vadd.f32 %v527, %v568
        %v577 = vadd.f32 %v528, %v569
        %v578 = vadd.f32 %v529, %v570
        %v579 = vadd.f32 %v530, %v571
        %v580 = vadd.f32 %v531, %v572
        %v581 = vadd.f32 %v532, %v573
        %v582 = vadd.f32 %v533, %v574
        %v583 = vmul.f32 %v337, 0.25
        %v584 = vadd.f32 %v340, %v349
        %v585 = vadd.f32 %v341, %v350
        %v586 = vadd.f32 %v342, %v351
        %v587 = vadd.f32 %v343, %v352
        %v588 = vadd.f32 %v344, %v353
        %v589 = vadd.f32 %v345, %v354
        %v590 = vadd.f32 %v346, %v583
        %v591 = vadd.f32 %v347, %v583
        %v600 = vrot.slane %v584, 7
        %v601 = vrot.slane %v585, 7
        %v602 = vrot.slane %v586, 7
        %v603 = vrot.slane %v587, 7
        %v604 = vrot.slane %v588, 7
        %v605 = vrot.slane %v589, 7
        %v606 = vrot.slane %v590, 7
        %v607 = vrot.slane %v591, 7
        %v616 = vsel %vm387, %v584, %v600
        %v617 = vsel %vm387, %v585, %v601
        %v618 = vsel %vm387, %v586, %v602
        %v619 = vsel %vm387, %v587, %v603
        %v620 = vsel %vm387, %v588, %v604
        %v621 = vsel %vm387, %v589, %v605
        %v622 = vsel %vm387, %v590, %v606
        %v623 = vsel %vm387, %v591, %v607
        %s624 = scalar_lea.vmem %s319, 16
        %v625 = vld [vmem:[%s624] ss:$2 sm:$0xff]
        %s626 = scalar_lea.vmem %s624, 32
        %v627 = vld [vmem:[%s626] ss:$2 sm:$0xff]
        %s628 = scalar_lea.vmem %s624, 64
        %v629 = vld [vmem:[%s628] ss:$2 sm:$0xff]
        %s630 = scalar_lea.vmem %s624, 96
        %v631 = vld [vmem:[%s630] ss:$2 sm:$0xff]
        %s632 = scalar_lea.vmem %s624, 128
        %v633 = vld [vmem:[%s632] ss:$2 sm:$0xff]
        %s634 = scalar_lea.vmem %s624, 160
        %v635 = vld [vmem:[%s634] ss:$2 sm:$0xff]
        %s636 = scalar_lea.vmem %s624, 192
        %v637 = vld [vmem:[%s636] ss:$2 sm:$0xff]
        %s638 = scalar_lea.vmem %s624, 224
        %v639 = vld [vmem:[%s638] ss:$2 sm:$0xff]
        %v640 = vmul.f32 %v584, 0.75
        %v641 = vmul.f32 %v585, 0.75
        %v642 = vmul.f32 %v586, 0.75
        %v643 = vmul.f32 %v587, 0.75
        %v644 = vmul.f32 %v588, 0.75
        %v645 = vmul.f32 %v589, 0.75
        %v646 = vmul.f32 %v590, 0.75
        %v647 = vmul.f32 %v591, 0.75
        %v648 = vmul.f32 %v616, 0.25
        %v649 = vmul.f32 %v617, 0.25
        %v650 = vmul.f32 %v618, 0.25
        %v651 = vmul.f32 %v619, 0.25
        %v652 = vmul.f32 %v620, 0.25
        %v653 = vmul.f32 %v621, 0.25
        %v654 = vmul.f32 %v622, 0.25
        %v655 = vmul.f32 %v623, 0.25
        %v656 = vadd.f32 %v640, %v648
        %v657 = vadd.f32 %v641, %v649
        %v658 = vadd.f32 %v642, %v650
        %v659 = vadd.f32 %v643, %v651
        %v660 = vadd.f32 %v644, %v652
        %v661 = vadd.f32 %v645, %v653
        %v662 = vadd.f32 %v646, %v654
        %v663 = vadd.f32 %v647, %v655
        %v664 = vadd.f32 %v656, %v625
        %v665 = vadd.f32 %v657, %v627
        %v666 = vadd.f32 %v658, %v629
        %v667 = vadd.f32 %v659, %v631
        %v668 = vadd.f32 %v660, %v633
        %v669 = vadd.f32 %v661, %v635
        %v670 = vadd.f32 %v662, %v637
        %v671 = vadd.f32 %v663, %v639
        %v672 = vperm.slane %v338, 7
        %v673 = vmul.f32 %v664, %v672
        %v674 = vmul.f32 %v665, %v672
        %v675 = vmul.f32 %v666, %v672
        %v676 = vmul.f32 %v667, %v672
        %v677 = vmul.f32 %v668, %v672
        %v678 = vmul.f32 %v669, %v672
        %v679 = vmul.f32 %v670, %v672
        %v680 = vmul.f32 %v671, %v672
        %v681 = vadd.f32 %v575, %v673
        %v682 = vadd.f32 %v576, %v674
        %v683 = vadd.f32 %v577, %v675
        %v684 = vadd.f32 %v578, %v676
        %v685 = vadd.f32 %v579, %v677
        %v686 = vadd.f32 %v580, %v678
        %v687 = vadd.f32 %v581, %v679
        %v688 = vadd.f32 %v582, %v680
        %v689 = vperm.slane %v338, 1
        %v690 = vmul.f32 %v689, 0.0
        %v691 = vmul.f32 %v664, %v689
        %v692 = vmul.f32 %v665, %v689
        %v693 = vmul.f32 %v666, %v689
        %v694 = vmul.f32 %v667, %v689
        %v695 = vmul.f32 %v668, %v689
        %v696 = vmul.f32 %v669, %v689
        %v697 = vmul.f32 %v670, %v689
        %v698 = vadd.f32 %v681, %v690
        %v699 = vadd.f32 %v682, %v691
        %v700 = vadd.f32 %v683, %v692
        %v701 = vadd.f32 %v684, %v693
        %v702 = vadd.f32 %v685, %v694
        %v703 = vadd.f32 %v686, %v695
        %v704 = vadd.f32 %v687, %v696
        %v705 = vadd.f32 %v688, %v697
        %v706 = vrot.slane %v584, 1
        %v707 = vrot.slane %v585, 1
        %v708 = vrot.slane %v586, 1
        %v709 = vrot.slane %v587, 1
        %v710 = vrot.slane %v588, 1
        %v711 = vrot.slane %v589, 1
        %v712 = vrot.slane %v590, 1
        %v713 = vrot.slane %v591, 1
        %v722 = vsel %vm468, %v706, %v584
        %v723 = vsel %vm468, %v707, %v585
        %v724 = vsel %vm468, %v708, %v586
        %v725 = vsel %vm468, %v709, %v587
        %v726 = vsel %vm468, %v710, %v588
        %v727 = vsel %vm468, %v711, %v589
        %v728 = vsel %vm468, %v712, %v590
        %v729 = vsel %vm468, %v713, %v591
        %s730 = scalar_lea.vmem %s624, 1
        %v731 = vld [vmem:[%s730] ss:$2 sm:$0xff]
        %s732 = scalar_lea.vmem %s624, 33
        %v733 = vld [vmem:[%s732] ss:$2 sm:$0xff]
        %s734 = scalar_lea.vmem %s624, 65
        %v735 = vld [vmem:[%s734] ss:$2 sm:$0xff]
        %s736 = scalar_lea.vmem %s624, 97
        %v737 = vld [vmem:[%s736] ss:$2 sm:$0xff]
        %s738 = scalar_lea.vmem %s624, 129
        %v739 = vld [vmem:[%s738] ss:$2 sm:$0xff]
        %s740 = scalar_lea.vmem %s624, 161
        %v741 = vld [vmem:[%s740] ss:$2 sm:$0xff]
        %s742 = scalar_lea.vmem %s624, 193
        %v743 = vld [vmem:[%s742] ss:$2 sm:$0xff]
        %s744 = scalar_lea.vmem %s624, 225
        %v745 = vld [vmem:[%s744] ss:$2 sm:$0xff]
        %v746 = vmul.f32 %v722, 0.25
        %v747 = vmul.f32 %v723, 0.25
        %v748 = vmul.f32 %v724, 0.25
        %v749 = vmul.f32 %v725, 0.25
        %v750 = vmul.f32 %v726, 0.25
        %v751 = vmul.f32 %v727, 0.25
        %v752 = vmul.f32 %v728, 0.25
        %v753 = vmul.f32 %v729, 0.25
        %v754 = vadd.f32 %v640, %v746
        %v755 = vadd.f32 %v641, %v747
        %v756 = vadd.f32 %v642, %v748
        %v757 = vadd.f32 %v643, %v749
        %v758 = vadd.f32 %v644, %v750
        %v759 = vadd.f32 %v645, %v751
        %v760 = vadd.f32 %v646, %v752
        %v761 = vadd.f32 %v647, %v753
        %v762 = vadd.f32 %v754, %v731
        %v763 = vadd.f32 %v755, %v733
        %v764 = vadd.f32 %v756, %v735
        %v765 = vadd.f32 %v757, %v737
        %v766 = vadd.f32 %v758, %v739
        %v767 = vadd.f32 %v759, %v741
        %v768 = vadd.f32 %v760, %v743
        %v769 = vadd.f32 %v761, %v745
        %v770 = vperm.slane %v339, 0
        %v771 = vmul.f32 %v762, %v770
        %v772 = vmul.f32 %v763, %v770
        %v773 = vmul.f32 %v764, %v770
        %v774 = vmul.f32 %v765, %v770
        %v775 = vmul.f32 %v766, %v770
        %v776 = vmul.f32 %v767, %v770
        %v777 = vmul.f32 %v768, %v770
        %v778 = vmul.f32 %v769, %v770
        %v779 = vadd.f32 %v698, %v771
        %v780 = vadd.f32 %v699, %v772
        %v781 = vadd.f32 %v700, %v773
        %v782 = vadd.f32 %v701, %v774
        %v783 = vadd.f32 %v702, %v775
        %v784 = vadd.f32 %v703, %v776
        %v785 = vadd.f32 %v704, %v777
        %v786 = vadd.f32 %v705, %v778
        %v795 = vrot.slane %v762, 7
        %v796 = vrot.slane %v763, 7
        %v797 = vrot.slane %v764, 7
        %v798 = vrot.slane %v765, 7
        %v799 = vrot.slane %v766, 7
        %v800 = vrot.slane %v767, 7
        %v801 = vrot.slane %v768, 7
        %v802 = vrot.slane %v769, 7
        %v811 = vsel %vm387, 0.0, %v795
        %v812 = vsel %vm387, 0.0, %v796
        %v813 = vsel %vm387, 0.0, %v797
        %v814 = vsel %vm387, 0.0, %v798
        %v815 = vsel %vm387, 0.0, %v799
        %v816 = vsel %vm387, 0.0, %v800
        %v817 = vsel %vm387, 0.0, %v801
        %v818 = vsel %vm387, 0.0, %v802
        %v819 = vperm.slane %v338, 6
        %v820 = vmul.f32 %v811, %v819
        %v821 = vmul.f32 %v812, %v819
        %v822 = vmul.f32 %v813, %v819
        %v823 = vmul.f32 %v814, %v819
        %v824 = vmul.f32 %v815, %v819
        %v825 = vmul.f32 %v816, %v819
        %v826 = vmul.f32 %v817, %v819
        %v827 = vmul.f32 %v818, %v819
        %v828 = vadd.f32 %v779, %v820
        %v829 = vadd.f32 %v780, %v821
        %v830 = vadd.f32 %v781, %v822
        %v831 = vadd.f32 %v782, %v823
        %v832 = vadd.f32 %v783, %v824
        %v833 = vadd.f32 %v784, %v825
        %v834 = vadd.f32 %v785, %v826
        %v835 = vadd.f32 %v786, %v827
        %v836 = vperm.slane %v338, 2
        %v837 = vmul.f32 %v836, 0.0
        %v838 = vmul.f32 %v762, %v836
        %v839 = vmul.f32 %v763, %v836
        %v840 = vmul.f32 %v764, %v836
        %v841 = vmul.f32 %v765, %v836
        %v842 = vmul.f32 %v766, %v836
        %v843 = vmul.f32 %v767, %v836
        %v844 = vmul.f32 %v768, %v836
        %v845 = vadd.f32 %v828, %v837
        %v846 = vadd.f32 %v829, %v838
        %v847 = vadd.f32 %v830, %v839
        %v848 = vadd.f32 %v831, %v840
        %v849 = vadd.f32 %v832, %v841
        %v850 = vadd.f32 %v833, %v842
        %v851 = vadd.f32 %v834, %v843
        %v852 = vadd.f32 %v835, %v844
        %v854 = vrot.slane 0.0, 7
        %v856 = vsel %vm387, 0.0, %v854
        %v857 = vperm.slane %v338, 0
        %v858 = vmul.f32 %v856, %v857
        %v859 = vmul.f32 %v811, %v857
        %v860 = vmul.f32 %v812, %v857
        %v861 = vmul.f32 %v813, %v857
        %v862 = vmul.f32 %v814, %v857
        %v863 = vmul.f32 %v815, %v857
        %v864 = vmul.f32 %v816, %v857
        %v865 = vmul.f32 %v817, %v857
        %v866 = vadd.f32 %v845, %v858
        %v867 = vadd.f32 %v846, %v859
        %v868 = vadd.f32 %v847, %v860
        %v869 = vadd.f32 %v848, %v861
        %v870 = vadd.f32 %v849, %v862
        %v871 = vadd.f32 %v850, %v863
        %v872 = vadd.f32 %v851, %v864
        %v873 = vadd.f32 %v852, %v865
        %v874 = vld [vmem:[%s4] sm:$0xf]
        %v875 = vld [vmem:[%s4 + $0x4] sm:$0xf]
        %v876 = vld [vmem:[%s4 + $0x8] sm:$0xf]
        %v877 = vld [vmem:[%s4 + $0xc] sm:$0xf]
        %v878 = vld [vmem:[%s4 + $0x10] sm:$0xf]
        %v879 = vld [vmem:[%s4 + $0x14] sm:$0xf]
        %v880 = vld [vmem:[%s4 + $0x18] sm:$0xf]
        %v881 = vld [vmem:[%s4 + $0x1c] sm:$0xf]
        %v882 = vld [vmem:[%s4 + $0x20] sm:$0xf]
        %v883 = vld [vmem:[%s4 + $0x24] sm:$0xf]
        %v884 = vld [vmem:[%s4 + $0x28] sm:$0xf]
        %v885 = vld [vmem:[%s4 + $0x2c] sm:$0xf]
        %v886 = vld [vmem:[%s4 + $0x30] sm:$0xf]
        %v887 = vld [vmem:[%s4 + $0x34] sm:$0xf]
        %v888 = vld [vmem:[%s4 + $0x38] sm:$0xf]
        %v889 = vld [vmem:[%s4 + $0x3c] sm:$0xf]
        %v890 = vld [vmem:[%s5] sm:$0x1]
        %v891 = vpack.c.bf16 %v867, %v866
        %v892 = vpack.c.bf16 %v869, %v868
        %v893 = vpack.c.bf16 %v871, %v870
        %v894 = vpack.c.bf16 %v873, %v872
        %v896 = vperm.slane %v890, 0
        %v914 = vunpack.c.l.b16 %v874
        %v915 = vunpack.c.l.b16 %v875
        %v916 = vunpack.c.l.b16 %v876
        %v917 = vunpack.c.l.b16 %v877
        %v918 = vunpack.c.l.b16 %v878
        %v919 = vunpack.c.l.b16 %v879
        %v920 = vunpack.c.l.b16 %v880
        %v921 = vunpack.c.l.b16 %v881
        %v922 = vunpack.c.l.b16 %v882
        %v923 = vunpack.c.l.b16 %v883
        %v924 = vunpack.c.l.b16 %v884
        %v925 = vunpack.c.l.b16 %v885
        %v926 = vunpack.c.l.b16 %v886
        %v927 = vunpack.c.l.b16 %v887
        %v928 = vunpack.c.l.b16 %v888
        %v929 = vunpack.c.l.b16 %v889
        %v930 = vpack.c.b16 %v915, %v914
        %v931 = vpack.c.b16 %v917, %v916
        %v932 = vpack.c.b16 %v919, %v918
        %v933 = vpack.c.b16 %v921, %v920
        %v934 = vpack.c.b16 %v923, %v922
        %v935 = vpack.c.b16 %v925, %v924
        %v936 = vpack.c.b16 %v927, %v926
        %v937 = vpack.c.b16 %v929, %v928
        %946 = vmatpush.bf16.msra.mxu0 %v937
        %947 = vmatpush.bf16.msra.mxu0 %v936
        %948 = vmatpush.bf16.msra.mxu0 %v935
        %949 = vmatpush.bf16.msra.mxu0 %v934
        %950 = vmatpush.bf16.msra.mxu0 %v933
        %951 = vmatpush.bf16.msra.mxu0 %v932
        %952 = vmatpush.bf16.msra.mxu0 %v931
        %953 = vmatpush.bf16.msra.mxu0 %v930
        %954 = vmatmul.bf16.gmra.mxu0 %v891
        %v955 = vpop.f32.mrf.mxu0
        %v956 = vadd.f32 %v896, %v955
        %v957 = vpop.f32.mrf.mxu0
        %v958 = vadd.f32 %v896, %v957
        %959 = vmatmul.bf16.gmra.mxu0 %v892
        %v960 = vpop.f32.mrf.mxu0
        %v961 = vadd.f32 %v896, %v960
        %v962 = vpop.f32.mrf.mxu0
        %v963 = vadd.f32 %v896, %v962
        %964 = vmatmul.bf16.gmra.mxu0 %v893
        %v965 = vpop.f32.mrf.mxu0
        %v966 = vadd.f32 %v896, %v965
        %v967 = vpop.f32.mrf.mxu0
        %v968 = vadd.f32 %v896, %v967
        %969 = vmatmul.bf16.gmra.mxu0 %v894
        %v970 = vpop.f32.mrf.mxu0
        %v971 = vadd.f32 %v896, %v970
        %v972 = vpop.f32.mrf.mxu0
        %v973 = vadd.f32 %v896, %v972
        %974 = vdwg.mxu0
        %v975 = vmax.f32 %v956, 0.0
        %v976 = vmax.f32 %v958, 0.0
        %v977 = vmax.f32 %v961, 0.0
        %v978 = vmax.f32 %v963, 0.0
        %v979 = vmax.f32 %v966, 0.0
        %v980 = vmax.f32 %v968, 0.0
        %v981 = vmax.f32 %v971, 0.0
        %v982 = vmax.f32 %v973, 0.0
        %983 = vst [vmem:[%s329] sm:$0xff] %v975
        %984 = vst [vmem:[%s329 + $0x8] sm:$0xff] %v976
        %985 = vst [vmem:[%s329 + $0x10] sm:$0xff] %v977
        %986 = vst [vmem:[%s329 + $0x18] sm:$0xff] %v978
        %987 = vst [vmem:[%s329 + $0x20] sm:$0xff] %v979
        %988 = vst [vmem:[%s329 + $0x28] sm:$0xff] %v980
        %989 = vst [vmem:[%s329 + $0x30] sm:$0xff] %v981
        %990 = vst [vmem:[%s329 + $0x38] sm:$0xff] %v982
        %v991 = vld [vmem:[%s324] sm:$0xff]
        %v992 = vld [vmem:[%s324 + $0x8] sm:$0xff]
        %v993 = vld [vmem:[%s324 + $0x10] sm:$0xff]
        %v994 = vld [vmem:[%s324 + $0x18] sm:$0xff]
        %v995 = vld [vmem:[%s324 + $0x20] sm:$0xff]
        %v996 = vld [vmem:[%s324 + $0x28] sm:$0xff]
        %v997 = vld [vmem:[%s324 + $0x30] sm:$0xff]
        %v998 = vld [vmem:[%s324 + $0x38] sm:$0xff]
        %v999 = vadd.f32 %v975, %v991
        %v1000 = vadd.f32 %v976, %v992
        %v1001 = vadd.f32 %v977, %v993
        %v1002 = vadd.f32 %v978, %v994
        %v1003 = vadd.f32 %v979, %v995
        %v1004 = vadd.f32 %v980, %v996
        %v1005 = vadd.f32 %v981, %v997
        %v1006 = vadd.f32 %v982, %v998
        %1007 = vst [vmem:[%s309] sm:$0xff] %v999
        %1008 = vst [vmem:[%s309 + $0x8] sm:$0xff] %v1000
        %1009 = vst [vmem:[%s309 + $0x10] sm:$0xff] %v1001
        %1010 = vst [vmem:[%s309 + $0x18] sm:$0xff] %v1002
        %1011 = vst [vmem:[%s309 + $0x20] sm:$0xff] %v1003
        %1012 = vst [vmem:[%s309 + $0x28] sm:$0xff] %v1004
        %1013 = vst [vmem:[%s309 + $0x30] sm:$0xff] %v1005
        %1014 = vst [vmem:[%s309 + $0x38] sm:$0xff] %v1006
        %p1015 = scmp.lt.s32.totalorder %s22, 1
        %s1016 = scalar_select %p1015, %s22, 1
        %s1017 = smul.addr %s1016, 8
        %s1018 = smul.addr %s1017, 8
        %s1019 = scalar_lea.vmem %s6, %s1018
        %s1020 = sand.u32 %s197, 1
        %s1021 = scalar_lea.sflag [#allocation3], %s1020
        %s1022 = sand.u32 %s197, 1
        %s1023 = smul.addr %s1022, 64
        %s1024 = scalar_lea.vmem [#allocation2], %s1023
        // Predicated region
        $region45: #{fpem_v2_forward.9} parent=43 // pred_check
          %p1025 = pneg %p181
        $region46: #{fpem_v2_forward.9} parent=43 // pred_check_branch
          %1027 = sbr.rel (%p1025) target = $region48
        $region47: #{fpem_v2_forward.9} parent=43 // pred_region
          _
        $region48: #{fpem_v2_forward.9} parent=43 // pred_fallthru
          _
        // Predicated region
        $region49: #{fpem_v2_forward.9} parent=43 // pred_check
          %p1028 = pneg %p207
        $region50: #{fpem_v2_forward.9} parent=43 // pred_check_branch
          %1030 = sbr.rel (%p1028) target = $region52
        $region51: #{fpem_v2_forward.9} parent=43 // pred_region
          %1032 = vsyncadd %s1021, 0
          %s1033 = smul.addr %s22, 8
          %s1034 = smul.addr %s1033, 8
          %s1035 = scalar_lea.hbm %s7, %s1034
          %s1036 = sshll.u32 %s1024, 4
          %s1037 = int_to_ptr.vmem [resolvable:$true] %s1036
          %s1038 = sshll.u32 %s1035, 4
          %s1039 = int_to_ptr.hbm [resolvable:$true] %s1038
          %1044 = dma.vmem_to_hbm [thread:$0]  %s1037, 1024, %s1039, %s1021, 128, 128, 8
        $region52: #{fpem_v2_forward.9} parent=43 // pred_fallthru
          _
      $region44: #{fpem_v2_forward.9} parent=5 // pred_fallthru
        _
      %p1045 = scmp.le.s32.totalorder 2, %s17
      // Predicated region
      $region53: #{fpem_v2_forward.9} parent=5 // pred_check
        %p1046 = pneg %p1045
      $region54: #{fpem_v2_forward.9} parent=5 // pred_check_branch
        %1048 = sbr.rel (%p1046) target = $region56
      $region55: #{fpem_v2_forward.9} parent=5 // pred_region
        %s1049 = ssub.s32 %s17, 2
        // Predicated region
        $region57: #{fpem_v2_forward.9} parent=55 // pred_check
          %p1050 = pneg %p187
        $region58: #{fpem_v2_forward.9} parent=55 // pred_check_branch
          %1052 = sbr.rel (%p1050) target = $region60
        $region59: #{fpem_v2_forward.9} parent=55 // pred_region
          %p1053 = scmp.lt.s32.totalorder %s23, 1
          %s1054 = scalar_select %p1053, %s23, 1
          %s1055 = smul.addr %s1054, 8
          %s1056 = smul.addr %s1055, 8
          %s1057 = scalar_lea.vmem %s6, %s1056
        $region60: #{fpem_v2_forward.9} parent=55 // pred_fallthru
          _
        // Predicated region
        $region61: #{fpem_v2_forward.9} parent=55 // pred_check
          %p1058 = pneg %p213
        $region62: #{fpem_v2_forward.9} parent=55 // pred_check_branch
          %1060 = sbr.rel (%p1058) target = $region64
        $region63: #{fpem_v2_forward.9} parent=55 // pred_region
          %s1061 = sand.u32 %s198, 1
          %s1062 = scalar_lea.sflag [#allocation3], %s1061
          %s1063 = sand.u32 %s198, 1
          %s1064 = smul.addr %s1063, 64
          %s1065 = scalar_lea.vmem [#allocation2], %s1064
          %1067 = dma.done %s1062, 1024
        $region64: #{fpem_v2_forward.9} parent=55 // pred_fallthru
          _
      $region56: #{fpem_v2_forward.9} parent=5 // pred_fallthru
        _
    $region6: #{fpem_v2_forward.9} parent=1 // loop_footer
      %s21 = sadd.s32 1, %s17
    $region7: #{fpem_v2_forward.9} parent=1 // loop_footer_branch
      %16 = sbr.rel target = $region3
    $region8: #{fpem_v2_forward.9} parent=1 // loop_exit
      _
    %1068 = vsyncpa [#allocation3], 1
    %s1069 = scalar_lea.sflag [#allocation3], 1
    %1070 = vsyncpa %s1069, 1

// kernel: fpem_v2_forward.11
$region0: #{fpem_v2_forward.11}
  #allocation0 [shape = 'u32[]', space=smem, size = 0x4, offset = 0x4, fixed_abs, tag = 'smem constant byte address 0x4 - core index']
  #allocation1 [shape = 'u32[72,128]{1,0:T(1,128)}', space=vmem, size = 0x9000, scoped, tag = 'internal scratch']
  %s0 = inlined_call_operand.vmem [shape: f32[2,2,2,128], index: 0, kind: input, shape index: {}]
  %s1 = inlined_call_operand.vmem [shape: f32[2,2,2,4,128], index: 1, kind: input, shape index: {}]
  %s2 = inlined_call_operand.vmem [shape: f32[9,128], index: 2, kind: input, shape index: {}]
  %s3 = inlined_call_operand.vmem [shape: bf16[128,128], index: 3, kind: input, shape index: {}]
  %s4 = inlined_call_operand.vmem [shape: f32[1,128], index: 4, kind: input, shape index: {}]
  %s5 = inlined_call_operand.hbm [shape: f32[2,2,2,128], index: 5, kind: output, shape index: {}]
  %s6 = sld [smem:[#allocation0]]
  $region53: #{fpem_v2_forward.11} parent=0
    _
  %s8 = ssub.s32 1, %s6
  %s9 = scalar_select 0, %s8, %s6
  $region1: #{fpem_v2_forward.11} parent=0
    #allocation2 [shape = 'u8[4096]{0}', space=vmem, size = 0x1000, scoped, tag = 'output window, operand 0']
    #allocation3 [shape = 's32[2]{0}', space=sflag, size = 0x8, scoped, tag = 'scoped memory for fpem_v2_forward.11']
    %10 = vsyncpa [#allocation3], 0
    %s11 = scalar_lea.sflag [#allocation3], 1
    %12 = vsyncpa %s11, 0
    loop: start=0, step=1, limit=4
    $region2: #{fpem_v2_forward.11} parent=1 // loop_pre_header
      _
    $region3: #{fpem_v2_forward.11} parent=1 // loop_header
      %s14 = sphi 0, %s18
      %p15 = scmp.ge.s32.totalorder %s14, 4
      %s24 = sphi 0, %s26
      %s27 = sphi 0, %s24
      %s28 = sphi 0, %s27
      %s44 = sphi 0, %s28
      %s50 = sphi 0, %s52
      %s53 = sphi 0, %s50
      %s54 = sphi 0, %s53
      %s70 = sphi 0, %s54
      %s74 = sphi 0, %s74
      %s76 = sphi 0, %s74
      %s77 = sphi 0, %s76
      %s91 = sphi 0, %s77
      %s95 = sphi 0, %s95
      %s97 = sphi 0, %s95
      %s98 = sphi 0, %s97
      %s112 = sphi 0, %s98
      %s116 = sphi 0, %s116
      %s118 = sphi 0, %s116
      %s119 = sphi 0, %s118
      %s133 = sphi 0, %s119
      %s139 = sphi 0, %s141
      %s142 = sphi 0, %s139
      %s143 = sphi 0, %s142
      %s159 = sphi 0, %s143
    $region4: #{fpem_v2_forward.11} parent=1 // loop_header_branch
      %17 = sbr.rel (%p15) target = $region8
    $region5: #{fpem_v2_forward.11} parent=1 // loop_body
      %s19 = ssub.s32 %s14, 1
      %s20 = ssub.s32 %s14, 2
      %s21 = sadd.s32 %s14, 1
      %s22 = ssub.s32 %s14, %s21
      %p23 = scmp.eq.s32.totalorder %s22, 0
      %s25 = sadd.s32 %s24, 1
      %s26 = scalar_select %p23, %s24, %s25
      %p29 = pneg %p23
      %p30 = scmp.eq.s32.totalorder %s14, 1
      %p31 = por %p29, %p30
      %p32 = scmp.ne.s32.totalorder %s24, %s27
      %p33 = scmp.eq.s32.totalorder %s14, 0
      %p34 = por %p32, %p33
      %p35 = scmp.ne.s32.totalorder %s24, %s27
      %p36 = scmp.eq.s32.totalorder %s19, 1
      %p37 = por %p35, %p36
      %p38 = scmp.ne.s32.totalorder %s27, %s28
      %p39 = scmp.eq.s32.totalorder %s19, 0
      %p40 = por %p38, %p39
      %p41 = scmp.ne.s32.totalorder %s27, %s28
      %p42 = scmp.eq.s32.totalorder %s20, 1
      %p43 = por %p41, %p42
      %p45 = scmp.ne.s32.totalorder %s28, %s44
      %p46 = scmp.eq.s32.totalorder %s20, 0
      %p47 = por %p45, %p46
      %s48 = ssub.s32 %s14, %s21
      %p49 = scmp.eq.s32.totalorder %s48, 0
      %s51 = sadd.s32 %s50, 1
      %s52 = scalar_select %p49, %s50, %s51
      %p55 = pneg %p49
      %p56 = scmp.eq.s32.totalorder %s14, 1
      %p57 = por %p55, %p56
      %p58 = scmp.ne.s32.totalorder %s50, %s53
      %p59 = scmp.eq.s32.totalorder %s14, 0
      %p60 = por %p58, %p59
      %p61 = scmp.ne.s32.totalorder %s50, %s53
      %p62 = scmp.eq.s32.totalorder %s19, 1
      %p63 = por %p61, %p62
      %p64 = scmp.ne.s32.totalorder %s53, %s54
      %p65 = scmp.eq.s32.totalorder %s19, 0
      %p66 = por %p64, %p65
      %p67 = scmp.ne.s32.totalorder %s53, %s54
      %p68 = scmp.eq.s32.totalorder %s20, 1
      %p69 = por %p67, %p68
      %p71 = scmp.ne.s32.totalorder %s54, %s70
      %p72 = scmp.eq.s32.totalorder %s20, 0
      %p73 = por %p71, %p72
      %s75 = sadd.s32 %s74, 1
      %p78 = scmp.eq.s32.totalorder %s14, 1
      %p79 = scmp.ne.s32.totalorder %s74, %s76
      %p80 = scmp.eq.s32.totalorder %s14, 0
      %p81 = por %p79, %p80
      %p82 = scmp.ne.s32.totalorder %s74, %s76
      %p83 = scmp.eq.s32.totalorder %s19, 1
      %p84 = por %p82, %p83
      %p85 = scmp.ne.s32.totalorder %s76, %s77
      %p86 = scmp.eq.s32.totalorder %s19, 0
      %p87 = por %p85, %p86
      %p88 = scmp.ne.s32.totalorder %s76, %s77
      %p89 = scmp.eq.s32.totalorder %s20, 1
      %p90 = por %p88, %p89
      %p92 = scmp.ne.s32.totalorder %s77, %s91
      %p93 = scmp.eq.s32.totalorder %s20, 0
      %p94 = por %p92, %p93
      %s96 = sadd.s32 %s95, 1
      %p99 = scmp.eq.s32.totalorder %s14, 1
      %p100 = scmp.ne.s32.totalorder %s95, %s97
      %p101 = scmp.eq.s32.totalorder %s14, 0
      %p102 = por %p100, %p101
      %p103 = scmp.ne.s32.totalorder %s95, %s97
      %p104 = scmp.eq.s32.totalorder %s19, 1
      %p105 = por %p103, %p104
      %p106 = scmp.ne.s32.totalorder %s97, %s98
      %p107 = scmp.eq.s32.totalorder %s19, 0
      %p108 = por %p106, %p107
      %p109 = scmp.ne.s32.totalorder %s97, %s98
      %p110 = scmp.eq.s32.totalorder %s20, 1
      %p111 = por %p109, %p110
      %p113 = scmp.ne.s32.totalorder %s98, %s112
      %p114 = scmp.eq.s32.totalorder %s20, 0
      %p115 = por %p113, %p114
      %s117 = sadd.s32 %s116, 1
      %p120 = scmp.eq.s32.totalorder %s14, 1
      %p121 = scmp.ne.s32.totalorder %s116, %s118
      %p122 = scmp.eq.s32.totalorder %s14, 0
      %p123 = por %p121, %p122
      %p124 = scmp.ne.s32.totalorder %s116, %s118
      %p125 = scmp.eq.s32.totalorder %s19, 1
      %p126 = por %p124, %p125
      %p127 = scmp.ne.s32.totalorder %s118, %s119
      %p128 = scmp.eq.s32.totalorder %s19, 0
      %p129 = por %p127, %p128
      %p130 = scmp.ne.s32.totalorder %s118, %s119
      %p131 = scmp.eq.s32.totalorder %s20, 1
      %p132 = por %p130, %p131
      %p134 = scmp.ne.s32.totalorder %s119, %s133
      %p135 = scmp.eq.s32.totalorder %s20, 0
      %p136 = por %p134, %p135
      %s137 = ssub.s32 %s14, %s21
      %p138 = scmp.eq.s32.totalorder %s137, 0
      %s140 = sadd.s32 %s139, 1
      %s141 = scalar_select %p138, %s139, %s140
      %p144 = pneg %p138
      %p145 = scmp.eq.s32.totalorder %s14, 1
      %p146 = por %p144, %p145
      %p147 = scmp.ne.s32.totalorder %s139, %s142
      %p148 = scmp.eq.s32.totalorder %s14, 0
      %p149 = por %p147, %p148
      %p150 = scmp.ne.s32.totalorder %s139, %s142
      %p151 = scmp.eq.s32.totalorder %s19, 1
      %p152 = por %p150, %p151
      %p153 = scmp.ne.s32.totalorder %s142, %s143
      %p154 = scmp.eq.s32.totalorder %s19, 0
      %p155 = por %p153, %p154
      %p156 = scmp.ne.s32.totalorder %s142, %s143
      %p157 = scmp.eq.s32.totalorder %s20, 1
      %p158 = por %p156, %p157
      %p160 = scmp.ne.s32.totalorder %s143, %s159
      %p161 = scmp.eq.s32.totalorder %s20, 0
      %p162 = por %p160, %p161
      %p163 = scmp.le.s32.totalorder 1, %s14
      %p164 = scmp.lt.s32.totalorder %s14, 3
      %p165 = pnand %p163, %p164
      %p166 = pneg %p165
      // Predicated region
      $region9: #{fpem_v2_forward.11} parent=5 // pred_check
        _
      $region10: #{fpem_v2_forward.11} parent=5 // pred_check_branch
        %168 = sbr.rel (%p165) target = $region12
      $region11: #{fpem_v2_forward.11} parent=5 // pred_region
        %s169 = ssub.s32 %s14, 1
        // Predicated region
        $region13: #{fpem_v2_forward.11} parent=11 // pred_check
          %p170 = pneg %p87
        $region14: #{fpem_v2_forward.11} parent=11 // pred_check_branch
          %172 = sbr.rel (%p170) target = $region16
        $region15: #{fpem_v2_forward.11} parent=11 // pred_region
          _
        $region16: #{fpem_v2_forward.11} parent=11 // pred_fallthru
          _
        // Predicated region
        $region17: #{fpem_v2_forward.11} parent=11 // pred_check
          %p173 = pneg %p108
        $region18: #{fpem_v2_forward.11} parent=11 // pred_check_branch
          %175 = sbr.rel (%p173) target = $region20
        $region19: #{fpem_v2_forward.11} parent=11 // pred_region
          _
        $region20: #{fpem_v2_forward.11} parent=11 // pred_fallthru
          _
        // Predicated region
        $region21: #{fpem_v2_forward.11} parent=11 // pred_check
          %p176 = pneg %p129
        $region22: #{fpem_v2_forward.11} parent=11 // pred_check_branch
          %178 = sbr.rel (%p176) target = $region24
        $region23: #{fpem_v2_forward.11} parent=11 // pred_region
          _
        $region24: #{fpem_v2_forward.11} parent=11 // pred_fallthru
          _
      $region12: #{fpem_v2_forward.11} parent=5 // pred_fallthru
        _
      %p179 = scmp.lt.s32.totalorder %s14, 2
      // Predicated region
      $region25: #{fpem_v2_forward.11} parent=5 // pred_check
        %p180 = pneg %p179
      $region26: #{fpem_v2_forward.11} parent=5 // pred_check_branch
        %182 = sbr.rel (%p180) target = $region28
      $region27: #{fpem_v2_forward.11} parent=5 // pred_region
        // Predicated region
        $region29: #{fpem_v2_forward.11} parent=27 // pred_check
          %p183 = pneg %p34
        $region30: #{fpem_v2_forward.11} parent=27 // pred_check_branch
          %185 = sbr.rel (%p183) target = $region32
        $region31: #{fpem_v2_forward.11} parent=27 // pred_region
          %p186 = scmp.lt.s32.totalorder %s14, 1
          %s187 = scalar_select %p186, %s14, 1
          %s188 = smul.addr %s187, 2
          %s189 = smul.addr %s188, 2
          %s190 = scalar_lea.vmem %s0, %s189
        $region32: #{fpem_v2_forward.11} parent=27 // pred_fallthru
          _
        // Predicated region
        $region33: #{fpem_v2_forward.11} parent=27 // pred_check
          %p191 = pneg %p60
        $region34: #{fpem_v2_forward.11} parent=27 // pred_check_branch
          %193 = sbr.rel (%p191) target = $region36
        $region35: #{fpem_v2_forward.11} parent=27 // pred_region
          %p194 = scmp.lt.s32.totalorder %s14, 1
          %s195 = scalar_select %p194, %s14, 1
          %s196 = smul.addr %s195, 4
          %s197 = smul.addr %s196, 4
          %s198 = scalar_lea.vmem %s1, %s197
        $region36: #{fpem_v2_forward.11} parent=27 // pred_fallthru
          _
      $region28: #{fpem_v2_forward.11} parent=5 // pred_fallthru
        _
      %p199 = scmp.le.s32.totalorder 1, %s14
      %p200 = scmp.lt.s32.totalorder %s14, 3
      %p201 = pnand %p199, %p200
      %p202 = pneg %p201
      // Predicated region
      $region37: #{fpem_v2_forward.11} parent=5 // pred_check
        _
      $region38: #{fpem_v2_forward.11} parent=5 // pred_check_branch
        %204 = sbr.rel (%p201) target = $region40
      $region39: #{fpem_v2_forward.11} parent=5 // pred_region
        %s205 = ssub.s32 %s14, 1
        %p206 = scmp.lt.s32.totalorder %s19, 1
        %s207 = scalar_select %p206, %s19, 1
        %s208 = smul.addr %s207, 2
        %s209 = smul.addr %s208, 2
        %s210 = scalar_lea.vmem %s0, %s209
        %p211 = pneg %p40
        %p212 = pneg %p37
        %p213 = scmp.lt.s32.totalorder %s19, 1
        %s214 = scalar_select %p213, %s19, 1
        %s215 = smul.addr %s214, 4
        %s216 = smul.addr %s215, 4
        %s217 = scalar_lea.vmem %s1, %s216
        %p218 = pneg %p66
        %p219 = pneg %p63
        %p220 = pneg %p87
        %p221 = pneg %p84
        %p222 = pneg %p108
        %p223 = pneg %p105
        %p224 = pneg %p129
        %p225 = pneg %p126
        %p226 = pneg %p155
        %p227 = pneg %p152
        %s228 = sand.u32 %s142, 1
        %s229 = scalar_lea.sflag [#allocation3], %s228
        %s230 = sand.u32 %s142, 1
        %s231 = smul.addr %s230, 4
        %s232 = scalar_lea.vmem [#allocation2], %s231
        %p233 = scmp.lt.s32.totalorder %s19, 1
        %s234 = scalar_select %p233, %s19, 1
        %s235 = smul.addr %s234, 2
        %s236 = smul.addr %s235, 2
        %s237 = scalar_lea.vmem %s0, %s236
        %p238 = scmp.lt.s32.totalorder %s19, 1
        %s239 = scalar_select %p238, %s19, 1
        %s240 = smul.addr %s239, 4
        %s241 = smul.addr %s240, 4
        %s242 = scalar_lea.vmem %s1, %s241
        %v243 = vld [vmem:[%s237] sm:$0x3]
        %v244 = vld [vmem:[%s237 + $0x2] sm:$0x3]
        %v245 = vld [vmem:[%s2] sm:$0xff]
        %v246 = vld [vmem:[%s2 + $0x8] sm:$0x1]
        %v247 = vmul.f32 %v243, 0.75
        %v248 = vmul.f32 %v244, 0.75
        %v249 = vmul.f32 %v243, 0.25
        %v250 = vadd.f32 %v247, %v249
        %v251 = vadd.f32 %v248, %v249
        %v254 = vrot.slane %v250, 7
        %v255 = vrot.slane %v251, 7
        %vm258 = vcmask 1040384
        %v259 = vsel %vm258, %v250, %v254
        %v260 = vsel %vm258, %v251, %v255
        %v261 = vld [vmem:[%s242] ss:$2 sm:$0x3]
        %s262 = scalar_lea.vmem %s242, 8
        %v263 = vld [vmem:[%s262] ss:$2 sm:$0x3]
        %v264 = vmul.f32 %v250, 0.75
        %v265 = vmul.f32 %v251, 0.75
        %v266 = vmul.f32 %v259, 0.25
        %v267 = vmul.f32 %v260, 0.25
        %v268 = vadd.f32 %v264, %v266
        %v269 = vadd.f32 %v265, %v267
        %v270 = vadd.f32 %v268, %v261
        %v271 = vadd.f32 %v269, %v263
        %v272 = vperm.slane %v245, 4
        %v273 = vmul.f32 %v270, %v272
        %v274 = vmul.f32 %v271, %v272
        %v275 = vrot.slane %v250, 1
        %v276 = vrot.slane %v251, 1
        %v279 = vsel %vm258, %v275, %v250
        %v280 = vsel %vm258, %v276, %v251
        %s281 = scalar_lea.vmem %s242, 1
        %v282 = vld [vmem:[%s281] ss:$2 sm:$0x3]
        %s283 = scalar_lea.vmem %s242, 9
        %v284 = vld [vmem:[%s283] ss:$2 sm:$0x3]
        %v285 = vmul.f32 %v279, 0.25
        %v286 = vmul.f32 %v280, 0.25
        %v287 = vadd.f32 %v264, %v285
        %v288 = vadd.f32 %v265, %v286
        %v289 = vadd.f32 %v287, %v282
        %v290 = vadd.f32 %v288, %v284
        %v291 = vperm.slane %v245, 5
        %v292 = vmul.f32 %v289, %v291
        %v293 = vmul.f32 %v290, %v291
        %v294 = vadd.f32 %v273, %v292
        %v295 = vadd.f32 %v274, %v293
        %v298 = vrot.slane %v289, 7
        %v299 = vrot.slane %v290, 7
        %v302 = vsel %vm258, 0.0, %v298
        %v303 = vsel %vm258, 0.0, %v299
        %v304 = vperm.slane %v245, 3
        %v305 = vmul.f32 %v302, %v304
        %v306 = vmul.f32 %v303, %v304
        %v307 = vadd.f32 %v294, %v305
        %v308 = vadd.f32 %v295, %v306
        %v309 = vmul.f32 %v244, 0.25
        %v310 = vadd.f32 %v247, %v309
        %v311 = vadd.f32 %v248, %v309
        %v314 = vrot.slane %v310, 7
        %v315 = vrot.slane %v311, 7
        %v318 = vsel %vm258, %v310, %v314
        %v319 = vsel %vm258, %v311, %v315
        %s320 = scalar_lea.vmem %s242, 4
        %v321 = vld [vmem:[%s320] ss:$2 sm:$0x3]
        %s322 = scalar_lea.vmem %s320, 8
        %v323 = vld [vmem:[%s322] ss:$2 sm:$0x3]
        %v324 = vmul.f32 %v310, 0.75
        %v325 = vmul.f32 %v311, 0.75
        %v326 = vmul.f32 %v318, 0.25
        %v327 = vmul.f32 %v319, 0.25
        %v328 = vadd.f32 %v324, %v326
        %v329 = vadd.f32 %v325, %v327
        %v330 = vadd.f32 %v328, %v321
        %v331 = vadd.f32 %v329, %v323
        %v332 = vperm.slane %v245, 7
        %v333 = vmul.f32 %v330, %v332
        %v334 = vmul.f32 %v331, %v332
        %v335 = vadd.f32 %v307, %v333
        %v336 = vadd.f32 %v308, %v334
        %v337 = vperm.slane %v245, 1
        %v338 = vmul.f32 %v337, 0.0
        %v339 = vmul.f32 %v330, %v337
        %v340 = vadd.f32 %v335, %v338
        %v341 = vadd.f32 %v336, %v339
        %v342 = vrot.slane %v310, 1
        %v343 = vrot.slane %v311, 1
        %v346 = vsel %vm258, %v342, %v310
        %v347 = vsel %vm258, %v343, %v311
        %s348 = scalar_lea.vmem %s320, 1
        %v349 = vld [vmem:[%s348] ss:$2 sm:$0x3]
        %s350 = scalar_lea.vmem %s320, 9
        %v351 = vld [vmem:[%s350] ss:$2 sm:$0x3]
        %v352 = vmul.f32 %v346, 0.25
        %v353 = vmul.f32 %v347, 0.25
        %v354 = vadd.f32 %v324, %v352
        %v355 = vadd.f32 %v325, %v353
        %v356 = vadd.f32 %v354, %v349
        %v357 = vadd.f32 %v355, %v351
        %v358 = vperm.slane %v246, 0
        %v359 = vmul.f32 %v356, %v358
        %v360 = vmul.f32 %v357, %v358
        %v361 = vadd.f32 %v340, %v359
        %v362 = vadd.f32 %v341, %v360
        %v365 = vrot.slane %v356, 7
        %v366 = vrot.slane %v357, 7
        %v369 = vsel %vm258, 0.0, %v365
        %v370 = vsel %vm258, 0.0, %v366
        %v371 = vperm.slane %v245, 6
        %v372 = vmul.f32 %v369, %v371
        %v373 = vmul.f32 %v370, %v371
        %v374 = vadd.f32 %v361, %v372
        %v375 = vadd.f32 %v362, %v373
        %v376 = vperm.slane %v245, 2
        %v377 = vmul.f32 %v376, 0.0
        %v378 = vmul.f32 %v356, %v376
        %v379 = vadd.f32 %v374, %v377
        %v380 = vadd.f32 %v375, %v378
        %v382 = vrot.slane 0.0, 7
        %v384 = vsel %vm258, 0.0, %v382
        %v385 = vperm.slane %v245, 0
        %v386 = vmul.f32 %v384, %v385
        %v387 = vmul.f32 %v369, %v385
        %v388 = vadd.f32 %v379, %v386
        %v389 = vadd.f32 %v380, %v387
        %v390 = vld [vmem:[%s3] sm:$0xf]
        %v391 = vld [vmem:[%s3 + $0x4] sm:$0xf]
        %v392 = vld [vmem:[%s3 + $0x8] sm:$0xf]
        %v393 = vld [vmem:[%s3 + $0xc] sm:$0xf]
        %v394 = vld [vmem:[%s3 + $0x10] sm:$0xf]
        %v395 = vld [vmem:[%s3 + $0x14] sm:$0xf]
        %v396 = vld [vmem:[%s3 + $0x18] sm:$0xf]
        %v397 = vld [vmem:[%s3 + $0x1c] sm:$0xf]
        %v398 = vld [vmem:[%s3 + $0x20] sm:$0xf]
        %v399 = vld [vmem:[%s3 + $0x24] sm:$0xf]
        %v400 = vld [vmem:[%s3 + $0x28] sm:$0xf]
        %v401 = vld [vmem:[%s3 + $0x2c] sm:$0xf]
        %v402 = vld [vmem:[%s3 + $0x30] sm:$0xf]
        %v403 = vld [vmem:[%s3 + $0x34] sm:$0xf]
        %v404 = vld [vmem:[%s3 + $0x38] sm:$0xf]
        %v405 = vld [vmem:[%s3 + $0x3c] sm:$0xf]
        %v406 = vld [vmem:[%s4] sm:$0x1]
        %vm407 = vcmask 1041408
        %v408 = vsel %vm407, %v388, 0.0
        %v409 = vsel %vm407, %v389, 0.0
        %v410 = vpack.c.bf16 %v409, %v408
        %v412 = vperm.slane %v406, 0
        %v430 = vunpack.c.l.b16 %v390
        %v431 = vunpack.c.l.b16 %v391
        %v432 = vunpack.c.l.b16 %v392
        %v433 = vunpack.c.l.b16 %v393
        %v434 = vunpack.c.l.b16 %v394
        %v435 = vunpack.c.l.b16 %v395
        %v436 = vunpack.c.l.b16 %v396
        %v437 = vunpack.c.l.b16 %v397
        %v438 = vunpack.c.l.b16 %v398
        %v439 = vunpack.c.l.b16 %v399
        %v440 = vunpack.c.l.b16 %v400
        %v441 = vunpack.c.l.b16 %v401
        %v442 = vunpack.c.l.b16 %v402
        %v443 = vunpack.c.l.b16 %v403
        %v444 = vunpack.c.l.b16 %v404
        %v445 = vunpack.c.l.b16 %v405
        %v446 = vpack.c.b16 %v431, %v430
        %v447 = vpack.c.b16 %v433, %v432
        %v448 = vpack.c.b16 %v435, %v434
        %v449 = vpack.c.b16 %v437, %v436
        %v450 = vpack.c.b16 %v439, %v438
        %v451 = vpack.c.b16 %v441, %v440
        %v452 = vpack.c.b16 %v443, %v442
        %v453 = vpack.c.b16 %v445, %v444
        %462 = vmatpush.bf16.msra.mxu0 %v453
        %463 = vmatpush.bf16.msra.mxu0 %v452
        %464 = vmatpush.bf16.msra.mxu0 %v451
        %465 = vmatpush.bf16.msra.mxu0 %v450
        %466 = vmatpush.bf16.msra.mxu0 %v449
        %467 = vmatpush.bf16.msra.mxu0 %v448
        %468 = vmatpush.bf16.msra.mxu0 %v447
        %469 = vmatpush.bf16.msra.mxu0 %v446
        %470 = vmatmul.bf16.gmra.mxu0 %v410
        %v471 = vpop.f32.mrf.mxu0
        %v472 = vadd.f32 %v412, %v471
        %v473 = vpop.f32.mrf.mxu0
        %v474 = vadd.f32 %v412, %v473
        %475 = vdwg.mxu0
        %v476 = vmax.f32 %v472, 0.0
        %v477 = vmax.f32 %v474, 0.0
        %v478 = vadd.f32 %v476, %v243
        %v479 = vadd.f32 %v477, %v244
        %480 = vst [vmem:[%s232] sm:$0x3] %v478
        %481 = vst [vmem:[%s232 + $0x2] sm:$0x3] %v479
        %s482 = sand.u32 %s142, 1
        %s483 = scalar_lea.sflag [#allocation3], %s482
        %s484 = sand.u32 %s142, 1
        %s485 = smul.addr %s484, 4
        %s486 = scalar_lea.vmem [#allocation2], %s485
        // Predicated region
        $region41: #{fpem_v2_forward.11} parent=39 // pred_check
          %p487 = pneg %p152
        $region42: #{fpem_v2_forward.11} parent=39 // pred_check_branch
          %489 = sbr.rel (%p487) target = $region44
        $region43: #{fpem_v2_forward.11} parent=39 // pred_region
          %491 = vsyncadd %s483, 0
          %s492 = smul.addr %s19, 2
          %s493 = smul.addr %s492, 2
          %s494 = scalar_lea.hbm %s5, %s493
          %s495 = sshll.u32 %s486, 4
          %s496 = int_to_ptr.vmem [resolvable:$true] %s495
          %s497 = sshll.u32 %s494, 4
          %s498 = int_to_ptr.hbm [resolvable:$true] %s497
          %503 = dma.vmem_to_hbm [thread:$0]  %s496, 64, %s498, %s483, 32, 32, 2
        $region44: #{fpem_v2_forward.11} parent=39 // pred_fallthru
          _
      $region40: #{fpem_v2_forward.11} parent=5 // pred_fallthru
        _
      %p504 = scmp.le.s32.totalorder 2, %s14
      // Predicated region
      $region45: #{fpem_v2_forward.11} parent=5 // pred_check
        %p505 = pneg %p504
      $region46: #{fpem_v2_forward.11} parent=5 // pred_check_branch
        %507 = sbr.rel (%p505) target = $region48
      $region47: #{fpem_v2_forward.11} parent=5 // pred_region
        %s508 = ssub.s32 %s14, 2
        // Predicated region
        $region49: #{fpem_v2_forward.11} parent=47 // pred_check
          %p509 = pneg %p158
        $region50: #{fpem_v2_forward.11} parent=47 // pred_check_branch
          %511 = sbr.rel (%p509) target = $region52
        $region51: #{fpem_v2_forward.11} parent=47 // pred_region
          %s512 = sand.u32 %s143, 1
          %s513 = scalar_lea.sflag [#allocation3], %s512
          %s514 = sand.u32 %s143, 1
          %s515 = smul.addr %s514, 4
          %s516 = scalar_lea.vmem [#allocation2], %s515
          %518 = dma.done %s513, 64
        $region52: #{fpem_v2_forward.11} parent=47 // pred_fallthru
          _
      $region48: #{fpem_v2_forward.11} parent=5 // pred_fallthru
        _
    $region6: #{fpem_v2_forward.11} parent=1 // loop_footer
      %s18 = sadd.s32 1, %s14
    $region7: #{fpem_v2_forward.11} parent=1 // loop_footer_branch
      %13 = sbr.rel target = $region3
    $region8: #{fpem_v2_forward.11} parent=1 // loop_exit
      _
    %519 = vsyncpa [#allocation3], 1
    %s520 = scalar_lea.sflag [#allocation3], 1
    %521 = vsyncpa %s520, 1

// kernel: fpem_v2_forward.8
$region0: #{fpem_v2_forward.8}
  #allocation0 [shape = 'u32[]', space=smem, size = 0x4, offset = 0x4, fixed_abs, tag = 'smem constant byte address 0x4 - core index']
  #allocation1 [shape = 'u32[72,128]{1,0:T(1,128)}', space=vmem, size = 0x9000, scoped, tag = 'internal scratch']
  %s0 = inlined_call_operand.vmem [shape: f32[2,8,16,128], index: 0, kind: input, shape index: {}]
  %s1 = inlined_call_operand.vmem [shape: f32[2,16,16,128], index: 1, kind: input, shape index: {}]
  %s2 = inlined_call_operand.vmem [shape: f32[9,128], index: 2, kind: input, shape index: {}]
  %s3 = inlined_call_operand.vmem [shape: bf16[128,128], index: 3, kind: input, shape index: {}]
  %s4 = inlined_call_operand.vmem [shape: f32[1,128], index: 4, kind: input, shape index: {}]
  %s5 = inlined_call_operand.vmem [shape: f32[2,16,16,128], index: 5, kind: output, shape index: {0}]
  %s6 = inlined_call_operand.hbm [shape: f32[2,16,16,128], index: 6, kind: output, shape index: {1}]
  %7 = xla_tuple %s5, %s6
  %s8 = sld [smem:[#allocation0]]
  $region61: #{fpem_v2_forward.8} parent=0
    _
  %s10 = ssub.s32 1, %s8
  %s11 = scalar_select 0, %s10, %s8
  $region1: #{fpem_v2_forward.8} parent=0
    #allocation2 [shape = 'u8[262144]{0}', space=vmem, size = 0x40000, scoped, tag = 'output window, operand 1']
    #allocation3 [shape = 's32[2]{0}', space=sflag, size = 0x8, scoped, tag = 'scoped memory for fpem_v2_forward.8']
    %12 = vsyncpa [#allocation3], 0
    %s13 = scalar_lea.sflag [#allocation3], 1
    %14 = vsyncpa %s13, 0
    loop: start=0, step=1, limit=4
    $region2: #{fpem_v2_forward.8} parent=1 // loop_pre_header
      _
    $region3: #{fpem_v2_forward.8} parent=1 // loop_header
      %s16 = sphi 0, %s20
      %p17 = scmp.ge.s32.totalorder %s16, 4
      %s26 = sphi 0, %s28
      %s29 = sphi 0, %s26
      %s30 = sphi 0, %s29
      %s46 = sphi 0, %s30
      %s52 = sphi 0, %s54
      %s55 = sphi 0, %s52
      %s56 = sphi 0, %s55
      %s72 = sphi 0, %s56
      %s76 = sphi 0, %s76
      %s78 = sphi 0, %s76
      %s79 = sphi 0, %s78
      %s93 = sphi 0, %s79
      %s97 = sphi 0, %s97
      %s99 = sphi 0, %s97
      %s100 = sphi 0, %s99
      %s114 = sphi 0, %s100
      %s118 = sphi 0, %s118
      %s120 = sphi 0, %s118
      %s121 = sphi 0, %s120
      %s135 = sphi 0, %s121
      %s141 = sphi 0, %s143
      %s144 = sphi 0, %s141
      %s145 = sphi 0, %s144
      %s161 = sphi 0, %s145
      %s167 = sphi 0, %s169
      %s170 = sphi 0, %s167
      %s171 = sphi 0, %s170
      %s187 = sphi 0, %s171
    $region4: #{fpem_v2_forward.8} parent=1 // loop_header_branch
      %19 = sbr.rel (%p17) target = $region8
    $region5: #{fpem_v2_forward.8} parent=1 // loop_body
      %s21 = ssub.s32 %s16, 1
      %s22 = ssub.s32 %s16, 2
      %s23 = sadd.s32 %s16, 1
      %s24 = ssub.s32 %s16, %s23
      %p25 = scmp.eq.s32.totalorder %s24, 0
      %s27 = sadd.s32 %s26, 1
      %s28 = scalar_select %p25, %s26, %s27
      %p31 = pneg %p25
      %p32 = scmp.eq.s32.totalorder %s16, 1
      %p33 = por %p31, %p32
      %p34 = scmp.ne.s32.totalorder %s26, %s29
      %p35 = scmp.eq.s32.totalorder %s16, 0
      %p36 = por %p34, %p35
      %p37 = scmp.ne.s32.totalorder %s26, %s29
      %p38 = scmp.eq.s32.totalorder %s21, 1
      %p39 = por %p37, %p38
      %p40 = scmp.ne.s32.totalorder %s29, %s30
      %p41 = scmp.eq.s32.totalorder %s21, 0
      %p42 = por %p40, %p41
      %p43 = scmp.ne.s32.totalorder %s29, %s30
      %p44 = scmp.eq.s32.totalorder %s22, 1
      %p45 = por %p43, %p44
      %p47 = scmp.ne.s32.totalorder %s30, %s46
      %p48 = scmp.eq.s32.totalorder %s22, 0
      %p49 = por %p47, %p48
      %s50 = ssub.s32 %s16, %s23
      %p51 = scmp.eq.s32.totalorder %s50, 0
      %s53 = sadd.s32 %s52, 1
      %s54 = scalar_select %p51, %s52, %s53
      %p57 = pneg %p51
      %p58 = scmp.eq.s32.totalorder %s16, 1
      %p59 = por %p57, %p58
      %p60 = scmp.ne.s32.totalorder %s52, %s55
      %p61 = scmp.eq.s32.totalorder %s16, 0
      %p62 = por %p60, %p61
      %p63 = scmp.ne.s32.totalorder %s52, %s55
      %p64 = scmp.eq.s32.totalorder %s21, 1
      %p65 = por %p63, %p64
      %p66 = scmp.ne.s32.totalorder %s55, %s56
      %p67 = scmp.eq.s32.totalorder %s21, 0
      %p68 = por %p66, %p67
      %p69 = scmp.ne.s32.totalorder %s55, %s56
      %p70 = scmp.eq.s32.totalorder %s22, 1
      %p71 = por %p69, %p70
      %p73 = scmp.ne.s32.totalorder %s56, %s72
      %p74 = scmp.eq.s32.totalorder %s22, 0
      %p75 = por %p73, %p74
      %s77 = sadd.s32 %s76, 1
      %p80 = scmp.eq.s32.totalorder %s16, 1
      %p81 = scmp.ne.s32.totalorder %s76, %s78
      %p82 = scmp.eq.s32.totalorder %s16, 0
      %p83 = por %p81, %p82
      %p84 = scmp.ne.s32.totalorder %s76, %s78
      %p85 = scmp.eq.s32.totalorder %s21, 1
      %p86 = por %p84, %p85
      %p87 = scmp.ne.s32.totalorder %s78, %s79
      %p88 = scmp.eq.s32.totalorder %s21, 0
      %p89 = por %p87, %p88
      %p90 = scmp.ne.s32.totalorder %s78, %s79
      %p91 = scmp.eq.s32.totalorder %s22, 1
      %p92 = por %p90, %p91
      %p94 = scmp.ne.s32.totalorder %s79, %s93
      %p95 = scmp.eq.s32.totalorder %s22, 0
      %p96 = por %p94, %p95
      %s98 = sadd.s32 %s97, 1
      %p101 = scmp.eq.s32.totalorder %s16, 1
      %p102 = scmp.ne.s32.totalorder %s97, %s99
      %p103 = scmp.eq.s32.totalorder %s16, 0
      %p104 = por %p102, %p103
      %p105 = scmp.ne.s32.totalorder %s97, %s99
      %p106 = scmp.eq.s32.totalorder %s21, 1
      %p107 = por %p105, %p106
      %p108 = scmp.ne.s32.totalorder %s99, %s100
      %p109 = scmp.eq.s32.totalorder %s21, 0
      %p110 = por %p108, %p109
      %p111 = scmp.ne.s32.totalorder %s99, %s100
      %p112 = scmp.eq.s32.totalorder %s22, 1
      %p113 = por %p111, %p112
      %p115 = scmp.ne.s32.totalorder %s100, %s114
      %p116 = scmp.eq.s32.totalorder %s22, 0
      %p117 = por %p115, %p116
      %s119 = sadd.s32 %s118, 1
      %p122 = scmp.eq.s32.totalorder %s16, 1
      %p123 = scmp.ne.s32.totalorder %s118, %s120
      %p124 = scmp.eq.s32.totalorder %s16, 0
      %p125 = por %p123, %p124
      %p126 = scmp.ne.s32.totalorder %s118, %s120
      %p127 = scmp.eq.s32.totalorder %s21, 1
      %p128 = por %p126, %p127
      %p129 = scmp.ne.s32.totalorder %s120, %s121
      %p130 = scmp.eq.s32.totalorder %s21, 0
      %p131 = por %p129, %p130
      %p132 = scmp.ne.s32.totalorder %s120, %s121
      %p133 = scmp.eq.s32.totalorder %s22, 1
      %p134 = por %p132, %p133
      %p136 = scmp.ne.s32.totalorder %s121, %s135
      %p137 = scmp.eq.s32.totalorder %s22, 0
      %p138 = por %p136, %p137
      %s139 = ssub.s32 %s16, %s23
      %p140 = scmp.eq.s32.totalorder %s139, 0
      %s142 = sadd.s32 %s141, 1
      %s143 = scalar_select %p140, %s141, %s142
      %p146 = pneg %p140
      %p147 = scmp.eq.s32.totalorder %s16, 1
      %p148 = por %p146, %p147
      %p149 = scmp.ne.s32.totalorder %s141, %s144
      %p150 = scmp.eq.s32.totalorder %s16, 0
      %p151 = por %p149, %p150
      %p152 = scmp.ne.s32.totalorder %s141, %s144
      %p153 = scmp.eq.s32.totalorder %s21, 1
      %p154 = por %p152, %p153
      %p155 = scmp.ne.s32.totalorder %s144, %s145
      %p156 = scmp.eq.s32.totalorder %s21, 0
      %p157 = por %p155, %p156
      %p158 = scmp.ne.s32.totalorder %s144, %s145
      %p159 = scmp.eq.s32.totalorder %s22, 1
      %p160 = por %p158, %p159
      %p162 = scmp.ne.s32.totalorder %s145, %s161
      %p163 = scmp.eq.s32.totalorder %s22, 0
      %p164 = por %p162, %p163
      %s165 = ssub.s32 %s16, %s23
      %p166 = scmp.eq.s32.totalorder %s165, 0
      %s168 = sadd.s32 %s167, 1
      %s169 = scalar_select %p166, %s167, %s168
      %p172 = pneg %p166
      %p173 = scmp.eq.s32.totalorder %s16, 1
      %p174 = por %p172, %p173
      %p175 = scmp.ne.s32.totalorder %s167, %s170
      %p176 = scmp.eq.s32.totalorder %s16, 0
      %p177 = por %p175, %p176
      %p178 = scmp.ne.s32.totalorder %s167, %s170
      %p179 = scmp.eq.s32.totalorder %s21, 1
      %p180 = por %p178, %p179
      %p181 = scmp.ne.s32.totalorder %s170, %s171
      %p182 = scmp.eq.s32.totalorder %s21, 0
      %p183 = por %p181, %p182
      %p184 = scmp.ne.s32.totalorder %s170, %s171
      %p185 = scmp.eq.s32.totalorder %s22, 1
      %p186 = por %p184, %p185
      %p188 = scmp.ne.s32.totalorder %s171, %s187
      %p189 = scmp.eq.s32.totalorder %s22, 0
      %p190 = por %p188, %p189
      %p191 = scmp.le.s32.totalorder 1, %s16
      %p192 = scmp.lt.s32.totalorder %s16, 3
      %p193 = pnand %p191, %p192
      %p194 = pneg %p193
      // Predicated region
      $region9: #{fpem_v2_forward.8} parent=5 // pred_check
        _
      $region10: #{fpem_v2_forward.8} parent=5 // pred_check_branch
        %196 = sbr.rel (%p193) target = $region12
      $region11: #{fpem_v2_forward.8} parent=5 // pred_region
        %s197 = ssub.s32 %s16, 1
        // Predicated region
        $region13: #{fpem_v2_forward.8} parent=11 // pred_check
          %p198 = pneg %p89
        $region14: #{fpem_v2_forward.8} parent=11 // pred_check_branch
          %200 = sbr.rel (%p198) target = $region16
        $region15: #{fpem_v2_forward.8} parent=11 // pred_region
          _
        $region16: #{fpem_v2_forward.8} parent=11 // pred_fallthru
          _
        // Predicated region
        $region17: #{fpem_v2_forward.8} parent=11 // pred_check
          %p201 = pneg %p110
        $region18: #{fpem_v2_forward.8} parent=11 // pred_check_branch
          %203 = sbr.rel (%p201) target = $region20
        $region19: #{fpem_v2_forward.8} parent=11 // pred_region
          _
        $region20: #{fpem_v2_forward.8} parent=11 // pred_fallthru
          _
        // Predicated region
        $region21: #{fpem_v2_forward.8} parent=11 // pred_check
          %p204 = pneg %p131
        $region22: #{fpem_v2_forward.8} parent=11 // pred_check_branch
          %206 = sbr.rel (%p204) target = $region24
        $region23: #{fpem_v2_forward.8} parent=11 // pred_region
          _
        $region24: #{fpem_v2_forward.8} parent=11 // pred_fallthru
          _
      $region12: #{fpem_v2_forward.8} parent=5 // pred_fallthru
        _
      %p207 = scmp.lt.s32.totalorder %s16, 2
      // Predicated region
      $region25: #{fpem_v2_forward.8} parent=5 // pred_check
        %p208 = pneg %p207
      $region26: #{fpem_v2_forward.8} parent=5 // pred_check_branch
        %210 = sbr.rel (%p208) target = $region28
      $region27: #{fpem_v2_forward.8} parent=5 // pred_region
        // Predicated region
        $region29: #{fpem_v2_forward.8} parent=27 // pred_check
          %p211 = pneg %p36
        $region30: #{fpem_v2_forward.8} parent=27 // pred_check_branch
          %213 = sbr.rel (%p211) target = $region32
        $region31: #{fpem_v2_forward.8} parent=27 // pred_region
          %p214 = scmp.lt.s32.totalorder %s16, 1
          %s215 = scalar_select %p214, %s16, 1
          %s216 = smul.addr %s215, 16
          %s217 = smul.addr %s216, 8
          %s218 = scalar_lea.vmem %s0, %s217
        $region32: #{fpem_v2_forward.8} parent=27 // pred_fallthru
          _
        // Predicated region
        $region33: #{fpem_v2_forward.8} parent=27 // pred_check
          %p219 = pneg %p62
        $region34: #{fpem_v2_forward.8} parent=27 // pred_check_branch
          %221 = sbr.rel (%p219) target = $region36
        $region35: #{fpem_v2_forward.8} parent=27 // pred_region
          %p222 = scmp.lt.s32.totalorder %s16, 1
          %s223 = scalar_select %p222, %s16, 1
          %s224 = smul.addr %s223, 32
          %s225 = smul.addr %s224, 8
          %s226 = scalar_lea.vmem %s1, %s225
        $region36: #{fpem_v2_forward.8} parent=27 // pred_fallthru
          _
      $region28: #{fpem_v2_forward.8} parent=5 // pred_fallthru
        _
      %p227 = scmp.le.s32.totalorder 1, %s16
      %p228 = scmp.lt.s32.totalorder %s16, 3
      %p229 = pnand %p227, %p228
      %p230 = pneg %p229
      // Predicated region
      $region37: #{fpem_v2_forward.8} parent=5 // pred_check
        _
      $region38: #{fpem_v2_forward.8} parent=5 // pred_check_branch
        %232 = sbr.rel (%p229) target = $region40
      $region39: #{fpem_v2_forward.8} parent=5 // pred_region
        %s233 = ssub.s32 %s16, 1
        %p234 = scmp.lt.s32.totalorder %s21, 1
        %s235 = scalar_select %p234, %s21, 1
        %s236 = smul.addr %s235, 16
        %s237 = smul.addr %s236, 8
        %s238 = scalar_lea.vmem %s0, %s237
        %p239 = pneg %p42
        %p240 = pneg %p39
        %p241 = scmp.lt.s32.totalorder %s21, 1
        %s242 = scalar_select %p241, %s21, 1
        %s243 = smul.addr %s242, 32
        %s244 = smul.addr %s243, 8
        %s245 = scalar_lea.vmem %s1, %s244
        %p246 = pneg %p68
        %p247 = pneg %p65
        %p248 = pneg %p89
        %p249 = pneg %p86
        %p250 = pneg %p110
        %p251 = pneg %p107
        %p252 = pneg %p131
        %p253 = pneg %p128
        %p254 = pneg %p157
        %p255 = pneg %p154
        %p256 = scmp.lt.s32.totalorder %s21, 1
        %s257 = scalar_select %p256, %s21, 1
        %s258 = smul.addr %s257, 32
        %s259 = smul.addr %s258, 8
        %s260 = scalar_lea.vmem %s5, %s259
        %p261 = pneg %p183
        %p262 = pneg %p180
        %s263 = sand.u32 %s170, 1
        %s264 = scalar_lea.sflag [#allocation3], %s263
        %s265 = sand.u32 %s170, 1
        %s266 = smul.addr %s265, 256
        %s267 = scalar_lea.vmem [#allocation2], %s266
        %p268 = scmp.lt.s32.totalorder %s21, 1
        %s269 = scalar_select %p268, %s21, 1
        %s270 = smul.addr %s269, 16
        %s271 = smul.addr %s270, 8
        %s272 = scalar_lea.vmem %s0, %s271
        %p273 = scmp.lt.s32.totalorder %s21, 1
        %s274 = scalar_select %p273, %s21, 1
        %s275 = smul.addr %s274, 32
        %s276 = smul.addr %s275, 8
        %s277 = scalar_lea.vmem %s1, %s276
        %p278 = scmp.lt.s32.totalorder %s21, 1
        %s279 = scalar_select %p278, %s21, 1
        %s280 = smul.addr %s279, 32
        %s281 = smul.addr %s280, 8
        %s282 = scalar_lea.vmem %s5, %s281
        %v283 = vld [vmem:[%s277] sm:$0xff]
        %v284 = vld [vmem:[%s277 + $0x8] sm:$0xff]
        %v285 = vld [vmem:[%s277 + $0x10] sm:$0xff]
        %v286 = vld [vmem:[%s277 + $0x18] sm:$0xff]
        %v287 = vld [vmem:[%s277 + $0x20] sm:$0xff]
        %v288 = vld [vmem:[%s277 + $0x28] sm:$0xff]
        %v289 = vld [vmem:[%s277 + $0x30] sm:$0xff]
        %v290 = vld [vmem:[%s277 + $0x38] sm:$0xff]
        %v291 = vld [vmem:[%s277 + $0x40] sm:$0xff]
        %v292 = vld [vmem:[%s277 + $0x48] sm:$0xff]
        %v293 = vld [vmem:[%s277 + $0x50] sm:$0xff]
        %v294 = vld [vmem:[%s277 + $0x58] sm:$0xff]
        %v295 = vld [vmem:[%s277 + $0x60] sm:$0xff]
        %v296 = vld [vmem:[%s277 + $0x68] sm:$0xff]
        %v297 = vld [vmem:[%s277 + $0x70] sm:$0xff]
        %v298 = vld [vmem:[%s277 + $0x78] sm:$0xff]
        %v299 = vld [vmem:[%s277 + $0x80] sm:$0xff]
        %v300 = vld [vmem:[%s277 + $0x88] sm:$0xff]
        %v301 = vld [vmem:[%s277 + $0x90] sm:$0xff]
        %v302 = vld [vmem:[%s277 + $0x98] sm:$0xff]
        %v303 = vld [vmem:[%s277 + $0xa0] sm:$0xff]
        %v304 = vld [vmem:[%s277 + $0xa8] sm:$0xff]
        %v305 = vld [vmem:[%s277 + $0xb0] sm:$0xff]
        %v306 = vld [vmem:[%s277 + $0xb8] sm:$0xff]
        %v307 = vld [vmem:[%s277 + $0xc0] sm:$0xff]
        %v308 = vld [vmem:[%s277 + $0xc8] sm:$0xff]
        %v309 = vld [vmem:[%s277 + $0xd0] sm:$0xff]
        %v310 = vld [vmem:[%s277 + $0xd8] sm:$0xff]
        %v311 = vld [vmem:[%s277 + $0xe0] sm:$0xff]
        %v312 = vld [vmem:[%s277 + $0xe8] sm:$0xff]
        %v313 = vld [vmem:[%s277 + $0xf0] sm:$0xff]
        %v314 = vld [vmem:[%s277 + $0xf8] sm:$0xff]
        %v315 = vld [vmem:[%s272] sm:$0xff]
        %v316 = vld [vmem:[%s272 + $0x8] sm:$0xff]
        %v317 = vld [vmem:[%s272 + $0x10] sm:$0xff]
        %v318 = vld [vmem:[%s272 + $0x18] sm:$0xff]
        %v319 = vld [vmem:[%s272 + $0x20] sm:$0xff]
        %v320 = vld [vmem:[%s272 + $0x28] sm:$0xff]
        %v321 = vld [vmem:[%s272 + $0x30] sm:$0xff]
        %v322 = vld [vmem:[%s272 + $0x38] sm:$0xff]
        %v323 = vld [vmem:[%s272 + $0x40] sm:$0xff]
        %v324 = vld [vmem:[%s272 + $0x48] sm:$0xff]
        %v325 = vld [vmem:[%s272 + $0x50] sm:$0xff]
        %v326 = vld [vmem:[%s272 + $0x58] sm:$0xff]
        %v327 = vld [vmem:[%s272 + $0x60] sm:$0xff]
        %v328 = vld [vmem:[%s272 + $0x68] sm:$0xff]
        %v329 = vld [vmem:[%s272 + $0x70] sm:$0xff]
        %v330 = vld [vmem:[%s272 + $0x78] sm:$0xff]
        %v331 = vld [vmem:[%s2] sm:$0xff]
        %v332 = vld [vmem:[%s2 + $0x8] sm:$0x1]
        %v333 = vmul.f32 %v315, 0.75
        %v334 = vmul.f32 %v316, 0.75
        %v335 = vmul.f32 %v317, 0.75
        %v336 = vmul.f32 %v318, 0.75
        %v337 = vmul.f32 %v319, 0.75
        %v338 = vmul.f32 %v320, 0.75
        %v339 = vmul.f32 %v321, 0.75
        %v340 = vmul.f32 %v322, 0.75
        %v341 = vmul.f32 %v323, 0.75
        %v342 = vmul.f32 %v324, 0.75
        %v343 = vmul.f32 %v325, 0.75
        %v344 = vmul.f32 %v326, 0.75
        %v345 = vmul.f32 %v327, 0.75
        %v346 = vmul.f32 %v328, 0.75
        %v347 = vmul.f32 %v329, 0.75
        %v348 = vmul.f32 %v330, 0.75
        %v349 = vmul.f32 %v315, 0.25
        %v350 = vmul.f32 %v316, 0.25
        %v351 = vmul.f32 %v317, 0.25
        %v352 = vmul.f32 %v318, 0.25
        %v353 = vmul.f32 %v319, 0.25
        %v354 = vmul.f32 %v320, 0.25
        %v355 = vmul.f32 %v321, 0.25
        %v356 = vmul.f32 %v322, 0.25
        %v357 = vmul.f32 %v323, 0.25
        %v358 = vmul.f32 %v324, 0.25
        %v359 = vmul.f32 %v325, 0.25
        %v360 = vmul.f32 %v326, 0.25
        %v361 = vmul.f32 %v327, 0.25
        %v362 = vmul.f32 %v328, 0.25
        %v363 = vadd.f32 %v333, %v349
        %v364 = vadd.f32 %v334, %v350
        %v365 = vadd.f32 %v335, %v349
        %v366 = vadd.f32 %v336, %v350
        %v367 = vadd.f32 %v337, %v351
        %v368 = vadd.f32 %v338, %v352
        %v369 = vadd.f32 %v339, %v353
        %v370 = vadd.f32 %v340, %v354
        %v371 = vadd.f32 %v341, %v355
        %v372 = vadd.f32 %v342, %v356
        %v373 = vadd.f32 %v343, %v357
        %v374 = vadd.f32 %v344, %v358
        %v375 = vadd.f32 %v345, %v359
        %v376 = vadd.f32 %v346, %v360
        %v377 = vadd.f32 %v347, %v361
        %v378 = vadd.f32 %v348, %v362
        %v379 = vmul.f32 %v329, 0.25
        %v380 = vmul.f32 %v330, 0.25
        %v381 = vadd.f32 %v333, %v351
        %v382 = vadd.f32 %v334, %v352
        %v383 = vadd.f32 %v335, %v353
        %v384 = vadd.f32 %v336, %v354
        %v385 = vadd.f32 %v337, %v355
        %v386 = vadd.f32 %v338, %v356
        %v387 = vadd.f32 %v339, %v357
        %v388 = vadd.f32 %v340, %v358
        %v389 = vadd.f32 %v341, %v359
        %v390 = vadd.f32 %v342, %v360
        %v391 = vadd.f32 %v343, %v361
        %v392 = vadd.f32 %v344, %v362
        %v393 = vadd.f32 %v345, %v379
        %v394 = vadd.f32 %v346, %v380
        %v395 = vadd.f32 %v347, %v379
        %v396 = vadd.f32 %v348, %v380
        %v397 = vadd.f32 %v363, %v283
        %v398 = vadd.f32 %v364, %v284
        %v399 = vadd.f32 %v381, %v285
        %v400 = vadd.f32 %v382, %v286
        %v401 = vadd.f32 %v365, %v287
        %v402 = vadd.f32 %v366, %v288
        %v403 = vadd.f32 %v383, %v289
        %v404 = vadd.f32 %v384, %v290
        %v405 = vadd.f32 %v367, %v291
        %v406 = vadd.f32 %v368, %v292
        %v407 = vadd.f32 %v385, %v293
        %v408 = vadd.f32 %v386, %v294
        %v409 = vadd.f32 %v369, %v295
        %v410 = vadd.f32 %v370, %v296
        %v411 = vadd.f32 %v387, %v297
        %v412 = vadd.f32 %v388, %v298
        %v413 = vadd.f32 %v371, %v299
        %v414 = vadd.f32 %v372, %v300
        %v415 = vadd.f32 %v389, %v301
        %v416 = vadd.f32 %v390, %v302
        %v417 = vadd.f32 %v373, %v303
        %v418 = vadd.f32 %v374, %v304
        %v419 = vadd.f32 %v391, %v305
        %v420 = vadd.f32 %v392, %v306
        %v421 = vadd.f32 %v375, %v307
        %v422 = vadd.f32 %v376, %v308
        %v423 = vadd.f32 %v393, %v309
        %v424 = vadd.f32 %v394, %v310
        %v425 = vadd.f32 %v377, %v311
        %v426 = vadd.f32 %v378, %v312
        %v427 = vadd.f32 %v395, %v313
        %v428 = vadd.f32 %v396, %v314
        %vm460 = vcmask 1040384
        %v461 = vrot.slane 0.0, 7
        %v462 = vsel %vm460, %v461, %v461
        %v463 = vrot.slane %v397, 7
        %v464 = vrot.slane %v398, 7
        %v465 = vsel %vm460, %v463, %v464
        %v466 = vrot.slane %v399, 7
        %v467 = vrot.slane %v400, 7
        %v468 = vsel %vm460, %v466, %v467
        %v469 = vrot.slane %v401, 7
        %v470 = vrot.slane %v402, 7
        %v471 = vsel %vm460, %v469, %v470
        %v472 = vrot.slane %v403, 7
        %v473 = vrot.slane %v404, 7
        %v474 = vsel %vm460, %v472, %v473
        %v475 = vrot.slane %v405, 7
        %v476 = vrot.slane %v406, 7
        %v477 = vsel %vm460, %v475, %v476
        %v478 = vrot.slane %v407, 7
        %v479 = vrot.slane %v408, 7
        %v480 = vsel %vm460, %v478, %v479
        %v481 = vrot.slane %v409, 7
        %v482 = vrot.slane %v410, 7
        %v483 = vsel %vm460, %v481, %v482
        %v484 = vrot.slane %v411, 7
        %v485 = vrot.slane %v412, 7
        %v486 = vsel %vm460, %v484, %v485
        %v487 = vrot.slane %v413, 7
        %v488 = vrot.slane %v414, 7
        %v489 = vsel %vm460, %v487, %v488
        %v490 = vrot.slane %v415, 7
        %v491 = vrot.slane %v416, 7
        %v492 = vsel %vm460, %v490, %v491
        %v493 = vrot.slane %v417, 7
        %v494 = vrot.slane %v418, 7
        %v495 = vsel %vm460, %v493, %v494
        %v496 = vrot.slane %v419, 7
        %v497 = vrot.slane %v420, 7
        %v498 = vsel %vm460, %v496, %v497
        %v499 = vrot.slane %v421, 7
        %v500 = vrot.slane %v422, 7
        %v501 = vsel %vm460, %v499, %v500
        %v502 = vrot.slane %v423, 7
        %v503 = vrot.slane %v424, 7
        %v504 = vsel %vm460, %v502, %v503
        %v505 = vrot.slane %v425, 7
        %v506 = vrot.slane %v426, 7
        %v507 = vsel %vm460, %v505, %v506
        %v540 = vsel %vm460, 0.0, %v461
        %v541 = vsel %vm460, 0.0, %v463
        %v542 = vsel %vm460, 0.0, %v466
        %v543 = vsel %vm460, 0.0, %v469
        %v544 = vsel %vm460, 0.0, %v472
        %v545 = vsel %vm460, 0.0, %v475
        %v546 = vsel %vm460, 0.0, %v478
        %v547 = vsel %vm460, 0.0, %v481
        %v548 = vsel %vm460, 0.0, %v484
        %v549 = vsel %vm460, 0.0, %v487
        %v550 = vsel %vm460, 0.0, %v490
        %v551 = vsel %vm460, 0.0, %v493
        %v552 = vsel %vm460, 0.0, %v496
        %v553 = vsel %vm460, 0.0, %v499
        %v554 = vsel %vm460, 0.0, %v502
        %v555 = vsel %vm460, 0.0, %v505
        %v556 = vperm.slane %v331, 0
        %v557 = vmul.f32 %v540, %v556
        %v558 = vmul.f32 %v462, %v556
        %v559 = vmul.f32 %v541, %v556
        %v560 = vmul.f32 %v465, %v556
        %v561 = vmul.f32 %v542, %v556
        %v562 = vmul.f32 %v468, %v556
        %v563 = vmul.f32 %v543, %v556
        %v564 = vmul.f32 %v471, %v556
        %v565 = vmul.f32 %v544, %v556
        %v566 = vmul.f32 %v474, %v556
        %v567 = vmul.f32 %v545, %v556
        %v568 = vmul.f32 %v477, %v556
        %v569 = vmul.f32 %v546, %v556
        %v570 = vmul.f32 %v480, %v556
        %v571 = vmul.f32 %v547, %v556
        %v572 = vmul.f32 %v483, %v556
        %v573 = vmul.f32 %v548, %v556
        %v574 = vmul.f32 %v486, %v556
        %v575 = vmul.f32 %v549, %v556
        %v576 = vmul.f32 %v489, %v556
        %v577 = vmul.f32 %v550, %v556
        %v578 = vmul.f32 %v492, %v556
        %v579 = vmul.f32 %v551, %v556
        %v580 = vmul.f32 %v495, %v556
        %v581 = vmul.f32 %v552, %v556
        %v582 = vmul.f32 %v498, %v556
        %v583 = vmul.f32 %v553, %v556
        %v584 = vmul.f32 %v501, %v556
        %v585 = vmul.f32 %v554, %v556
        %v586 = vmul.f32 %v504, %v556
        %v587 = vmul.f32 %v555, %v556
        %v588 = vmul.f32 %v507, %v556
        %v589 = vperm.slane %v331, 1
        %v590 = vmul.f32 %v589, 0.0
        %v591 = vmul.f32 %v397, %v589
        %v592 = vmul.f32 %v398, %v589
        %v593 = vmul.f32 %v399, %v589
        %v594 = vmul.f32 %v400, %v589
        %v595 = vmul.f32 %v401, %v589
        %v596 = vmul.f32 %v402, %v589
        %v597 = vmul.f32 %v403, %v589
        %v598 = vmul.f32 %v404, %v589
        %v599 = vmul.f32 %v405, %v589
        %v600 = vmul.f32 %v406, %v589
        %v601 = vmul.f32 %v407, %v589
        %v602 = vmul.f32 %v408, %v589
        %v603 = vmul.f32 %v409, %v589
        %v604 = vmul.f32 %v410, %v589
        %v605 = vmul.f32 %v411, %v589
        %v606 = vmul.f32 %v412, %v589
        %v607 = vmul.f32 %v413, %v589
        %v608 = vmul.f32 %v414, %v589
        %v609 = vmul.f32 %v415, %v589
        %v610 = vmul.f32 %v416, %v589
        %v611 = vmul.f32 %v417, %v589
        %v612 = vmul.f32 %v418, %v589
        %v613 = vmul.f32 %v419, %v589
        %v614 = vmul.f32 %v420, %v589
        %v615 = vmul.f32 %v421, %v589
        %v616 = vmul.f32 %v422, %v589
        %v617 = vmul.f32 %v423, %v589
        %v618 = vmul.f32 %v424, %v589
        %v619 = vmul.f32 %v425, %v589
        %v620 = vmul.f32 %v426, %v589
        %v621 = vadd.f32 %v557, %v590
        %v622 = vadd.f32 %v558, %v590
        %v623 = vadd.f32 %v559, %v591
        %v624 = vadd.f32 %v560, %v592
        %v625 = vadd.f32 %v561, %v593
        %v626 = vadd.f32 %v562, %v594
        %v627 = vadd.f32 %v563, %v595
        %v628 = vadd.f32 %v564, %v596
        %v629 = vadd.f32 %v565, %v597
        %v630 = vadd.f32 %v566, %v598
        %v631 = vadd.f32 %v567, %v599
        %v632 = vadd.f32 %v568, %v600
        %v633 = vadd.f32 %v569, %v601
        %v634 = vadd.f32 %v570, %v602
        %v635 = vadd.f32 %v571, %v603
        %v636 = vadd.f32 %v572, %v604
        %v637 = vadd.f32 %v573, %v605
        %v638 = vadd.f32 %v574, %v606
        %v639 = vadd.f32 %v575, %v607
        %v640 = vadd.f32 %v576, %v608
        %v641 = vadd.f32 %v577, %v609
        %v642 = vadd.f32 %v578, %v610
        %v643 = vadd.f32 %v579, %v611
        %v644 = vadd.f32 %v580, %v612
        %v645 = vadd.f32 %v581, %v613
        %v646 = vadd.f32 %v582, %v614
        %v647 = vadd.f32 %v583, %v615
        %v648 = vadd.f32 %v584, %v616
        %v649 = vadd.f32 %v585, %v617
        %v650 = vadd.f32 %v586, %v618
        %v651 = vadd.f32 %v587, %v619
        %v652 = vadd.f32 %v588, %v620
        %vm653 = vcmask 1046528
        %v654 = vrot.slane 0.0, 1
        %v655 = vsel %vm653, %v654, %v654
        %v656 = vrot.slane %v397, 1
        %v657 = vrot.slane %v398, 1
        %v658 = vsel %vm653, %v656, %v657
        %v659 = vrot.slane %v399, 1
        %v660 = vrot.slane %v400, 1
        %v661 = vsel %vm653, %v659, %v660
        %v662 = vrot.slane %v401, 1
        %v663 = vrot.slane %v402, 1
        %v664 = vsel %vm653, %v662, %v663
        %v665 = vrot.slane %v403, 1
        %v666 = vrot.slane %v404, 1
        %v667 = vsel %vm653, %v665, %v666
        %v668 = vrot.slane %v405, 1
        %v669 = vrot.slane %v406, 1
        %v670 = vsel %vm653, %v668, %v669
        %v671 = vrot.slane %v407, 1
        %v672 = vrot.slane %v408, 1
        %v673 = vsel %vm653, %v671, %v672
        %v674 = vrot.slane %v409, 1
        %v675 = vrot.slane %v410, 1
        %v676 = vsel %vm653, %v674, %v675
        %v677 = vrot.slane %v411, 1
        %v678 = vrot.slane %v412, 1
        %v679 = vsel %vm653, %v677, %v678
        %v680 = vrot.slane %v413, 1
        %v681 = vrot.slane %v414, 1
        %v682 = vsel %vm653, %v680, %v681
        %v683 = vrot.slane %v415, 1
        %v684 = vrot.slane %v416, 1
        %v685 = vsel %vm653, %v683, %v684
        %v686 = vrot.slane %v417, 1
        %v687 = vrot.slane %v418, 1
        %v688 = vsel %vm653, %v686, %v687
        %v689 = vrot.slane %v419, 1
        %v690 = vrot.slane %v420, 1
        %v691 = vsel %vm653, %v689, %v690
        %v692 = vrot.slane %v421, 1
        %v693 = vrot.slane %v422, 1
        %v694 = vsel %vm653, %v692, %v693
        %v695 = vrot.slane %v423, 1
        %v696 = vrot.slane %v424, 1
        %v697 = vsel %vm653, %v695, %v696
        %v698 = vrot.slane %v425, 1
        %v699 = vrot.slane %v426, 1
        %v700 = vsel %vm653, %v698, %v699
        %v733 = vsel %vm653, %v654, 0.0
        %v734 = vsel %vm653, %v657, 0.0
        %v735 = vsel %vm653, %v660, 0.0
        %v736 = vsel %vm653, %v663, 0.0
        %v737 = vsel %vm653, %v666, 0.0
        %v738 = vsel %vm653, %v669, 0.0
        %v739 = vsel %vm653, %v672, 0.0
        %v740 = vsel %vm653, %v675, 0.0
        %v741 = vsel %vm653, %v678, 0.0
        %v742 = vsel %vm653, %v681, 0.0
        %v743 = vsel %vm653, %v684, 0.0
        %v744 = vsel %vm653, %v687, 0.0
        %v745 = vsel %vm653, %v690, 0.0
        %v746 = vsel %vm653, %v693, 0.0
        %v747 = vsel %vm653, %v696, 0.0
        %v748 = vsel %vm653, %v699, 0.0
        %v749 = vperm.slane %v331, 2
        %v750 = vmul.f32 %v655, %v749
        %v751 = vmul.f32 %v733, %v749
        %v752 = vmul.f32 %v658, %v749
        %v753 = vmul.f32 %v734, %v749
        %v754 = vmul.f32 %v661, %v749
        %v755 = vmul.f32 %v735, %v749
        %v756 = vmul.f32 %v664, %v749
        %v757 = vmul.f32 %v736, %v749
        %v758 = vmul.f32 %v667, %v749
        %v759 = vmul.f32 %v737, %v749
        %v760 = vmul.f32 %v670, %v749
        %v761 = vmul.f32 %v738, %v749
        %v762 = vmul.f32 %v673, %v749
        %v763 = vmul.f32 %v739, %v749
        %v764 = vmul.f32 %v676, %v749
        %v765 = vmul.f32 %v740, %v749
        %v766 = vmul.f32 %v679, %v749
        %v767 = vmul.f32 %v741, %v749
        %v768 = vmul.f32 %v682, %v749
        %v769 = vmul.f32 %v742, %v749
        %v770 = vmul.f32 %v685, %v749
        %v771 = vmul.f32 %v743, %v749
        %v772 = vmul.f32 %v688, %v749
        %v773 = vmul.f32 %v744, %v749
        %v774 = vmul.f32 %v691, %v749
        %v775 = vmul.f32 %v745, %v749
        %v776 = vmul.f32 %v694, %v749
        %v777 = vmul.f32 %v746, %v749
        %v778 = vmul.f32 %v697, %v749
        %v779 = vmul.f32 %v747, %v749
        %v780 = vmul.f32 %v700, %v749
        %v781 = vmul.f32 %v748, %v749
        %v782 = vadd.f32 %v621, %v750
        %v783 = vadd.f32 %v622, %v751
        %v784 = vadd.f32 %v623, %v752
        %v785 = vadd.f32 %v624, %v753
        %v786 = vadd.f32 %v625, %v754
        %v787 = vadd.f32 %v626, %v755
        %v788 = vadd.f32 %v627, %v756
        %v789 = vadd.f32 %v628, %v757
        %v790 = vadd.f32 %v629, %v758
        %v791 = vadd.f32 %v630, %v759
        %v792 = vadd.f32 %v631, %v760
        %v793 = vadd.f32 %v632, %v761
        %v794 = vadd.f32 %v633, %v762
        %v795 = vadd.f32 %v634, %v763
        %v796 = vadd.f32 %v635, %v764
        %v797 = vadd.f32 %v636, %v765
        %v798 = vadd.f32 %v637, %v766
        %v799 = vadd.f32 %v638, %v767
        %v800 = vadd.f32 %v639, %v768
        %v801 = vadd.f32 %v640, %v769
        %v802 = vadd.f32 %v641, %v770
        %v803 = vadd.f32 %v642, %v771
        %v804 = vadd.f32 %v643, %v772
        %v805 = vadd.f32 %v644, %v773
        %v806 = vadd.f32 %v645, %v774
        %v807 = vadd.f32 %v646, %v775
        %v808 = vadd.f32 %v647, %v776
        %v809 = vadd.f32 %v648, %v777
        %v810 = vadd.f32 %v649, %v778
        %v811 = vadd.f32 %v650, %v779
        %v812 = vadd.f32 %v651, %v780
        %v813 = vadd.f32 %v652, %v781
        %v816 = vrot.slane %v427, 7
        %v817 = vrot.slane %v428, 7
        %v818 = vsel %vm460, %v816, %v817
        %v821 = vsel %vm460, 0.0, %v816
        %v822 = vperm.slane %v331, 3
        %v823 = vmul.f32 %v541, %v822
        %v824 = vmul.f32 %v465, %v822
        %v825 = vmul.f32 %v542, %v822
        %v826 = vmul.f32 %v468, %v822
        %v827 = vmul.f32 %v543, %v822
        %v828 = vmul.f32 %v471, %v822
        %v829 = vmul.f32 %v544, %v822
        %v830 = vmul.f32 %v474, %v822
        %v831 = vmul.f32 %v545, %v822
        %v832 = vmul.f32 %v477, %v822
        %v833 = vmul.f32 %v546, %v822
        %v834 = vmul.f32 %v480, %v822
        %v835 = vmul.f32 %v547, %v822
        %v836 = vmul.f32 %v483, %v822
        %v837 = vmul.f32 %v548, %v822
        %v838 = vmul.f32 %v486, %v822
        %v839 = vmul.f32 %v549, %v822
        %v840 = vmul.f32 %v489, %v822
        %v841 = vmul.f32 %v550, %v822
        %v842 = vmul.f32 %v492, %v822
        %v843 = vmul.f32 %v551, %v822
        %v844 = vmul.f32 %v495, %v822
        %v845 = vmul.f32 %v552, %v822
        %v846 = vmul.f32 %v498, %v822
        %v847 = vmul.f32 %v553, %v822
        %v848 = vmul.f32 %v501, %v822
        %v849 = vmul.f32 %v554, %v822
        %v850 = vmul.f32 %v504, %v822
        %v851 = vmul.f32 %v555, %v822
        %v852 = vmul.f32 %v507, %v822
        %v853 = vmul.f32 %v821, %v822
        %v854 = vmul.f32 %v818, %v822
        %v855 = vadd.f32 %v782, %v823
        %v856 = vadd.f32 %v783, %v824
        %v857 = vadd.f32 %v784, %v825
        %v858 = vadd.f32 %v785, %v826
        %v859 = vadd.f32 %v786, %v827
        %v860 = vadd.f32 %v787, %v828
        %v861 = vadd.f32 %v788, %v829
        %v862 = vadd.f32 %v789, %v830
        %v863 = vadd.f32 %v790, %v831
        %v864 = vadd.f32 %v791, %v832
        %v865 = vadd.f32 %v792, %v833
        %v866 = vadd.f32 %v793, %v834
        %v867 = vadd.f32 %v794, %v835
        %v868 = vadd.f32 %v795, %v836
        %v869 = vadd.f32 %v796, %v837
        %v870 = vadd.f32 %v797, %v838
        %v871 = vadd.f32 %v798, %v839
        %v872 = vadd.f32 %v799, %v840
        %v873 = vadd.f32 %v800, %v841
        %v874 = vadd.f32 %v801, %v842
        %v875 = vadd.f32 %v802, %v843
        %v876 = vadd.f32 %v803, %v844
        %v877 = vadd.f32 %v804, %v845
        %v878 = vadd.f32 %v805, %v846
        %v879 = vadd.f32 %v806, %v847
        %v880 = vadd.f32 %v807, %v848
        %v881 = vadd.f32 %v808, %v849
        %v882 = vadd.f32 %v809, %v850
        %v883 = vadd.f32 %v810, %v851
        %v884 = vadd.f32 %v811, %v852
        %v885 = vadd.f32 %v812, %v853
        %v886 = vadd.f32 %v813, %v854
        %v887 = vperm.slane %v331, 4
        %v888 = vmul.f32 %v397, %v887
        %v889 = vmul.f32 %v398, %v887
        %v890 = vmul.f32 %v399, %v887
        %v891 = vmul.f32 %v400, %v887
        %v892 = vmul.f32 %v401, %v887
        %v893 = vmul.f32 %v402, %v887
        %v894 = vmul.f32 %v403, %v887
        %v895 = vmul.f32 %v404, %v887
        %v896 = vmul.f32 %v405, %v887
        %v897 = vmul.f32 %v406, %v887
        %v898 = vmul.f32 %v407, %v887
        %v899 = vmul.f32 %v408, %v887
        %v900 = vmul.f32 %v409, %v887
        %v901 = vmul.f32 %v410, %v887
        %v902 = vmul.f32 %v411, %v887
        %v903 = vmul.f32 %v412, %v887
        %v904 = vmul.f32 %v413, %v887
        %v905 = vmul.f32 %v414, %v887
        %v906 = vmul.f32 %v415, %v887
        %v907 = vmul.f32 %v416, %v887
        %v908 = vmul.f32 %v417, %v887
        %v909 = vmul.f32 %v418, %v887
        %v910 = vmul.f32 %v419, %v887
        %v911 = vmul.f32 %v420, %v887
        %v912 = vmul.f32 %v421, %v887
        %v913 = vmul.f32 %v422, %v887
        %v914 = vmul.f32 %v423, %v887
        %v915 = vmul.f32 %v424, %v887
        %v916 = vmul.f32 %v425, %v887
        %v917 = vmul.f32 %v426, %v887
        %v918 = vmul.f32 %v427, %v887
        %v919 = vmul.f32 %v428, %v887
        %v920 = vadd.f32 %v855, %v888
        %v921 = vadd.f32 %v856, %v889
        %v922 = vadd.f32 %v857, %v890
        %v923 = vadd.f32 %v858, %v891
        %v924 = vadd.f32 %v859, %v892
        %v925 = vadd.f32 %v860, %v893
        %v926 = vadd.f32 %v861, %v894
        %v927 = vadd.f32 %v862, %v895
        %v928 = vadd.f32 %v863, %v896
        %v929 = vadd.f32 %v864, %v897
        %v930 = vadd.f32 %v865, %v898
        %v931 = vadd.f32 %v866, %v899
        %v932 = vadd.f32 %v867, %v900
        %v933 = vadd.f32 %v868, %v901
        %v934 = vadd.f32 %v869, %v902
        %v935 = vadd.f32 %v870, %v903
        %v936 = vadd.f32 %v871, %v904
        %v937 = vadd.f32 %v872, %v905
        %v938 = vadd.f32 %v873, %v906
        %v939 = vadd.f32 %v874, %v907
        %v940 = vadd.f32 %v875, %v908
        %v941 = vadd.f32 %v876, %v909
        %v942 = vadd.f32 %v877, %v910
        %v943 = vadd.f32 %v878, %v911
        %v944 = vadd.f32 %v879, %v912
        %v945 = vadd.f32 %v880, %v913
        %v946 = vadd.f32 %v881, %v914
        %v947 = vadd.f32 %v882, %v915
        %v948 = vadd.f32 %v883, %v916
        %v949 = vadd.f32 %v884, %v917
        %v950 = vadd.f32 %v885, %v918
        %v951 = vadd.f32 %v886, %v919
        %v952 = vrot.slane %v427, 1
        %v953 = vrot.slane %v428, 1
        %v954 = vsel %vm653, %v952, %v953
        %v957 = vsel %vm653, %v953, 0.0
        %v958 = vperm.slane %v331, 5
        %v959 = vmul.f32 %v658, %v958
        %v960 = vmul.f32 %v734, %v958
        %v961 = vmul.f32 %v661, %v958
        %v962 = vmul.f32 %v735, %v958
        %v963 = vmul.f32 %v664, %v958
        %v964 = vmul.f32 %v736, %v958
        %v965 = vmul.f32 %v667, %v958
        %v966 = vmul.f32 %v737, %v958
        %v967 = vmul.f32 %v670, %v958
        %v968 = vmul.f32 %v738, %v958
        %v969 = vmul.f32 %v673, %v958
        %v970 = vmul.f32 %v739, %v958
        %v971 = vmul.f32 %v676, %v958
        %v972 = vmul.f32 %v740, %v958
        %v973 = vmul.f32 %v679, %v958
        %v974 = vmul.f32 %v741, %v958
        %v975 = vmul.f32 %v682, %v958
        %v976 = vmul.f32 %v742, %v958
        %v977 = vmul.f32 %v685, %v958
        %v978 = vmul.f32 %v743, %v958
        %v979 = vmul.f32 %v688, %v958
        %v980 = vmul.f32 %v744, %v958
        %v981 = vmul.f32 %v691, %v958
        %v982 = vmul.f32 %v745, %v958
        %v983 = vmul.f32 %v694, %v958
        %v984 = vmul.f32 %v746, %v958
        %v985 = vmul.f32 %v697, %v958
        %v986 = vmul.f32 %v747, %v958
        %v987 = vmul.f32 %v700, %v958
        %v988 = vmul.f32 %v748, %v958
        %v989 = vmul.f32 %v954, %v958
        %v990 = vmul.f32 %v957, %v958
        %v991 = vadd.f32 %v920, %v959
        %v992 = vadd.f32 %v921, %v960
        %v993 = vadd.f32 %v922, %v961
        %v994 = vadd.f32 %v923, %v962
        %v995 = vadd.f32 %v924, %v963
        %v996 = vadd.f32 %v925, %v964
        %v997 = vadd.f32 %v926, %v965
        %v998 = vadd.f32 %v927, %v966
        %v999 = vadd.f32 %v928, %v967
        %v1000 = vadd.f32 %v929, %v968
        %v1001 = vadd.f32 %v930, %v969
        %v1002 = vadd.f32 %v931, %v970
        %v1003 = vadd.f32 %v932, %v971
        %v1004 = vadd.f32 %v933, %v972
        %v1005 = vadd.f32 %v934, %v973
        %v1006 = vadd.f32 %v935, %v974
        %v1007 = vadd.f32 %v936, %v975
        %v1008 = vadd.f32 %v937, %v976
        %v1009 = vadd.f32 %v938, %v977
        %v1010 = vadd.f32 %v939, %v978
        %v1011 = vadd.f32 %v940, %v979
        %v1012 = vadd.f32 %v941, %v980
        %v1013 = vadd.f32 %v942, %v981
        %v1014 = vadd.f32 %v943, %v982
        %v1015 = vadd.f32 %v944, %v983
        %v1016 = vadd.f32 %v945, %v984
        %v1017 = vadd.f32 %v946, %v985
        %v1018 = vadd.f32 %v947, %v986
        %v1019 = vadd.f32 %v948, %v987
        %v1020 = vadd.f32 %v949, %v988
        %v1021 = vadd.f32 %v950, %v989
        %v1022 = vadd.f32 %v951, %v990
        %v1023 = vperm.slane %v331, 6
        %v1024 = vmul.f32 %v542, %v1023
        %v1025 = vmul.f32 %v468, %v1023
        %v1026 = vmul.f32 %v543, %v1023
        %v1027 = vmul.f32 %v471, %v1023
        %v1028 = vmul.f32 %v544, %v1023
        %v1029 = vmul.f32 %v474, %v1023
        %v1030 = vmul.f32 %v545, %v1023
        %v1031 = vmul.f32 %v477, %v1023
        %v1032 = vmul.f32 %v546, %v1023
        %v1033 = vmul.f32 %v480, %v1023
        %v1034 = vmul.f32 %v547, %v1023
        %v1035 = vmul.f32 %v483, %v1023
        %v1036 = vmul.f32 %v548, %v1023
        %v1037 = vmul.f32 %v486, %v1023
        %v1038 = vmul.f32 %v549, %v1023
        %v1039 = vmul.f32 %v489, %v1023
        %v1040 = vmul.f32 %v550, %v1023
        %v1041 = vmul.f32 %v492, %v1023
        %v1042 = vmul.f32 %v551, %v1023
        %v1043 = vmul.f32 %v495, %v1023
        %v1044 = vmul.f32 %v552, %v1023
        %v1045 = vmul.f32 %v498, %v1023
        %v1046 = vmul.f32 %v553, %v1023
        %v1047 = vmul.f32 %v501, %v1023
        %v1048 = vmul.f32 %v554, %v1023
        %v1049 = vmul.f32 %v504, %v1023
        %v1050 = vmul.f32 %v555, %v1023
        %v1051 = vmul.f32 %v507, %v1023
        %v1052 = vmul.f32 %v821, %v1023
        %v1053 = vmul.f32 %v818, %v1023
        %v1054 = vmul.f32 %v540, %v1023
        %v1055 = vmul.f32 %v462, %v1023
        %v1056 = vadd.f32 %v991, %v1024
        %v1057 = vadd.f32 %v992, %v1025
        %v1058 = vadd.f32 %v993, %v1026
        %v1059 = vadd.f32 %v994, %v1027
        %v1060 = vadd.f32 %v995, %v1028
        %v1061 = vadd.f32 %v996, %v1029
        %v1062 = vadd.f32 %v997, %v1030
        %v1063 = vadd.f32 %v998, %v1031
        %v1064 = vadd.f32 %v999, %v1032
        %v1065 = vadd.f32 %v1000, %v1033
        %v1066 = vadd.f32 %v1001, %v1034
        %v1067 = vadd.f32 %v1002, %v1035
        %v1068 = vadd.f32 %v1003, %v1036
        %v1069 = vadd.f32 %v1004, %v1037
        %v1070 = vadd.f32 %v1005, %v1038
        %v1071 = vadd.f32 %v1006, %v1039
        %v1072 = vadd.f32 %v1007, %v1040
        %v1073 = vadd.f32 %v1008, %v1041
        %v1074 = vadd.f32 %v1009, %v1042
        %v1075 = vadd.f32 %v1010, %v1043
        %v1076 = vadd.f32 %v1011, %v1044
        %v1077 = vadd.f32 %v1012, %v1045
        %v1078 = vadd.f32 %v1013, %v1046
        %v1079 = vadd.f32 %v1014, %v1047
        %v1080 = vadd.f32 %v1015, %v1048
        %v1081 = vadd.f32 %v1016, %v1049
        %v1082 = vadd.f32 %v1017, %v1050
        %v1083 = vadd.f32 %v1018, %v1051
        %v1084 = vadd.f32 %v1019, %v1052
        %v1085 = vadd.f32 %v1020, %v1053
        %v1086 = vadd.f32 %v1021, %v1054
        %v1087 = vadd.f32 %v1022, %v1055
        %v1088 = vperm.slane %v331, 7
        %v1089 = vmul.f32 %v399, %v1088
        %v1090 = vmul.f32 %v400, %v1088
        %v1091 = vmul.f32 %v401, %v1088
        %v1092 = vmul.f32 %v402, %v1088
        %v1093 = vmul.f32 %v403, %v1088
        %v1094 = vmul.f32 %v404, %v1088
        %v1095 = vmul.f32 %v405, %v1088
        %v1096 = vmul.f32 %v406, %v1088
        %v1097 = vmul.f32 %v407, %v1088
        %v1098 = vmul.f32 %v408, %v1088
        %v1099 = vmul.f32 %v409, %v1088
        %v1100 = vmul.f32 %v410, %v1088
        %v1101 = vmul.f32 %v411, %v1088
        %v1102 = vmul.f32 %v412, %v1088
        %v1103 = vmul.f32 %v413, %v1088
        %v1104 = vmul.f32 %v414, %v1088
        %v1105 = vmul.f32 %v415, %v1088
        %v1106 = vmul.f32 %v416, %v1088
        %v1107 = vmul.f32 %v417, %v1088
        %v1108 = vmul.f32 %v418, %v1088
        %v1109 = vmul.f32 %v419, %v1088
        %v1110 = vmul.f32 %v420, %v1088
        %v1111 = vmul.f32 %v421, %v1088
        %v1112 = vmul.f32 %v422, %v1088
        %v1113 = vmul.f32 %v423, %v1088
        %v1114 = vmul.f32 %v424, %v1088
        %v1115 = vmul.f32 %v425, %v1088
        %v1116 = vmul.f32 %v426, %v1088
        %v1117 = vmul.f32 %v427, %v1088
        %v1118 = vmul.f32 %v428, %v1088
        %v1119 = vmul.f32 %v1088, 0.0
        %v1120 = vadd.f32 %v1056, %v1089
        %v1121 = vadd.f32 %v1057, %v1090
        %v1122 = vadd.f32 %v1058, %v1091
        %v1123 = vadd.f32 %v1059, %v1092
        %v1124 = vadd.f32 %v1060, %v1093
        %v1125 = vadd.f32 %v1061, %v1094
        %v1126 = vadd.f32 %v1062, %v1095
        %v1127 = vadd.f32 %v1063, %v1096
        %v1128 = vadd.f32 %v1064, %v1097
        %v1129 = vadd.f32 %v1065, %v1098
        %v1130 = vadd.f32 %v1066, %v1099
        %v1131 = vadd.f32 %v1067, %v1100
        %v1132 = vadd.f32 %v1068, %v1101
        %v1133 = vadd.f32 %v1069, %v1102
        %v1134 = vadd.f32 %v1070, %v1103
        %v1135 = vadd.f32 %v1071, %v1104
        %v1136 = vadd.f32 %v1072, %v1105
        %v1137 = vadd.f32 %v1073, %v1106
        %v1138 = vadd.f32 %v1074, %v1107
        %v1139 = vadd.f32 %v1075, %v1108
        %v1140 = vadd.f32 %v1076, %v1109
        %v1141 = vadd.f32 %v1077, %v1110
        %v1142 = vadd.f32 %v1078, %v1111
        %v1143 = vadd.f32 %v1079, %v1112
        %v1144 = vadd.f32 %v1080, %v1113
        %v1145 = vadd.f32 %v1081, %v1114
        %v1146 = vadd.f32 %v1082, %v1115
        %v1147 = vadd.f32 %v1083, %v1116
        %v1148 = vadd.f32 %v1084, %v1117
        %v1149 = vadd.f32 %v1085, %v1118
        %v1150 = vadd.f32 %v1086, %v1119
        %v1151 = vadd.f32 %v1087, %v1119
        %v1152 = vperm.slane %v332, 0
        %v1153 = vmul.f32 %v661, %v1152
        %v1154 = vmul.f32 %v735, %v1152
        %v1155 = vmul.f32 %v664, %v1152
        %v1156 = vmul.f32 %v736, %v1152
        %v1157 = vmul.f32 %v667, %v1152
        %v1158 = vmul.f32 %v737, %v1152
        %v1159 = vmul.f32 %v670, %v1152
        %v1160 = vmul.f32 %v738, %v1152
        %v1161 = vmul.f32 %v673, %v1152
        %v1162 = vmul.f32 %v739, %v1152
        %v1163 = vmul.f32 %v676, %v1152
        %v1164 = vmul.f32 %v740, %v1152
        %v1165 = vmul.f32 %v679, %v1152
        %v1166 = vmul.f32 %v741, %v1152
        %v1167 = vmul.f32 %v682, %v1152
        %v1168 = vmul.f32 %v742, %v1152
        %v1169 = vmul.f32 %v685, %v1152
        %v1170 = vmul.f32 %v743, %v1152
        %v1171 = vmul.f32 %v688, %v1152
        %v1172 = vmul.f32 %v744, %v1152
        %v1173 = vmul.f32 %v691, %v1152
        %v1174 = vmul.f32 %v745, %v1152
        %v1175 = vmul.f32 %v694, %v1152
        %v1176 = vmul.f32 %v746, %v1152
        %v1177 = vmul.f32 %v697, %v1152
        %v1178 = vmul.f32 %v747, %v1152
        %v1179 = vmul.f32 %v700, %v1152
        %v1180 = vmul.f32 %v748, %v1152
        %v1181 = vmul.f32 %v954, %v1152
        %v1182 = vmul.f32 %v957, %v1152
        %v1183 = vmul.f32 %v655, %v1152
        %v1184 = vmul.f32 %v733, %v1152
        %v1185 = vadd.f32 %v1120, %v1153
        %v1186 = vadd.f32 %v1121, %v1154
        %v1187 = vadd.f32 %v1122, %v1155
        %v1188 = vadd.f32 %v1123, %v1156
        %v1189 = vadd.f32 %v1124, %v1157
        %v1190 = vadd.f32 %v1125, %v1158
        %v1191 = vadd.f32 %v1126, %v1159
        %v1192 = vadd.f32 %v1127, %v1160
        %v1193 = vadd.f32 %v1128, %v1161
        %v1194 = vadd.f32 %v1129, %v1162
        %v1195 = vadd.f32 %v1130, %v1163
        %v1196 = vadd.f32 %v1131, %v1164
        %v1197 = vadd.f32 %v1132, %v1165
        %v1198 = vadd.f32 %v1133, %v1166
        %v1199 = vadd.f32 %v1134, %v1167
        %v1200 = vadd.f32 %v1135, %v1168
        %v1201 = vadd.f32 %v1136, %v1169
        %v1202 = vadd.f32 %v1137, %v1170
        %v1203 = vadd.f32 %v1138, %v1171
        %v1204 = vadd.f32 %v1139, %v1172
        %v1205 = vadd.f32 %v1140, %v1173
        %v1206 = vadd.f32 %v1141, %v1174
        %v1207 = vadd.f32 %v1142, %v1175
        %v1208 = vadd.f32 %v1143, %v1176
        %v1209 = vadd.f32 %v1144, %v1177
        %v1210 = vadd.f32 %v1145, %v1178
        %v1211 = vadd.f32 %v1146, %v1179
        %v1212 = vadd.f32 %v1147, %v1180
        %v1213 = vadd.f32 %v1148, %v1181
        %v1214 = vadd.f32 %v1149, %v1182
        %v1215 = vadd.f32 %v1150, %v1183
        %v1216 = vadd.f32 %v1151, %v1184
        %v1217 = vld [vmem:[%s3] sm:$0xf]
        %v1218 = vld [vmem:[%s3 + $0x4] sm:$0xf]
        %v1219 = vld [vmem:[%s3 + $0x8] sm:$0xf]
        %v1220 = vld [vmem:[%s3 + $0xc] sm:$0xf]
        %v1221 = vld [vmem:[%s3 + $0x10] sm:$0xf]
        %v1222 = vld [vmem:[%s3 + $0x14] sm:$0xf]
        %v1223 = vld [vmem:[%s3 + $0x18] sm:$0xf]
        %v1224 = vld [vmem:[%s3 + $0x1c] sm:$0xf]
        %v1225 = vld [vmem:[%s3 + $0x20] sm:$0xf]
        %v1226 = vld [vmem:[%s3 + $0x24] sm:$0xf]
        %v1227 = vld [vmem:[%s3 + $0x28] sm:$0xf]
        %v1228 = vld [vmem:[%s3 + $0x2c] sm:$0xf]
        %v1229 = vld [vmem:[%s3 + $0x30] sm:$0xf]
        %v1230 = vld [vmem:[%s3 + $0x34] sm:$0xf]
        %v1231 = vld [vmem:[%s3 + $0x38] sm:$0xf]
        %v1232 = vld [vmem:[%s3 + $0x3c] sm:$0xf]
        %v1233 = vld [vmem:[%s4] sm:$0x1]
        %v1234 = vpack.c.bf16 %v1186, %v1185
        %v1235 = vpack.c.bf16 %v1188, %v1187
        %v1236 = vpack.c.bf16 %v1190, %v1189
        %v1237 = vpack.c.bf16 %v1192, %v1191
        %v1238 = vpack.c.bf16 %v1194, %v1193
        %v1239 = vpack.c.bf16 %v1196, %v1195
        %v1240 = vpack.c.bf16 %v1198, %v1197
        %v1241 = vpack.c.bf16 %v1200, %v1199
        %v1242 = vpack.c.bf16 %v1202, %v1201
        %v1243 = vpack.c.bf16 %v1204, %v1203
        %v1244 = vpack.c.bf16 %v1206, %v1205
        %v1245 = vpack.c.bf16 %v1208, %v1207
        %v1246 = vpack.c.bf16 %v1210, %v1209
        %v1247 = vpack.c.bf16 %v1212, %v1211
        %v1248 = vpack.c.bf16 %v1214, %v1213
        %v1249 = vpack.c.bf16 %v1216, %v1215
        %v1251 = vperm.slane %v1233, 0
        %v1269 = vunpack.c.l.b16 %v1217
        %v1270 = vunpack.c.l.b16 %v1218
        %v1271 = vunpack.c.l.b16 %v1219
        %v1272 = vunpack.c.l.b16 %v1220
        %v1273 = vunpack.c.l.b16 %v1221
        %v1274 = vunpack.c.l.b16 %v1222
        %v1275 = vunpack.c.l.b16 %v1223
        %v1276 = vunpack.c.l.b16 %v1224
        %v1277 = vunpack.c.l.b16 %v1225
        %v1278 = vunpack.c.l.b16 %v1226
        %v1279 = vunpack.c.l.b16 %v1227
        %v1280 = vunpack.c.l.b16 %v1228
        %v1281 = vunpack.c.l.b16 %v1229
        %v1282 = vunpack.c.l.b16 %v1230
        %v1283 = vunpack.c.l.b16 %v1231
        %v1284 = vunpack.c.l.b16 %v1232
        %v1285 = vpack.c.b16 %v1270, %v1269
        %v1286 = vpack.c.b16 %v1272, %v1271
        %v1287 = vpack.c.b16 %v1274, %v1273
        %v1288 = vpack.c.b16 %v1276, %v1275
        %v1289 = vpack.c.b16 %v1278, %v1277
        %v1290 = vpack.c.b16 %v1280, %v1279
        %v1291 = vpack.c.b16 %v1282, %v1281
        %v1292 = vpack.c.b16 %v1284, %v1283
        %1301 = vmatpush.bf16.msra.mxu0 %v1292
        %1302 = vmatpush.bf16.msra.mxu0 %v1291
        %1303 = vmatpush.bf16.msra.mxu0 %v1290
        %1304 = vmatpush.bf16.msra.mxu0 %v1289
        %1305 = vmatpush.bf16.msra.mxu0 %v1288
        %1306 = vmatpush.bf16.msra.mxu0 %v1287
        %1307 = vmatpush.bf16.msra.mxu0 %v1286
        %1308 = vmatpush.bf16.msra.mxu0 %v1285
        %1309 = vmatmul.bf16.gmra.mxu0 %v1234
        %v1310 = vpop.f32.mrf.mxu0
        %v1311 = vadd.f32 %v1251, %v1310
        %v1312 = vpop.f32.mrf.mxu0
        %v1313 = vadd.f32 %v1251, %v1312
        %1314 = vmatmul.bf16.gmra.mxu0 %v1235
        %v1315 = vpop.f32.mrf.mxu0
        %v1316 = vadd.f32 %v1251, %v1315
        %v1317 = vpop.f32.mrf.mxu0
        %v1318 = vadd.f32 %v1251, %v1317
        %1319 = vmatmul.bf16.gmra.mxu0 %v1236
        %v1320 = vpop.f32.mrf.mxu0
        %v1321 = vadd.f32 %v1251, %v1320
        %v1322 = vpop.f32.mrf.mxu0
        %v1323 = vadd.f32 %v1251, %v1322
        %1324 = vmatmul.bf16.gmra.mxu0 %v1237
        %v1325 = vpop.f32.mrf.mxu0
        %v1326 = vadd.f32 %v1251, %v1325
        %v1327 = vpop.f32.mrf.mxu0
        %v1328 = vadd.f32 %v1251, %v1327
        %1329 = vmatmul.bf16.gmra.mxu0 %v1238
        %v1330 = vpop.f32.mrf.mxu0
        %v1331 = vadd.f32 %v1251, %v1330
        %v1332 = vpop.f32.mrf.mxu0
        %v1333 = vadd.f32 %v1251, %v1332
        %1334 = vmatmul.bf16.gmra.mxu0 %v1239
        %v1335 = vpop.f32.mrf.mxu0
        %v1336 = vadd.f32 %v1251, %v1335
        %v1337 = vpop.f32.mrf.mxu0
        %v1338 = vadd.f32 %v1251, %v1337
        %1339 = vmatmul.bf16.gmra.mxu0 %v1240
        %v1340 = vpop.f32.mrf.mxu0
        %v1341 = vadd.f32 %v1251, %v1340
        %v1342 = vpop.f32.mrf.mxu0
        %v1343 = vadd.f32 %v1251, %v1342
        %1344 = vmatmul.bf16.gmra.mxu0 %v1241
        %v1345 = vpop.f32.mrf.mxu0
        %v1346 = vadd.f32 %v1251, %v1345
        %v1347 = vpop.f32.mrf.mxu0
        %v1348 = vadd.f32 %v1251, %v1347
        %1349 = vmatmul.bf16.gmra.mxu0 %v1242
        %v1350 = vpop.f32.mrf.mxu0
        %v1351 = vadd.f32 %v1251, %v1350
        %v1352 = vpop.f32.mrf.mxu0
        %v1353 = vadd.f32 %v1251, %v1352
        %1354 = vmatmul.bf16.gmra.mxu0 %v1243
        %v1355 = vpop.f32.mrf.mxu0
        %v1356 = vadd.f32 %v1251, %v1355
        %v1357 = vpop.f32.mrf.mxu0
        %v1358 = vadd.f32 %v1251, %v1357
        %1359 = vmatmul.bf16.gmra.mxu0 %v1244
        %v1360 = vpop.f32.mrf.mxu0
        %v1361 = vadd.f32 %v1251, %v1360
        %v1362 = vpop.f32.mrf.mxu0
        %v1363 = vadd.f32 %v1251, %v1362
        %1364 = vmatmul.bf16.gmra.mxu0 %v1245
        %v1365 = vpop.f32.mrf.mxu0
        %v1366 = vadd.f32 %v1251, %v1365
        %v1367 = vpop.f32.mrf.mxu0
        %v1368 = vadd.f32 %v1251, %v1367
        %1369 = vmatmul.bf16.gmra.mxu0 %v1246
        %v1370 = vpop.f32.mrf.mxu0
        %v1371 = vadd.f32 %v1251, %v1370
        %v1372 = vpop.f32.mrf.mxu0
        %v1373 = vadd.f32 %v1251, %v1372
        %1374 = vmatmul.bf16.gmra.mxu0 %v1247
        %v1375 = vpop.f32.mrf.mxu0
        %v1376 = vadd.f32 %v1251, %v1375
        %v1377 = vpop.f32.mrf.mxu0
        %v1378 = vadd.f32 %v1251, %v1377
        %1379 = vmatmul.bf16.gmra.mxu0 %v1248
        %v1380 = vpop.f32.mrf.mxu0
        %v1381 = vadd.f32 %v1251, %v1380
        %v1382 = vpop.f32.mrf.mxu0
        %v1383 = vadd.f32 %v1251, %v1382
        %1384 = vmatmul.bf16.gmra.mxu0 %v1249
        %v1385 = vpop.f32.mrf.mxu0
        %v1386 = vadd.f32 %v1251, %v1385
        %v1387 = vpop.f32.mrf.mxu0
        %v1388 = vadd.f32 %v1251, %v1387
        %1389 = vdwg.mxu0
        %v1390 = vmax.f32 %v1311, 0.0
        %v1391 = vmax.f32 %v1313, 0.0
        %v1392 = vmax.f32 %v1316, 0.0
        %v1393 = vmax.f32 %v1318, 0.0
        %v1394 = vmax.f32 %v1321, 0.0
        %v1395 = vmax.f32 %v1323, 0.0
        %v1396 = vmax.f32 %v1326, 0.0
        %v1397 = vmax.f32 %v1328, 0.0
        %v1398 = vmax.f32 %v1331, 0.0
        %v1399 = vmax.f32 %v1333, 0.0
        %v1400 = vmax.f32 %v1336, 0.0
        %v1401 = vmax.f32 %v1338, 0.0
        %v1402 = vmax.f32 %v1341, 0.0
        %v1403 = vmax.f32 %v1343, 0.0
        %v1404 = vmax.f32 %v1346, 0.0
        %v1405 = vmax.f32 %v1348, 0.0
        %v1406 = vmax.f32 %v1351, 0.0
        %v1407 = vmax.f32 %v1353, 0.0
        %v1408 = vmax.f32 %v1356, 0.0
        %v1409 = vmax.f32 %v1358, 0.0
        %v1410 = vmax.f32 %v1361, 0.0
        %v1411 = vmax.f32 %v1363, 0.0
        %v1412 = vmax.f32 %v1366, 0.0
        %v1413 = vmax.f32 %v1368, 0.0
        %v1414 = vmax.f32 %v1371, 0.0
        %v1415 = vmax.f32 %v1373, 0.0
        %v1416 = vmax.f32 %v1376, 0.0
        %v1417 = vmax.f32 %v1378, 0.0
        %v1418 = vmax.f32 %v1381, 0.0
        %v1419 = vmax.f32 %v1383, 0.0
        %v1420 = vmax.f32 %v1386, 0.0
        %v1421 = vmax.f32 %v1388, 0.0
        %1422 = vst [vmem:[%s282] sm:$0xff] %v1390
        %1423 = vst [vmem:[%s282 + $0x8] sm:$0xff] %v1391
        %1424 = vst [vmem:[%s282 + $0x10] sm:$0xff] %v1392
        %1425 = vst [vmem:[%s282 + $0x18] sm:$0xff] %v1393
        %1426 = vst [vmem:[%s282 + $0x20] sm:$0xff] %v1394
        %1427 = vst [vmem:[%s282 + $0x28] sm:$0xff] %v1395
        %1428 = vst [vmem:[%s282 + $0x30] sm:$0xff] %v1396
        %1429 = vst [vmem:[%s282 + $0x38] sm:$0xff] %v1397
        %1430 = vst [vmem:[%s282 + $0x40] sm:$0xff] %v1398
        %1431 = vst [vmem:[%s282 + $0x48] sm:$0xff] %v1399
        %1432 = vst [vmem:[%s282 + $0x50] sm:$0xff] %v1400
        %1433 = vst [vmem:[%s282 + $0x58] sm:$0xff] %v1401
        %1434 = vst [vmem:[%s282 + $0x60] sm:$0xff] %v1402
        %1435 = vst [vmem:[%s282 + $0x68] sm:$0xff] %v1403
        %1436 = vst [vmem:[%s282 + $0x70] sm:$0xff] %v1404
        %1437 = vst [vmem:[%s282 + $0x78] sm:$0xff] %v1405
        %1438 = vst [vmem:[%s282 + $0x80] sm:$0xff] %v1406
        %1439 = vst [vmem:[%s282 + $0x88] sm:$0xff] %v1407
        %1440 = vst [vmem:[%s282 + $0x90] sm:$0xff] %v1408
        %1441 = vst [vmem:[%s282 + $0x98] sm:$0xff] %v1409
        %1442 = vst [vmem:[%s282 + $0xa0] sm:$0xff] %v1410
        %1443 = vst [vmem:[%s282 + $0xa8] sm:$0xff] %v1411
        %1444 = vst [vmem:[%s282 + $0xb0] sm:$0xff] %v1412
        %1445 = vst [vmem:[%s282 + $0xb8] sm:$0xff] %v1413
        %1446 = vst [vmem:[%s282 + $0xc0] sm:$0xff] %v1414
        %1447 = vst [vmem:[%s282 + $0xc8] sm:$0xff] %v1415
        %1448 = vst [vmem:[%s282 + $0xd0] sm:$0xff] %v1416
        %1449 = vst [vmem:[%s282 + $0xd8] sm:$0xff] %v1417
        %1450 = vst [vmem:[%s282 + $0xe0] sm:$0xff] %v1418
        %1451 = vst [vmem:[%s282 + $0xe8] sm:$0xff] %v1419
        %1452 = vst [vmem:[%s282 + $0xf0] sm:$0xff] %v1420
        %1453 = vst [vmem:[%s282 + $0xf8] sm:$0xff] %v1421
        %v1454 = vadd.f32 %v1390, %v283
        %v1455 = vadd.f32 %v1391, %v284
        %v1456 = vadd.f32 %v1392, %v285
        %v1457 = vadd.f32 %v1393, %v286
        %v1458 = vadd.f32 %v1394, %v287
        %v1459 = vadd.f32 %v1395, %v288
        %v1460 = vadd.f32 %v1396, %v289
        %v1461 = vadd.f32 %v1397, %v290
        %v1462 = vadd.f32 %v1398, %v291
        %v1463 = vadd.f32 %v1399, %v292
        %v1464 = vadd.f32 %v1400, %v293
        %v1465 = vadd.f32 %v1401, %v294
        %v1466 = vadd.f32 %v1402, %v295
        %v1467 = vadd.f32 %v1403, %v296
        %v1468 = vadd.f32 %v1404, %v297
        %v1469 = vadd.f32 %v1405, %v298
        %v1470 = vadd.f32 %v1406, %v299
        %v1471 = vadd.f32 %v1407, %v300
        %v1472 = vadd.f32 %v1408, %v301
        %v1473 = vadd.f32 %v1409, %v302
        %v1474 = vadd.f32 %v1410, %v303
        %v1475 = vadd.f32 %v1411, %v304
        %v1476 = vadd.f32 %v1412, %v305
        %v1477 = vadd.f32 %v1413, %v306
        %v1478 = vadd.f32 %v1414, %v307
        %v1479 = vadd.f32 %v1415, %v308
        %v1480 = vadd.f32 %v1416, %v309
        %v1481 = vadd.f32 %v1417, %v310
        %v1482 = vadd.f32 %v1418, %v311
        %v1483 = vadd.f32 %v1419, %v312
        %v1484 = vadd.f32 %v1420, %v313
        %v1485 = vadd.f32 %v1421, %v314
        %1486 = vst [vmem:[%s267] sm:$0xff] %v1454
        %1487 = vst [vmem:[%s267 + $0x8] sm:$0xff] %v1455
        %1488 = vst [vmem:[%s267 + $0x10] sm:$0xff] %v1456
        %1489 = vst [vmem:[%s267 + $0x18] sm:$0xff] %v1457
        %1490 = vst [vmem:[%s267 + $0x20] sm:$0xff] %v1458
        %1491 = vst [vmem:[%s267 + $0x28] sm:$0xff] %v1459
        %1492 = vst [vmem:[%s267 + $0x30] sm:$0xff] %v1460
        %1493 = vst [vmem:[%s267 + $0x38] sm:$0xff] %v1461
        %1494 = vst [vmem:[%s267 + $0x40] sm:$0xff] %v1462
        %1495 = vst [vmem:[%s267 + $0x48] sm:$0xff] %v1463
        %1496 = vst [vmem:[%s267 + $0x50] sm:$0xff] %v1464
        %1497 = vst [vmem:[%s267 + $0x58] sm:$0xff] %v1465
        %1498 = vst [vmem:[%s267 + $0x60] sm:$0xff] %v1466
        %1499 = vst [vmem:[%s267 + $0x68] sm:$0xff] %v1467
        %1500 = vst [vmem:[%s267 + $0x70] sm:$0xff] %v1468
        %1501 = vst [vmem:[%s267 + $0x78] sm:$0xff] %v1469
        %1502 = vst [vmem:[%s267 + $0x80] sm:$0xff] %v1470
        %1503 = vst [vmem:[%s267 + $0x88] sm:$0xff] %v1471
        %1504 = vst [vmem:[%s267 + $0x90] sm:$0xff] %v1472
        %1505 = vst [vmem:[%s267 + $0x98] sm:$0xff] %v1473
        %1506 = vst [vmem:[%s267 + $0xa0] sm:$0xff] %v1474
        %1507 = vst [vmem:[%s267 + $0xa8] sm:$0xff] %v1475
        %1508 = vst [vmem:[%s267 + $0xb0] sm:$0xff] %v1476
        %1509 = vst [vmem:[%s267 + $0xb8] sm:$0xff] %v1477
        %1510 = vst [vmem:[%s267 + $0xc0] sm:$0xff] %v1478
        %1511 = vst [vmem:[%s267 + $0xc8] sm:$0xff] %v1479
        %1512 = vst [vmem:[%s267 + $0xd0] sm:$0xff] %v1480
        %1513 = vst [vmem:[%s267 + $0xd8] sm:$0xff] %v1481
        %1514 = vst [vmem:[%s267 + $0xe0] sm:$0xff] %v1482
        %1515 = vst [vmem:[%s267 + $0xe8] sm:$0xff] %v1483
        %1516 = vst [vmem:[%s267 + $0xf0] sm:$0xff] %v1484
        %1517 = vst [vmem:[%s267 + $0xf8] sm:$0xff] %v1485
        %p1518 = scmp.lt.s32.totalorder %s21, 1
        %s1519 = scalar_select %p1518, %s21, 1
        %s1520 = smul.addr %s1519, 32
        %s1521 = smul.addr %s1520, 8
        %s1522 = scalar_lea.vmem %s5, %s1521
        %s1523 = sand.u32 %s170, 1
        %s1524 = scalar_lea.sflag [#allocation3], %s1523
        %s1525 = sand.u32 %s170, 1
        %s1526 = smul.addr %s1525, 256
        %s1527 = scalar_lea.vmem [#allocation2], %s1526
        // Predicated region
        $region41: #{fpem_v2_forward.8} parent=39 // pred_check
          %p1528 = pneg %p154
        $region42: #{fpem_v2_forward.8} parent=39 // pred_check_branch
          %1530 = sbr.rel (%p1528) target = $region44
        $region43: #{fpem_v2_forward.8} parent=39 // pred_region
          _
        $region44: #{fpem_v2_forward.8} parent=39 // pred_fallthru
          _
        // Predicated region
        $region45: #{fpem_v2_forward.8} parent=39 // pred_check
          %p1531 = pneg %p180
        $region46: #{fpem_v2_forward.8} parent=39 // pred_check_branch
          %1533 = sbr.rel (%p1531) target = $region48
        $region47: #{fpem_v2_forward.8} parent=39 // pred_region
          %1535 = vsyncadd %s1524, 0
          %s1536 = smul.addr %s21, 32
          %s1537 = smul.addr %s1536, 8
          %s1538 = scalar_lea.hbm %s6, %s1537
          %s1539 = sshll.u32 %s1527, 4
          %s1540 = int_to_ptr.vmem [resolvable:$true] %s1539
          %s1541 = sshll.u32 %s1538, 4
          %s1542 = int_to_ptr.hbm [resolvable:$true] %s1541
          %1547 = dma.vmem_to_hbm [thread:$0]  %s1540, 4096, %s1542, %s1524, 128, 128, 8
        $region48: #{fpem_v2_forward.8} parent=39 // pred_fallthru
          _
      $region40: #{fpem_v2_forward.8} parent=5 // pred_fallthru
        _
      %p1548 = scmp.le.s32.totalorder 2, %s16
      // Predicated region
      $region49: #{fpem_v2_forward.8} parent=5 // pred_check
        %p1549 = pneg %p1548
      $region50: #{fpem_v2_forward.8} parent=5 // pred_check_branch
        %1551 = sbr.rel (%p1549) target = $region52
      $region51: #{fpem_v2_forward.8} parent=5 // pred_region
        %s1552 = ssub.s32 %s16, 2
        // Predicated region
        $region53: #{fpem_v2_forward.8} parent=51 // pred_check
          %p1553 = pneg %p160
        $region54: #{fpem_v2_forward.8} parent=51 // pred_check_branch
          %1555 = sbr.rel (%p1553) target = $region56
        $region55: #{fpem_v2_forward.8} parent=51 // pred_region
          %p1556 = scmp.lt.s32.totalorder %s22, 1
          %s1557 = scalar_select %p1556, %s22, 1
          %s1558 = smul.addr %s1557, 32
          %s1559 = smul.addr %s1558, 8
          %s1560 = scalar_lea.vmem %s5, %s1559
        $region56: #{fpem_v2_forward.8} parent=51 // pred_fallthru
          _
        // Predicated region
        $region57: #{fpem_v2_forward.8} parent=51 // pred_check
          %p1561 = pneg %p186
        $region58: #{fpem_v2_forward.8} parent=51 // pred_check_branch
          %1563 = sbr.rel (%p1561) target = $region60
        $region59: #{fpem_v2_forward.8} parent=51 // pred_region
          %s1564 = sand.u32 %s171, 1
          %s1565 = scalar_lea.sflag [#allocation3], %s1564
          %s1566 = sand.u32 %s171, 1
          %s1567 = smul.addr %s1566, 256
          %s1568 = scalar_lea.vmem [#allocation2], %s1567
          %1570 = dma.done %s1565, 4096
        $region60: #{fpem_v2_forward.8} parent=51 // pred_fallthru
          _
      $region52: #{fpem_v2_forward.8} parent=5 // pred_fallthru
        _
    $region6: #{fpem_v2_forward.8} parent=1 // loop_footer
      %s20 = sadd.s32 1, %s16
    $region7: #{fpem_v2_forward.8} parent=1 // loop_footer_branch
      %15 = sbr.rel target = $region3
    $region8: #{fpem_v2_forward.8} parent=1 // loop_exit
      _
    %1571 = vsyncpa [#allocation3], 1
    %s1572 = scalar_lea.sflag [#allocation3], 1
    %1573 = vsyncpa %s1572, 1

// kernel: fpem_v2_forward.10
$region0: #{fpem_v2_forward.10}
  #allocation0 [shape = 'u32[]', space=smem, size = 0x4, offset = 0x4, fixed_abs, tag = 'smem constant byte address 0x4 - core index']
  #allocation1 [shape = 'u32[72,128]{1,0:T(1,128)}', space=vmem, size = 0x9000, scoped, tag = 'internal scratch']
  %s0 = inlined_call_operand.vmem [shape: f32[2,4,4,128], index: 0, kind: input, shape index: {}]
  %s1 = inlined_call_operand.vmem [shape: f32[2,4,2,8,128], index: 1, kind: input, shape index: {}]
  %s2 = inlined_call_operand.vmem [shape: f32[2,4,4,128], index: 2, kind: input, shape index: {}]
  %s3 = inlined_call_operand.vmem [shape: f32[9,128], index: 3, kind: input, shape index: {}]
  %s4 = inlined_call_operand.vmem [shape: bf16[128,128], index: 4, kind: input, shape index: {}]
  %s5 = inlined_call_operand.vmem [shape: f32[1,128], index: 5, kind: input, shape index: {}]
  %s6 = inlined_call_operand.vmem [shape: f32[2,4,4,128], index: 6, kind: output, shape index: {0}]
  %s7 = inlined_call_operand.hbm [shape: f32[2,4,4,128], index: 7, kind: output, shape index: {1}]
  %8 = xla_tuple %s6, %s7
  %s9 = sld [smem:[#allocation0]]
  $region65: #{fpem_v2_forward.10} parent=0
    _
  %s11 = ssub.s32 1, %s9
  %s12 = scalar_select 0, %s11, %s9
  $region1: #{fpem_v2_forward.10} parent=0
    #allocation2 [shape = 'u8[16384]{0}', space=vmem, size = 0x4000, scoped, tag = 'output window, operand 1']
    #allocation3 [shape = 's32[2]{0}', space=sflag, size = 0x8, scoped, tag = 'scoped memory for fpem_v2_forward.10']
    %13 = vsyncpa [#allocation3], 0
    %s14 = scalar_lea.sflag [#allocation3], 1
    %15 = vsyncpa %s14, 0
    loop: start=0, step=1, limit=4
    $region2: #{fpem_v2_forward.10} parent=1 // loop_pre_header
      _
    $region3: #{fpem_v2_forward.10} parent=1 // loop_header
      %s17 = sphi 0, %s21
      %p18 = scmp.ge.s32.totalorder %s17, 4
      %s27 = sphi 0, %s29
      %s30 = sphi 0, %s27
      %s31 = sphi 0, %s30
      %s47 = sphi 0, %s31
      %s53 = sphi 0, %s55
      %s56 = sphi 0, %s53
      %s57 = sphi 0, %s56
      %s73 = sphi 0, %s57
      %s79 = sphi 0, %s81
      %s82 = sphi 0, %s79
      %s83 = sphi 0, %s82
      %s99 = sphi 0, %s83
      %s103 = sphi 0, %s103
      %s105 = sphi 0, %s103
      %s106 = sphi 0, %s105
      %s120 = sphi 0, %s106
      %s124 = sphi 0, %s124
      %s126 = sphi 0, %s124
      %s127 = sphi 0, %s126
      %s141 = sphi 0, %s127
      %s145 = sphi 0, %s145
      %s147 = sphi 0, %s145
      %s148 = sphi 0, %s147
      %s162 = sphi 0, %s148
      %s168 = sphi 0, %s170
      %s171 = sphi 0, %s168
      %s172 = sphi 0, %s171
      %s188 = sphi 0, %s172
      %s194 = sphi 0, %s196
      %s197 = sphi 0, %s194
      %s198 = sphi 0, %s197
      %s214 = sphi 0, %s198
    $region4: #{fpem_v2_forward.10} parent=1 // loop_header_branch
      %20 = sbr.rel (%p18) target = $region8
    $region5: #{fpem_v2_forward.10} parent=1 // loop_body
      %s22 = ssub.s32 %s17, 1
      %s23 = ssub.s32 %s17, 2
      %s24 = sadd.s32 %s17, 1
      %s25 = ssub.s32 %s17, %s24
      %p26 = scmp.eq.s32.totalorder %s25, 0
      %s28 = sadd.s32 %s27, 1
      %s29 = scalar_select %p26, %s27, %s28
      %p32 = pneg %p26
      %p33 = scmp.eq.s32.totalorder %s17, 1
      %p34 = por %p32, %p33
      %p35 = scmp.ne.s32.totalorder %s27, %s30
      %p36 = scmp.eq.s32.totalorder %s17, 0
      %p37 = por %p35, %p36
      %p38 = scmp.ne.s32.totalorder %s27, %s30
      %p39 = scmp.eq.s32.totalorder %s22, 1
      %p40 = por %p38, %p39
      %p41 = scmp.ne.s32.totalorder %s30, %s31
      %p42 = scmp.eq.s32.totalorder %s22, 0
      %p43 = por %p41, %p42
      %p44 = scmp.ne.s32.totalorder %s30, %s31
      %p45 = scmp.eq.s32.totalorder %s23, 1
      %p46 = por %p44, %p45
      %p48 = scmp.ne.s32.totalorder %s31, %s47
      %p49 = scmp.eq.s32.totalorder %s23, 0
      %p50 = por %p48, %p49
      %s51 = ssub.s32 %s17, %s24
      %p52 = scmp.eq.s32.totalorder %s51, 0
      %s54 = sadd.s32 %s53, 1
      %s55 = scalar_select %p52, %s53, %s54
      %p58 = pneg %p52
      %p59 = scmp.eq.s32.totalorder %s17, 1
      %p60 = por %p58, %p59
      %p61 = scmp.ne.s32.totalorder %s53, %s56
      %p62 = scmp.eq.s32.totalorder %s17, 0
      %p63 = por %p61, %p62
      %p64 = scmp.ne.s32.totalorder %s53, %s56
      %p65 = scmp.eq.s32.totalorder %s22, 1
      %p66 = por %p64, %p65
      %p67 = scmp.ne.s32.totalorder %s56, %s57
      %p68 = scmp.eq.s32.totalorder %s22, 0
      %p69 = por %p67, %p68
      %p70 = scmp.ne.s32.totalorder %s56, %s57
      %p71 = scmp.eq.s32.totalorder %s23, 1
      %p72 = por %p70, %p71
      %p74 = scmp.ne.s32.totalorder %s57, %s73
      %p75 = scmp.eq.s32.totalorder %s23, 0
      %p76 = por %p74, %p75
      %s77 = ssub.s32 %s17, %s24
      %p78 = scmp.eq.s32.totalorder %s77, 0
      %s80 = sadd.s32 %s79, 1
      %s81 = scalar_select %p78, %s79, %s80
      %p84 = pneg %p78
      %p85 = scmp.eq.s32.totalorder %s17, 1
      %p86 = por %p84, %p85
      %p87 = scmp.ne.s32.totalorder %s79, %s82
      %p88 = scmp.eq.s32.totalorder %s17, 0
      %p89 = por %p87, %p88
      %p90 = scmp.ne.s32.totalorder %s79, %s82
      %p91 = scmp.eq.s32.totalorder %s22, 1
      %p92 = por %p90, %p91
      %p93 = scmp.ne.s32.totalorder %s82, %s83
      %p94 = scmp.eq.s32.totalorder %s22, 0
      %p95 = por %p93, %p94
      %p96 = scmp.ne.s32.totalorder %s82, %s83
      %p97 = scmp.eq.s32.totalorder %s23, 1
      %p98 = por %p96, %p97
      %p100 = scmp.ne.s32.totalorder %s83, %s99
      %p101 = scmp.eq.s32.totalorder %s23, 0
      %p102 = por %p100, %p101
      %s104 = sadd.s32 %s103, 1
      %p107 = scmp.eq.s32.totalorder %s17, 1
      %p108 = scmp.ne.s32.totalorder %s103, %s105
      %p109 = scmp.eq.s32.totalorder %s17, 0
      %p110 = por %p108, %p109
      %p111 = scmp.ne.s32.totalorder %s103, %s105
      %p112 = scmp.eq.s32.totalorder %s22, 1
      %p113 = por %p111, %p112
      %p114 = scmp.ne.s32.totalorder %s105, %s106
      %p115 = scmp.eq.s32.totalorder %s22, 0
      %p116 = por %p114, %p115
      %p117 = scmp.ne.s32.totalorder %s105, %s106
      %p118 = scmp.eq.s32.totalorder %s23, 1
      %p119 = por %p117, %p118
      %p121 = scmp.ne.s32.totalorder %s106, %s120
      %p122 = scmp.eq.s32.totalorder %s23, 0
      %p123 = por %p121, %p122
      %s125 = sadd.s32 %s124, 1
      %p128 = scmp.eq.s32.totalorder %s17, 1
      %p129 = scmp.ne.s32.totalorder %s124, %s126
      %p130 = scmp.eq.s32.totalorder %s17, 0
      %p131 = por %p129, %p130
      %p132 = scmp.ne.s32.totalorder %s124, %s126
      %p133 = scmp.eq.s32.totalorder %s22, 1
      %p134 = por %p132, %p133
      %p135 = scmp.ne.s32.totalorder %s126, %s127
      %p136 = scmp.eq.s32.totalorder %s22, 0
      %p137 = por %p135, %p136
      %p138 = scmp.ne.s32.totalorder %s126, %s127
      %p139 = scmp.eq.s32.totalorder %s23, 1
      %p140 = por %p138, %p139
      %p142 = scmp.ne.s32.totalorder %s127, %s141
      %p143 = scmp.eq.s32.totalorder %s23, 0
      %p144 = por %p142, %p143
      %s146 = sadd.s32 %s145, 1
      %p149 = scmp.eq.s32.totalorder %s17, 1
      %p150 = scmp.ne.s32.totalorder %s145, %s147
      %p151 = scmp.eq.s32.totalorder %s17, 0
      %p152 = por %p150, %p151
      %p153 = scmp.ne.s32.totalorder %s145, %s147
      %p154 = scmp.eq.s32.totalorder %s22, 1
      %p155 = por %p153, %p154
      %p156 = scmp.ne.s32.totalorder %s147, %s148
      %p157 = scmp.eq.s32.totalorder %s22, 0
      %p158 = por %p156, %p157
      %p159 = scmp.ne.s32.totalorder %s147, %s148
      %p160 = scmp.eq.s32.totalorder %s23, 1
      %p161 = por %p159, %p160
      %p163 = scmp.ne.s32.totalorder %s148, %s162
      %p164 = scmp.eq.s32.totalorder %s23, 0
      %p165 = por %p163, %p164
      %s166 = ssub.s32 %s17, %s24
      %p167 = scmp.eq.s32.totalorder %s166, 0
      %s169 = sadd.s32 %s168, 1
      %s170 = scalar_select %p167, %s168, %s169
      %p173 = pneg %p167
      %p174 = scmp.eq.s32.totalorder %s17, 1
      %p175 = por %p173, %p174
      %p176 = scmp.ne.s32.totalorder %s168, %s171
      %p177 = scmp.eq.s32.totalorder %s17, 0
      %p178 = por %p176, %p177
      %p179 = scmp.ne.s32.totalorder %s168, %s171
      %p180 = scmp.eq.s32.totalorder %s22, 1
      %p181 = por %p179, %p180
      %p182 = scmp.ne.s32.totalorder %s171, %s172
      %p183 = scmp.eq.s32.totalorder %s22, 0
      %p184 = por %p182, %p183
      %p185 = scmp.ne.s32.totalorder %s171, %s172
      %p186 = scmp.eq.s32.totalorder %s23, 1
      %p187 = por %p185, %p186
      %p189 = scmp.ne.s32.totalorder %s172, %s188
      %p190 = scmp.eq.s32.totalorder %s23, 0
      %p191 = por %p189, %p190
      %s192 = ssub.s32 %s17, %s24
      %p193 = scmp.eq.s32.totalorder %s192, 0
      %s195 = sadd.s32 %s194, 1
      %s196 = scalar_select %p193, %s194, %s195
      %p199 = pneg %p193
      %p200 = scmp.eq.s32.totalorder %s17, 1
      %p201 = por %p199, %p200
      %p202 = scmp.ne.s32.totalorder %s194, %s197
      %p203 = scmp.eq.s32.totalorder %s17, 0
      %p204 = por %p202, %p203
      %p205 = scmp.ne.s32.totalorder %s194, %s197
      %p206 = scmp.eq.s32.totalorder %s22, 1
      %p207 = por %p205, %p206
      %p208 = scmp.ne.s32.totalorder %s197, %s198
      %p209 = scmp.eq.s32.totalorder %s22, 0
      %p210 = por %p208, %p209
      %p211 = scmp.ne.s32.totalorder %s197, %s198
      %p212 = scmp.eq.s32.totalorder %s23, 1
      %p213 = por %p211, %p212
      %p215 = scmp.ne.s32.totalorder %s198, %s214
      %p216 = scmp.eq.s32.totalorder %s23, 0
      %p217 = por %p215, %p216
      %p218 = scmp.le.s32.totalorder 1, %s17
      %p219 = scmp.lt.s32.totalorder %s17, 3
      %p220 = pnand %p218, %p219
      %p221 = pneg %p220
      // Predicated region
      $region9: #{fpem_v2_forward.10} parent=5 // pred_check
        _
      $region10: #{fpem_v2_forward.10} parent=5 // pred_check_branch
        %223 = sbr.rel (%p220) target = $region12
      $region11: #{fpem_v2_forward.10} parent=5 // pred_region
        %s224 = ssub.s32 %s17, 1
        // Predicated region
        $region13: #{fpem_v2_forward.10} parent=11 // pred_check
          %p225 = pneg %p116
        $region14: #{fpem_v2_forward.10} parent=11 // pred_check_branch
          %227 = sbr.rel (%p225) target = $region16
        $region15: #{fpem_v2_forward.10} parent=11 // pred_region
          _
        $region16: #{fpem_v2_forward.10} parent=11 // pred_fallthru
          _
        // Predicated region
        $region17: #{fpem_v2_forward.10} parent=11 // pred_check
          %p228 = pneg %p137
        $region18: #{fpem_v2_forward.10} parent=11 // pred_check_branch
          %230 = sbr.rel (%p228) target = $region20
        $region19: #{fpem_v2_forward.10} parent=11 // pred_region
          _
        $region20: #{fpem_v2_forward.10} parent=11 // pred_fallthru
          _
        // Predicated region
        $region21: #{fpem_v2_forward.10} parent=11 // pred_check
          %p231 = pneg %p158
        $region22: #{fpem_v2_forward.10} parent=11 // pred_check_branch
          %233 = sbr.rel (%p231) target = $region24
        $region23: #{fpem_v2_forward.10} parent=11 // pred_region
          _
        $region24: #{fpem_v2_forward.10} parent=11 // pred_fallthru
          _
      $region12: #{fpem_v2_forward.10} parent=5 // pred_fallthru
        _
      %p234 = scmp.lt.s32.totalorder %s17, 2
      // Predicated region
      $region25: #{fpem_v2_forward.10} parent=5 // pred_check
        %p235 = pneg %p234
      $region26: #{fpem_v2_forward.10} parent=5 // pred_check_branch
        %237 = sbr.rel (%p235) target = $region28
      $region27: #{fpem_v2_forward.10} parent=5 // pred_region
        // Predicated region
        $region29: #{fpem_v2_forward.10} parent=27 // pred_check
          %p238 = pneg %p37
        $region30: #{fpem_v2_forward.10} parent=27 // pred_check_branch
          %240 = sbr.rel (%p238) target = $region32
        $region31: #{fpem_v2_forward.10} parent=27 // pred_region
          %p241 = scmp.lt.s32.totalorder %s17, 1
          %s242 = scalar_select %p241, %s17, 1
          %s243 = smul.addr %s242, 4
          %s244 = smul.addr %s243, 4
          %s245 = scalar_lea.vmem %s0, %s244
        $region32: #{fpem_v2_forward.10} parent=27 // pred_fallthru
          _
        // Predicated region
        $region33: #{fpem_v2_forward.10} parent=27 // pred_check
          %p246 = pneg %p63
        $region34: #{fpem_v2_forward.10} parent=27 // pred_check_branch
          %248 = sbr.rel (%p246) target = $region36
        $region35: #{fpem_v2_forward.10} parent=27 // pred_region
          %p249 = scmp.lt.s32.totalorder %s17, 1
          %s250 = scalar_select %p249, %s17, 1
          %s251 = smul.addr %s250, 8
          %s252 = smul.addr %s251, 8
          %s253 = scalar_lea.vmem %s1, %s252
        $region36: #{fpem_v2_forward.10} parent=27 // pred_fallthru
          _
        // Predicated region
        $region37: #{fpem_v2_forward.10} parent=27 // pred_check
          %p254 = pneg %p89
        $region38: #{fpem_v2_forward.10} parent=27 // pred_check_branch
          %256 = sbr.rel (%p254) target = $region40
        $region39: #{fpem_v2_forward.10} parent=27 // pred_region
          %p257 = scmp.lt.s32.totalorder %s17, 1
          %s258 = scalar_select %p257, %s17, 1
          %s259 = smul.addr %s258, 4
          %s260 = smul.addr %s259, 4
          %s261 = scalar_lea.vmem %s2, %s260
        $region40: #{fpem_v2_forward.10} parent=27 // pred_fallthru
          _
      $region28: #{fpem_v2_forward.10} parent=5 // pred_fallthru
        _
      %p262 = scmp.le.s32.totalorder 1, %s17
      %p263 = scmp.lt.s32.totalorder %s17, 3
      %p264 = pnand %p262, %p263
      %p265 = pneg %p264
      // Predicated region
      $region41: #{fpem_v2_forward.10} parent=5 // pred_check
        _
      $region42: #{fpem_v2_forward.10} parent=5 // pred_check_branch
        %267 = sbr.rel (%p264) target = $region44
      $region43: #{fpem_v2_forward.10} parent=5 // pred_region
        %s268 = ssub.s32 %s17, 1
        %p269 = scmp.lt.s32.totalorder %s22, 1
        %s270 = scalar_select %p269, %s22, 1
        %s271 = smul.addr %s270, 4
        %s272 = smul.addr %s271, 4
        %s273 = scalar_lea.vmem %s0, %s272
        %p274 = pneg %p43
        %p275 = pneg %p40
        %p276 = scmp.lt.s32.totalorder %s22, 1
        %s277 = scalar_select %p276, %s22, 1
        %s278 = smul.addr %s277, 8
        %s279 = smul.addr %s278, 8
        %s280 = scalar_lea.vmem %s1, %s279
        %p281 = pneg %p69
        %p282 = pneg %p66
        %p283 = scmp.lt.s32.totalorder %s22, 1
        %s284 = scalar_select %p283, %s22, 1
        %s285 = smul.addr %s284, 4
        %s286 = smul.addr %s285, 4
        %s287 = scalar_lea.vmem %s2, %s286
        %p288 = pneg %p95
        %p289 = pneg %p92
        %p290 = pneg %p116
        %p291 = pneg %p113
        %p292 = pneg %p137
        %p293 = pneg %p134
        %p294 = pneg %p158
        %p295 = pneg %p155
        %p296 = pneg %p184
        %p297 = pneg %p181
        %p298 = scmp.lt.s32.totalorder %s22, 1
        %s299 = scalar_select %p298, %s22, 1
        %s300 = smul.addr %s299, 4
        %s301 = smul.addr %s300, 4
        %s302 = scalar_lea.vmem %s6, %s301
        %p303 = pneg %p210
        %p304 = pneg %p207
        %s305 = sand.u32 %s197, 1
        %s306 = scalar_lea.sflag [#allocation3], %s305
        %s307 = sand.u32 %s197, 1
        %s308 = smul.addr %s307, 16
        %s309 = scalar_lea.vmem [#allocation2], %s308
        %p310 = scmp.lt.s32.totalorder %s22, 1
        %s311 = scalar_select %p310, %s22, 1
        %s312 = smul.addr %s311, 4
        %s313 = smul.addr %s312, 4
        %s314 = scalar_lea.vmem %s0, %s313
        %p315 = scmp.lt.s32.totalorder %s22, 1
        %s316 = scalar_select %p315, %s22, 1
        %s317 = smul.addr %s316, 8
        %s318 = smul.addr %s317, 8
        %s319 = scalar_lea.vmem %s1, %s318
        %p320 = scmp.lt.s32.totalorder %s22, 1
        %s321 = scalar_select %p320, %s22, 1
        %s322 = smul.addr %s321, 4
        %s323 = smul.addr %s322, 4
        %s324 = scalar_lea.vmem %s2, %s323
        %p325 = scmp.lt.s32.totalorder %s22, 1
        %s326 = scalar_select %p325, %s22, 1
        %s327 = smul.addr %s326, 4
        %s328 = smul.addr %s327, 4
        %s329 = scalar_lea.vmem %s6, %s328
        %v330 = vld [vmem:[%s314] sm:$0xf]
        %v331 = vld [vmem:[%s314 + $0x4] sm:$0xf]
        %v332 = vld [vmem:[%s314 + $0x8] sm:$0xf]
        %v333 = vld [vmem:[%s314 + $0xc] sm:$0xf]
        %v334 = vld [vmem:[%s3] sm:$0xff]
        %v335 = vld [vmem:[%s3 + $0x8] sm:$0x1]
        %v336 = vmul.f32 %v330, 0.75
        %v337 = vmul.f32 %v331, 0.75
        %v338 = vmul.f32 %v332, 0.75
        %v339 = vmul.f32 %v333, 0.75
        %v340 = vmul.f32 %v330, 0.25
        %v341 = vmul.f32 %v331, 0.25
        %v342 = vmul.f32 %v332, 0.25
        %v343 = vadd.f32 %v336, %v340
        %v344 = vadd.f32 %v337, %v340
        %v345 = vadd.f32 %v338, %v341
        %v346 = vadd.f32 %v339, %v342
        %v351 = vrot.slane %v343, 7
        %v352 = vrot.slane %v344, 7
        %v353 = vrot.slane %v345, 7
        %v354 = vrot.slane %v346, 7
        %vm359 = vcmask 1040384
        %v360 = vsel %vm359, %v343, %v351
        %v361 = vsel %vm359, %v344, %v352
        %v362 = vsel %vm359, %v345, %v353
        %v363 = vsel %vm359, %v346, %v354
        %v364 = vld [vmem:[%s319] ss:$2 sm:$0xf]
        %s365 = scalar_lea.vmem %s319, 16
        %v366 = vld [vmem:[%s365] ss:$2 sm:$0xf]
        %s367 = scalar_lea.vmem %s319, 32
        %v368 = vld [vmem:[%s367] ss:$2 sm:$0xf]
        %s369 = scalar_lea.vmem %s319, 48
        %v370 = vld [vmem:[%s369] ss:$2 sm:$0xf]
        %v371 = vmul.f32 %v343, 0.75
        %v372 = vmul.f32 %v344, 0.75
        %v373 = vmul.f32 %v345, 0.75
        %v374 = vmul.f32 %v346, 0.75
        %v375 = vmul.f32 %v360, 0.25
        %v376 = vmul.f32 %v361, 0.25
        %v377 = vmul.f32 %v362, 0.25
        %v378 = vmul.f32 %v363, 0.25
        %v379 = vadd.f32 %v371, %v375
        %v380 = vadd.f32 %v372, %v376
        %v381 = vadd.f32 %v373, %v377
        %v382 = vadd.f32 %v374, %v378
        %v383 = vadd.f32 %v379, %v364
        %v384 = vadd.f32 %v380, %v366
        %v385 = vadd.f32 %v381, %v368
        %v386 = vadd.f32 %v382, %v370
        %v387 = vperm.slane %v334, 4
        %v388 = vmul.f32 %v383, %v387
        %v389 = vmul.f32 %v384, %v387
        %v390 = vmul.f32 %v385, %v387
        %v391 = vmul.f32 %v386, %v387
        %v392 = vrot.slane %v343, 1
        %v393 = vrot.slane %v344, 1
        %v394 = vrot.slane %v345, 1
        %v395 = vrot.slane %v346, 1
        %vm400 = vcmask 1042432
        %v401 = vsel %vm400, %v392, %v343
        %v402 = vsel %vm400, %v393, %v344
        %v403 = vsel %vm400, %v394, %v345
        %v404 = vsel %vm400, %v395, %v346
        %s405 = scalar_lea.vmem %s319, 1
        %v406 = vld [vmem:[%s405] ss:$2 sm:$0xf]
        %s407 = scalar_lea.vmem %s319, 17
        %v408 = vld [vmem:[%s407] ss:$2 sm:$0xf]
        %s409 = scalar_lea.vmem %s319, 33
        %v410 = vld [vmem:[%s409] ss:$2 sm:$0xf]
        %s411 = scalar_lea.vmem %s319, 49
        %v412 = vld [vmem:[%s411] ss:$2 sm:$0xf]
        %v413 = vmul.f32 %v401, 0.25
        %v414 = vmul.f32 %v402, 0.25
        %v415 = vmul.f32 %v403, 0.25
        %v416 = vmul.f32 %v404, 0.25
        %v417 = vadd.f32 %v371, %v413
        %v418 = vadd.f32 %v372, %v414
        %v419 = vadd.f32 %v373, %v415
        %v420 = vadd.f32 %v374, %v416
        %v421 = vadd.f32 %v417, %v406
        %v422 = vadd.f32 %v418, %v408
        %v423 = vadd.f32 %v419, %v410
        %v424 = vadd.f32 %v420, %v412
        %v425 = vperm.slane %v334, 5
        %v426 = vmul.f32 %v421, %v425
        %v427 = vmul.f32 %v422, %v425
        %v428 = vmul.f32 %v423, %v425
        %v429 = vmul.f32 %v424, %v425
        %v430 = vadd.f32 %v388, %v426
        %v431 = vadd.f32 %v389, %v427
        %v432 = vadd.f32 %v390, %v428
        %v433 = vadd.f32 %v391, %v429
        %v438 = vrot.slane %v421, 7
        %v439 = vrot.slane %v422, 7
        %v440 = vrot.slane %v423, 7
        %v441 = vrot.slane %v424, 7
        %v446 = vsel %vm359, 0.0, %v438
        %v447 = vsel %vm359, 0.0, %v439
        %v448 = vsel %vm359, 0.0, %v440
        %v449 = vsel %vm359, 0.0, %v441
        %v450 = vperm.slane %v334, 3
        %v451 = vmul.f32 %v446, %v450
        %v452 = vmul.f32 %v447, %v450
        %v453 = vmul.f32 %v448, %v450
        %v454 = vmul.f32 %v449, %v450
        %v455 = vadd.f32 %v430, %v451
        %v456 = vadd.f32 %v431, %v452
        %v457 = vadd.f32 %v432, %v453
        %v458 = vadd.f32 %v433, %v454
        %v459 = vmul.f32 %v333, 0.25
        %v460 = vadd.f32 %v336, %v341
        %v461 = vadd.f32 %v337, %v342
        %v462 = vadd.f32 %v338, %v459
        %v463 = vadd.f32 %v339, %v459
        %v468 = vrot.slane %v460, 7
        %v469 = vrot.slane %v461, 7
        %v470 = vrot.slane %v462, 7
        %v471 = vrot.slane %v463, 7
        %v476 = vsel %vm359, %v460, %v468
        %v477 = vsel %vm359, %v461, %v469
        %v478 = vsel %vm359, %v462, %v470
        %v479 = vsel %vm359, %v463, %v471
        %s480 = scalar_lea.vmem %s319, 8
        %v481 = vld [vmem:[%s480] ss:$2 sm:$0xf]
        %s482 = scalar_lea.vmem %s480, 16
        %v483 = vld [vmem:[%s482] ss:$2 sm:$0xf]
        %s484 = scalar_lea.vmem %s480, 32
        %v485 = vld [vmem:[%s484] ss:$2 sm:$0xf]
        %s486 = scalar_lea.vmem %s480, 48
        %v487 = vld [vmem:[%s486] ss:$2 sm:$0xf]
        %v488 = vmul.f32 %v460, 0.75
        %v489 = vmul.f32 %v461, 0.75
        %v490 = vmul.f32 %v462, 0.75
        %v491 = vmul.f32 %v463, 0.75
        %v492 = vmul.f32 %v476, 0.25
        %v493 = vmul.f32 %v477, 0.25
        %v494 = vmul.f32 %v478, 0.25
        %v495 = vmul.f32 %v479, 0.25
        %v496 = vadd.f32 %v488, %v492
        %v497 = vadd.f32 %v489, %v493
        %v498 = vadd.f32 %v490, %v494
        %v499 = vadd.f32 %v491, %v495
        %v500 = vadd.f32 %v496, %v481
        %v501 = vadd.f32 %v497, %v483
        %v502 = vadd.f32 %v498, %v485
        %v503 = vadd.f32 %v499, %v487
        %v504 = vperm.slane %v334, 7
        %v505 = vmul.f32 %v500, %v504
        %v506 = vmul.f32 %v501, %v504
        %v507 = vmul.f32 %v502, %v504
        %v508 = vmul.f32 %v503, %v504
        %v509 = vadd.f32 %v455, %v505
        %v510 = vadd.f32 %v456, %v506
        %v511 = vadd.f32 %v457, %v507
        %v512 = vadd.f32 %v458, %v508
        %v513 = vperm.slane %v334, 1
        %v514 = vmul.f32 %v513, 0.0
        %v515 = vmul.f32 %v500, %v513
        %v516 = vmul.f32 %v501, %v513
        %v517 = vmul.f32 %v502, %v513
        %v518 = vadd.f32 %v509, %v514
        %v519 = vadd.f32 %v510, %v515
        %v520 = vadd.f32 %v511, %v516
        %v521 = vadd.f32 %v512, %v517
        %v522 = vrot.slane %v460, 1
        %v523 = vrot.slane %v461, 1
        %v524 = vrot.slane %v462, 1
        %v525 = vrot.slane %v463, 1
        %v530 = vsel %vm400, %v522, %v460
        %v531 = vsel %vm400, %v523, %v461
        %v532 = vsel %vm400, %v524, %v462
        %v533 = vsel %vm400, %v525, %v463
        %s534 = scalar_lea.vmem %s480, 1
        %v535 = vld [vmem:[%s534] ss:$2 sm:$0xf]
        %s536 = scalar_lea.vmem %s480, 17
        %v537 = vld [vmem:[%s536] ss:$2 sm:$0xf]
        %s538 = scalar_lea.vmem %s480, 33
        %v539 = vld [vmem:[%s538] ss:$2 sm:$0xf]
        %s540 = scalar_lea.vmem %s480, 49
        %v541 = vld [vmem:[%s540] ss:$2 sm:$0xf]
        %v542 = vmul.f32 %v530, 0.25
        %v543 = vmul.f32 %v531, 0.25
        %v544 = vmul.f32 %v532, 0.25
        %v545 = vmul.f32 %v533, 0.25
        %v546 = vadd.f32 %v488, %v542
        %v547 = vadd.f32 %v489, %v543
        %v548 = vadd.f32 %v490, %v544
        %v549 = vadd.f32 %v491, %v545
        %v550 = vadd.f32 %v546, %v535
        %v551 = vadd.f32 %v547, %v537
        %v552 = vadd.f32 %v548, %v539
        %v553 = vadd.f32 %v549, %v541
        %v554 = vperm.slane %v335, 0
        %v555 = vmul.f32 %v550, %v554
        %v556 = vmul.f32 %v551, %v554
        %v557 = vmul.f32 %v552, %v554
        %v558 = vmul.f32 %v553, %v554
        %v559 = vadd.f32 %v518, %v555
        %v560 = vadd.f32 %v519, %v556
        %v561 = vadd.f32 %v520, %v557
        %v562 = vadd.f32 %v521, %v558
        %v567 = vrot.slane %v550, 7
        %v568 = vrot.slane %v551, 7
        %v569 = vrot.slane %v552, 7
        %v570 = vrot.slane %v553, 7
        %v575 = vsel %vm359, 0.0, %v567
        %v576 = vsel %vm359, 0.0, %v568
        %v577 = vsel %vm359, 0.0, %v569
        %v578 = vsel %vm359, 0.0, %v570
        %v579 = vperm.slane %v334, 6
        %v580 = vmul.f32 %v575, %v579
        %v581 = vmul.f32 %v576, %v579
        %v582 = vmul.f32 %v577, %v579
        %v583 = vmul.f32 %v578, %v579
        %v584 = vadd.f32 %v559, %v580
        %v585 = vadd.f32 %v560, %v581
        %v586 = vadd.f32 %v561, %v582
        %v587 = vadd.f32 %v562, %v583
        %v588 = vperm.slane %v334, 2
        %v589 = vmul.f32 %v588, 0.0
        %v590 = vmul.f32 %v550, %v588
        %v591 = vmul.f32 %v551, %v588
        %v592 = vmul.f32 %v552, %v588
        %v593 = vadd.f32 %v584, %v589
        %v594 = vadd.f32 %v585, %v590
        %v595 = vadd.f32 %v586, %v591
        %v596 = vadd.f32 %v587, %v592
        %v598 = vrot.slane 0.0, 7
        %v600 = vsel %vm359, 0.0, %v598
        %v601 = vperm.slane %v334, 0
        %v602 = vmul.f32 %v600, %v601
        %v603 = vmul.f32 %v575, %v601
        %v604 = vmul.f32 %v576, %v601
        %v605 = vmul.f32 %v577, %v601
        %v606 = vadd.f32 %v593, %v602
        %v607 = vadd.f32 %v594, %v603
        %v608 = vadd.f32 %v595, %v604
        %v609 = vadd.f32 %v596, %v605
        %v610 = vld [vmem:[%s4] sm:$0xf]
        %v611 = vld [vmem:[%s4 + $0x4] sm:$0xf]
        %v612 = vld [vmem:[%s4 + $0x8] sm:$0xf]
        %v613 = vld [vmem:[%s4 + $0xc] sm:$0xf]
        %v614 = vld [vmem:[%s4 + $0x10] sm:$0xf]
        %v615 = vld [vmem:[%s4 + $0x14] sm:$0xf]
        %v616 = vld [vmem:[%s4 + $0x18] sm:$0xf]
        %v617 = vld [vmem:[%s4 + $0x1c] sm:$0xf]
        %v618 = vld [vmem:[%s4 + $0x20] sm:$0xf]
        %v619 = vld [vmem:[%s4 + $0x24] sm:$0xf]
        %v620 = vld [vmem:[%s4 + $0x28] sm:$0xf]
        %v621 = vld [vmem:[%s4 + $0x2c] sm:$0xf]
        %v622 = vld [vmem:[%s4 + $0x30] sm:$0xf]
        %v623 = vld [vmem:[%s4 + $0x34] sm:$0xf]
        %v624 = vld [vmem:[%s4 + $0x38] sm:$0xf]
        %v625 = vld [vmem:[%s4 + $0x3c] sm:$0xf]
        %v626 = vld [vmem:[%s5] sm:$0x1]
        %vm627 = vcmask 1043456
        %v628 = vsel %vm627, %v606, 0.0
        %v629 = vsel %vm627, %v607, 0.0
        %v630 = vsel %vm627, %v608, 0.0
        %v631 = vsel %vm627, %v609, 0.0
        %v632 = vpack.c.bf16 %v629, %v628
        %v633 = vpack.c.bf16 %v631, %v630
        %v635 = vperm.slane %v626, 0
        %v653 = vunpack.c.l.b16 %v610
        %v654 = vunpack.c.l.b16 %v611
        %v655 = vunpack.c.l.b16 %v612
        %v656 = vunpack.c.l.b16 %v613
        %v657 = vunpack.c.l.b16 %v614
        %v658 = vunpack.c.l.b16 %v615
        %v659 = vunpack.c.l.b16 %v616
        %v660 = vunpack.c.l.b16 %v617
        %v661 = vunpack.c.l.b16 %v618
        %v662 = vunpack.c.l.b16 %v619
        %v663 = vunpack.c.l.b16 %v620
        %v664 = vunpack.c.l.b16 %v621
        %v665 = vunpack.c.l.b16 %v622
        %v666 = vunpack.c.l.b16 %v623
        %v667 = vunpack.c.l.b16 %v624
        %v668 = vunpack.c.l.b16 %v625
        %v669 = vpack.c.b16 %v654, %v653
        %v670 = vpack.c.b16 %v656, %v655
        %v671 = vpack.c.b16 %v658, %v657
        %v672 = vpack.c.b16 %v660, %v659
        %v673 = vpack.c.b16 %v662, %v661
        %v674 = vpack.c.b16 %v664, %v663
        %v675 = vpack.c.b16 %v666, %v665
        %v676 = vpack.c.b16 %v668, %v667
        %685 = vmatpush.bf16.msra.mxu0 %v676
        %686 = vmatpush.bf16.msra.mxu0 %v675
        %687 = vmatpush.bf16.msra.mxu0 %v674
        %688 = vmatpush.bf16.msra.mxu0 %v673
        %689 = vmatpush.bf16.msra.mxu0 %v672
        %690 = vmatpush.bf16.msra.mxu0 %v671
        %691 = vmatpush.bf16.msra.mxu0 %v670
        %692 = vmatpush.bf16.msra.mxu0 %v669
        %693 = vmatmul.bf16.gmra.mxu0 %v632
        %v694 = vpop.f32.mrf.mxu0
        %v695 = vadd.f32 %v635, %v694
        %v696 = vpop.f32.mrf.mxu0
        %v697 = vadd.f32 %v635, %v696
        %698 = vmatmul.bf16.gmra.mxu0 %v633
        %v699 = vpop.f32.mrf.mxu0
        %v700 = vadd.f32 %v635, %v699
        %v701 = vpop.f32.mrf.mxu0
        %v702 = vadd.f32 %v635, %v701
        %703 = vdwg.mxu0
        %v704 = vmax.f32 %v695, 0.0
        %v705 = vmax.f32 %v697, 0.0
        %v706 = vmax.f32 %v700, 0.0
        %v707 = vmax.f32 %v702, 0.0
        %708 = vst [vmem:[%s329] sm:$0xf] %v704
        %709 = vst [vmem:[%s329 + $0x4] sm:$0xf] %v705
        %710 = vst [vmem:[%s329 + $0x8] sm:$0xf] %v706
        %711 = vst [vmem:[%s329 + $0xc] sm:$0xf] %v707
        %v712 = vld [vmem:[%s324] sm:$0xf]
        %v713 = vld [vmem:[%s324 + $0x4] sm:$0xf]
        %v714 = vld [vmem:[%s324 + $0x8] sm:$0xf]
        %v715 = vld [vmem:[%s324 + $0xc] sm:$0xf]
        %v716 = vadd.f32 %v704, %v712
        %v717 = vadd.f32 %v705, %v713
        %v718 = vadd.f32 %v706, %v714
        %v719 = vadd.f32 %v707, %v715
        %720 = vst [vmem:[%s309] sm:$0xf] %v716
        %721 = vst [vmem:[%s309 + $0x4] sm:$0xf] %v717
        %722 = vst [vmem:[%s309 + $0x8] sm:$0xf] %v718
        %723 = vst [vmem:[%s309 + $0xc] sm:$0xf] %v719
        %p724 = scmp.lt.s32.totalorder %s22, 1
        %s725 = scalar_select %p724, %s22, 1
        %s726 = smul.addr %s725, 4
        %s727 = smul.addr %s726, 4
        %s728 = scalar_lea.vmem %s6, %s727
        %s729 = sand.u32 %s197, 1
        %s730 = scalar_lea.sflag [#allocation3], %s729
        %s731 = sand.u32 %s197, 1
        %s732 = smul.addr %s731, 16
        %s733 = scalar_lea.vmem [#allocation2], %s732
        // Predicated region
        $region45: #{fpem_v2_forward.10} parent=43 // pred_check
          %p734 = pneg %p181
        $region46: #{fpem_v2_forward.10} parent=43 // pred_check_branch
          %736 = sbr.rel (%p734) target = $region48
        $region47: #{fpem_v2_forward.10} parent=43 // pred_region
          _
        $region48: #{fpem_v2_forward.10} parent=43 // pred_fallthru
          _
        // Predicated region
        $region49: #{fpem_v2_forward.10} parent=43 // pred_check
          %p737 = pneg %p207
        $region50: #{fpem_v2_forward.10} parent=43 // pred_check_branch
          %739 = sbr.rel (%p737) target = $region52
        $region51: #{fpem_v2_forward.10} parent=43 // pred_region
          %741 = vsyncadd %s730, 0
          %s742 = smul.addr %s22, 4
          %s743 = smul.addr %s742, 4
          %s744 = scalar_lea.hbm %s7, %s743
          %s745 = sshll.u32 %s733, 4
          %s746 = int_to_ptr.vmem [resolvable:$true] %s745
          %s747 = sshll.u32 %s744, 4
          %s748 = int_to_ptr.hbm [resolvable:$true] %s747
          %753 = dma.vmem_to_hbm [thread:$0]  %s746, 256, %s748, %s730, 64, 64, 4
        $region52: #{fpem_v2_forward.10} parent=43 // pred_fallthru
          _
      $region44: #{fpem_v2_forward.10} parent=5 // pred_fallthru
        _
      %p754 = scmp.le.s32.totalorder 2, %s17
      // Predicated region
      $region53: #{fpem_v2_forward.10} parent=5 // pred_check
        %p755 = pneg %p754
      $region54: #{fpem_v2_forward.10} parent=5 // pred_check_branch
        %757 = sbr.rel (%p755) target = $region56
      $region55: #{fpem_v2_forward.10} parent=5 // pred_region
        %s758 = ssub.s32 %s17, 2
        // Predicated region
        $region57: #{fpem_v2_forward.10} parent=55 // pred_check
          %p759 = pneg %p187
        $region58: #{fpem_v2_forward.10} parent=55 // pred_check_branch
          %761 = sbr.rel (%p759) target = $region60
        $region59: #{fpem_v2_forward.10} parent=55 // pred_region
          %p762 = scmp.lt.s32.totalorder %s23, 1
          %s763 = scalar_select %p762, %s23, 1
          %s764 = smul.addr %s763, 4
          %s765 = smul.addr %s764, 4
          %s766 = scalar_lea.vmem %s6, %s765
        $region60: #{fpem_v2_forward.10} parent=55 // pred_fallthru
          _
        // Predicated region
        $region61: #{fpem_v2_forward.10} parent=55 // pred_check
          %p767 = pneg %p213
        $region62: #{fpem_v2_forward.10} parent=55 // pred_check_branch
          %769 = sbr.rel (%p767) target = $region64
        $region63: #{fpem_v2_forward.10} parent=55 // pred_region
          %s770 = sand.u32 %s198, 1
          %s771 = scalar_lea.sflag [#allocation3], %s770
          %s772 = sand.u32 %s198, 1
          %s773 = smul.addr %s772, 16
          %s774 = scalar_lea.vmem [#allocation2], %s773
          %776 = dma.done %s771, 256
        $region64: #{fpem_v2_forward.10} parent=55 // pred_fallthru
          _
      $region56: #{fpem_v2_forward.10} parent=5 // pred_fallthru
        _
    $region6: #{fpem_v2_forward.10} parent=1 // loop_footer
      %s21 = sadd.s32 1, %s17
    $region7: #{fpem_v2_forward.10} parent=1 // loop_footer_branch
      %16 = sbr.rel target = $region3
    $region8: #{fpem_v2_forward.10} parent=1 // loop_exit
      _
    %777 = vsyncpa [#allocation3], 1
    %s778 = scalar_lea.sflag [#allocation3], 1
    %779 = vsyncpa %s778, 1

</llo_original>
